<compile_context>
chip_gen: v6e
topology: v6e:2x2x1
jax: 0.10.0
libtpu: 0.0.40
codegen_flags: <defaults>
</compile_context>

<pallas_src>
import functools

import jax
import jax.numpy as jnp
from jax.experimental import pallas as pl
from jax.experimental.pallas import tpu as pltpu

IN_DIM = 11
HID = 1024
OUT_DIM = 3

IN_PAD = 16     # 11 (+1 bias feature) -> 16; block last-dim equals full padded dim
OUT_PAD = 128   # 3 -> 128: keep output lane-dense (unmasked vst)


def _round_up(x, m):
    return (x + m - 1) // m * m


def mlp_kernel_pipelined(x_ref, w1_ref, w2_ref, b2_ref, w3_ref, b3_ref,
                         w4_ref, b4_ref, o_ref):
    """Multi-grid-step variant: all weights are pipelined VMEM-resident blocks
    (constant index_map -> fetched once, never re-copied between steps)."""
    wdt = w2_ref.dtype
    # fc1 + relu (fc1 bias is folded into w1; x carries a 1.0 feature column)
    h = jnp.dot(x_ref[...].astype(w1_ref.dtype), w1_ref[...],
                preferred_element_type=jnp.float32)
    h = jnp.maximum(h, 0.0)
    # fc2 + relu
    h = jnp.dot(h.astype(wdt), w2_ref[...], preferred_element_type=jnp.float32)
    h = jnp.maximum(h + b2_ref[...], 0.0)
    # fc3 + relu
    h = jnp.dot(h.astype(wdt), w3_ref[...], preferred_element_type=jnp.float32)
    h = jnp.maximum(h + b3_ref[...], 0.0)
    # fc4 + sigmoid
    y = jnp.dot(h.astype(w4_ref.dtype), w4_ref[...],
                preferred_element_type=jnp.float32)
    o_ref[...] = jax.nn.sigmoid(y + b4_ref[...]).astype(o_ref.dtype)


def mlp_kernel_prefetch_w34(x_ref, w1_ref, w2_ref, b2_ref, w3_hbm, b3_ref,
                            w4_hbm, b4_ref, o_ref, w3_vmem, w4_vmem, sem):
    """Single-grid-step variant: w3/w4 arrive as raw HBM refs and are DMA'd into
    VMEM scratch at kernel entry so the copies overlap fc1/fc2 compute; we only
    wait right before each weight is needed."""
    w3_cp = pltpu.make_async_copy(w3_hbm, w3_vmem, sem.at[0])
    w4_cp = pltpu.make_async_copy(w4_hbm, w4_vmem, sem.at[1])
    w3_cp.start()
    w4_cp.start()

    wdt = w2_ref.dtype
    # fc1 + relu (bias folded into w1)
    h = jnp.dot(x_ref[...].astype(w1_ref.dtype), w1_ref[...],
                preferred_element_type=jnp.float32)
    h = jnp.maximum(h, 0.0)
    # fc2 + relu
    h = jnp.dot(h.astype(wdt), w2_ref[...], preferred_element_type=jnp.float32)
    h = jnp.maximum(h + b2_ref[...], 0.0)
    # fc3 + relu (wait for w3 only now)
    w3_cp.wait()
    h = jnp.dot(h.astype(wdt), w3_vmem[...], preferred_element_type=jnp.float32)
    h = jnp.maximum(h + b3_ref[...], 0.0)
    # fc4 + sigmoid (wait for w4 only now)
    w4_cp.wait()
    y = jnp.dot(h.astype(w4_vmem.dtype), w4_vmem[...],
                preferred_element_type=jnp.float32)
    o_ref[...] = jax.nn.sigmoid(y + b4_ref[...]).astype(o_ref.dtype)


def prepare_params(params, weight_dtype=jnp.bfloat16):
    """One-time (offline) padding / casting of the parameters.

    Weights are (in_features, out_features) (transposed vs. torch). Padding:
      * w1 rows 11 -> IN_PAD; row 11 carries b1 (the wrapper feeds a constant
        1.0 feature in that column), remaining pad rows are zero,
      * w4 cols & b4  3 -> OUT_PAD with zeros (padded outputs are sliced off).
    Weights are cast to `weight_dtype` (bf16 recommended); biases stay f32.
    """
    w1, b1, w2, b2, w3, b3, w4, b4 = params
    w1_p = jnp.zeros((IN_PAD, HID), jnp.float32)
    w1_p = w1_p.at[:IN_DIM, :].set(w1)
    w1_p = w1_p.at[IN_DIM, :].set(b1.reshape(-1))          # folded fc1 bias
    w1_p = w1_p.astype(weight_dtype)
    w4_p = jnp.pad(w4, ((0, 0), (0, OUT_PAD - OUT_DIM))).astype(weight_dtype)
    b4_p = jnp.pad(b4, ((0, 0), (0, OUT_PAD - OUT_DIM))).astype(jnp.float32)
    return (w1_p,
            w2.astype(weight_dtype), b2.astype(jnp.float32),
            w3.astype(weight_dtype), b3.astype(jnp.float32),
            w4_p, b4_p)


@functools.partial(jax.jit, static_argnames=("block_b",))
def neural_network_forward(x, prepared_params, *, block_b=512):
    """x: (B, 11) float32 -> (B, 3) float32. `prepared_params` from prepare_params()."""
    w1, w2, b2, w3, b3, w4, b4 = prepared_params
    B = x.shape[0]
    if B == 0:  # empty batch edge case
        return jnp.zeros((0, OUT_DIM), jnp.float32)

    # Batch tile: large (default 512) to amortize the ~0.35us grid-step cost,
    # sublane-aligned, never larger than the padded batch, and capped at half
    # the padded batch so v7x's two TensorCores both receive grid steps.
    b8 = _round_up(B, 8)
    tb = min(_round_up(block_b, 8), b8)
    tb = min(tb, max(_round_up(pl.cdiv(b8, 2), 8), 8))
    b_pad = _round_up(B, tb)
    num_tiles = b_pad // tb

    # Append the constant 1.0 bias-feature column (fc1 bias folded into w1),
    # then zero-pad features to IN_PAD and batch to b_pad.
    x_aug = jnp.concatenate([x, jnp.ones((B, 1), x.dtype)], axis=1)
    x_p = jnp.pad(x_aug, ((0, b_pad - B), (0, IN_PAD - IN_DIM - 1)))

    # Weights/biases: one full block with a constant index_map -> VMEM-resident,
    # never re-copied between grid steps.
    full = lambda shape: pl.BlockSpec(shape, lambda i: (0, 0))

    if num_tiles == 1:
        # Latency path: hide the w3/w4 part of the step-0 weight prologue behind
        # fc1/fc2 compute with manual DMAs (safe: single grid step per core).
        kernel = mlp_kernel_prefetch_w34
        in_specs = [
            pl.BlockSpec((tb, IN_PAD), lambda i: (i, 0)),   # x tile
            full((IN_PAD, HID)),                            # w1 (+ folded b1)
            full((HID, HID)),                               # w2
            full((1, HID)),                                 # b2
            pl.BlockSpec(memory_space=pl.ANY),              # w3 (manual DMA)
            full((1, HID)),                                 # b3
            pl.BlockSpec(memory_space=pl.ANY),              # w4 (manual DMA)
            full((1, OUT_PAD)),                             # b4
        ]
        scratch_shapes = [
            pltpu.VMEM((HID, HID), w3.dtype),
            pltpu.VMEM((HID, OUT_PAD), w4.dtype),
            pltpu.SemaphoreType.DMA((2,)),
        ]
    else:
        # Throughput path: everything pipelined; invariant weight blocks are
        # fetched once and stay resident across all batch tiles.
        kernel = mlp_kernel_pipelined
        in_specs = [
            pl.BlockSpec((tb, IN_PAD), lambda i: (i, 0)),   # x tile
            full((IN_PAD, HID)),                            # w1 (+ folded b1)
            full((HID, HID)),                               # w2
            full((1, HID)),                                 # b2
            full((HID, HID)),                               # w3
            full((1, HID)),                                 # b3
            full((HID, OUT_PAD)),                           # w4
            full((1, OUT_PAD)),                             # b4
        ]
        scratch_shapes = []

    out = pl.pallas_call(
        kernel,
        out_shape=jax.ShapeDtypeStruct((b_pad, OUT_PAD), jnp.float32),
        grid_spec=pltpu.PrefetchScalarGridSpec(
            num_scalar_prefetch=0,
            grid=(num_tiles,),
            in_specs=in_specs,
            out_specs=pl.BlockSpec((tb, OUT_PAD), lambda i: (i, 0)),
            scratch_shapes=scratch_shapes,
        ),
        compiler_params=pltpu.CompilerParams(
            dimension_semantics=("parallel",),   # batch tiles independent (megacore)
            # bf16 weights + tb<=1024 fit comfortably under 48 MiB even with the
            # pipeline's default double buffering; stays below v7x's 64 MiB VMEM
            # and overrides v5e's small 16 MiB default scope.
            vmem_limit_bytes=48 << 20,
        ),
    )(x_p, w1, w2, b2, w3, b3, w4, b4)

    return out[:B, :OUT_DIM]


def init_params(key):
    """PyTorch nn.Linear default init: U(-1/sqrt(fan_in), 1/sqrt(fan_in)).
    Weights stored as (in_features, out_features)."""
    def linear(k, fan_in, fan_out):
        kw, kb = jax.random.split(k)
        bound = 1.0 / jnp.sqrt(fan_in)
        w = jax.random.uniform(kw, (fan_in, fan_out), jnp.float32, -bound, bound)
        b = jax.random.uniform(kb, (1, fan_out), jnp.float32, -bound, bound)
        return w, b

    k1, k2, k3, k4 = jax.random.split(key, 4)
    w1, b1 = linear(k1, IN_DIM, HID)
    w2, b2 = linear(k2, HID, HID)
    w3, b3 = linear(k3, HID, HID)
    w4, b4 = linear(k4, HID, OUT_DIM)
    return (w1, b1, w2, b2, w3, b3, w4, b4)


def reference_forward(x, params):
    w1, b1, w2, b2, w3, b3, w4, b4 = params
    h = jnp.maximum(x @ w1 + b1, 0.0)
    h = jnp.maximum(h @ w2 + b2, 0.0)
    h = jnp.maximum(h @ w3 + b3, 0.0)
    return jax.nn.sigmoid(h @ w4 + b4)


if __name__ == "__main__":
    key = jax.random.PRNGKey(0)
    kp, kx = jax.random.split(key)
    params = init_params(kp)

    # --- Small, non-aligned batch: single grid step -> manual-DMA (latency) path.
    x_small = jax.random.normal(kx, (6, IN_DIM), jnp.float32)
    ref_small = reference_forward(x_small, params)

    # f32-weight path: tight tolerance vs. the fp32 reference.
    p_f32 = prepare_params(params, weight_dtype=jnp.float32)
    out_f32 = jax.block_until_ready(neural_network_forward(x_small, p_f32))
    assert out_f32.shape == (6, OUT_DIM), out_f32.shape
    assert jnp.allclose(out_f32, ref_small, atol=1e-5, rtol=1e-5), float(
        jnp.max(jnp.abs(out_f32 - ref_small)))

    # bf16-weight path (performance configuration): looser tolerance.
    p_bf16 = prepare_params(params, weight_dtype=jnp.bfloat16)
    out_bf16 = jax.block_until_ready(neural_network_forward(x_small, p_bf16))
    assert out_bf16.shape == (6, OUT_DIM), out_bf16.shape
    assert jnp.allclose(out_bf16, ref_small, atol=2e-2), float(
        jnp.max(jnp.abs(out_bf16 - ref_small)))

    # --- Small multi-tile batch (forces the pipelined multi-step path via a
    # tiny block_b) to validate the throughput kernel at small shapes.
    x_multi = jax.random.normal(jax.random.PRNGKey(2), (40, IN_DIM), jnp.float32)
    out_multi = jax.block_until_ready(
        neural_network_forward(x_multi, p_bf16, block_b=16))
    ref_multi = reference_forward(x_multi, params)
    assert out_multi.shape == (40, OUT_DIM), out_multi.shape
    assert jnp.allclose(out_multi, ref_multi, atol=2e-2), float(
        jnp.max(jnp.abs(out_multi - ref_multi)))

    # --- Larger, non-aligned batch with default block_b: exercises the
    # half-batch tile cap (tb=504, 2 grid steps) on the pipelined path.
    x_big = jax.random.normal(jax.random.PRNGKey(1), (1000, IN_DIM), jnp.float32)
    out_big = jax.block_until_ready(neural_network_forward(x_big, p_bf16))
    ref_big = reference_forward(x_big, params)
    assert out_big.shape == (1000, OUT_DIM), out_big.shape
    assert jnp.allclose(out_big, ref_big, atol=2e-2), float(
        jnp.max(jnp.abs(out_big - ref_big)))

    print("KERNEL_OK")
</pallas_src>

<mosaic_0001>
module attributes {stable_mosaic.version = 11 : i64} {
  func.func @mlp_kernel_prefetch_w34(%arg0: i32, %arg1: memref<8x16xf32, #tpu.memory_space<vmem>>, %arg2: memref<16x1024xf32, #tpu.memory_space<vmem>>, %arg3: memref<1024x1024xf32, #tpu.memory_space<vmem>>, %arg4: memref<1x1024xf32, #tpu.memory_space<vmem>>, %arg5: memref<1024x1024xf32, #tpu.memory_space<any>>, %arg6: memref<1x1024xf32, #tpu.memory_space<vmem>>, %arg7: memref<1024x128xf32, #tpu.memory_space<any>>, %arg8: memref<1x128xf32, #tpu.memory_space<vmem>>, %arg9: memref<8x128xf32, #tpu.memory_space<vmem>>, %arg10: memref<1024x1024xf32, #tpu.memory_space<vmem>>, %arg11: memref<1024x128xf32, #tpu.memory_space<vmem>>, %arg12: memref<2x!tpu.dma_semaphore, #tpu.memory_space<semaphore_mem>>) attributes {dimension_semantics = [#tpu.dimension_semantics<parallel>], iteration_bounds = array<i64: 1>, scalar_prefetch = 0 : i64, scratch_operands = 3 : i64, tpu.core_type = #tpu.core_type<tc>, window_params = [{transform_indices = @transform_0, window_bounds = array<i64: 8, 16>}, {pipeline_mode = #tpu.pipeline_mode<synchronous>, transform_indices = @transform_1, window_bounds = array<i64: 16, 1024>}, {pipeline_mode = #tpu.pipeline_mode<synchronous>, transform_indices = @transform_2, window_bounds = array<i64: 1024, 1024>}, {pipeline_mode = #tpu.pipeline_mode<synchronous>, transform_indices = @transform_3, window_bounds = array<i64: 1, 1024>}, {}, {pipeline_mode = #tpu.pipeline_mode<synchronous>, transform_indices = @transform_5, window_bounds = array<i64: 1, 1024>}, {}, {pipeline_mode = #tpu.pipeline_mode<synchronous>, transform_indices = @transform_7, window_bounds = array<i64: 1, 128>}, {transform_indices = @transform_8, window_bounds = array<i64: 8, 128>}]} {
    %c0_i32 = arith.constant 0 : i32
    %0 = tpu.memref_slice %arg12[%c0_i32] : memref<2x!tpu.dma_semaphore, #tpu.memory_space<semaphore_mem>> -> memref<1x!tpu.dma_semaphore, #tpu.memory_space<semaphore_mem>>
    %1 = tpu.memref_squeeze %0 : memref<1x!tpu.dma_semaphore, #tpu.memory_space<semaphore_mem>> -> memref<!tpu.dma_semaphore, #tpu.memory_space<semaphore_mem>>
    tpu.enqueue_dma source(%arg5 : memref<1024x1024xf32, #tpu.memory_space<any>>) target(%arg10 : memref<1024x1024xf32, #tpu.memory_space<vmem>>) target_semaphore(%1 : memref<!tpu.dma_semaphore, #tpu.memory_space<semaphore_mem>>)
    %c1_i32 = arith.constant 1 : i32
    %2 = tpu.memref_slice %arg12[%c1_i32] : memref<2x!tpu.dma_semaphore, #tpu.memory_space<semaphore_mem>> -> memref<1x!tpu.dma_semaphore, #tpu.memory_space<semaphore_mem>>
    %3 = tpu.memref_squeeze %2 : memref<1x!tpu.dma_semaphore, #tpu.memory_space<semaphore_mem>> -> memref<!tpu.dma_semaphore, #tpu.memory_space<semaphore_mem>>
    tpu.enqueue_dma source(%arg7 : memref<1024x128xf32, #tpu.memory_space<any>>) target(%arg11 : memref<1024x128xf32, #tpu.memory_space<vmem>>) target_semaphore(%3 : memref<!tpu.dma_semaphore, #tpu.memory_space<semaphore_mem>>)
    %c0 = arith.constant 0 : index
    %c0_0 = arith.constant 0 : index
    %4 = vector.load %arg1[%c0, %c0_0] : memref<8x16xf32, #tpu.memory_space<vmem>>, vector<8x16xf32>
    %c0_1 = arith.constant 0 : index
    %c0_2 = arith.constant 0 : index
    %5 = vector.load %arg2[%c0_1, %c0_2] : memref<16x1024xf32, #tpu.memory_space<vmem>>, vector<16x1024xf32>
    %cst = arith.constant dense<0.000000e+00> : vector<8x1024xf32>
    %6 = tpu.matmul %4, %5, %cst {dimension_numbers = #tpu.dot_dimension_numbers<[1], [0], [0], [1], [0, 0, 1, 1], [], []>} : vector<8x16xf32>, vector<16x1024xf32>, vector<8x1024xf32> -> vector<8x1024xf32>
    %cst_3 = arith.constant 0.000000e+00 : f32
    %7 = vector.broadcast %cst_3 : f32 to vector<8x1024xf32>
    %8 = arith.maximumf %6, %7 : vector<8x1024xf32>
    %c0_4 = arith.constant 0 : index
    %c0_5 = arith.constant 0 : index
    %9 = vector.load %arg3[%c0_4, %c0_5] : memref<1024x1024xf32, #tpu.memory_space<vmem>>, vector<1024x1024xf32>
    %cst_6 = arith.constant dense<0.000000e+00> : vector<8x1024xf32>
    %10 = tpu.matmul %8, %9, %cst_6 {dimension_numbers = #tpu.dot_dimension_numbers<[1], [0], [0], [1], [0, 0, 1, 1], [], []>} : vector<8x1024xf32>, vector<1024x1024xf32>, vector<8x1024xf32> -> vector<8x1024xf32>
    %c0_7 = arith.constant 0 : index
    %c0_8 = arith.constant 0 : index
    %11 = vector.load %arg4[%c0_7, %c0_8] : memref<1x1024xf32, #tpu.memory_space<vmem>>, vector<1x1024xf32>
    %12 = vector.broadcast %11 : vector<1x1024xf32> to vector<8x1024xf32>
    %13 = arith.addf %10, %12 : vector<8x1024xf32>
    %cst_9 = arith.constant 0.000000e+00 : f32
    %14 = vector.broadcast %cst_9 : f32 to vector<8x1024xf32>
    %15 = arith.maximumf %13, %14 : vector<8x1024xf32>
    %c0_i32_10 = arith.constant 0 : i32
    %16 = tpu.memref_slice %arg12[%c0_i32_10] : memref<2x!tpu.dma_semaphore, #tpu.memory_space<semaphore_mem>> -> memref<1x!tpu.dma_semaphore, #tpu.memory_space<semaphore_mem>>
    %17 = tpu.memref_squeeze %16 : memref<1x!tpu.dma_semaphore, #tpu.memory_space<semaphore_mem>> -> memref<!tpu.dma_semaphore, #tpu.memory_space<semaphore_mem>>
    tpu.wait_dma2 semaphore(%17 : memref<!tpu.dma_semaphore, #tpu.memory_space<semaphore_mem>>) src(%arg5 : memref<1024x1024xf32, #tpu.memory_space<any>>) dst(%arg10 : memref<1024x1024xf32, #tpu.memory_space<vmem>>)
    %c0_11 = arith.constant 0 : index
    %c0_12 = arith.constant 0 : index
    %18 = vector.load %arg10[%c0_11, %c0_12] : memref<1024x1024xf32, #tpu.memory_space<vmem>>, vector<1024x1024xf32>
    %cst_13 = arith.constant dense<0.000000e+00> : vector<8x1024xf32>
    %19 = tpu.matmul %15, %18, %cst_13 {dimension_numbers = #tpu.dot_dimension_numbers<[1], [0], [0], [1], [0, 0, 1, 1], [], []>} : vector<8x1024xf32>, vector<1024x1024xf32>, vector<8x1024xf32> -> vector<8x1024xf32>
    %c0_14 = arith.constant 0 : index
    %c0_15 = arith.constant 0 : index
    %20 = vector.load %arg6[%c0_14, %c0_15] : memref<1x1024xf32, #tpu.memory_space<vmem>>, vector<1x1024xf32>
    %21 = vector.broadcast %20 : vector<1x1024xf32> to vector<8x1024xf32>
    %22 = arith.addf %19, %21 : vector<8x1024xf32>
    %cst_16 = arith.constant 0.000000e+00 : f32
    %23 = vector.broadcast %cst_16 : f32 to vector<8x1024xf32>
    %24 = arith.maximumf %22, %23 : vector<8x1024xf32>
    %c1_i32_17 = arith.constant 1 : i32
    %25 = tpu.memref_slice %arg12[%c1_i32_17] : memref<2x!tpu.dma_semaphore, #tpu.memory_space<semaphore_mem>> -> memref<1x!tpu.dma_semaphore, #tpu.memory_space<semaphore_mem>>
    %26 = tpu.memref_squeeze %25 : memref<1x!tpu.dma_semaphore, #tpu.memory_space<semaphore_mem>> -> memref<!tpu.dma_semaphore, #tpu.memory_space<semaphore_mem>>
    tpu.wait_dma2 semaphore(%26 : memref<!tpu.dma_semaphore, #tpu.memory_space<semaphore_mem>>) src(%arg7 : memref<1024x128xf32, #tpu.memory_space<any>>) dst(%arg11 : memref<1024x128xf32, #tpu.memory_space<vmem>>)
    %c0_18 = arith.constant 0 : index
    %c0_19 = arith.constant 0 : index
    %27 = vector.load %arg11[%c0_18, %c0_19] : memref<1024x128xf32, #tpu.memory_space<vmem>>, vector<1024x128xf32>
    %cst_20 = arith.constant dense<0.000000e+00> : vector<8x128xf32>
    %28 = tpu.matmul %24, %27, %cst_20 {dimension_numbers = #tpu.dot_dimension_numbers<[1], [0], [0], [1], [0, 0, 1, 1], [], []>} : vector<8x1024xf32>, vector<1024x128xf32>, vector<8x128xf32> -> vector<8x128xf32>
    %c0_21 = arith.constant 0 : index
    %c0_22 = arith.constant 0 : index
    %29 = vector.load %arg8[%c0_21, %c0_22] : memref<1x128xf32, #tpu.memory_space<vmem>>, vector<1x128xf32>
    %30 = vector.broadcast %29 : vector<1x128xf32> to vector<8x128xf32>
    %31 = arith.addf %28, %30 : vector<8x128xf32>
    %32 = arith.negf %31 : vector<8x128xf32>
    %33 = math.exp %32 : vector<8x128xf32>
    %cst_23 = arith.constant 1.000000e+00 : f32
    %34 = vector.broadcast %cst_23 : f32 to vector<8x128xf32>
    %35 = arith.addf %34, %33 : vector<8x128xf32>
    %36 = arith.divf %34, %35 : vector<8x128xf32>
    %c0_24 = arith.constant 0 : index
    %c0_25 = arith.constant 0 : index
    %37 = vector.load %arg9[%c0_24, %c0_25] : memref<8x128xf32, #tpu.memory_space<vmem>>, vector<8x128xf32>
    tpu.vector_store %arg9[%c0_24, %c0_25], %36 {strides = array<i32>} : memref<8x128xf32, #tpu.memory_space<vmem>>, vector<8x128xf32>,
    return
  }
  func.func @transform_0(%arg0: i32) -> (i32, i32) {
    %c0_i32 = arith.constant 0 : i32
    %c0_i32_0 = arith.constant 0 : i32
    return %arg0, %c0_i32 : i32, i32
  }
  func.func @transform_1(%arg0: i32) -> (i32, i32) {
    %c0_i32 = arith.constant 0 : i32
    %c0_i32_0 = arith.constant 0 : i32
    %c0_i32_1 = arith.constant 0 : i32
    return %c0_i32, %c0_i32_0 : i32, i32
  }
  func.func @transform_2(%arg0: i32) -> (i32, i32) {
    %c0_i32 = arith.constant 0 : i32
    %c0_i32_0 = arith.constant 0 : i32
    %c0_i32_1 = arith.constant 0 : i32
    return %c0_i32, %c0_i32_0 : i32, i32
  }
  func.func @transform_3(%arg0: i32) -> (i32, i32) {
    %c0_i32 = arith.constant 0 : i32
    %c0_i32_0 = arith.constant 0 : i32
    %c0_i32_1 = arith.constant 0 : i32
    return %c0_i32, %c0_i32_0 : i32, i32
  }
  func.func @transform_5(%arg0: i32) -> (i32, i32) {
    %c0_i32 = arith.constant 0 : i32
    %c0_i32_0 = arith.constant 0 : i32
    %c0_i32_1 = arith.constant 0 : i32
    return %c0_i32, %c0_i32_0 : i32, i32
  }
  func.func @transform_7(%arg0: i32) -> (i32, i32) {
    %c0_i32 = arith.constant 0 : i32
    %c0_i32_0 = arith.constant 0 : i32
    %c0_i32_1 = arith.constant 0 : i32
    return %c0_i32, %c0_i32_0 : i32, i32
  }
  func.func @transform_8(%arg0: i32) -> (i32, i32) {
    %c0_i32 = arith.constant 0 : i32
    %c0_i32_0 = arith.constant 0 : i32
    return %arg0, %c0_i32 : i32, i32
  }
}

</mosaic_0001>

<llo_original>
// kernel: neural_network_forward.1
$region0: #{neural_network_forward.1}
  #allocation0 [shape = 'u32[]', space=smem, size = 0x4, offset = 0x4, fixed_abs, tag = 'smem constant byte address 0x4 - core index']
  #allocation1 [shape = 'u32[144,128]{1,0:T(1,128)}', space=vmem, size = 0x12000, scoped, tag = 'internal scratch']
  #allocation2 [shape = 'f32[1024,1024]{1,0:T(8,128)}', space=vmem, size = 0x400000, scoped, tag = 'scratch operand']
  #allocation3 [shape = 'f32[1024,128]{1,0:T(8,128)}', space=vmem, size = 0x80000, scoped, tag = 'scratch operand']
  #allocation4 [shape = 's32[2]{0}', space=sflag, size = 0x8, scoped, tag = 'scratch operand']
  #allocation13 [shape = 's32[]', space=sflag, size = 0x4, offset = 0, fixed_abs, tag = 'sflag constant byte address 0x0 - dummy sync flag']
  #allocation14 [shape = 's32[]', space=sflag, size = 0x4, offset = 0, fixed_abs, tag = 'sflag constant byte address 0x0 - dummy sync flag']
  #allocation15 [shape = 'u32[]', space=smem, size = 0x4, offset = 0x44, fixed_abs, tag = 'smem constant byte address 0x44 - assertion arg 0']
  #allocation16 [shape = 'u32[]', space=smem, size = 0x4, offset = 0x48, fixed_abs, tag = 'smem constant byte address 0x48 - assertion arg 1']
  #allocation17 [shape = 's32[]', space=sflag, size = 0x4, offset = 0, fixed_abs, tag = 'sflag constant byte address 0x0 - dummy sync flag']
  #allocation18 [shape = 's32[]', space=sflag, size = 0x4, offset = 0, fixed_abs, tag = 'sflag constant byte address 0x0 - dummy sync flag']
  %s0 = inlined_call_operand.vmem [shape: f32[8,16], index: 0, kind: input, shape index: {}]
  %s1 = inlined_call_operand.hbm [shape: f32[16,1024], index: 1, kind: input, shape index: {}]
  %s2 = inlined_call_operand.hbm [shape: f32[1024,1024], index: 2, kind: input, shape index: {}]
  %s3 = inlined_call_operand.hbm [shape: f32[1,1024], index: 3, kind: input, shape index: {}]
  %s4 = inlined_call_operand.hbm [shape: f32[1024,1024], index: 4, kind: input, shape index: {}]
  %s5 = inlined_call_operand.hbm [shape: f32[1,1024], index: 5, kind: input, shape index: {}]
  %s6 = inlined_call_operand.hbm [shape: f32[1024,128], index: 6, kind: input, shape index: {}]
  %s7 = inlined_call_operand.hbm [shape: f32[1,128], index: 7, kind: input, shape index: {}]
  %s8 = inlined_call_operand.vmem [shape: f32[8,128], index: 8, kind: output, shape index: {}]
  %s9 = sld [smem:[#allocation0]]
  $region62: #{neural_network_forward.1} parent=0
    _
  %s11 = ssub.s32 1, %s9
  %s12 = scalar_select 0, %s11, %s9
  $region1: #{neural_network_forward.1} parent=0
    #allocation5 [shape = 'u8[65536]{0}', space=vmem, size = 0x10000, scoped, tag = 'input window, operand 1, single buffered']
    #allocation6 [shape = 's32[1]{0}', space=sflag, size = 0x4, scoped, tag = 'scoped memory for neural_network_forward.1']
    #allocation7 [shape = 'u8[4194304]{0}', space=vmem, size = 0x400000, scoped, tag = 'input window, operand 2, single buffered']
    #allocation8 [shape = 's32[1]{0}', space=sflag, size = 0x4, scoped, tag = 'scoped memory for neural_network_forward.1']
    #allocation9 [shape = 'u8[4096]{0}', space=vmem, size = 0x1000, scoped, tag = 'input window, operand 3, single buffered']
    #allocation10 [shape = 'u8[4096]{0}', space=vmem, size = 0x1000, scoped, tag = 'input window, operand 5, single buffered']
    #allocation11 [shape = 's32[1]{0}', space=sflag, size = 0x4, scoped, tag = 'scoped memory for neural_network_forward.1']
    #allocation12 [shape = 'u8[512]{0}', space=vmem, size = 0x400, scoped, tag = 'input window, operand 7, single buffered']
    %13 = vsyncpa [#allocation6], 0
    %14 = vsyncpa [#allocation8], 0
    %15 = vsyncpa [#allocation11], 0
    // Predicated region
    $region2: #{neural_network_forward.1} parent=1 // pred_check
      _
    $region3: #{neural_network_forward.1} parent=1 // pred_check_branch
      %17 = sbr.rel (0) target = $region5
    $region4: #{neural_network_forward.1} parent=1 // pred_region
      _
    $region5: #{neural_network_forward.1} parent=1 // pred_fallthru
      _
    // Predicated region
    $region6: #{neural_network_forward.1} parent=1 // pred_check
      _
    $region7: #{neural_network_forward.1} parent=1 // pred_check_branch
      %19 = sbr.rel (0) target = $region9
    $region8: #{neural_network_forward.1} parent=1 // pred_region
      %s21 = ssub.s32 2048, 2048
      %22 = vsyncadd [#allocation6], %s21
      %s23 = sshll.u32 [#allocation5], 4
      %s24 = int_to_ptr.vmem [resolvable:$true] %s23
      %29 = dma.hbm_to_vmem [thread:$0]  %s1, 2048, %s24, [#allocation6], 1024, 1024, 64
    $region9: #{neural_network_forward.1} parent=1 // pred_fallthru
      _
    // Predicated region
    $region10: #{neural_network_forward.1} parent=1 // pred_check
      _
    $region11: #{neural_network_forward.1} parent=1 // pred_check_branch
      %31 = sbr.rel (0) target = $region13
    $region12: #{neural_network_forward.1} parent=1 // pred_region
      %s33 = ssub.s32 131072, 131072
      %34 = vsyncadd [#allocation8], %s33
      %s35 = sshll.u32 [#allocation7], 4
      %s36 = int_to_ptr.vmem [resolvable:$true] %s35
      %41 = dma.hbm_to_vmem [thread:$0]  %s2, 131072, %s36, [#allocation8], 1024, 1024, 64
    $region13: #{neural_network_forward.1} parent=1 // pred_fallthru
      _
    // Predicated region
    $region14: #{neural_network_forward.1} parent=1 // pred_check
      _
    $region15: #{neural_network_forward.1} parent=1 // pred_check_branch
      %43 = sbr.rel (0) target = $region17
    $region16: #{neural_network_forward.1} parent=1 // pred_region
      %s45 = ssub.s32 128, 128
      %46 = vsyncadd [#allocation8], %s45
      %s48 = sshll.u32 [#allocation9], 4
      %s49 = int_to_ptr.vmem [resolvable:$true] %s48
      %51 = dma.hbm_to_vmem [thread:$0]  %s3, 128, %s49, [#allocation8]
    $region17: #{neural_network_forward.1} parent=1 // pred_fallthru
      _
    // Predicated region
    $region18: #{neural_network_forward.1} parent=1 // pred_check
      _
    $region19: #{neural_network_forward.1} parent=1 // pred_check_branch
      %53 = sbr.rel (0) target = $region21
    $region20: #{neural_network_forward.1} parent=1 // pred_region
      %s55 = ssub.s32 128, 128
      %56 = vsyncadd [#allocation11], %s55
      %s58 = sshll.u32 [#allocation10], 4
      %s59 = int_to_ptr.vmem [resolvable:$true] %s58
      %61 = dma.hbm_to_vmem [thread:$0]  %s5, 128, %s59, [#allocation11]
    $region21: #{neural_network_forward.1} parent=1 // pred_fallthru
      _
    // Predicated region
    $region22: #{neural_network_forward.1} parent=1 // pred_check
      _
    $region23: #{neural_network_forward.1} parent=1 // pred_check_branch
      %63 = sbr.rel (0) target = $region25
    $region24: #{neural_network_forward.1} parent=1 // pred_region
      %s65 = ssub.s32 16, 16
      %66 = vsyncadd [#allocation11], %s65
      %s68 = sshll.u32 [#allocation12], 4
      %s69 = int_to_ptr.vmem [resolvable:$true] %s68
      %71 = dma.hbm_to_vmem [thread:$0]  %s7, 16, %s69, [#allocation11]
    $region25: #{neural_network_forward.1} parent=1 // pred_fallthru
      _
    // Predicated region
    $region26: #{neural_network_forward.1} parent=1 // pred_check
      _
    $region27: #{neural_network_forward.1} parent=1 // pred_check_branch
      %73 = sbr.rel (0) target = $region29
    $region28: #{neural_network_forward.1} parent=1 // pred_region
      %74 = dma.done [#allocation6], 2048
    $region29: #{neural_network_forward.1} parent=1 // pred_fallthru
      _
    // Predicated region
    $region30: #{neural_network_forward.1} parent=1 // pred_check
      _
    $region31: #{neural_network_forward.1} parent=1 // pred_check_branch
      %76 = sbr.rel (0) target = $region33
    $region32: #{neural_network_forward.1} parent=1 // pred_region
      %77 = dma.done [#allocation8], 131072
    $region33: #{neural_network_forward.1} parent=1 // pred_fallthru
      _
    // Predicated region
    $region34: #{neural_network_forward.1} parent=1 // pred_check
      _
    $region35: #{neural_network_forward.1} parent=1 // pred_check_branch
      %79 = sbr.rel (0) target = $region37
    $region36: #{neural_network_forward.1} parent=1 // pred_region
      %80 = dma.done [#allocation8], 128
    $region37: #{neural_network_forward.1} parent=1 // pred_fallthru
      _
    // Predicated region
    $region38: #{neural_network_forward.1} parent=1 // pred_check
      _
    $region39: #{neural_network_forward.1} parent=1 // pred_check_branch
      %82 = sbr.rel (0) target = $region41
    $region40: #{neural_network_forward.1} parent=1 // pred_region
      %83 = dma.done [#allocation11], 128
    $region41: #{neural_network_forward.1} parent=1 // pred_fallthru
      _
    // Predicated region
    $region42: #{neural_network_forward.1} parent=1 // pred_check
      _
    $region43: #{neural_network_forward.1} parent=1 // pred_check_branch
      %85 = sbr.rel (0) target = $region45
    $region44: #{neural_network_forward.1} parent=1 // pred_region
      %86 = dma.done [#allocation11], 16
    $region45: #{neural_network_forward.1} parent=1 // pred_fallthru
      _
    // Predicated region
    $region46: #{neural_network_forward.1} parent=1 // pred_check
      _
    $region47: #{neural_network_forward.1} parent=1 // pred_check_branch
      %88 = sbr.rel target = $region49
    $region48: #{neural_network_forward.1} parent=1 // pred_region
      %89 = sst [smem:[#allocation15]] [#allocation14]
      %90 = sst [smem:[#allocation16]] [#allocation13]
    $region49: #{neural_network_forward.1} parent=1 // pred_fallthru
      _
    %92 = shalt.err (0)
    %s94 = sshll.u32 [#allocation2], 4
    %s95 = int_to_ptr.vmem [resolvable:$true] %s94
    %97 = dma.hbm_to_vmem [thread:$0]  %s4, 131072, %s95, [#allocation4]
    %s98 = scalar_lea.sflag [#allocation4], 1
    // Predicated region
    $region50: #{neural_network_forward.1} parent=1 // pred_check
      _
    $region51: #{neural_network_forward.1} parent=1 // pred_check_branch
      %100 = sbr.rel target = $region53
    $region52: #{neural_network_forward.1} parent=1 // pred_region
      %101 = sst [smem:[#allocation15]] [#allocation18]
      %102 = sst [smem:[#allocation16]] [#allocation17]
    $region53: #{neural_network_forward.1} parent=1 // pred_fallthru
      _
    %104 = shalt.err (0)
    %s106 = sshll.u32 [#allocation3], 4
    %s107 = int_to_ptr.vmem [resolvable:$true] %s106
    %109 = dma.hbm_to_vmem [thread:$0]  %s6, 16384, %s107, %s98
    %v110 = vld [vmem:[%s0] sm:$0xff]
    %v111 = vld [vmem:[#allocation5] sm:$0xff]
    %v112 = vld [vmem:[#allocation5 + $0x8] sm:$0xff]
    %v113 = vld [vmem:[#allocation5 + $0x10] sm:$0xff]
    %v114 = vld [vmem:[#allocation5 + $0x18] sm:$0xff]
    %v115 = vld [vmem:[#allocation5 + $0x20] sm:$0xff]
    %v116 = vld [vmem:[#allocation5 + $0x28] sm:$0xff]
    %v117 = vld [vmem:[#allocation5 + $0x30] sm:$0xff]
    %v118 = vld [vmem:[#allocation5 + $0x38] sm:$0xff]
    %v119 = vld [vmem:[#allocation5 + $0x40] sm:$0xff]
    %v120 = vld [vmem:[#allocation5 + $0x48] sm:$0xff]
    %v121 = vld [vmem:[#allocation5 + $0x50] sm:$0xff]
    %v122 = vld [vmem:[#allocation5 + $0x58] sm:$0xff]
    %v123 = vld [vmem:[#allocation5 + $0x60] sm:$0xff]
    %v124 = vld [vmem:[#allocation5 + $0x68] sm:$0xff]
    %v125 = vld [vmem:[#allocation5 + $0x70] sm:$0xff]
    %v126 = vld [vmem:[#allocation5 + $0x78] sm:$0xff]
    %vm127 = vcmask 130048
    %v129 = vsel %vm127, %v110, 0
    %131 = vmatprep.subr.mxu0 0.0
    %132 = vmatpush1.msra.mxu0 0.0
    %133 = vmatprep.subr.mxu0 0.0
    %134 = vmatpush1.msra.mxu0 0.0
    %135 = vmatprep.subr.mxu0 0.0
    %136 = vmatpush1.msra.mxu0 0.0
    %137 = vmatprep.subr.mxu0 0.0
    %138 = vmatpush1.msra.mxu0 0.0
    %139 = vmatprep.subr.mxu0 0.0
    %140 = vmatpush1.msra.mxu0 0.0
    %141 = vmatprep.subr.mxu0 0.0
    %142 = vmatpush1.msra.mxu0 0.0
    %143 = vmatprep.subr.mxu0 0.0
    %144 = vmatpush1.msra.mxu0 0.0
    %145 = vmatprep.subr.mxu0 0.0
    %146 = vmatpush1.msra.mxu0 0.0
    %147 = vmatprep.subr.mxu0 0.0
    %148 = vmatpush1.msra.mxu0 0.0
    %149 = vmatprep.subr.mxu0 0.0
    %150 = vmatpush1.msra.mxu0 0.0
    %151 = vmatprep.subr.mxu0 0.0
    %152 = vmatpush1.msra.mxu0 0.0
    %153 = vmatprep.subr.mxu0 0.0
    %154 = vmatpush1.msra.mxu0 0.0
    %155 = vmatprep.subr.mxu0 0.0
    %156 = vmatpush1.msra.mxu0 0.0
    %157 = vmatprep.subr.mxu0 0.0
    %158 = vmatpush1.msra.mxu0 0.0
    %159 = vmatprep.subr.mxu0 %v120
    %160 = vmatpush1.msra.mxu0 %v119
    %161 = vmatprep.subr.mxu0 %v112
    %162 = vmatpush1.msra.mxu0 %v111
    %163 = vmatprep.subr.mxu0 0.0
    %164 = vmatpush2.msra.mxu0 0.0
    %165 = vmatprep.subr.mxu0 0.0
    %166 = vmatpush2.msra.mxu0 0.0
    %167 = vmatprep.subr.mxu0 0.0
    %168 = vmatpush2.msra.mxu0 0.0
    %169 = vmatprep.subr.mxu0 0.0
    %170 = vmatpush2.msra.mxu0 0.0
    %171 = vmatprep.subr.mxu0 0.0
    %172 = vmatpush2.msra.mxu0 0.0
    %173 = vmatprep.subr.mxu0 0.0
    %174 = vmatpush2.msra.mxu0 0.0
    %175 = vmatprep.subr.mxu0 0.0
    %176 = vmatpush2.msra.mxu0 0.0
    %177 = vmatprep.subr.mxu0 0.0
    %178 = vmatpush2.msra.mxu0 0.0
    %179 = vmatprep.subr.mxu0 0.0
    %180 = vmatpush2.msra.mxu0 0.0
    %181 = vmatprep.subr.mxu0 0.0
    %182 = vmatpush2.msra.mxu0 0.0
    %183 = vmatprep.subr.mxu0 0.0
    %184 = vmatpush2.msra.mxu0 0.0
    %185 = vmatprep.subr.mxu0 0.0
    %186 = vmatpush2.msra.mxu0 0.0
    %187 = vmatprep.subr.mxu0 0.0
    %188 = vmatpush2.msra.mxu0 0.0
    %189 = vmatprep.subr.mxu0 0.0
    %190 = vmatpush2.msra.mxu0 0.0
    %191 = vmatprep.subr.mxu0 0.0
    %192 = vmatpush2.msra.mxu0 0.0
    %193 = vmatprep.subr.mxu0 0.0
    %194 = vmatpush2.msra.mxu0 0.0
    %195 = vmatprep.mubr.f32.mxu0 0.0
    %196 = vmatmul.mubr.f32.gmra.mxu0 %v129
    %v197 = vpop.f32.mrf.mxu0
    %v198 = vadd.f32 0.0, %v197
    %v199 = vpop.f32.mrf.mxu0
    %v200 = vadd.f32 0.0, %v199
    %201 = vdwg.mxu0
    %202 = vmatprep.subr.mxu0 0.0
    %203 = vmatpush1.msra.mxu0 0.0
    %204 = vmatprep.subr.mxu0 0.0
    %205 = vmatpush1.msra.mxu0 0.0
    %206 = vmatprep.subr.mxu0 0.0
    %207 = vmatpush1.msra.mxu0 0.0
    %208 = vmatprep.subr.mxu0 0.0
    %209 = vmatpush1.msra.mxu0 0.0
    %210 = vmatprep.subr.mxu0 0.0
    %211 = vmatpush1.msra.mxu0 0.0
    %212 = vmatprep.subr.mxu0 0.0
    %213 = vmatpush1.msra.mxu0 0.0
    %214 = vmatprep.subr.mxu0 0.0
    %215 = vmatpush1.msra.mxu0 0.0
    %216 = vmatprep.subr.mxu0 0.0
    %217 = vmatpush1.msra.mxu0 0.0
    %218 = vmatprep.subr.mxu0 0.0
    %219 = vmatpush1.msra.mxu0 0.0
    %220 = vmatprep.subr.mxu0 0.0
    %221 = vmatpush1.msra.mxu0 0.0
    %222 = vmatprep.subr.mxu0 0.0
    %223 = vmatpush1.msra.mxu0 0.0
    %224 = vmatprep.subr.mxu0 0.0
    %225 = vmatpush1.msra.mxu0 0.0
    %226 = vmatprep.subr.mxu0 0.0
    %227 = vmatpush1.msra.mxu0 0.0
    %228 = vmatprep.subr.mxu0 0.0
    %229 = vmatpush1.msra.mxu0 0.0
    %230 = vmatprep.subr.mxu0 %v122
    %231 = vmatpush1.msra.mxu0 %v121
    %232 = vmatprep.subr.mxu0 %v114
    %233 = vmatpush1.msra.mxu0 %v113
    %234 = vmatprep.subr.mxu0 0.0
    %235 = vmatpush2.msra.mxu0 0.0
    %236 = vmatprep.subr.mxu0 0.0
    %237 = vmatpush2.msra.mxu0 0.0
    %238 = vmatprep.subr.mxu0 0.0
    %239 = vmatpush2.msra.mxu0 0.0
    %240 = vmatprep.subr.mxu0 0.0
    %241 = vmatpush2.msra.mxu0 0.0
    %242 = vmatprep.subr.mxu0 0.0
    %243 = vmatpush2.msra.mxu0 0.0
    %244 = vmatprep.subr.mxu0 0.0
    %245 = vmatpush2.msra.mxu0 0.0
    %246 = vmatprep.subr.mxu0 0.0
    %247 = vmatpush2.msra.mxu0 0.0
    %248 = vmatprep.subr.mxu0 0.0
    %249 = vmatpush2.msra.mxu0 0.0
    %250 = vmatprep.subr.mxu0 0.0
    %251 = vmatpush2.msra.mxu0 0.0
    %252 = vmatprep.subr.mxu0 0.0
    %253 = vmatpush2.msra.mxu0 0.0
    %254 = vmatprep.subr.mxu0 0.0
    %255 = vmatpush2.msra.mxu0 0.0
    %256 = vmatprep.subr.mxu0 0.0
    %257 = vmatpush2.msra.mxu0 0.0
    %258 = vmatprep.subr.mxu0 0.0
    %259 = vmatpush2.msra.mxu0 0.0
    %260 = vmatprep.subr.mxu0 0.0
    %261 = vmatpush2.msra.mxu0 0.0
    %262 = vmatprep.subr.mxu0 0.0
    %263 = vmatpush2.msra.mxu0 0.0
    %264 = vmatprep.subr.mxu0 0.0
    %265 = vmatpush2.msra.mxu0 0.0
    %266 = vmatprep.mubr.f32.mxu0 0.0
    %267 = vmatmul.mubr.f32.gmra.mxu0 %v129
    %v268 = vpop.f32.mrf.mxu0
    %v269 = vadd.f32 0.0, %v268
    %v270 = vpop.f32.mrf.mxu0
    %v271 = vadd.f32 0.0, %v270
    %272 = vdwg.mxu0
    %273 = vmatprep.subr.mxu0 0.0
    %274 = vmatpush1.msra.mxu0 0.0
    %275 = vmatprep.subr.mxu0 0.0
    %276 = vmatpush1.msra.mxu0 0.0
    %277 = vmatprep.subr.mxu0 0.0
    %278 = vmatpush1.msra.mxu0 0.0
    %279 = vmatprep.subr.mxu0 0.0
    %280 = vmatpush1.msra.mxu0 0.0
    %281 = vmatprep.subr.mxu0 0.0
    %282 = vmatpush1.msra.mxu0 0.0
    %283 = vmatprep.subr.mxu0 0.0
    %284 = vmatpush1.msra.mxu0 0.0
    %285 = vmatprep.subr.mxu0 0.0
    %286 = vmatpush1.msra.mxu0 0.0
    %287 = vmatprep.subr.mxu0 0.0
    %288 = vmatpush1.msra.mxu0 0.0
    %289 = vmatprep.subr.mxu0 0.0
    %290 = vmatpush1.msra.mxu0 0.0
    %291 = vmatprep.subr.mxu0 0.0
    %292 = vmatpush1.msra.mxu0 0.0
    %293 = vmatprep.subr.mxu0 0.0
    %294 = vmatpush1.msra.mxu0 0.0
    %295 = vmatprep.subr.mxu0 0.0
    %296 = vmatpush1.msra.mxu0 0.0
    %297 = vmatprep.subr.mxu0 0.0
    %298 = vmatpush1.msra.mxu0 0.0
    %299 = vmatprep.subr.mxu0 0.0
    %300 = vmatpush1.msra.mxu0 0.0
    %301 = vmatprep.subr.mxu0 %v124
    %302 = vmatpush1.msra.mxu0 %v123
    %303 = vmatprep.subr.mxu0 %v116
    %304 = vmatpush1.msra.mxu0 %v115
    %305 = vmatprep.subr.mxu0 0.0
    %306 = vmatpush2.msra.mxu0 0.0
    %307 = vmatprep.subr.mxu0 0.0
    %308 = vmatpush2.msra.mxu0 0.0
    %309 = vmatprep.subr.mxu0 0.0
    %310 = vmatpush2.msra.mxu0 0.0
    %311 = vmatprep.subr.mxu0 0.0
    %312 = vmatpush2.msra.mxu0 0.0
    %313 = vmatprep.subr.mxu0 0.0
    %314 = vmatpush2.msra.mxu0 0.0
    %315 = vmatprep.subr.mxu0 0.0
    %316 = vmatpush2.msra.mxu0 0.0
    %317 = vmatprep.subr.mxu0 0.0
    %318 = vmatpush2.msra.mxu0 0.0
    %319 = vmatprep.subr.mxu0 0.0
    %320 = vmatpush2.msra.mxu0 0.0
    %321 = vmatprep.subr.mxu0 0.0
    %322 = vmatpush2.msra.mxu0 0.0
    %323 = vmatprep.subr.mxu0 0.0
    %324 = vmatpush2.msra.mxu0 0.0
    %325 = vmatprep.subr.mxu0 0.0
    %326 = vmatpush2.msra.mxu0 0.0
    %327 = vmatprep.subr.mxu0 0.0
    %328 = vmatpush2.msra.mxu0 0.0
    %329 = vmatprep.subr.mxu0 0.0
    %330 = vmatpush2.msra.mxu0 0.0
    %331 = vmatprep.subr.mxu0 0.0
    %332 = vmatpush2.msra.mxu0 0.0
    %333 = vmatprep.subr.mxu0 0.0
    %334 = vmatpush2.msra.mxu0 0.0
    %335 = vmatprep.subr.mxu0 0.0
    %336 = vmatpush2.msra.mxu0 0.0
    %337 = vmatprep.mubr.f32.mxu0 0.0
    %338 = vmatmul.mubr.f32.gmra.mxu0 %v129
    %v339 = vpop.f32.mrf.mxu0
    %v340 = vadd.f32 0.0, %v339
    %v341 = vpop.f32.mrf.mxu0
    %v342 = vadd.f32 0.0, %v341
    %343 = vdwg.mxu0
    %344 = vmatprep.subr.mxu0 0.0
    %345 = vmatpush1.msra.mxu0 0.0
    %346 = vmatprep.subr.mxu0 0.0
    %347 = vmatpush1.msra.mxu0 0.0
    %348 = vmatprep.subr.mxu0 0.0
    %349 = vmatpush1.msra.mxu0 0.0
    %350 = vmatprep.subr.mxu0 0.0
    %351 = vmatpush1.msra.mxu0 0.0
    %352 = vmatprep.subr.mxu0 0.0
    %353 = vmatpush1.msra.mxu0 0.0
    %354 = vmatprep.subr.mxu0 0.0
    %355 = vmatpush1.msra.mxu0 0.0
    %356 = vmatprep.subr.mxu0 0.0
    %357 = vmatpush1.msra.mxu0 0.0
    %358 = vmatprep.subr.mxu0 0.0
    %359 = vmatpush1.msra.mxu0 0.0
    %360 = vmatprep.subr.mxu0 0.0
    %361 = vmatpush1.msra.mxu0 0.0
    %362 = vmatprep.subr.mxu0 0.0
    %363 = vmatpush1.msra.mxu0 0.0
    %364 = vmatprep.subr.mxu0 0.0
    %365 = vmatpush1.msra.mxu0 0.0
    %366 = vmatprep.subr.mxu0 0.0
    %367 = vmatpush1.msra.mxu0 0.0
    %368 = vmatprep.subr.mxu0 0.0
    %369 = vmatpush1.msra.mxu0 0.0
    %370 = vmatprep.subr.mxu0 0.0
    %371 = vmatpush1.msra.mxu0 0.0
    %372 = vmatprep.subr.mxu0 %v126
    %373 = vmatpush1.msra.mxu0 %v125
    %374 = vmatprep.subr.mxu0 %v118
    %375 = vmatpush1.msra.mxu0 %v117
    %376 = vmatprep.subr.mxu0 0.0
    %377 = vmatpush2.msra.mxu0 0.0
    %378 = vmatprep.subr.mxu0 0.0
    %379 = vmatpush2.msra.mxu0 0.0
    %380 = vmatprep.subr.mxu0 0.0
    %381 = vmatpush2.msra.mxu0 0.0
    %382 = vmatprep.subr.mxu0 0.0
    %383 = vmatpush2.msra.mxu0 0.0
    %384 = vmatprep.subr.mxu0 0.0
    %385 = vmatpush2.msra.mxu0 0.0
    %386 = vmatprep.subr.mxu0 0.0
    %387 = vmatpush2.msra.mxu0 0.0
    %388 = vmatprep.subr.mxu0 0.0
    %389 = vmatpush2.msra.mxu0 0.0
    %390 = vmatprep.subr.mxu0 0.0
    %391 = vmatpush2.msra.mxu0 0.0
    %392 = vmatprep.subr.mxu0 0.0
    %393 = vmatpush2.msra.mxu0 0.0
    %394 = vmatprep.subr.mxu0 0.0
    %395 = vmatpush2.msra.mxu0 0.0
    %396 = vmatprep.subr.mxu0 0.0
    %397 = vmatpush2.msra.mxu0 0.0
    %398 = vmatprep.subr.mxu0 0.0
    %399 = vmatpush2.msra.mxu0 0.0
    %400 = vmatprep.subr.mxu0 0.0
    %401 = vmatpush2.msra.mxu0 0.0
    %402 = vmatprep.subr.mxu0 0.0
    %403 = vmatpush2.msra.mxu0 0.0
    %404 = vmatprep.subr.mxu0 0.0
    %405 = vmatpush2.msra.mxu0 0.0
    %406 = vmatprep.subr.mxu0 0.0
    %407 = vmatpush2.msra.mxu0 0.0
    %408 = vmatprep.mubr.f32.mxu0 0.0
    %409 = vmatmul.mubr.f32.gmra.mxu0 %v129
    %v410 = vpop.f32.mrf.mxu0
    %v411 = vadd.f32 0.0, %v410
    %v412 = vpop.f32.mrf.mxu0
    %v413 = vadd.f32 0.0, %v412
    %414 = vdwg.mxu0
    %v415 = vmax.f32 %v198, 0.0
    %v416 = vmax.f32 %v200, 0.0
    %v417 = vmax.f32 %v269, 0.0
    %v418 = vmax.f32 %v271, 0.0
    %v419 = vmax.f32 %v340, 0.0
    %v420 = vmax.f32 %v342, 0.0
    %v421 = vmax.f32 %v411, 0.0
    %v422 = vmax.f32 %v413, 0.0
    %v423 = vld [vmem:[#allocation7] sm:$0xff]
    %v424 = vld [vmem:[#allocation7 + $0x8] sm:$0xff]
    %v425 = vld [vmem:[#allocation7 + $0x10] sm:$0xff]
    %v426 = vld [vmem:[#allocation7 + $0x18] sm:$0xff]
    %v427 = vld [vmem:[#allocation7 + $0x20] sm:$0xff]
    %v428 = vld [vmem:[#allocation7 + $0x28] sm:$0xff]
    %v429 = vld [vmem:[#allocation7 + $0x30] sm:$0xff]
    %v430 = vld [vmem:[#allocation7 + $0x38] sm:$0xff]
    %v431 = vld [vmem:[#allocation7 + $0x40] sm:$0xff]
    %v432 = vld [vmem:[#allocation7 + $0x48] sm:$0xff]
    %v433 = vld [vmem:[#allocation7 + $0x50] sm:$0xff]
    %v434 = vld [vmem:[#allocation7 + $0x58] sm:$0xff]
    %v435 = vld [vmem:[#allocation7 + $0x60] sm:$0xff]
    %v436 = vld [vmem:[#allocation7 + $0x68] sm:$0xff]
    %v437 = vld [vmem:[#allocation7 + $0x70] sm:$0xff]
    %v438 = vld [vmem:[#allocation7 + $0x78] sm:$0xff]
    %v439 = vld [vmem:[#allocation7 + $0x80] sm:$0xff]
    %v440 = vld [vmem:[#allocation7 + $0x88] sm:$0xff]
    %v441 = vld [vmem:[#allocation7 + $0x90] sm:$0xff]
    %v442 = vld [vmem:[#allocation7 + $0x98] sm:$0xff]
    %v443 = vld [vmem:[#allocation7 + $0xa0] sm:$0xff]
    %v444 = vld [vmem:[#allocation7 + $0xa8] sm:$0xff]
    %v445 = vld [vmem:[#allocation7 + $0xb0] sm:$0xff]
    %v446 = vld [vmem:[#allocation7 + $0xb8] sm:$0xff]
    %v447 = vld [vmem:[#allocation7 + $0xc0] sm:$0xff]
    %v448 = vld [vmem:[#allocation7 + $0xc8] sm:$0xff]
    %v449 = vld [vmem:[#allocation7 + $0xd0] sm:$0xff]
    %v450 = vld [vmem:[#allocation7 + $0xd8] sm:$0xff]
    %v451 = vld [vmem:[#allocation7 + $0xe0] sm:$0xff]
    %v452 = vld [vmem:[#allocation7 + $0xe8] sm:$0xff]
    %v453 = vld [vmem:[#allocation7 + $0xf0] sm:$0xff]
    %v454 = vld [vmem:[#allocation7 + $0xf8] sm:$0xff]
    %v455 = vld [vmem:[#allocation7 + $0x100] sm:$0xff]
    %v456 = vld [vmem:[#allocation7 + $0x108] sm:$0xff]
    %v457 = vld [vmem:[#allocation7 + $0x110] sm:$0xff]
    %v458 = vld [vmem:[#allocation7 + $0x118] sm:$0xff]
    %v459 = vld [vmem:[#allocation7 + $0x120] sm:$0xff]
    %v460 = vld [vmem:[#allocation7 + $0x128] sm:$0xff]
    %v461 = vld [vmem:[#allocation7 + $0x130] sm:$0xff]
    %v462 = vld [vmem:[#allocation7 + $0x138] sm:$0xff]
    %v463 = vld [vmem:[#allocation7 + $0x140] sm:$0xff]
    %v464 = vld [vmem:[#allocation7 + $0x148] sm:$0xff]
    %v465 = vld [vmem:[#allocation7 + $0x150] sm:$0xff]
    %v466 = vld [vmem:[#allocation7 + $0x158] sm:$0xff]
    %v467 = vld [vmem:[#allocation7 + $0x160] sm:$0xff]
    %v468 = vld [vmem:[#allocation7 + $0x168] sm:$0xff]
    %v469 = vld [vmem:[#allocation7 + $0x170] sm:$0xff]
    %v470 = vld [vmem:[#allocation7 + $0x178] sm:$0xff]
    %v471 = vld [vmem:[#allocation7 + $0x180] sm:$0xff]
    %v472 = vld [vmem:[#allocation7 + $0x188] sm:$0xff]
    %v473 = vld [vmem:[#allocation7 + $0x190] sm:$0xff]
    %v474 = vld [vmem:[#allocation7 + $0x198] sm:$0xff]
    %v475 = vld [vmem:[#allocation7 + $0x1a0] sm:$0xff]
    %v476 = vld [vmem:[#allocation7 + $0x1a8] sm:$0xff]
    %v477 = vld [vmem:[#allocation7 + $0x1b0] sm:$0xff]
    %v478 = vld [vmem:[#allocation7 + $0x1b8] sm:$0xff]
    %v479 = vld [vmem:[#allocation7 + $0x1c0] sm:$0xff]
    %v480 = vld [vmem:[#allocation7 + $0x1c8] sm:$0xff]
    %v481 = vld [vmem:[#allocation7 + $0x1d0] sm:$0xff]
    %v482 = vld [vmem:[#allocation7 + $0x1d8] sm:$0xff]
    %v483 = vld [vmem:[#allocation7 + $0x1e0] sm:$0xff]
    %v484 = vld [vmem:[#allocation7 + $0x1e8] sm:$0xff]
    %v485 = vld [vmem:[#allocation7 + $0x1f0] sm:$0xff]
    %v486 = vld [vmem:[#allocation7 + $0x1f8] sm:$0xff]
    %v487 = vld [vmem:[#allocation7 + $0x200] sm:$0xff]
    %v488 = vld [vmem:[#allocation7 + $0x208] sm:$0xff]
    %v489 = vld [vmem:[#allocation7 + $0x210] sm:$0xff]
    %v490 = vld [vmem:[#allocation7 + $0x218] sm:$0xff]
    %v491 = vld [vmem:[#allocation7 + $0x220] sm:$0xff]
    %v492 = vld [vmem:[#allocation7 + $0x228] sm:$0xff]
    %v493 = vld [vmem:[#allocation7 + $0x230] sm:$0xff]
    %v494 = vld [vmem:[#allocation7 + $0x238] sm:$0xff]
    %v495 = vld [vmem:[#allocation7 + $0x240] sm:$0xff]
    %v496 = vld [vmem:[#allocation7 + $0x248] sm:$0xff]
    %v497 = vld [vmem:[#allocation7 + $0x250] sm:$0xff]
    %v498 = vld [vmem:[#allocation7 + $0x258] sm:$0xff]
    %v499 = vld [vmem:[#allocation7 + $0x260] sm:$0xff]
    %v500 = vld [vmem:[#allocation7 + $0x268] sm:$0xff]
    %v501 = vld [vmem:[#allocation7 + $0x270] sm:$0xff]
    %v502 = vld [vmem:[#allocation7 + $0x278] sm:$0xff]
    %v503 = vld [vmem:[#allocation7 + $0x280] sm:$0xff]
    %v504 = vld [vmem:[#allocation7 + $0x288] sm:$0xff]
    %v505 = vld [vmem:[#allocation7 + $0x290] sm:$0xff]
    %v506 = vld [vmem:[#allocation7 + $0x298] sm:$0xff]
    %v507 = vld [vmem:[#allocation7 + $0x2a0] sm:$0xff]
    %v508 = vld [vmem:[#allocation7 + $0x2a8] sm:$0xff]
    %v509 = vld [vmem:[#allocation7 + $0x2b0] sm:$0xff]
    %v510 = vld [vmem:[#allocation7 + $0x2b8] sm:$0xff]
    %v511 = vld [vmem:[#allocation7 + $0x2c0] sm:$0xff]
    %v512 = vld [vmem:[#allocation7 + $0x2c8] sm:$0xff]
    %v513 = vld [vmem:[#allocation7 + $0x2d0] sm:$0xff]
    %v514 = vld [vmem:[#allocation7 + $0x2d8] sm:$0xff]
    %v515 = vld [vmem:[#allocation7 + $0x2e0] sm:$0xff]
    %v516 = vld [vmem:[#allocation7 + $0x2e8] sm:$0xff]
    %v517 = vld [vmem:[#allocation7 + $0x2f0] sm:$0xff]
    %v518 = vld [vmem:[#allocation7 + $0x2f8] sm:$0xff]
    %v519 = vld [vmem:[#allocation7 + $0x300] sm:$0xff]
    %v520 = vld [vmem:[#allocation7 + $0x308] sm:$0xff]
    %v521 = vld [vmem:[#allocation7 + $0x310] sm:$0xff]
    %v522 = vld [vmem:[#allocation7 + $0x318] sm:$0xff]
    %v523 = vld [vmem:[#allocation7 + $0x320] sm:$0xff]
    %v524 = vld [vmem:[#allocation7 + $0x328] sm:$0xff]
    %v525 = vld [vmem:[#allocation7 + $0x330] sm:$0xff]
    %v526 = vld [vmem:[#allocation7 + $0x338] sm:$0xff]
    %v527 = vld [vmem:[#allocation7 + $0x340] sm:$0xff]
    %v528 = vld [vmem:[#allocation7 + $0x348] sm:$0xff]
    %v529 = vld [vmem:[#allocation7 + $0x350] sm:$0xff]
    %v530 = vld [vmem:[#allocation7 + $0x358] sm:$0xff]
    %v531 = vld [vmem:[#allocation7 + $0x360] sm:$0xff]
    %v532 = vld [vmem:[#allocation7 + $0x368] sm:$0xff]
    %v533 = vld [vmem:[#allocation7 + $0x370] sm:$0xff]
    %v534 = vld [vmem:[#allocation7 + $0x378] sm:$0xff]
    %v535 = vld [vmem:[#allocation7 + $0x380] sm:$0xff]
    %v536 = vld [vmem:[#allocation7 + $0x388] sm:$0xff]
    %v537 = vld [vmem:[#allocation7 + $0x390] sm:$0xff]
    %v538 = vld [vmem:[#allocation7 + $0x398] sm:$0xff]
    %v539 = vld [vmem:[#allocation7 + $0x3a0] sm:$0xff]
    %v540 = vld [vmem:[#allocation7 + $0x3a8] sm:$0xff]
    %v541 = vld [vmem:[#allocation7 + $0x3b0] sm:$0xff]
    %v542 = vld [vmem:[#allocation7 + $0x3b8] sm:$0xff]
    %v543 = vld [vmem:[#allocation7 + $0x3c0] sm:$0xff]
    %v544 = vld [vmem:[#allocation7 + $0x3c8] sm:$0xff]
    %v545 = vld [vmem:[#allocation7 + $0x3d0] sm:$0xff]
    %v546 = vld [vmem:[#allocation7 + $0x3d8] sm:$0xff]
    %v547 = vld [vmem:[#allocation7 + $0x3e0] sm:$0xff]
    %v548 = vld [vmem:[#allocation7 + $0x3e8] sm:$0xff]
    %v549 = vld [vmem:[#allocation7 + $0x3f0] sm:$0xff]
    %v550 = vld [vmem:[#allocation7 + $0x3f8] sm:$0xff]
    %v551 = vld [vmem:[#allocation7 + $0x400] sm:$0xff]
    %v552 = vld [vmem:[#allocation7 + $0x408] sm:$0xff]
    %v553 = vld [vmem:[#allocation7 + $0x410] sm:$0xff]
    %v554 = vld [vmem:[#allocation7 + $0x418] sm:$0xff]
    %v555 = vld [vmem:[#allocation7 + $0x420] sm:$0xff]
    %v556 = vld [vmem:[#allocation7 + $0x428] sm:$0xff]
    %v557 = vld [vmem:[#allocation7 + $0x430] sm:$0xff]
    %v558 = vld [vmem:[#allocation7 + $0x438] sm:$0xff]
    %v559 = vld [vmem:[#allocation7 + $0x440] sm:$0xff]
    %v560 = vld [vmem:[#allocation7 + $0x448] sm:$0xff]
    %v561 = vld [vmem:[#allocation7 + $0x450] sm:$0xff]
    %v562 = vld [vmem:[#allocation7 + $0x458] sm:$0xff]
    %v563 = vld [vmem:[#allocation7 + $0x460] sm:$0xff]
    %v564 = vld [vmem:[#allocation7 + $0x468] sm:$0xff]
    %v565 = vld [vmem:[#allocation7 + $0x470] sm:$0xff]
    %v566 = vld [vmem:[#allocation7 + $0x478] sm:$0xff]
    %v567 = vld [vmem:[#allocation7 + $0x480] sm:$0xff]
    %v568 = vld [vmem:[#allocation7 + $0x488] sm:$0xff]
    %v569 = vld [vmem:[#allocation7 + $0x490] sm:$0xff]
    %v570 = vld [vmem:[#allocation7 + $0x498] sm:$0xff]
    %v571 = vld [vmem:[#allocation7 + $0x4a0] sm:$0xff]
    %v572 = vld [vmem:[#allocation7 + $0x4a8] sm:$0xff]
    %v573 = vld [vmem:[#allocation7 + $0x4b0] sm:$0xff]
    %v574 = vld [vmem:[#allocation7 + $0x4b8] sm:$0xff]
    %v575 = vld [vmem:[#allocation7 + $0x4c0] sm:$0xff]
    %v576 = vld [vmem:[#allocation7 + $0x4c8] sm:$0xff]
    %v577 = vld [vmem:[#allocation7 + $0x4d0] sm:$0xff]
    %v578 = vld [vmem:[#allocation7 + $0x4d8] sm:$0xff]
    %v579 = vld [vmem:[#allocation7 + $0x4e0] sm:$0xff]
    %v580 = vld [vmem:[#allocation7 + $0x4e8] sm:$0xff]
    %v581 = vld [vmem:[#allocation7 + $0x4f0] sm:$0xff]
    %v582 = vld [vmem:[#allocation7 + $0x4f8] sm:$0xff]
    %v583 = vld [vmem:[#allocation7 + $0x500] sm:$0xff]
    %v584 = vld [vmem:[#allocation7 + $0x508] sm:$0xff]
    %v585 = vld [vmem:[#allocation7 + $0x510] sm:$0xff]
    %v586 = vld [vmem:[#allocation7 + $0x518] sm:$0xff]
    %v587 = vld [vmem:[#allocation7 + $0x520] sm:$0xff]
    %v588 = vld [vmem:[#allocation7 + $0x528] sm:$0xff]
    %v589 = vld [vmem:[#allocation7 + $0x530] sm:$0xff]
    %v590 = vld [vmem:[#allocation7 + $0x538] sm:$0xff]
    %v591 = vld [vmem:[#allocation7 + $0x540] sm:$0xff]
    %v592 = vld [vmem:[#allocation7 + $0x548] sm:$0xff]
    %v593 = vld [vmem:[#allocation7 + $0x550] sm:$0xff]
    %v594 = vld [vmem:[#allocation7 + $0x558] sm:$0xff]
    %v595 = vld [vmem:[#allocation7 + $0x560] sm:$0xff]
    %v596 = vld [vmem:[#allocation7 + $0x568] sm:$0xff]
    %v597 = vld [vmem:[#allocation7 + $0x570] sm:$0xff]
    %v598 = vld [vmem:[#allocation7 + $0x578] sm:$0xff]
    %v599 = vld [vmem:[#allocation7 + $0x580] sm:$0xff]
    %v600 = vld [vmem:[#allocation7 + $0x588] sm:$0xff]
    %v601 = vld [vmem:[#allocation7 + $0x590] sm:$0xff]
    %v602 = vld [vmem:[#allocation7 + $0x598] sm:$0xff]
    %v603 = vld [vmem:[#allocation7 + $0x5a0] sm:$0xff]
    %v604 = vld [vmem:[#allocation7 + $0x5a8] sm:$0xff]
    %v605 = vld [vmem:[#allocation7 + $0x5b0] sm:$0xff]
    %v606 = vld [vmem:[#allocation7 + $0x5b8] sm:$0xff]
    %v607 = vld [vmem:[#allocation7 + $0x5c0] sm:$0xff]
    %v608 = vld [vmem:[#allocation7 + $0x5c8] sm:$0xff]
    %v609 = vld [vmem:[#allocation7 + $0x5d0] sm:$0xff]
    %v610 = vld [vmem:[#allocation7 + $0x5d8] sm:$0xff]
    %v611 = vld [vmem:[#allocation7 + $0x5e0] sm:$0xff]
    %v612 = vld [vmem:[#allocation7 + $0x5e8] sm:$0xff]
    %v613 = vld [vmem:[#allocation7 + $0x5f0] sm:$0xff]
    %v614 = vld [vmem:[#allocation7 + $0x5f8] sm:$0xff]
    %v615 = vld [vmem:[#allocation7 + $0x600] sm:$0xff]
    %v616 = vld [vmem:[#allocation7 + $0x608] sm:$0xff]
    %v617 = vld [vmem:[#allocation7 + $0x610] sm:$0xff]
    %v618 = vld [vmem:[#allocation7 + $0x618] sm:$0xff]
    %v619 = vld [vmem:[#allocation7 + $0x620] sm:$0xff]
    %v620 = vld [vmem:[#allocation7 + $0x628] sm:$0xff]
    %v621 = vld [vmem:[#allocation7 + $0x630] sm:$0xff]
    %v622 = vld [vmem:[#allocation7 + $0x638] sm:$0xff]
    %v623 = vld [vmem:[#allocation7 + $0x640] sm:$0xff]
    %v624 = vld [vmem:[#allocation7 + $0x648] sm:$0xff]
    %v625 = vld [vmem:[#allocation7 + $0x650] sm:$0xff]
    %v626 = vld [vmem:[#allocation7 + $0x658] sm:$0xff]
    %v627 = vld [vmem:[#allocation7 + $0x660] sm:$0xff]
    %v628 = vld [vmem:[#allocation7 + $0x668] sm:$0xff]
    %v629 = vld [vmem:[#allocation7 + $0x670] sm:$0xff]
    %v630 = vld [vmem:[#allocation7 + $0x678] sm:$0xff]
    %v631 = vld [vmem:[#allocation7 + $0x680] sm:$0xff]
    %v632 = vld [vmem:[#allocation7 + $0x688] sm:$0xff]
    %v633 = vld [vmem:[#allocation7 + $0x690] sm:$0xff]
    %v634 = vld [vmem:[#allocation7 + $0x698] sm:$0xff]
    %v635 = vld [vmem:[#allocation7 + $0x6a0] sm:$0xff]
    %v636 = vld [vmem:[#allocation7 + $0x6a8] sm:$0xff]
    %v637 = vld [vmem:[#allocation7 + $0x6b0] sm:$0xff]
    %v638 = vld [vmem:[#allocation7 + $0x6b8] sm:$0xff]
    %v639 = vld [vmem:[#allocation7 + $0x6c0] sm:$0xff]
    %v640 = vld [vmem:[#allocation7 + $0x6c8] sm:$0xff]
    %v641 = vld [vmem:[#allocation7 + $0x6d0] sm:$0xff]
    %v642 = vld [vmem:[#allocation7 + $0x6d8] sm:$0xff]
    %v643 = vld [vmem:[#allocation7 + $0x6e0] sm:$0xff]
    %v644 = vld [vmem:[#allocation7 + $0x6e8] sm:$0xff]
    %v645 = vld [vmem:[#allocation7 + $0x6f0] sm:$0xff]
    %v646 = vld [vmem:[#allocation7 + $0x6f8] sm:$0xff]
    %v647 = vld [vmem:[#allocation7 + $0x700] sm:$0xff]
    %v648 = vld [vmem:[#allocation7 + $0x708] sm:$0xff]
    %v649 = vld [vmem:[#allocation7 + $0x710] sm:$0xff]
    %v650 = vld [vmem:[#allocation7 + $0x718] sm:$0xff]
    %v651 = vld [vmem:[#allocation7 + $0x720] sm:$0xff]
    %v652 = vld [vmem:[#allocation7 + $0x728] sm:$0xff]
    %v653 = vld [vmem:[#allocation7 + $0x730] sm:$0xff]
    %v654 = vld [vmem:[#allocation7 + $0x738] sm:$0xff]
    %v655 = vld [vmem:[#allocation7 + $0x740] sm:$0xff]
    %v656 = vld [vmem:[#allocation7 + $0x748] sm:$0xff]
    %v657 = vld [vmem:[#allocation7 + $0x750] sm:$0xff]
    %v658 = vld [vmem:[#allocation7 + $0x758] sm:$0xff]
    %v659 = vld [vmem:[#allocation7 + $0x760] sm:$0xff]
    %v660 = vld [vmem:[#allocation7 + $0x768] sm:$0xff]
    %v661 = vld [vmem:[#allocation7 + $0x770] sm:$0xff]
    %v662 = vld [vmem:[#allocation7 + $0x778] sm:$0xff]
    %v663 = vld [vmem:[#allocation7 + $0x780] sm:$0xff]
    %v664 = vld [vmem:[#allocation7 + $0x788] sm:$0xff]
    %v665 = vld [vmem:[#allocation7 + $0x790] sm:$0xff]
    %v666 = vld [vmem:[#allocation7 + $0x798] sm:$0xff]
    %v667 = vld [vmem:[#allocation7 + $0x7a0] sm:$0xff]
    %v668 = vld [vmem:[#allocation7 + $0x7a8] sm:$0xff]
    %v669 = vld [vmem:[#allocation7 + $0x7b0] sm:$0xff]
    %v670 = vld [vmem:[#allocation7 + $0x7b8] sm:$0xff]
    %v671 = vld [vmem:[#allocation7 + $0x7c0] sm:$0xff]
    %v672 = vld [vmem:[#allocation7 + $0x7c8] sm:$0xff]
    %v673 = vld [vmem:[#allocation7 + $0x7d0] sm:$0xff]
    %v674 = vld [vmem:[#allocation7 + $0x7d8] sm:$0xff]
    %v675 = vld [vmem:[#allocation7 + $0x7e0] sm:$0xff]
    %v676 = vld [vmem:[#allocation7 + $0x7e8] sm:$0xff]
    %v677 = vld [vmem:[#allocation7 + $0x7f0] sm:$0xff]
    %v678 = vld [vmem:[#allocation7 + $0x7f8] sm:$0xff]
    %v679 = vld [vmem:[#allocation7 + $0x800] sm:$0xff]
    %v680 = vld [vmem:[#allocation7 + $0x808] sm:$0xff]
    %v681 = vld [vmem:[#allocation7 + $0x810] sm:$0xff]
    %v682 = vld [vmem:[#allocation7 + $0x818] sm:$0xff]
    %v683 = vld [vmem:[#allocation7 + $0x820] sm:$0xff]
    %v684 = vld [vmem:[#allocation7 + $0x828] sm:$0xff]
    %v685 = vld [vmem:[#allocation7 + $0x830] sm:$0xff]
    %v686 = vld [vmem:[#allocation7 + $0x838] sm:$0xff]
    %v687 = vld [vmem:[#allocation7 + $0x840] sm:$0xff]
    %v688 = vld [vmem:[#allocation7 + $0x848] sm:$0xff]
    %v689 = vld [vmem:[#allocation7 + $0x850] sm:$0xff]
    %v690 = vld [vmem:[#allocation7 + $0x858] sm:$0xff]
    %v691 = vld [vmem:[#allocation7 + $0x860] sm:$0xff]
    %v692 = vld [vmem:[#allocation7 + $0x868] sm:$0xff]
    %v693 = vld [vmem:[#allocation7 + $0x870] sm:$0xff]
    %v694 = vld [vmem:[#allocation7 + $0x878] sm:$0xff]
    %v695 = vld [vmem:[#allocation7 + $0x880] sm:$0xff]
    %v696 = vld [vmem:[#allocation7 + $0x888] sm:$0xff]
    %v697 = vld [vmem:[#allocation7 + $0x890] sm:$0xff]
    %v698 = vld [vmem:[#allocation7 + $0x898] sm:$0xff]
    %v699 = vld [vmem:[#allocation7 + $0x8a0] sm:$0xff]
    %v700 = vld [vmem:[#allocation7 + $0x8a8] sm:$0xff]
    %v701 = vld [vmem:[#allocation7 + $0x8b0] sm:$0xff]
    %v702 = vld [vmem:[#allocation7 + $0x8b8] sm:$0xff]
    %v703 = vld [vmem:[#allocation7 + $0x8c0] sm:$0xff]
    %v704 = vld [vmem:[#allocation7 + $0x8c8] sm:$0xff]
    %v705 = vld [vmem:[#allocation7 + $0x8d0] sm:$0xff]
    %v706 = vld [vmem:[#allocation7 + $0x8d8] sm:$0xff]
    %v707 = vld [vmem:[#allocation7 + $0x8e0] sm:$0xff]
    %v708 = vld [vmem:[#allocation7 + $0x8e8] sm:$0xff]
    %v709 = vld [vmem:[#allocation7 + $0x8f0] sm:$0xff]
    %v710 = vld [vmem:[#allocation7 + $0x8f8] sm:$0xff]
    %v711 = vld [vmem:[#allocation7 + $0x900] sm:$0xff]
    %v712 = vld [vmem:[#allocation7 + $0x908] sm:$0xff]
    %v713 = vld [vmem:[#allocation7 + $0x910] sm:$0xff]
    %v714 = vld [vmem:[#allocation7 + $0x918] sm:$0xff]
    %v715 = vld [vmem:[#allocation7 + $0x920] sm:$0xff]
    %v716 = vld [vmem:[#allocation7 + $0x928] sm:$0xff]
    %v717 = vld [vmem:[#allocation7 + $0x930] sm:$0xff]
    %v718 = vld [vmem:[#allocation7 + $0x938] sm:$0xff]
    %v719 = vld [vmem:[#allocation7 + $0x940] sm:$0xff]
    %v720 = vld [vmem:[#allocation7 + $0x948] sm:$0xff]
    %v721 = vld [vmem:[#allocation7 + $0x950] sm:$0xff]
    %v722 = vld [vmem:[#allocation7 + $0x958] sm:$0xff]
    %v723 = vld [vmem:[#allocation7 + $0x960] sm:$0xff]
    %v724 = vld [vmem:[#allocation7 + $0x968] sm:$0xff]
    %v725 = vld [vmem:[#allocation7 + $0x970] sm:$0xff]
    %v726 = vld [vmem:[#allocation7 + $0x978] sm:$0xff]
    %v727 = vld [vmem:[#allocation7 + $0x980] sm:$0xff]
    %v728 = vld [vmem:[#allocation7 + $0x988] sm:$0xff]
    %v729 = vld [vmem:[#allocation7 + $0x990] sm:$0xff]
    %v730 = vld [vmem:[#allocation7 + $0x998] sm:$0xff]
    %v731 = vld [vmem:[#allocation7 + $0x9a0] sm:$0xff]
    %v732 = vld [vmem:[#allocation7 + $0x9a8] sm:$0xff]
    %v733 = vld [vmem:[#allocation7 + $0x9b0] sm:$0xff]
    %v734 = vld [vmem:[#allocation7 + $0x9b8] sm:$0xff]
    %v735 = vld [vmem:[#allocation7 + $0x9c0] sm:$0xff]
    %v736 = vld [vmem:[#allocation7 + $0x9c8] sm:$0xff]
    %v737 = vld [vmem:[#allocation7 + $0x9d0] sm:$0xff]
    %v738 = vld [vmem:[#allocation7 + $0x9d8] sm:$0xff]
    %v739 = vld [vmem:[#allocation7 + $0x9e0] sm:$0xff]
    %v740 = vld [vmem:[#allocation7 + $0x9e8] sm:$0xff]
    %v741 = vld [vmem:[#allocation7 + $0x9f0] sm:$0xff]
    %v742 = vld [vmem:[#allocation7 + $0x9f8] sm:$0xff]
    %v743 = vld [vmem:[#allocation7 + $0xa00] sm:$0xff]
    %v744 = vld [vmem:[#allocation7 + $0xa08] sm:$0xff]
    %v745 = vld [vmem:[#allocation7 + $0xa10] sm:$0xff]
    %v746 = vld [vmem:[#allocation7 + $0xa18] sm:$0xff]
    %v747 = vld [vmem:[#allocation7 + $0xa20] sm:$0xff]
    %v748 = vld [vmem:[#allocation7 + $0xa28] sm:$0xff]
    %v749 = vld [vmem:[#allocation7 + $0xa30] sm:$0xff]
    %v750 = vld [vmem:[#allocation7 + $0xa38] sm:$0xff]
    %v751 = vld [vmem:[#allocation7 + $0xa40] sm:$0xff]
    %v752 = vld [vmem:[#allocation7 + $0xa48] sm:$0xff]
    %v753 = vld [vmem:[#allocation7 + $0xa50] sm:$0xff]
    %v754 = vld [vmem:[#allocation7 + $0xa58] sm:$0xff]
    %v755 = vld [vmem:[#allocation7 + $0xa60] sm:$0xff]
    %v756 = vld [vmem:[#allocation7 + $0xa68] sm:$0xff]
    %v757 = vld [vmem:[#allocation7 + $0xa70] sm:$0xff]
    %v758 = vld [vmem:[#allocation7 + $0xa78] sm:$0xff]
    %v759 = vld [vmem:[#allocation7 + $0xa80] sm:$0xff]
    %v760 = vld [vmem:[#allocation7 + $0xa88] sm:$0xff]
    %v761 = vld [vmem:[#allocation7 + $0xa90] sm:$0xff]
    %v762 = vld [vmem:[#allocation7 + $0xa98] sm:$0xff]
    %v763 = vld [vmem:[#allocation7 + $0xaa0] sm:$0xff]
    %v764 = vld [vmem:[#allocation7 + $0xaa8] sm:$0xff]
    %v765 = vld [vmem:[#allocation7 + $0xab0] sm:$0xff]
    %v766 = vld [vmem:[#allocation7 + $0xab8] sm:$0xff]
    %v767 = vld [vmem:[#allocation7 + $0xac0] sm:$0xff]
    %v768 = vld [vmem:[#allocation7 + $0xac8] sm:$0xff]
    %v769 = vld [vmem:[#allocation7 + $0xad0] sm:$0xff]
    %v770 = vld [vmem:[#allocation7 + $0xad8] sm:$0xff]
    %v771 = vld [vmem:[#allocation7 + $0xae0] sm:$0xff]
    %v772 = vld [vmem:[#allocation7 + $0xae8] sm:$0xff]
    %v773 = vld [vmem:[#allocation7 + $0xaf0] sm:$0xff]
    %v774 = vld [vmem:[#allocation7 + $0xaf8] sm:$0xff]
    %v775 = vld [vmem:[#allocation7 + $0xb00] sm:$0xff]
    %v776 = vld [vmem:[#allocation7 + $0xb08] sm:$0xff]
    %v777 = vld [vmem:[#allocation7 + $0xb10] sm:$0xff]
    %v778 = vld [vmem:[#allocation7 + $0xb18] sm:$0xff]
    %v779 = vld [vmem:[#allocation7 + $0xb20] sm:$0xff]
    %v780 = vld [vmem:[#allocation7 + $0xb28] sm:$0xff]
    %v781 = vld [vmem:[#allocation7 + $0xb30] sm:$0xff]
    %v782 = vld [vmem:[#allocation7 + $0xb38] sm:$0xff]
    %v783 = vld [vmem:[#allocation7 + $0xb40] sm:$0xff]
    %v784 = vld [vmem:[#allocation7 + $0xb48] sm:$0xff]
    %v785 = vld [vmem:[#allocation7 + $0xb50] sm:$0xff]
    %v786 = vld [vmem:[#allocation7 + $0xb58] sm:$0xff]
    %v787 = vld [vmem:[#allocation7 + $0xb60] sm:$0xff]
    %v788 = vld [vmem:[#allocation7 + $0xb68] sm:$0xff]
    %v789 = vld [vmem:[#allocation7 + $0xb70] sm:$0xff]
    %v790 = vld [vmem:[#allocation7 + $0xb78] sm:$0xff]
    %v791 = vld [vmem:[#allocation7 + $0xb80] sm:$0xff]
    %v792 = vld [vmem:[#allocation7 + $0xb88] sm:$0xff]
    %v793 = vld [vmem:[#allocation7 + $0xb90] sm:$0xff]
    %v794 = vld [vmem:[#allocation7 + $0xb98] sm:$0xff]
    %v795 = vld [vmem:[#allocation7 + $0xba0] sm:$0xff]
    %v796 = vld [vmem:[#allocation7 + $0xba8] sm:$0xff]
    %v797 = vld [vmem:[#allocation7 + $0xbb0] sm:$0xff]
    %v798 = vld [vmem:[#allocation7 + $0xbb8] sm:$0xff]
    %v799 = vld [vmem:[#allocation7 + $0xbc0] sm:$0xff]
    %v800 = vld [vmem:[#allocation7 + $0xbc8] sm:$0xff]
    %v801 = vld [vmem:[#allocation7 + $0xbd0] sm:$0xff]
    %v802 = vld [vmem:[#allocation7 + $0xbd8] sm:$0xff]
    %v803 = vld [vmem:[#allocation7 + $0xbe0] sm:$0xff]
    %v804 = vld [vmem:[#allocation7 + $0xbe8] sm:$0xff]
    %v805 = vld [vmem:[#allocation7 + $0xbf0] sm:$0xff]
    %v806 = vld [vmem:[#allocation7 + $0xbf8] sm:$0xff]
    %v807 = vld [vmem:[#allocation7 + $0xc00] sm:$0xff]
    %v808 = vld [vmem:[#allocation7 + $0xc08] sm:$0xff]
    %v809 = vld [vmem:[#allocation7 + $0xc10] sm:$0xff]
    %v810 = vld [vmem:[#allocation7 + $0xc18] sm:$0xff]
    %v811 = vld [vmem:[#allocation7 + $0xc20] sm:$0xff]
    %v812 = vld [vmem:[#allocation7 + $0xc28] sm:$0xff]
    %v813 = vld [vmem:[#allocation7 + $0xc30] sm:$0xff]
    %v814 = vld [vmem:[#allocation7 + $0xc38] sm:$0xff]
    %v815 = vld [vmem:[#allocation7 + $0xc40] sm:$0xff]
    %v816 = vld [vmem:[#allocation7 + $0xc48] sm:$0xff]
    %v817 = vld [vmem:[#allocation7 + $0xc50] sm:$0xff]
    %v818 = vld [vmem:[#allocation7 + $0xc58] sm:$0xff]
    %v819 = vld [vmem:[#allocation7 + $0xc60] sm:$0xff]
    %v820 = vld [vmem:[#allocation7 + $0xc68] sm:$0xff]
    %v821 = vld [vmem:[#allocation7 + $0xc70] sm:$0xff]
    %v822 = vld [vmem:[#allocation7 + $0xc78] sm:$0xff]
    %v823 = vld [vmem:[#allocation7 + $0xc80] sm:$0xff]
    %v824 = vld [vmem:[#allocation7 + $0xc88] sm:$0xff]
    %v825 = vld [vmem:[#allocation7 + $0xc90] sm:$0xff]
    %v826 = vld [vmem:[#allocation7 + $0xc98] sm:$0xff]
    %v827 = vld [vmem:[#allocation7 + $0xca0] sm:$0xff]
    %v828 = vld [vmem:[#allocation7 + $0xca8] sm:$0xff]
    %v829 = vld [vmem:[#allocation7 + $0xcb0] sm:$0xff]
    %v830 = vld [vmem:[#allocation7 + $0xcb8] sm:$0xff]
    %v831 = vld [vmem:[#allocation7 + $0xcc0] sm:$0xff]
    %v832 = vld [vmem:[#allocation7 + $0xcc8] sm:$0xff]
    %v833 = vld [vmem:[#allocation7 + $0xcd0] sm:$0xff]
    %v834 = vld [vmem:[#allocation7 + $0xcd8] sm:$0xff]
    %v835 = vld [vmem:[#allocation7 + $0xce0] sm:$0xff]
    %v836 = vld [vmem:[#allocation7 + $0xce8] sm:$0xff]
    %v837 = vld [vmem:[#allocation7 + $0xcf0] sm:$0xff]
    %v838 = vld [vmem:[#allocation7 + $0xcf8] sm:$0xff]
    %v839 = vld [vmem:[#allocation7 + $0xd00] sm:$0xff]
    %v840 = vld [vmem:[#allocation7 + $0xd08] sm:$0xff]
    %v841 = vld [vmem:[#allocation7 + $0xd10] sm:$0xff]
    %v842 = vld [vmem:[#allocation7 + $0xd18] sm:$0xff]
    %v843 = vld [vmem:[#allocation7 + $0xd20] sm:$0xff]
    %v844 = vld [vmem:[#allocation7 + $0xd28] sm:$0xff]
    %v845 = vld [vmem:[#allocation7 + $0xd30] sm:$0xff]
    %v846 = vld [vmem:[#allocation7 + $0xd38] sm:$0xff]
    %v847 = vld [vmem:[#allocation7 + $0xd40] sm:$0xff]
    %v848 = vld [vmem:[#allocation7 + $0xd48] sm:$0xff]
    %v849 = vld [vmem:[#allocation7 + $0xd50] sm:$0xff]
    %v850 = vld [vmem:[#allocation7 + $0xd58] sm:$0xff]
    %v851 = vld [vmem:[#allocation7 + $0xd60] sm:$0xff]
    %v852 = vld [vmem:[#allocation7 + $0xd68] sm:$0xff]
    %v853 = vld [vmem:[#allocation7 + $0xd70] sm:$0xff]
    %v854 = vld [vmem:[#allocation7 + $0xd78] sm:$0xff]
    %v855 = vld [vmem:[#allocation7 + $0xd80] sm:$0xff]
    %v856 = vld [vmem:[#allocation7 + $0xd88] sm:$0xff]
    %v857 = vld [vmem:[#allocation7 + $0xd90] sm:$0xff]
    %v858 = vld [vmem:[#allocation7 + $0xd98] sm:$0xff]
    %v859 = vld [vmem:[#allocation7 + $0xda0] sm:$0xff]
    %v860 = vld [vmem:[#allocation7 + $0xda8] sm:$0xff]
    %v861 = vld [vmem:[#allocation7 + $0xdb0] sm:$0xff]
    %v862 = vld [vmem:[#allocation7 + $0xdb8] sm:$0xff]
    %v863 = vld [vmem:[#allocation7 + $0xdc0] sm:$0xff]
    %v864 = vld [vmem:[#allocation7 + $0xdc8] sm:$0xff]
    %v865 = vld [vmem:[#allocation7 + $0xdd0] sm:$0xff]
    %v866 = vld [vmem:[#allocation7 + $0xdd8] sm:$0xff]
    %v867 = vld [vmem:[#allocation7 + $0xde0] sm:$0xff]
    %v868 = vld [vmem:[#allocation7 + $0xde8] sm:$0xff]
    %v869 = vld [vmem:[#allocation7 + $0xdf0] sm:$0xff]
    %v870 = vld [vmem:[#allocation7 + $0xdf8] sm:$0xff]
    %v871 = vld [vmem:[#allocation7 + $0xe00] sm:$0xff]
    %v872 = vld [vmem:[#allocation7 + $0xe08] sm:$0xff]
    %v873 = vld [vmem:[#allocation7 + $0xe10] sm:$0xff]
    %v874 = vld [vmem:[#allocation7 + $0xe18] sm:$0xff]
    %v875 = vld [vmem:[#allocation7 + $0xe20] sm:$0xff]
    %v876 = vld [vmem:[#allocation7 + $0xe28] sm:$0xff]
    %v877 = vld [vmem:[#allocation7 + $0xe30] sm:$0xff]
    %v878 = vld [vmem:[#allocation7 + $0xe38] sm:$0xff]
    %v879 = vld [vmem:[#allocation7 + $0xe40] sm:$0xff]
    %v880 = vld [vmem:[#allocation7 + $0xe48] sm:$0xff]
    %v881 = vld [vmem:[#allocation7 + $0xe50] sm:$0xff]
    %v882 = vld [vmem:[#allocation7 + $0xe58] sm:$0xff]
    %v883 = vld [vmem:[#allocation7 + $0xe60] sm:$0xff]
    %v884 = vld [vmem:[#allocation7 + $0xe68] sm:$0xff]
    %v885 = vld [vmem:[#allocation7 + $0xe70] sm:$0xff]
    %v886 = vld [vmem:[#allocation7 + $0xe78] sm:$0xff]
    %v887 = vld [vmem:[#allocation7 + $0xe80] sm:$0xff]
    %v888 = vld [vmem:[#allocation7 + $0xe88] sm:$0xff]
    %v889 = vld [vmem:[#allocation7 + $0xe90] sm:$0xff]
    %v890 = vld [vmem:[#allocation7 + $0xe98] sm:$0xff]
    %v891 = vld [vmem:[#allocation7 + $0xea0] sm:$0xff]
    %v892 = vld [vmem:[#allocation7 + $0xea8] sm:$0xff]
    %v893 = vld [vmem:[#allocation7 + $0xeb0] sm:$0xff]
    %v894 = vld [vmem:[#allocation7 + $0xeb8] sm:$0xff]
    %v895 = vld [vmem:[#allocation7 + $0xec0] sm:$0xff]
    %v896 = vld [vmem:[#allocation7 + $0xec8] sm:$0xff]
    %v897 = vld [vmem:[#allocation7 + $0xed0] sm:$0xff]
    %v898 = vld [vmem:[#allocation7 + $0xed8] sm:$0xff]
    %v899 = vld [vmem:[#allocation7 + $0xee0] sm:$0xff]
    %v900 = vld [vmem:[#allocation7 + $0xee8] sm:$0xff]
    %v901 = vld [vmem:[#allocation7 + $0xef0] sm:$0xff]
    %v902 = vld [vmem:[#allocation7 + $0xef8] sm:$0xff]
    %v903 = vld [vmem:[#allocation7 + $0xf00] sm:$0xff]
    %v904 = vld [vmem:[#allocation7 + $0xf08] sm:$0xff]
    %v905 = vld [vmem:[#allocation7 + $0xf10] sm:$0xff]
    %v906 = vld [vmem:[#allocation7 + $0xf18] sm:$0xff]
    %v907 = vld [vmem:[#allocation7 + $0xf20] sm:$0xff]
    %v908 = vld [vmem:[#allocation7 + $0xf28] sm:$0xff]
    %v909 = vld [vmem:[#allocation7 + $0xf30] sm:$0xff]
    %v910 = vld [vmem:[#allocation7 + $0xf38] sm:$0xff]
    %v911 = vld [vmem:[#allocation7 + $0xf40] sm:$0xff]
    %v912 = vld [vmem:[#allocation7 + $0xf48] sm:$0xff]
    %v913 = vld [vmem:[#allocation7 + $0xf50] sm:$0xff]
    %v914 = vld [vmem:[#allocation7 + $0xf58] sm:$0xff]
    %v915 = vld [vmem:[#allocation7 + $0xf60] sm:$0xff]
    %v916 = vld [vmem:[#allocation7 + $0xf68] sm:$0xff]
    %v917 = vld [vmem:[#allocation7 + $0xf70] sm:$0xff]
    %v918 = vld [vmem:[#allocation7 + $0xf78] sm:$0xff]
    %v919 = vld [vmem:[#allocation7 + $0xf80] sm:$0xff]
    %v920 = vld [vmem:[#allocation7 + $0xf88] sm:$0xff]
    %v921 = vld [vmem:[#allocation7 + $0xf90] sm:$0xff]
    %v922 = vld [vmem:[#allocation7 + $0xf98] sm:$0xff]
    %v923 = vld [vmem:[#allocation7 + $0xfa0] sm:$0xff]
    %v924 = vld [vmem:[#allocation7 + $0xfa8] sm:$0xff]
    %v925 = vld [vmem:[#allocation7 + $0xfb0] sm:$0xff]
    %v926 = vld [vmem:[#allocation7 + $0xfb8] sm:$0xff]
    %v927 = vld [vmem:[#allocation7 + $0xfc0] sm:$0xff]
    %v928 = vld [vmem:[#allocation7 + $0xfc8] sm:$0xff]
    %v929 = vld [vmem:[#allocation7 + $0xfd0] sm:$0xff]
    %v930 = vld [vmem:[#allocation7 + $0xfd8] sm:$0xff]
    %v931 = vld [vmem:[#allocation7 + $0xfe0] sm:$0xff]
    %v932 = vld [vmem:[#allocation7 + $0xfe8] sm:$0xff]
    %v933 = vld [vmem:[#allocation7 + $0xff0] sm:$0xff]
    %v934 = vld [vmem:[#allocation7 + $0xff8] sm:$0xff]
    %v935 = vld [vmem:[#allocation7 + $0x1000] sm:$0xff]
    %v936 = vld [vmem:[#allocation7 + $0x1008] sm:$0xff]
    %v937 = vld [vmem:[#allocation7 + $0x1010] sm:$0xff]
    %v938 = vld [vmem:[#allocation7 + $0x1018] sm:$0xff]
    %v939 = vld [vmem:[#allocation7 + $0x1020] sm:$0xff]
    %v940 = vld [vmem:[#allocation7 + $0x1028] sm:$0xff]
    %v941 = vld [vmem:[#allocation7 + $0x1030] sm:$0xff]
    %v942 = vld [vmem:[#allocation7 + $0x1038] sm:$0xff]
    %v943 = vld [vmem:[#allocation7 + $0x1040] sm:$0xff]
    %v944 = vld [vmem:[#allocation7 + $0x1048] sm:$0xff]
    %v945 = vld [vmem:[#allocation7 + $0x1050] sm:$0xff]
    %v946 = vld [vmem:[#allocation7 + $0x1058] sm:$0xff]
    %v947 = vld [vmem:[#allocation7 + $0x1060] sm:$0xff]
    %v948 = vld [vmem:[#allocation7 + $0x1068] sm:$0xff]
    %v949 = vld [vmem:[#allocation7 + $0x1070] sm:$0xff]
    %v950 = vld [vmem:[#allocation7 + $0x1078] sm:$0xff]
    %v951 = vld [vmem:[#allocation7 + $0x1080] sm:$0xff]
    %v952 = vld [vmem:[#allocation7 + $0x1088] sm:$0xff]
    %v953 = vld [vmem:[#allocation7 + $0x1090] sm:$0xff]
    %v954 = vld [vmem:[#allocation7 + $0x1098] sm:$0xff]
    %v955 = vld [vmem:[#allocation7 + $0x10a0] sm:$0xff]
    %v956 = vld [vmem:[#allocation7 + $0x10a8] sm:$0xff]
    %v957 = vld [vmem:[#allocation7 + $0x10b0] sm:$0xff]
    %v958 = vld [vmem:[#allocation7 + $0x10b8] sm:$0xff]
    %v959 = vld [vmem:[#allocation7 + $0x10c0] sm:$0xff]
    %v960 = vld [vmem:[#allocation7 + $0x10c8] sm:$0xff]
    %v961 = vld [vmem:[#allocation7 + $0x10d0] sm:$0xff]
    %v962 = vld [vmem:[#allocation7 + $0x10d8] sm:$0xff]
    %v963 = vld [vmem:[#allocation7 + $0x10e0] sm:$0xff]
    %v964 = vld [vmem:[#allocation7 + $0x10e8] sm:$0xff]
    %v965 = vld [vmem:[#allocation7 + $0x10f0] sm:$0xff]
    %v966 = vld [vmem:[#allocation7 + $0x10f8] sm:$0xff]
    %v967 = vld [vmem:[#allocation7 + $0x1100] sm:$0xff]
    %v968 = vld [vmem:[#allocation7 + $0x1108] sm:$0xff]
    %v969 = vld [vmem:[#allocation7 + $0x1110] sm:$0xff]
    %v970 = vld [vmem:[#allocation7 + $0x1118] sm:$0xff]
    %v971 = vld [vmem:[#allocation7 + $0x1120] sm:$0xff]
    %v972 = vld [vmem:[#allocation7 + $0x1128] sm:$0xff]
    %v973 = vld [vmem:[#allocation7 + $0x1130] sm:$0xff]
    %v974 = vld [vmem:[#allocation7 + $0x1138] sm:$0xff]
    %v975 = vld [vmem:[#allocation7 + $0x1140] sm:$0xff]
    %v976 = vld [vmem:[#allocation7 + $0x1148] sm:$0xff]
    %v977 = vld [vmem:[#allocation7 + $0x1150] sm:$0xff]
    %v978 = vld [vmem:[#allocation7 + $0x1158] sm:$0xff]
    %v979 = vld [vmem:[#allocation7 + $0x1160] sm:$0xff]
    %v980 = vld [vmem:[#allocation7 + $0x1168] sm:$0xff]
    %v981 = vld [vmem:[#allocation7 + $0x1170] sm:$0xff]
    %v982 = vld [vmem:[#allocation7 + $0x1178] sm:$0xff]
    %v983 = vld [vmem:[#allocation7 + $0x1180] sm:$0xff]
    %v984 = vld [vmem:[#allocation7 + $0x1188] sm:$0xff]
    %v985 = vld [vmem:[#allocation7 + $0x1190] sm:$0xff]
    %v986 = vld [vmem:[#allocation7 + $0x1198] sm:$0xff]
    %v987 = vld [vmem:[#allocation7 + $0x11a0] sm:$0xff]
    %v988 = vld [vmem:[#allocation7 + $0x11a8] sm:$0xff]
    %v989 = vld [vmem:[#allocation7 + $0x11b0] sm:$0xff]
    %v990 = vld [vmem:[#allocation7 + $0x11b8] sm:$0xff]
    %v991 = vld [vmem:[#allocation7 + $0x11c0] sm:$0xff]
    %v992 = vld [vmem:[#allocation7 + $0x11c8] sm:$0xff]
    %v993 = vld [vmem:[#allocation7 + $0x11d0] sm:$0xff]
    %v994 = vld [vmem:[#allocation7 + $0x11d8] sm:$0xff]
    %v995 = vld [vmem:[#allocation7 + $0x11e0] sm:$0xff]
    %v996 = vld [vmem:[#allocation7 + $0x11e8] sm:$0xff]
    %v997 = vld [vmem:[#allocation7 + $0x11f0] sm:$0xff]
    %v998 = vld [vmem:[#allocation7 + $0x11f8] sm:$0xff]
    %v999 = vld [vmem:[#allocation7 + $0x1200] sm:$0xff]
    %v1000 = vld [vmem:[#allocation7 + $0x1208] sm:$0xff]
    %v1001 = vld [vmem:[#allocation7 + $0x1210] sm:$0xff]
    %v1002 = vld [vmem:[#allocation7 + $0x1218] sm:$0xff]
    %v1003 = vld [vmem:[#allocation7 + $0x1220] sm:$0xff]
    %v1004 = vld [vmem:[#allocation7 + $0x1228] sm:$0xff]
    %v1005 = vld [vmem:[#allocation7 + $0x1230] sm:$0xff]
    %v1006 = vld [vmem:[#allocation7 + $0x1238] sm:$0xff]
    %v1007 = vld [vmem:[#allocation7 + $0x1240] sm:$0xff]
    %v1008 = vld [vmem:[#allocation7 + $0x1248] sm:$0xff]
    %v1009 = vld [vmem:[#allocation7 + $0x1250] sm:$0xff]
    %v1010 = vld [vmem:[#allocation7 + $0x1258] sm:$0xff]
    %v1011 = vld [vmem:[#allocation7 + $0x1260] sm:$0xff]
    %v1012 = vld [vmem:[#allocation7 + $0x1268] sm:$0xff]
    %v1013 = vld [vmem:[#allocation7 + $0x1270] sm:$0xff]
    %v1014 = vld [vmem:[#allocation7 + $0x1278] sm:$0xff]
    %v1015 = vld [vmem:[#allocation7 + $0x1280] sm:$0xff]
    %v1016 = vld [vmem:[#allocation7 + $0x1288] sm:$0xff]
    %v1017 = vld [vmem:[#allocation7 + $0x1290] sm:$0xff]
    %v1018 = vld [vmem:[#allocation7 + $0x1298] sm:$0xff]
    %v1019 = vld [vmem:[#allocation7 + $0x12a0] sm:$0xff]
    %v1020 = vld [vmem:[#allocation7 + $0x12a8] sm:$0xff]
    %v1021 = vld [vmem:[#allocation7 + $0x12b0] sm:$0xff]
    %v1022 = vld [vmem:[#allocation7 + $0x12b8] sm:$0xff]
    %v1023 = vld [vmem:[#allocation7 + $0x12c0] sm:$0xff]
    %v1024 = vld [vmem:[#allocation7 + $0x12c8] sm:$0xff]
    %v1025 = vld [vmem:[#allocation7 + $0x12d0] sm:$0xff]
    %v1026 = vld [vmem:[#allocation7 + $0x12d8] sm:$0xff]
    %v1027 = vld [vmem:[#allocation7 + $0x12e0] sm:$0xff]
    %v1028 = vld [vmem:[#allocation7 + $0x12e8] sm:$0xff]
    %v1029 = vld [vmem:[#allocation7 + $0x12f0] sm:$0xff]
    %v1030 = vld [vmem:[#allocation7 + $0x12f8] sm:$0xff]
    %v1031 = vld [vmem:[#allocation7 + $0x1300] sm:$0xff]
    %v1032 = vld [vmem:[#allocation7 + $0x1308] sm:$0xff]
    %v1033 = vld [vmem:[#allocation7 + $0x1310] sm:$0xff]
    %v1034 = vld [vmem:[#allocation7 + $0x1318] sm:$0xff]
    %v1035 = vld [vmem:[#allocation7 + $0x1320] sm:$0xff]
    %v1036 = vld [vmem:[#allocation7 + $0x1328] sm:$0xff]
    %v1037 = vld [vmem:[#allocation7 + $0x1330] sm:$0xff]
    %v1038 = vld [vmem:[#allocation7 + $0x1338] sm:$0xff]
    %v1039 = vld [vmem:[#allocation7 + $0x1340] sm:$0xff]
    %v1040 = vld [vmem:[#allocation7 + $0x1348] sm:$0xff]
    %v1041 = vld [vmem:[#allocation7 + $0x1350] sm:$0xff]
    %v1042 = vld [vmem:[#allocation7 + $0x1358] sm:$0xff]
    %v1043 = vld [vmem:[#allocation7 + $0x1360] sm:$0xff]
    %v1044 = vld [vmem:[#allocation7 + $0x1368] sm:$0xff]
    %v1045 = vld [vmem:[#allocation7 + $0x1370] sm:$0xff]
    %v1046 = vld [vmem:[#allocation7 + $0x1378] sm:$0xff]
    %v1047 = vld [vmem:[#allocation7 + $0x1380] sm:$0xff]
    %v1048 = vld [vmem:[#allocation7 + $0x1388] sm:$0xff]
    %v1049 = vld [vmem:[#allocation7 + $0x1390] sm:$0xff]
    %v1050 = vld [vmem:[#allocation7 + $0x1398] sm:$0xff]
    %v1051 = vld [vmem:[#allocation7 + $0x13a0] sm:$0xff]
    %v1052 = vld [vmem:[#allocation7 + $0x13a8] sm:$0xff]
    %v1053 = vld [vmem:[#allocation7 + $0x13b0] sm:$0xff]
    %v1054 = vld [vmem:[#allocation7 + $0x13b8] sm:$0xff]
    %v1055 = vld [vmem:[#allocation7 + $0x13c0] sm:$0xff]
    %v1056 = vld [vmem:[#allocation7 + $0x13c8] sm:$0xff]
    %v1057 = vld [vmem:[#allocation7 + $0x13d0] sm:$0xff]
    %v1058 = vld [vmem:[#allocation7 + $0x13d8] sm:$0xff]
    %v1059 = vld [vmem:[#allocation7 + $0x13e0] sm:$0xff]
    %v1060 = vld [vmem:[#allocation7 + $0x13e8] sm:$0xff]
    %v1061 = vld [vmem:[#allocation7 + $0x13f0] sm:$0xff]
    %v1062 = vld [vmem:[#allocation7 + $0x13f8] sm:$0xff]
    %v1063 = vld [vmem:[#allocation7 + $0x1400] sm:$0xff]
    %v1064 = vld [vmem:[#allocation7 + $0x1408] sm:$0xff]
    %v1065 = vld [vmem:[#allocation7 + $0x1410] sm:$0xff]
    %v1066 = vld [vmem:[#allocation7 + $0x1418] sm:$0xff]
    %v1067 = vld [vmem:[#allocation7 + $0x1420] sm:$0xff]
    %v1068 = vld [vmem:[#allocation7 + $0x1428] sm:$0xff]
    %v1069 = vld [vmem:[#allocation7 + $0x1430] sm:$0xff]
    %v1070 = vld [vmem:[#allocation7 + $0x1438] sm:$0xff]
    %v1071 = vld [vmem:[#allocation7 + $0x1440] sm:$0xff]
    %v1072 = vld [vmem:[#allocation7 + $0x1448] sm:$0xff]
    %v1073 = vld [vmem:[#allocation7 + $0x1450] sm:$0xff]
    %v1074 = vld [vmem:[#allocation7 + $0x1458] sm:$0xff]
    %v1075 = vld [vmem:[#allocation7 + $0x1460] sm:$0xff]
    %v1076 = vld [vmem:[#allocation7 + $0x1468] sm:$0xff]
    %v1077 = vld [vmem:[#allocation7 + $0x1470] sm:$0xff]
    %v1078 = vld [vmem:[#allocation7 + $0x1478] sm:$0xff]
    %v1079 = vld [vmem:[#allocation7 + $0x1480] sm:$0xff]
    %v1080 = vld [vmem:[#allocation7 + $0x1488] sm:$0xff]
    %v1081 = vld [vmem:[#allocation7 + $0x1490] sm:$0xff]
    %v1082 = vld [vmem:[#allocation7 + $0x1498] sm:$0xff]
    %v1083 = vld [vmem:[#allocation7 + $0x14a0] sm:$0xff]
    %v1084 = vld [vmem:[#allocation7 + $0x14a8] sm:$0xff]
    %v1085 = vld [vmem:[#allocation7 + $0x14b0] sm:$0xff]
    %v1086 = vld [vmem:[#allocation7 + $0x14b8] sm:$0xff]
    %v1087 = vld [vmem:[#allocation7 + $0x14c0] sm:$0xff]
    %v1088 = vld [vmem:[#allocation7 + $0x14c8] sm:$0xff]
    %v1089 = vld [vmem:[#allocation7 + $0x14d0] sm:$0xff]
    %v1090 = vld [vmem:[#allocation7 + $0x14d8] sm:$0xff]
    %v1091 = vld [vmem:[#allocation7 + $0x14e0] sm:$0xff]
    %v1092 = vld [vmem:[#allocation7 + $0x14e8] sm:$0xff]
    %v1093 = vld [vmem:[#allocation7 + $0x14f0] sm:$0xff]
    %v1094 = vld [vmem:[#allocation7 + $0x14f8] sm:$0xff]
    %v1095 = vld [vmem:[#allocation7 + $0x1500] sm:$0xff]
    %v1096 = vld [vmem:[#allocation7 + $0x1508] sm:$0xff]
    %v1097 = vld [vmem:[#allocation7 + $0x1510] sm:$0xff]
    %v1098 = vld [vmem:[#allocation7 + $0x1518] sm:$0xff]
    %v1099 = vld [vmem:[#allocation7 + $0x1520] sm:$0xff]
    %v1100 = vld [vmem:[#allocation7 + $0x1528] sm:$0xff]
    %v1101 = vld [vmem:[#allocation7 + $0x1530] sm:$0xff]
    %v1102 = vld [vmem:[#allocation7 + $0x1538] sm:$0xff]
    %v1103 = vld [vmem:[#allocation7 + $0x1540] sm:$0xff]
    %v1104 = vld [vmem:[#allocation7 + $0x1548] sm:$0xff]
    %v1105 = vld [vmem:[#allocation7 + $0x1550] sm:$0xff]
    %v1106 = vld [vmem:[#allocation7 + $0x1558] sm:$0xff]
    %v1107 = vld [vmem:[#allocation7 + $0x1560] sm:$0xff]
    %v1108 = vld [vmem:[#allocation7 + $0x1568] sm:$0xff]
    %v1109 = vld [vmem:[#allocation7 + $0x1570] sm:$0xff]
    %v1110 = vld [vmem:[#allocation7 + $0x1578] sm:$0xff]
    %v1111 = vld [vmem:[#allocation7 + $0x1580] sm:$0xff]
    %v1112 = vld [vmem:[#allocation7 + $0x1588] sm:$0xff]
    %v1113 = vld [vmem:[#allocation7 + $0x1590] sm:$0xff]
    %v1114 = vld [vmem:[#allocation7 + $0x1598] sm:$0xff]
    %v1115 = vld [vmem:[#allocation7 + $0x15a0] sm:$0xff]
    %v1116 = vld [vmem:[#allocation7 + $0x15a8] sm:$0xff]
    %v1117 = vld [vmem:[#allocation7 + $0x15b0] sm:$0xff]
    %v1118 = vld [vmem:[#allocation7 + $0x15b8] sm:$0xff]
    %v1119 = vld [vmem:[#allocation7 + $0x15c0] sm:$0xff]
    %v1120 = vld [vmem:[#allocation7 + $0x15c8] sm:$0xff]
    %v1121 = vld [vmem:[#allocation7 + $0x15d0] sm:$0xff]
    %v1122 = vld [vmem:[#allocation7 + $0x15d8] sm:$0xff]
    %v1123 = vld [vmem:[#allocation7 + $0x15e0] sm:$0xff]
    %v1124 = vld [vmem:[#allocation7 + $0x15e8] sm:$0xff]
    %v1125 = vld [vmem:[#allocation7 + $0x15f0] sm:$0xff]
    %v1126 = vld [vmem:[#allocation7 + $0x15f8] sm:$0xff]
    %v1127 = vld [vmem:[#allocation7 + $0x1600] sm:$0xff]
    %v1128 = vld [vmem:[#allocation7 + $0x1608] sm:$0xff]
    %v1129 = vld [vmem:[#allocation7 + $0x1610] sm:$0xff]
    %v1130 = vld [vmem:[#allocation7 + $0x1618] sm:$0xff]
    %v1131 = vld [vmem:[#allocation7 + $0x1620] sm:$0xff]
    %v1132 = vld [vmem:[#allocation7 + $0x1628] sm:$0xff]
    %v1133 = vld [vmem:[#allocation7 + $0x1630] sm:$0xff]
    %v1134 = vld [vmem:[#allocation7 + $0x1638] sm:$0xff]
    %v1135 = vld [vmem:[#allocation7 + $0x1640] sm:$0xff]
    %v1136 = vld [vmem:[#allocation7 + $0x1648] sm:$0xff]
    %v1137 = vld [vmem:[#allocation7 + $0x1650] sm:$0xff]
    %v1138 = vld [vmem:[#allocation7 + $0x1658] sm:$0xff]
    %v1139 = vld [vmem:[#allocation7 + $0x1660] sm:$0xff]
    %v1140 = vld [vmem:[#allocation7 + $0x1668] sm:$0xff]
    %v1141 = vld [vmem:[#allocation7 + $0x1670] sm:$0xff]
    %v1142 = vld [vmem:[#allocation7 + $0x1678] sm:$0xff]
    %v1143 = vld [vmem:[#allocation7 + $0x1680] sm:$0xff]
    %v1144 = vld [vmem:[#allocation7 + $0x1688] sm:$0xff]
    %v1145 = vld [vmem:[#allocation7 + $0x1690] sm:$0xff]
    %v1146 = vld [vmem:[#allocation7 + $0x1698] sm:$0xff]
    %v1147 = vld [vmem:[#allocation7 + $0x16a0] sm:$0xff]
    %v1148 = vld [vmem:[#allocation7 + $0x16a8] sm:$0xff]
    %v1149 = vld [vmem:[#allocation7 + $0x16b0] sm:$0xff]
    %v1150 = vld [vmem:[#allocation7 + $0x16b8] sm:$0xff]
    %v1151 = vld [vmem:[#allocation7 + $0x16c0] sm:$0xff]
    %v1152 = vld [vmem:[#allocation7 + $0x16c8] sm:$0xff]
    %v1153 = vld [vmem:[#allocation7 + $0x16d0] sm:$0xff]
    %v1154 = vld [vmem:[#allocation7 + $0x16d8] sm:$0xff]
    %v1155 = vld [vmem:[#allocation7 + $0x16e0] sm:$0xff]
    %v1156 = vld [vmem:[#allocation7 + $0x16e8] sm:$0xff]
    %v1157 = vld [vmem:[#allocation7 + $0x16f0] sm:$0xff]
    %v1158 = vld [vmem:[#allocation7 + $0x16f8] sm:$0xff]
    %v1159 = vld [vmem:[#allocation7 + $0x1700] sm:$0xff]
    %v1160 = vld [vmem:[#allocation7 + $0x1708] sm:$0xff]
    %v1161 = vld [vmem:[#allocation7 + $0x1710] sm:$0xff]
    %v1162 = vld [vmem:[#allocation7 + $0x1718] sm:$0xff]
    %v1163 = vld [vmem:[#allocation7 + $0x1720] sm:$0xff]
    %v1164 = vld [vmem:[#allocation7 + $0x1728] sm:$0xff]
    %v1165 = vld [vmem:[#allocation7 + $0x1730] sm:$0xff]
    %v1166 = vld [vmem:[#allocation7 + $0x1738] sm:$0xff]
    %v1167 = vld [vmem:[#allocation7 + $0x1740] sm:$0xff]
    %v1168 = vld [vmem:[#allocation7 + $0x1748] sm:$0xff]
    %v1169 = vld [vmem:[#allocation7 + $0x1750] sm:$0xff]
    %v1170 = vld [vmem:[#allocation7 + $0x1758] sm:$0xff]
    %v1171 = vld [vmem:[#allocation7 + $0x1760] sm:$0xff]
    %v1172 = vld [vmem:[#allocation7 + $0x1768] sm:$0xff]
    %v1173 = vld [vmem:[#allocation7 + $0x1770] sm:$0xff]
    %v1174 = vld [vmem:[#allocation7 + $0x1778] sm:$0xff]
    %v1175 = vld [vmem:[#allocation7 + $0x1780] sm:$0xff]
    %v1176 = vld [vmem:[#allocation7 + $0x1788] sm:$0xff]
    %v1177 = vld [vmem:[#allocation7 + $0x1790] sm:$0xff]
    %v1178 = vld [vmem:[#allocation7 + $0x1798] sm:$0xff]
    %v1179 = vld [vmem:[#allocation7 + $0x17a0] sm:$0xff]
    %v1180 = vld [vmem:[#allocation7 + $0x17a8] sm:$0xff]
    %v1181 = vld [vmem:[#allocation7 + $0x17b0] sm:$0xff]
    %v1182 = vld [vmem:[#allocation7 + $0x17b8] sm:$0xff]
    %v1183 = vld [vmem:[#allocation7 + $0x17c0] sm:$0xff]
    %v1184 = vld [vmem:[#allocation7 + $0x17c8] sm:$0xff]
    %v1185 = vld [vmem:[#allocation7 + $0x17d0] sm:$0xff]
    %v1186 = vld [vmem:[#allocation7 + $0x17d8] sm:$0xff]
    %v1187 = vld [vmem:[#allocation7 + $0x17e0] sm:$0xff]
    %v1188 = vld [vmem:[#allocation7 + $0x17e8] sm:$0xff]
    %v1189 = vld [vmem:[#allocation7 + $0x17f0] sm:$0xff]
    %v1190 = vld [vmem:[#allocation7 + $0x17f8] sm:$0xff]
    %v1191 = vld [vmem:[#allocation7 + $0x1800] sm:$0xff]
    %v1192 = vld [vmem:[#allocation7 + $0x1808] sm:$0xff]
    %v1193 = vld [vmem:[#allocation7 + $0x1810] sm:$0xff]
    %v1194 = vld [vmem:[#allocation7 + $0x1818] sm:$0xff]
    %v1195 = vld [vmem:[#allocation7 + $0x1820] sm:$0xff]
    %v1196 = vld [vmem:[#allocation7 + $0x1828] sm:$0xff]
    %v1197 = vld [vmem:[#allocation7 + $0x1830] sm:$0xff]
    %v1198 = vld [vmem:[#allocation7 + $0x1838] sm:$0xff]
    %v1199 = vld [vmem:[#allocation7 + $0x1840] sm:$0xff]
    %v1200 = vld [vmem:[#allocation7 + $0x1848] sm:$0xff]
    %v1201 = vld [vmem:[#allocation7 + $0x1850] sm:$0xff]
    %v1202 = vld [vmem:[#allocation7 + $0x1858] sm:$0xff]
    %v1203 = vld [vmem:[#allocation7 + $0x1860] sm:$0xff]
    %v1204 = vld [vmem:[#allocation7 + $0x1868] sm:$0xff]
    %v1205 = vld [vmem:[#allocation7 + $0x1870] sm:$0xff]
    %v1206 = vld [vmem:[#allocation7 + $0x1878] sm:$0xff]
    %v1207 = vld [vmem:[#allocation7 + $0x1880] sm:$0xff]
    %v1208 = vld [vmem:[#allocation7 + $0x1888] sm:$0xff]
    %v1209 = vld [vmem:[#allocation7 + $0x1890] sm:$0xff]
    %v1210 = vld [vmem:[#allocation7 + $0x1898] sm:$0xff]
    %v1211 = vld [vmem:[#allocation7 + $0x18a0] sm:$0xff]
    %v1212 = vld [vmem:[#allocation7 + $0x18a8] sm:$0xff]
    %v1213 = vld [vmem:[#allocation7 + $0x18b0] sm:$0xff]
    %v1214 = vld [vmem:[#allocation7 + $0x18b8] sm:$0xff]
    %v1215 = vld [vmem:[#allocation7 + $0x18c0] sm:$0xff]
    %v1216 = vld [vmem:[#allocation7 + $0x18c8] sm:$0xff]
    %v1217 = vld [vmem:[#allocation7 + $0x18d0] sm:$0xff]
    %v1218 = vld [vmem:[#allocation7 + $0x18d8] sm:$0xff]
    %v1219 = vld [vmem:[#allocation7 + $0x18e0] sm:$0xff]
    %v1220 = vld [vmem:[#allocation7 + $0x18e8] sm:$0xff]
    %v1221 = vld [vmem:[#allocation7 + $0x18f0] sm:$0xff]
    %v1222 = vld [vmem:[#allocation7 + $0x18f8] sm:$0xff]
    %v1223 = vld [vmem:[#allocation7 + $0x1900] sm:$0xff]
    %v1224 = vld [vmem:[#allocation7 + $0x1908] sm:$0xff]
    %v1225 = vld [vmem:[#allocation7 + $0x1910] sm:$0xff]
    %v1226 = vld [vmem:[#allocation7 + $0x1918] sm:$0xff]
    %v1227 = vld [vmem:[#allocation7 + $0x1920] sm:$0xff]
    %v1228 = vld [vmem:[#allocation7 + $0x1928] sm:$0xff]
    %v1229 = vld [vmem:[#allocation7 + $0x1930] sm:$0xff]
    %v1230 = vld [vmem:[#allocation7 + $0x1938] sm:$0xff]
    %v1231 = vld [vmem:[#allocation7 + $0x1940] sm:$0xff]
    %v1232 = vld [vmem:[#allocation7 + $0x1948] sm:$0xff]
    %v1233 = vld [vmem:[#allocation7 + $0x1950] sm:$0xff]
    %v1234 = vld [vmem:[#allocation7 + $0x1958] sm:$0xff]
    %v1235 = vld [vmem:[#allocation7 + $0x1960] sm:$0xff]
    %v1236 = vld [vmem:[#allocation7 + $0x1968] sm:$0xff]
    %v1237 = vld [vmem:[#allocation7 + $0x1970] sm:$0xff]
    %v1238 = vld [vmem:[#allocation7 + $0x1978] sm:$0xff]
    %v1239 = vld [vmem:[#allocation7 + $0x1980] sm:$0xff]
    %v1240 = vld [vmem:[#allocation7 + $0x1988] sm:$0xff]
    %v1241 = vld [vmem:[#allocation7 + $0x1990] sm:$0xff]
    %v1242 = vld [vmem:[#allocation7 + $0x1998] sm:$0xff]
    %v1243 = vld [vmem:[#allocation7 + $0x19a0] sm:$0xff]
    %v1244 = vld [vmem:[#allocation7 + $0x19a8] sm:$0xff]
    %v1245 = vld [vmem:[#allocation7 + $0x19b0] sm:$0xff]
    %v1246 = vld [vmem:[#allocation7 + $0x19b8] sm:$0xff]
    %v1247 = vld [vmem:[#allocation7 + $0x19c0] sm:$0xff]
    %v1248 = vld [vmem:[#allocation7 + $0x19c8] sm:$0xff]
    %v1249 = vld [vmem:[#allocation7 + $0x19d0] sm:$0xff]
    %v1250 = vld [vmem:[#allocation7 + $0x19d8] sm:$0xff]
    %v1251 = vld [vmem:[#allocation7 + $0x19e0] sm:$0xff]
    %v1252 = vld [vmem:[#allocation7 + $0x19e8] sm:$0xff]
    %v1253 = vld [vmem:[#allocation7 + $0x19f0] sm:$0xff]
    %v1254 = vld [vmem:[#allocation7 + $0x19f8] sm:$0xff]
    %v1255 = vld [vmem:[#allocation7 + $0x1a00] sm:$0xff]
    %v1256 = vld [vmem:[#allocation7 + $0x1a08] sm:$0xff]
    %v1257 = vld [vmem:[#allocation7 + $0x1a10] sm:$0xff]
    %v1258 = vld [vmem:[#allocation7 + $0x1a18] sm:$0xff]
    %v1259 = vld [vmem:[#allocation7 + $0x1a20] sm:$0xff]
    %v1260 = vld [vmem:[#allocation7 + $0x1a28] sm:$0xff]
    %v1261 = vld [vmem:[#allocation7 + $0x1a30] sm:$0xff]
    %v1262 = vld [vmem:[#allocation7 + $0x1a38] sm:$0xff]
    %v1263 = vld [vmem:[#allocation7 + $0x1a40] sm:$0xff]
    %v1264 = vld [vmem:[#allocation7 + $0x1a48] sm:$0xff]
    %v1265 = vld [vmem:[#allocation7 + $0x1a50] sm:$0xff]
    %v1266 = vld [vmem:[#allocation7 + $0x1a58] sm:$0xff]
    %v1267 = vld [vmem:[#allocation7 + $0x1a60] sm:$0xff]
    %v1268 = vld [vmem:[#allocation7 + $0x1a68] sm:$0xff]
    %v1269 = vld [vmem:[#allocation7 + $0x1a70] sm:$0xff]
    %v1270 = vld [vmem:[#allocation7 + $0x1a78] sm:$0xff]
    %v1271 = vld [vmem:[#allocation7 + $0x1a80] sm:$0xff]
    %v1272 = vld [vmem:[#allocation7 + $0x1a88] sm:$0xff]
    %v1273 = vld [vmem:[#allocation7 + $0x1a90] sm:$0xff]
    %v1274 = vld [vmem:[#allocation7 + $0x1a98] sm:$0xff]
    %v1275 = vld [vmem:[#allocation7 + $0x1aa0] sm:$0xff]
    %v1276 = vld [vmem:[#allocation7 + $0x1aa8] sm:$0xff]
    %v1277 = vld [vmem:[#allocation7 + $0x1ab0] sm:$0xff]
    %v1278 = vld [vmem:[#allocation7 + $0x1ab8] sm:$0xff]
    %v1279 = vld [vmem:[#allocation7 + $0x1ac0] sm:$0xff]
    %v1280 = vld [vmem:[#allocation7 + $0x1ac8] sm:$0xff]
    %v1281 = vld [vmem:[#allocation7 + $0x1ad0] sm:$0xff]
    %v1282 = vld [vmem:[#allocation7 + $0x1ad8] sm:$0xff]
    %v1283 = vld [vmem:[#allocation7 + $0x1ae0] sm:$0xff]
    %v1284 = vld [vmem:[#allocation7 + $0x1ae8] sm:$0xff]
    %v1285 = vld [vmem:[#allocation7 + $0x1af0] sm:$0xff]
    %v1286 = vld [vmem:[#allocation7 + $0x1af8] sm:$0xff]
    %v1287 = vld [vmem:[#allocation7 + $0x1b00] sm:$0xff]
    %v1288 = vld [vmem:[#allocation7 + $0x1b08] sm:$0xff]
    %v1289 = vld [vmem:[#allocation7 + $0x1b10] sm:$0xff]
    %v1290 = vld [vmem:[#allocation7 + $0x1b18] sm:$0xff]
    %v1291 = vld [vmem:[#allocation7 + $0x1b20] sm:$0xff]
    %v1292 = vld [vmem:[#allocation7 + $0x1b28] sm:$0xff]
    %v1293 = vld [vmem:[#allocation7 + $0x1b30] sm:$0xff]
    %v1294 = vld [vmem:[#allocation7 + $0x1b38] sm:$0xff]
    %v1295 = vld [vmem:[#allocation7 + $0x1b40] sm:$0xff]
    %v1296 = vld [vmem:[#allocation7 + $0x1b48] sm:$0xff]
    %v1297 = vld [vmem:[#allocation7 + $0x1b50] sm:$0xff]
    %v1298 = vld [vmem:[#allocation7 + $0x1b58] sm:$0xff]
    %v1299 = vld [vmem:[#allocation7 + $0x1b60] sm:$0xff]
    %v1300 = vld [vmem:[#allocation7 + $0x1b68] sm:$0xff]
    %v1301 = vld [vmem:[#allocation7 + $0x1b70] sm:$0xff]
    %v1302 = vld [vmem:[#allocation7 + $0x1b78] sm:$0xff]
    %v1303 = vld [vmem:[#allocation7 + $0x1b80] sm:$0xff]
    %v1304 = vld [vmem:[#allocation7 + $0x1b88] sm:$0xff]
    %v1305 = vld [vmem:[#allocation7 + $0x1b90] sm:$0xff]
    %v1306 = vld [vmem:[#allocation7 + $0x1b98] sm:$0xff]
    %v1307 = vld [vmem:[#allocation7 + $0x1ba0] sm:$0xff]
    %v1308 = vld [vmem:[#allocation7 + $0x1ba8] sm:$0xff]
    %v1309 = vld [vmem:[#allocation7 + $0x1bb0] sm:$0xff]
    %v1310 = vld [vmem:[#allocation7 + $0x1bb8] sm:$0xff]
    %v1311 = vld [vmem:[#allocation7 + $0x1bc0] sm:$0xff]
    %v1312 = vld [vmem:[#allocation7 + $0x1bc8] sm:$0xff]
    %v1313 = vld [vmem:[#allocation7 + $0x1bd0] sm:$0xff]
    %v1314 = vld [vmem:[#allocation7 + $0x1bd8] sm:$0xff]
    %v1315 = vld [vmem:[#allocation7 + $0x1be0] sm:$0xff]
    %v1316 = vld [vmem:[#allocation7 + $0x1be8] sm:$0xff]
    %v1317 = vld [vmem:[#allocation7 + $0x1bf0] sm:$0xff]
    %v1318 = vld [vmem:[#allocation7 + $0x1bf8] sm:$0xff]
    %v1319 = vld [vmem:[#allocation7 + $0x1c00] sm:$0xff]
    %v1320 = vld [vmem:[#allocation7 + $0x1c08] sm:$0xff]
    %v1321 = vld [vmem:[#allocation7 + $0x1c10] sm:$0xff]
    %v1322 = vld [vmem:[#allocation7 + $0x1c18] sm:$0xff]
    %v1323 = vld [vmem:[#allocation7 + $0x1c20] sm:$0xff]
    %v1324 = vld [vmem:[#allocation7 + $0x1c28] sm:$0xff]
    %v1325 = vld [vmem:[#allocation7 + $0x1c30] sm:$0xff]
    %v1326 = vld [vmem:[#allocation7 + $0x1c38] sm:$0xff]
    %v1327 = vld [vmem:[#allocation7 + $0x1c40] sm:$0xff]
    %v1328 = vld [vmem:[#allocation7 + $0x1c48] sm:$0xff]
    %v1329 = vld [vmem:[#allocation7 + $0x1c50] sm:$0xff]
    %v1330 = vld [vmem:[#allocation7 + $0x1c58] sm:$0xff]
    %v1331 = vld [vmem:[#allocation7 + $0x1c60] sm:$0xff]
    %v1332 = vld [vmem:[#allocation7 + $0x1c68] sm:$0xff]
    %v1333 = vld [vmem:[#allocation7 + $0x1c70] sm:$0xff]
    %v1334 = vld [vmem:[#allocation7 + $0x1c78] sm:$0xff]
    %v1335 = vld [vmem:[#allocation7 + $0x1c80] sm:$0xff]
    %v1336 = vld [vmem:[#allocation7 + $0x1c88] sm:$0xff]
    %v1337 = vld [vmem:[#allocation7 + $0x1c90] sm:$0xff]
    %v1338 = vld [vmem:[#allocation7 + $0x1c98] sm:$0xff]
    %v1339 = vld [vmem:[#allocation7 + $0x1ca0] sm:$0xff]
    %v1340 = vld [vmem:[#allocation7 + $0x1ca8] sm:$0xff]
    %v1341 = vld [vmem:[#allocation7 + $0x1cb0] sm:$0xff]
    %v1342 = vld [vmem:[#allocation7 + $0x1cb8] sm:$0xff]
    %v1343 = vld [vmem:[#allocation7 + $0x1cc0] sm:$0xff]
    %v1344 = vld [vmem:[#allocation7 + $0x1cc8] sm:$0xff]
    %v1345 = vld [vmem:[#allocation7 + $0x1cd0] sm:$0xff]
    %v1346 = vld [vmem:[#allocation7 + $0x1cd8] sm:$0xff]
    %v1347 = vld [vmem:[#allocation7 + $0x1ce0] sm:$0xff]
    %v1348 = vld [vmem:[#allocation7 + $0x1ce8] sm:$0xff]
    %v1349 = vld [vmem:[#allocation7 + $0x1cf0] sm:$0xff]
    %v1350 = vld [vmem:[#allocation7 + $0x1cf8] sm:$0xff]
    %v1351 = vld [vmem:[#allocation7 + $0x1d00] sm:$0xff]
    %v1352 = vld [vmem:[#allocation7 + $0x1d08] sm:$0xff]
    %v1353 = vld [vmem:[#allocation7 + $0x1d10] sm:$0xff]
    %v1354 = vld [vmem:[#allocation7 + $0x1d18] sm:$0xff]
    %v1355 = vld [vmem:[#allocation7 + $0x1d20] sm:$0xff]
    %v1356 = vld [vmem:[#allocation7 + $0x1d28] sm:$0xff]
    %v1357 = vld [vmem:[#allocation7 + $0x1d30] sm:$0xff]
    %v1358 = vld [vmem:[#allocation7 + $0x1d38] sm:$0xff]
    %v1359 = vld [vmem:[#allocation7 + $0x1d40] sm:$0xff]
    %v1360 = vld [vmem:[#allocation7 + $0x1d48] sm:$0xff]
    %v1361 = vld [vmem:[#allocation7 + $0x1d50] sm:$0xff]
    %v1362 = vld [vmem:[#allocation7 + $0x1d58] sm:$0xff]
    %v1363 = vld [vmem:[#allocation7 + $0x1d60] sm:$0xff]
    %v1364 = vld [vmem:[#allocation7 + $0x1d68] sm:$0xff]
    %v1365 = vld [vmem:[#allocation7 + $0x1d70] sm:$0xff]
    %v1366 = vld [vmem:[#allocation7 + $0x1d78] sm:$0xff]
    %v1367 = vld [vmem:[#allocation7 + $0x1d80] sm:$0xff]
    %v1368 = vld [vmem:[#allocation7 + $0x1d88] sm:$0xff]
    %v1369 = vld [vmem:[#allocation7 + $0x1d90] sm:$0xff]
    %v1370 = vld [vmem:[#allocation7 + $0x1d98] sm:$0xff]
    %v1371 = vld [vmem:[#allocation7 + $0x1da0] sm:$0xff]
    %v1372 = vld [vmem:[#allocation7 + $0x1da8] sm:$0xff]
    %v1373 = vld [vmem:[#allocation7 + $0x1db0] sm:$0xff]
    %v1374 = vld [vmem:[#allocation7 + $0x1db8] sm:$0xff]
    %v1375 = vld [vmem:[#allocation7 + $0x1dc0] sm:$0xff]
    %v1376 = vld [vmem:[#allocation7 + $0x1dc8] sm:$0xff]
    %v1377 = vld [vmem:[#allocation7 + $0x1dd0] sm:$0xff]
    %v1378 = vld [vmem:[#allocation7 + $0x1dd8] sm:$0xff]
    %v1379 = vld [vmem:[#allocation7 + $0x1de0] sm:$0xff]
    %v1380 = vld [vmem:[#allocation7 + $0x1de8] sm:$0xff]
    %v1381 = vld [vmem:[#allocation7 + $0x1df0] sm:$0xff]
    %v1382 = vld [vmem:[#allocation7 + $0x1df8] sm:$0xff]
    %v1383 = vld [vmem:[#allocation7 + $0x1e00] sm:$0xff]
    %v1384 = vld [vmem:[#allocation7 + $0x1e08] sm:$0xff]
    %v1385 = vld [vmem:[#allocation7 + $0x1e10] sm:$0xff]
    %v1386 = vld [vmem:[#allocation7 + $0x1e18] sm:$0xff]
    %v1387 = vld [vmem:[#allocation7 + $0x1e20] sm:$0xff]
    %v1388 = vld [vmem:[#allocation7 + $0x1e28] sm:$0xff]
    %v1389 = vld [vmem:[#allocation7 + $0x1e30] sm:$0xff]
    %v1390 = vld [vmem:[#allocation7 + $0x1e38] sm:$0xff]
    %v1391 = vld [vmem:[#allocation7 + $0x1e40] sm:$0xff]
    %v1392 = vld [vmem:[#allocation7 + $0x1e48] sm:$0xff]
    %v1393 = vld [vmem:[#allocation7 + $0x1e50] sm:$0xff]
    %v1394 = vld [vmem:[#allocation7 + $0x1e58] sm:$0xff]
    %v1395 = vld [vmem:[#allocation7 + $0x1e60] sm:$0xff]
    %v1396 = vld [vmem:[#allocation7 + $0x1e68] sm:$0xff]
    %v1397 = vld [vmem:[#allocation7 + $0x1e70] sm:$0xff]
    %v1398 = vld [vmem:[#allocation7 + $0x1e78] sm:$0xff]
    %v1399 = vld [vmem:[#allocation7 + $0x1e80] sm:$0xff]
    %v1400 = vld [vmem:[#allocation7 + $0x1e88] sm:$0xff]
    %v1401 = vld [vmem:[#allocation7 + $0x1e90] sm:$0xff]
    %v1402 = vld [vmem:[#allocation7 + $0x1e98] sm:$0xff]
    %v1403 = vld [vmem:[#allocation7 + $0x1ea0] sm:$0xff]
    %v1404 = vld [vmem:[#allocation7 + $0x1ea8] sm:$0xff]
    %v1405 = vld [vmem:[#allocation7 + $0x1eb0] sm:$0xff]
    %v1406 = vld [vmem:[#allocation7 + $0x1eb8] sm:$0xff]
    %v1407 = vld [vmem:[#allocation7 + $0x1ec0] sm:$0xff]
    %v1408 = vld [vmem:[#allocation7 + $0x1ec8] sm:$0xff]
    %v1409 = vld [vmem:[#allocation7 + $0x1ed0] sm:$0xff]
    %v1410 = vld [vmem:[#allocation7 + $0x1ed8] sm:$0xff]
    %v1411 = vld [vmem:[#allocation7 + $0x1ee0] sm:$0xff]
    %v1412 = vld [vmem:[#allocation7 + $0x1ee8] sm:$0xff]
    %v1413 = vld [vmem:[#allocation7 + $0x1ef0] sm:$0xff]
    %v1414 = vld [vmem:[#allocation7 + $0x1ef8] sm:$0xff]
    %v1415 = vld [vmem:[#allocation7 + $0x1f00] sm:$0xff]
    %v1416 = vld [vmem:[#allocation7 + $0x1f08] sm:$0xff]
    %v1417 = vld [vmem:[#allocation7 + $0x1f10] sm:$0xff]
    %v1418 = vld [vmem:[#allocation7 + $0x1f18] sm:$0xff]
    %v1419 = vld [vmem:[#allocation7 + $0x1f20] sm:$0xff]
    %v1420 = vld [vmem:[#allocation7 + $0x1f28] sm:$0xff]
    %v1421 = vld [vmem:[#allocation7 + $0x1f30] sm:$0xff]
    %v1422 = vld [vmem:[#allocation7 + $0x1f38] sm:$0xff]
    %v1423 = vld [vmem:[#allocation7 + $0x1f40] sm:$0xff]
    %v1424 = vld [vmem:[#allocation7 + $0x1f48] sm:$0xff]
    %v1425 = vld [vmem:[#allocation7 + $0x1f50] sm:$0xff]
    %v1426 = vld [vmem:[#allocation7 + $0x1f58] sm:$0xff]
    %v1427 = vld [vmem:[#allocation7 + $0x1f60] sm:$0xff]
    %v1428 = vld [vmem:[#allocation7 + $0x1f68] sm:$0xff]
    %v1429 = vld [vmem:[#allocation7 + $0x1f70] sm:$0xff]
    %v1430 = vld [vmem:[#allocation7 + $0x1f78] sm:$0xff]
    %v1431 = vld [vmem:[#allocation7 + $0x1f80] sm:$0xff]
    %v1432 = vld [vmem:[#allocation7 + $0x1f88] sm:$0xff]
    %v1433 = vld [vmem:[#allocation7 + $0x1f90] sm:$0xff]
    %v1434 = vld [vmem:[#allocation7 + $0x1f98] sm:$0xff]
    %v1435 = vld [vmem:[#allocation7 + $0x1fa0] sm:$0xff]
    %v1436 = vld [vmem:[#allocation7 + $0x1fa8] sm:$0xff]
    %v1437 = vld [vmem:[#allocation7 + $0x1fb0] sm:$0xff]
    %v1438 = vld [vmem:[#allocation7 + $0x1fb8] sm:$0xff]
    %v1439 = vld [vmem:[#allocation7 + $0x1fc0] sm:$0xff]
    %v1440 = vld [vmem:[#allocation7 + $0x1fc8] sm:$0xff]
    %v1441 = vld [vmem:[#allocation7 + $0x1fd0] sm:$0xff]
    %v1442 = vld [vmem:[#allocation7 + $0x1fd8] sm:$0xff]
    %v1443 = vld [vmem:[#allocation7 + $0x1fe0] sm:$0xff]
    %v1444 = vld [vmem:[#allocation7 + $0x1fe8] sm:$0xff]
    %v1445 = vld [vmem:[#allocation7 + $0x1ff0] sm:$0xff]
    %v1446 = vld [vmem:[#allocation7 + $0x1ff8] sm:$0xff]
    %v1447 = vld [vmem:[#allocation9] sm:$0xff]
    %v1449 = vlaneseq
    %v1450 = vshrl.u32 %v1449, 7
    %v1451 = vsub.s32 0, %v1450
    %v1452 = vrot.slane %v1447, %v1451
    %v1453 = vlaneseq
    %v1454 = vshrl.u32 %v1453, 7
    %v1455 = vsub.s32 1, %v1454
    %v1456 = vrot.slane %v1447, %v1455
    %v1457 = vlaneseq
    %v1458 = vshrl.u32 %v1457, 7
    %v1459 = vsub.s32 2, %v1458
    %v1460 = vrot.slane %v1447, %v1459
    %v1461 = vlaneseq
    %v1462 = vshrl.u32 %v1461, 7
    %v1463 = vsub.s32 3, %v1462
    %v1464 = vrot.slane %v1447, %v1463
    %v1465 = vlaneseq
    %v1466 = vshrl.u32 %v1465, 7
    %v1467 = vsub.s32 4, %v1466
    %v1468 = vrot.slane %v1447, %v1467
    %v1469 = vlaneseq
    %v1470 = vshrl.u32 %v1469, 7
    %v1471 = vsub.s32 5, %v1470
    %v1472 = vrot.slane %v1447, %v1471
    %v1473 = vlaneseq
    %v1474 = vshrl.u32 %v1473, 7
    %v1475 = vsub.s32 6, %v1474
    %v1476 = vrot.slane %v1447, %v1475
    %v1477 = vlaneseq
    %v1478 = vshrl.u32 %v1477, 7
    %v1479 = vsub.s32 7, %v1478
    %v1480 = vrot.slane %v1447, %v1479
    %1489 = vmatprep.subr.mxu0 %v544
    %1490 = vmatpush1.msra.mxu0 %v543
    %1491 = vmatprep.subr.mxu0 %v536
    %1492 = vmatpush1.msra.mxu0 %v535
    %1493 = vmatprep.subr.mxu0 %v528
    %1494 = vmatpush1.msra.mxu0 %v527
    %1495 = vmatprep.subr.mxu0 %v520
    %1496 = vmatpush1.msra.mxu0 %v519
    %1497 = vmatprep.subr.mxu0 %v512
    %1498 = vmatpush1.msra.mxu0 %v511
    %1499 = vmatprep.subr.mxu0 %v504
    %1500 = vmatpush1.msra.mxu0 %v503
    %1501 = vmatprep.subr.mxu0 %v496
    %1502 = vmatpush1.msra.mxu0 %v495
    %1503 = vmatprep.subr.mxu0 %v488
    %1504 = vmatpush1.msra.mxu0 %v487
    %1505 = vmatprep.subr.mxu0 %v480
    %1506 = vmatpush1.msra.mxu0 %v479
    %1507 = vmatprep.subr.mxu0 %v472
    %1508 = vmatpush1.msra.mxu0 %v471
    %1509 = vmatprep.subr.mxu0 %v464
    %1510 = vmatpush1.msra.mxu0 %v463
    %1511 = vmatprep.subr.mxu0 %v456
    %1512 = vmatpush1.msra.mxu0 %v455
    %1513 = vmatprep.subr.mxu0 %v448
    %1514 = vmatpush1.msra.mxu0 %v447
    %1515 = vmatprep.subr.mxu0 %v440
    %1516 = vmatpush1.msra.mxu0 %v439
    %1517 = vmatprep.subr.mxu0 %v432
    %1518 = vmatpush1.msra.mxu0 %v431
    %1519 = vmatprep.subr.mxu0 %v424
    %1520 = vmatpush1.msra.mxu0 %v423
    %1521 = vmatprep.subr.mxu0 %v672
    %1522 = vmatpush2.msra.mxu0 %v671
    %1523 = vmatprep.subr.mxu0 %v664
    %1524 = vmatpush2.msra.mxu0 %v663
    %1525 = vmatprep.subr.mxu0 %v656
    %1526 = vmatpush2.msra.mxu0 %v655
    %1527 = vmatprep.subr.mxu0 %v648
    %1528 = vmatpush2.msra.mxu0 %v647
    %1529 = vmatprep.subr.mxu0 %v640
    %1530 = vmatpush2.msra.mxu0 %v639
    %1531 = vmatprep.subr.mxu0 %v632
    %1532 = vmatpush2.msra.mxu0 %v631
    %1533 = vmatprep.subr.mxu0 %v624
    %1534 = vmatpush2.msra.mxu0 %v623
    %1535 = vmatprep.subr.mxu0 %v616
    %1536 = vmatpush2.msra.mxu0 %v615
    %1537 = vmatprep.subr.mxu0 %v608
    %1538 = vmatpush2.msra.mxu0 %v607
    %1539 = vmatprep.subr.mxu0 %v600
    %1540 = vmatpush2.msra.mxu0 %v599
    %1541 = vmatprep.subr.mxu0 %v592
    %1542 = vmatpush2.msra.mxu0 %v591
    %1543 = vmatprep.subr.mxu0 %v584
    %1544 = vmatpush2.msra.mxu0 %v583
    %1545 = vmatprep.subr.mxu0 %v576
    %1546 = vmatpush2.msra.mxu0 %v575
    %1547 = vmatprep.subr.mxu0 %v568
    %1548 = vmatpush2.msra.mxu0 %v567
    %1549 = vmatprep.subr.mxu0 %v560
    %1550 = vmatpush2.msra.mxu0 %v559
    %1551 = vmatprep.subr.mxu0 %v552
    %1552 = vmatpush2.msra.mxu0 %v551
    %1553 = vmatprep.mubr.f32.mxu0 %v416
    %1554 = vmatmul.mubr.f32.gmra.mxu0 %v415
    %v1555 = vpop.f32.mrf.mxu0
    %v1556 = vadd.f32 %v1452, %v1555
    %v1557 = vpop.f32.mrf.mxu0
    %v1558 = vadd.f32 %v1456, %v1557
    %1559 = vdwg.mxu0
    %1560 = vmatprep.subr.mxu0 %v800
    %1561 = vmatpush1.msra.mxu0 %v799
    %1562 = vmatprep.subr.mxu0 %v792
    %1563 = vmatpush1.msra.mxu0 %v791
    %1564 = vmatprep.subr.mxu0 %v784
    %1565 = vmatpush1.msra.mxu0 %v783
    %1566 = vmatprep.subr.mxu0 %v776
    %1567 = vmatpush1.msra.mxu0 %v775
    %1568 = vmatprep.subr.mxu0 %v768
    %1569 = vmatpush1.msra.mxu0 %v767
    %1570 = vmatprep.subr.mxu0 %v760
    %1571 = vmatpush1.msra.mxu0 %v759
    %1572 = vmatprep.subr.mxu0 %v752
    %1573 = vmatpush1.msra.mxu0 %v751
    %1574 = vmatprep.subr.mxu0 %v744
    %1575 = vmatpush1.msra.mxu0 %v743
    %1576 = vmatprep.subr.mxu0 %v736
    %1577 = vmatpush1.msra.mxu0 %v735
    %1578 = vmatprep.subr.mxu0 %v728
    %1579 = vmatpush1.msra.mxu0 %v727
    %1580 = vmatprep.subr.mxu0 %v720
    %1581 = vmatpush1.msra.mxu0 %v719
    %1582 = vmatprep.subr.mxu0 %v712
    %1583 = vmatpush1.msra.mxu0 %v711
    %1584 = vmatprep.subr.mxu0 %v704
    %1585 = vmatpush1.msra.mxu0 %v703
    %1586 = vmatprep.subr.mxu0 %v696
    %1587 = vmatpush1.msra.mxu0 %v695
    %1588 = vmatprep.subr.mxu0 %v688
    %1589 = vmatpush1.msra.mxu0 %v687
    %1590 = vmatprep.subr.mxu0 %v680
    %1591 = vmatpush1.msra.mxu0 %v679
    %1592 = vmatprep.subr.mxu0 %v928
    %1593 = vmatpush2.msra.mxu0 %v927
    %1594 = vmatprep.subr.mxu0 %v920
    %1595 = vmatpush2.msra.mxu0 %v919
    %1596 = vmatprep.subr.mxu0 %v912
    %1597 = vmatpush2.msra.mxu0 %v911
    %1598 = vmatprep.subr.mxu0 %v904
    %1599 = vmatpush2.msra.mxu0 %v903
    %1600 = vmatprep.subr.mxu0 %v896
    %1601 = vmatpush2.msra.mxu0 %v895
    %1602 = vmatprep.subr.mxu0 %v888
    %1603 = vmatpush2.msra.mxu0 %v887
    %1604 = vmatprep.subr.mxu0 %v880
    %1605 = vmatpush2.msra.mxu0 %v879
    %1606 = vmatprep.subr.mxu0 %v872
    %1607 = vmatpush2.msra.mxu0 %v871
    %1608 = vmatprep.subr.mxu0 %v864
    %1609 = vmatpush2.msra.mxu0 %v863
    %1610 = vmatprep.subr.mxu0 %v856
    %1611 = vmatpush2.msra.mxu0 %v855
    %1612 = vmatprep.subr.mxu0 %v848
    %1613 = vmatpush2.msra.mxu0 %v847
    %1614 = vmatprep.subr.mxu0 %v840
    %1615 = vmatpush2.msra.mxu0 %v839
    %1616 = vmatprep.subr.mxu0 %v832
    %1617 = vmatpush2.msra.mxu0 %v831
    %1618 = vmatprep.subr.mxu0 %v824
    %1619 = vmatpush2.msra.mxu0 %v823
    %1620 = vmatprep.subr.mxu0 %v816
    %1621 = vmatpush2.msra.mxu0 %v815
    %1622 = vmatprep.subr.mxu0 %v808
    %1623 = vmatpush2.msra.mxu0 %v807
    %1624 = vmatprep.mubr.f32.mxu0 %v418
    %1625 = vmatmul.mubr.f32.gmra.mxu0 %v417
    %v1626 = vpop.f32.mrf.mxu0
    %v1627 = vadd.f32 %v1556, %v1626
    %v1628 = vpop.f32.mrf.mxu0
    %v1629 = vadd.f32 %v1558, %v1628
    %1630 = vdwg.mxu0
    %1631 = vmatprep.subr.mxu0 %v1056
    %1632 = vmatpush1.msra.mxu0 %v1055
    %1633 = vmatprep.subr.mxu0 %v1048
    %1634 = vmatpush1.msra.mxu0 %v1047
    %1635 = vmatprep.subr.mxu0 %v1040
    %1636 = vmatpush1.msra.mxu0 %v1039
    %1637 = vmatprep.subr.mxu0 %v1032
    %1638 = vmatpush1.msra.mxu0 %v1031
    %1639 = vmatprep.subr.mxu0 %v1024
    %1640 = vmatpush1.msra.mxu0 %v1023
    %1641 = vmatprep.subr.mxu0 %v1016
    %1642 = vmatpush1.msra.mxu0 %v1015
    %1643 = vmatprep.subr.mxu0 %v1008
    %1644 = vmatpush1.msra.mxu0 %v1007
    %1645 = vmatprep.subr.mxu0 %v1000
    %1646 = vmatpush1.msra.mxu0 %v999
    %1647 = vmatprep.subr.mxu0 %v992
    %1648 = vmatpush1.msra.mxu0 %v991
    %1649 = vmatprep.subr.mxu0 %v984
    %1650 = vmatpush1.msra.mxu0 %v983
    %1651 = vmatprep.subr.mxu0 %v976
    %1652 = vmatpush1.msra.mxu0 %v975
    %1653 = vmatprep.subr.mxu0 %v968
    %1654 = vmatpush1.msra.mxu0 %v967
    %1655 = vmatprep.subr.mxu0 %v960
    %1656 = vmatpush1.msra.mxu0 %v959
    %1657 = vmatprep.subr.mxu0 %v952
    %1658 = vmatpush1.msra.mxu0 %v951
    %1659 = vmatprep.subr.mxu0 %v944
    %1660 = vmatpush1.msra.mxu0 %v943
    %1661 = vmatprep.subr.mxu0 %v936
    %1662 = vmatpush1.msra.mxu0 %v935
    %1663 = vmatprep.subr.mxu0 %v1184
    %1664 = vmatpush2.msra.mxu0 %v1183
    %1665 = vmatprep.subr.mxu0 %v1176
    %1666 = vmatpush2.msra.mxu0 %v1175
    %1667 = vmatprep.subr.mxu0 %v1168
    %1668 = vmatpush2.msra.mxu0 %v1167
    %1669 = vmatprep.subr.mxu0 %v1160
    %1670 = vmatpush2.msra.mxu0 %v1159
    %1671 = vmatprep.subr.mxu0 %v1152
    %1672 = vmatpush2.msra.mxu0 %v1151
    %1673 = vmatprep.subr.mxu0 %v1144
    %1674 = vmatpush2.msra.mxu0 %v1143
    %1675 = vmatprep.subr.mxu0 %v1136
    %1676 = vmatpush2.msra.mxu0 %v1135
    %1677 = vmatprep.subr.mxu0 %v1128
    %1678 = vmatpush2.msra.mxu0 %v1127
    %1679 = vmatprep.subr.mxu0 %v1120
    %1680 = vmatpush2.msra.mxu0 %v1119
    %1681 = vmatprep.subr.mxu0 %v1112
    %1682 = vmatpush2.msra.mxu0 %v1111
    %1683 = vmatprep.subr.mxu0 %v1104
    %1684 = vmatpush2.msra.mxu0 %v1103
    %1685 = vmatprep.subr.mxu0 %v1096
    %1686 = vmatpush2.msra.mxu0 %v1095
    %1687 = vmatprep.subr.mxu0 %v1088
    %1688 = vmatpush2.msra.mxu0 %v1087
    %1689 = vmatprep.subr.mxu0 %v1080
    %1690 = vmatpush2.msra.mxu0 %v1079
    %1691 = vmatprep.subr.mxu0 %v1072
    %1692 = vmatpush2.msra.mxu0 %v1071
    %1693 = vmatprep.subr.mxu0 %v1064
    %1694 = vmatpush2.msra.mxu0 %v1063
    %1695 = vmatprep.mubr.f32.mxu0 %v420
    %1696 = vmatmul.mubr.f32.gmra.mxu0 %v419
    %v1697 = vpop.f32.mrf.mxu0
    %v1698 = vadd.f32 %v1627, %v1697
    %v1699 = vpop.f32.mrf.mxu0
    %v1700 = vadd.f32 %v1629, %v1699
    %1701 = vdwg.mxu0
    %1702 = vmatprep.subr.mxu0 %v1312
    %1703 = vmatpush1.msra.mxu0 %v1311
    %1704 = vmatprep.subr.mxu0 %v1304
    %1705 = vmatpush1.msra.mxu0 %v1303
    %1706 = vmatprep.subr.mxu0 %v1296
    %1707 = vmatpush1.msra.mxu0 %v1295
    %1708 = vmatprep.subr.mxu0 %v1288
    %1709 = vmatpush1.msra.mxu0 %v1287
    %1710 = vmatprep.subr.mxu0 %v1280
    %1711 = vmatpush1.msra.mxu0 %v1279
    %1712 = vmatprep.subr.mxu0 %v1272
    %1713 = vmatpush1.msra.mxu0 %v1271
    %1714 = vmatprep.subr.mxu0 %v1264
    %1715 = vmatpush1.msra.mxu0 %v1263
    %1716 = vmatprep.subr.mxu0 %v1256
    %1717 = vmatpush1.msra.mxu0 %v1255
    %1718 = vmatprep.subr.mxu0 %v1248
    %1719 = vmatpush1.msra.mxu0 %v1247
    %1720 = vmatprep.subr.mxu0 %v1240
    %1721 = vmatpush1.msra.mxu0 %v1239
    %1722 = vmatprep.subr.mxu0 %v1232
    %1723 = vmatpush1.msra.mxu0 %v1231
    %1724 = vmatprep.subr.mxu0 %v1224
    %1725 = vmatpush1.msra.mxu0 %v1223
    %1726 = vmatprep.subr.mxu0 %v1216
    %1727 = vmatpush1.msra.mxu0 %v1215
    %1728 = vmatprep.subr.mxu0 %v1208
    %1729 = vmatpush1.msra.mxu0 %v1207
    %1730 = vmatprep.subr.mxu0 %v1200
    %1731 = vmatpush1.msra.mxu0 %v1199
    %1732 = vmatprep.subr.mxu0 %v1192
    %1733 = vmatpush1.msra.mxu0 %v1191
    %1734 = vmatprep.subr.mxu0 %v1440
    %1735 = vmatpush2.msra.mxu0 %v1439
    %1736 = vmatprep.subr.mxu0 %v1432
    %1737 = vmatpush2.msra.mxu0 %v1431
    %1738 = vmatprep.subr.mxu0 %v1424
    %1739 = vmatpush2.msra.mxu0 %v1423
    %1740 = vmatprep.subr.mxu0 %v1416
    %1741 = vmatpush2.msra.mxu0 %v1415
    %1742 = vmatprep.subr.mxu0 %v1408
    %1743 = vmatpush2.msra.mxu0 %v1407
    %1744 = vmatprep.subr.mxu0 %v1400
    %1745 = vmatpush2.msra.mxu0 %v1399
    %1746 = vmatprep.subr.mxu0 %v1392
    %1747 = vmatpush2.msra.mxu0 %v1391
    %1748 = vmatprep.subr.mxu0 %v1384
    %1749 = vmatpush2.msra.mxu0 %v1383
    %1750 = vmatprep.subr.mxu0 %v1376
    %1751 = vmatpush2.msra.mxu0 %v1375
    %1752 = vmatprep.subr.mxu0 %v1368
    %1753 = vmatpush2.msra.mxu0 %v1367
    %1754 = vmatprep.subr.mxu0 %v1360
    %1755 = vmatpush2.msra.mxu0 %v1359
    %1756 = vmatprep.subr.mxu0 %v1352
    %1757 = vmatpush2.msra.mxu0 %v1351
    %1758 = vmatprep.subr.mxu0 %v1344
    %1759 = vmatpush2.msra.mxu0 %v1343
    %1760 = vmatprep.subr.mxu0 %v1336
    %1761 = vmatpush2.msra.mxu0 %v1335
    %1762 = vmatprep.subr.mxu0 %v1328
    %1763 = vmatpush2.msra.mxu0 %v1327
    %1764 = vmatprep.subr.mxu0 %v1320
    %1765 = vmatpush2.msra.mxu0 %v1319
    %1766 = vmatprep.mubr.f32.mxu0 %v422
    %1767 = vmatmul.mubr.f32.gmra.mxu0 %v421
    %v1768 = vpop.f32.mrf.mxu0
    %v1769 = vadd.f32 %v1698, %v1768
    %v1770 = vpop.f32.mrf.mxu0
    %v1771 = vadd.f32 %v1700, %v1770
    %1772 = vdwg.mxu0
    %1773 = vmatprep.subr.mxu0 %v546
    %1774 = vmatpush1.msra.mxu0 %v545
    %1775 = vmatprep.subr.mxu0 %v538
    %1776 = vmatpush1.msra.mxu0 %v537
    %1777 = vmatprep.subr.mxu0 %v530
    %1778 = vmatpush1.msra.mxu0 %v529
    %1779 = vmatprep.subr.mxu0 %v522
    %1780 = vmatpush1.msra.mxu0 %v521
    %1781 = vmatprep.subr.mxu0 %v514
    %1782 = vmatpush1.msra.mxu0 %v513
    %1783 = vmatprep.subr.mxu0 %v506
    %1784 = vmatpush1.msra.mxu0 %v505
    %1785 = vmatprep.subr.mxu0 %v498
    %1786 = vmatpush1.msra.mxu0 %v497
    %1787 = vmatprep.subr.mxu0 %v490
    %1788 = vmatpush1.msra.mxu0 %v489
    %1789 = vmatprep.subr.mxu0 %v482
    %1790 = vmatpush1.msra.mxu0 %v481
    %1791 = vmatprep.subr.mxu0 %v474
    %1792 = vmatpush1.msra.mxu0 %v473
    %1793 = vmatprep.subr.mxu0 %v466
    %1794 = vmatpush1.msra.mxu0 %v465
    %1795 = vmatprep.subr.mxu0 %v458
    %1796 = vmatpush1.msra.mxu0 %v457
    %1797 = vmatprep.subr.mxu0 %v450
    %1798 = vmatpush1.msra.mxu0 %v449
    %1799 = vmatprep.subr.mxu0 %v442
    %1800 = vmatpush1.msra.mxu0 %v441
    %1801 = vmatprep.subr.mxu0 %v434
    %1802 = vmatpush1.msra.mxu0 %v433
    %1803 = vmatprep.subr.mxu0 %v426
    %1804 = vmatpush1.msra.mxu0 %v425
    %1805 = vmatprep.subr.mxu0 %v674
    %1806 = vmatpush2.msra.mxu0 %v673
    %1807 = vmatprep.subr.mxu0 %v666
    %1808 = vmatpush2.msra.mxu0 %v665
    %1809 = vmatprep.subr.mxu0 %v658
    %1810 = vmatpush2.msra.mxu0 %v657
    %1811 = vmatprep.subr.mxu0 %v650
    %1812 = vmatpush2.msra.mxu0 %v649
    %1813 = vmatprep.subr.mxu0 %v642
    %1814 = vmatpush2.msra.mxu0 %v641
    %1815 = vmatprep.subr.mxu0 %v634
    %1816 = vmatpush2.msra.mxu0 %v633
    %1817 = vmatprep.subr.mxu0 %v626
    %1818 = vmatpush2.msra.mxu0 %v625
    %1819 = vmatprep.subr.mxu0 %v618
    %1820 = vmatpush2.msra.mxu0 %v617
    %1821 = vmatprep.subr.mxu0 %v610
    %1822 = vmatpush2.msra.mxu0 %v609
    %1823 = vmatprep.subr.mxu0 %v602
    %1824 = vmatpush2.msra.mxu0 %v601
    %1825 = vmatprep.subr.mxu0 %v594
    %1826 = vmatpush2.msra.mxu0 %v593
    %1827 = vmatprep.subr.mxu0 %v586
    %1828 = vmatpush2.msra.mxu0 %v585
    %1829 = vmatprep.subr.mxu0 %v578
    %1830 = vmatpush2.msra.mxu0 %v577
    %1831 = vmatprep.subr.mxu0 %v570
    %1832 = vmatpush2.msra.mxu0 %v569
    %1833 = vmatprep.subr.mxu0 %v562
    %1834 = vmatpush2.msra.mxu0 %v561
    %1835 = vmatprep.subr.mxu0 %v554
    %1836 = vmatpush2.msra.mxu0 %v553
    %1837 = vmatprep.mubr.f32.mxu0 %v416
    %1838 = vmatmul.mubr.f32.gmra.mxu0 %v415
    %v1839 = vpop.f32.mrf.mxu0
    %v1840 = vadd.f32 %v1460, %v1839
    %v1841 = vpop.f32.mrf.mxu0
    %v1842 = vadd.f32 %v1464, %v1841
    %1843 = vdwg.mxu0
    %1844 = vmatprep.subr.mxu0 %v802
    %1845 = vmatpush1.msra.mxu0 %v801
    %1846 = vmatprep.subr.mxu0 %v794
    %1847 = vmatpush1.msra.mxu0 %v793
    %1848 = vmatprep.subr.mxu0 %v786
    %1849 = vmatpush1.msra.mxu0 %v785
    %1850 = vmatprep.subr.mxu0 %v778
    %1851 = vmatpush1.msra.mxu0 %v777
    %1852 = vmatprep.subr.mxu0 %v770
    %1853 = vmatpush1.msra.mxu0 %v769
    %1854 = vmatprep.subr.mxu0 %v762
    %1855 = vmatpush1.msra.mxu0 %v761
    %1856 = vmatprep.subr.mxu0 %v754
    %1857 = vmatpush1.msra.mxu0 %v753
    %1858 = vmatprep.subr.mxu0 %v746
    %1859 = vmatpush1.msra.mxu0 %v745
    %1860 = vmatprep.subr.mxu0 %v738
    %1861 = vmatpush1.msra.mxu0 %v737
    %1862 = vmatprep.subr.mxu0 %v730
    %1863 = vmatpush1.msra.mxu0 %v729
    %1864 = vmatprep.subr.mxu0 %v722
    %1865 = vmatpush1.msra.mxu0 %v721
    %1866 = vmatprep.subr.mxu0 %v714
    %1867 = vmatpush1.msra.mxu0 %v713
    %1868 = vmatprep.subr.mxu0 %v706
    %1869 = vmatpush1.msra.mxu0 %v705
    %1870 = vmatprep.subr.mxu0 %v698
    %1871 = vmatpush1.msra.mxu0 %v697
    %1872 = vmatprep.subr.mxu0 %v690
    %1873 = vmatpush1.msra.mxu0 %v689
    %1874 = vmatprep.subr.mxu0 %v682
    %1875 = vmatpush1.msra.mxu0 %v681
    %1876 = vmatprep.subr.mxu0 %v930
    %1877 = vmatpush2.msra.mxu0 %v929
    %1878 = vmatprep.subr.mxu0 %v922
    %1879 = vmatpush2.msra.mxu0 %v921
    %1880 = vmatprep.subr.mxu0 %v914
    %1881 = vmatpush2.msra.mxu0 %v913
    %1882 = vmatprep.subr.mxu0 %v906
    %1883 = vmatpush2.msra.mxu0 %v905
    %1884 = vmatprep.subr.mxu0 %v898
    %1885 = vmatpush2.msra.mxu0 %v897
    %1886 = vmatprep.subr.mxu0 %v890
    %1887 = vmatpush2.msra.mxu0 %v889
    %1888 = vmatprep.subr.mxu0 %v882
    %1889 = vmatpush2.msra.mxu0 %v881
    %1890 = vmatprep.subr.mxu0 %v874
    %1891 = vmatpush2.msra.mxu0 %v873
    %1892 = vmatprep.subr.mxu0 %v866
    %1893 = vmatpush2.msra.mxu0 %v865
    %1894 = vmatprep.subr.mxu0 %v858
    %1895 = vmatpush2.msra.mxu0 %v857
    %1896 = vmatprep.subr.mxu0 %v850
    %1897 = vmatpush2.msra.mxu0 %v849
    %1898 = vmatprep.subr.mxu0 %v842
    %1899 = vmatpush2.msra.mxu0 %v841
    %1900 = vmatprep.subr.mxu0 %v834
    %1901 = vmatpush2.msra.mxu0 %v833
    %1902 = vmatprep.subr.mxu0 %v826
    %1903 = vmatpush2.msra.mxu0 %v825
    %1904 = vmatprep.subr.mxu0 %v818
    %1905 = vmatpush2.msra.mxu0 %v817
    %1906 = vmatprep.subr.mxu0 %v810
    %1907 = vmatpush2.msra.mxu0 %v809
    %1908 = vmatprep.mubr.f32.mxu0 %v418
    %1909 = vmatmul.mubr.f32.gmra.mxu0 %v417
    %v1910 = vpop.f32.mrf.mxu0
    %v1911 = vadd.f32 %v1840, %v1910
    %v1912 = vpop.f32.mrf.mxu0
    %v1913 = vadd.f32 %v1842, %v1912
    %1914 = vdwg.mxu0
    %1915 = vmatprep.subr.mxu0 %v1058
    %1916 = vmatpush1.msra.mxu0 %v1057
    %1917 = vmatprep.subr.mxu0 %v1050
    %1918 = vmatpush1.msra.mxu0 %v1049
    %1919 = vmatprep.subr.mxu0 %v1042
    %1920 = vmatpush1.msra.mxu0 %v1041
    %1921 = vmatprep.subr.mxu0 %v1034
    %1922 = vmatpush1.msra.mxu0 %v1033
    %1923 = vmatprep.subr.mxu0 %v1026
    %1924 = vmatpush1.msra.mxu0 %v1025
    %1925 = vmatprep.subr.mxu0 %v1018
    %1926 = vmatpush1.msra.mxu0 %v1017
    %1927 = vmatprep.subr.mxu0 %v1010
    %1928 = vmatpush1.msra.mxu0 %v1009
    %1929 = vmatprep.subr.mxu0 %v1002
    %1930 = vmatpush1.msra.mxu0 %v1001
    %1931 = vmatprep.subr.mxu0 %v994
    %1932 = vmatpush1.msra.mxu0 %v993
    %1933 = vmatprep.subr.mxu0 %v986
    %1934 = vmatpush1.msra.mxu0 %v985
    %1935 = vmatprep.subr.mxu0 %v978
    %1936 = vmatpush1.msra.mxu0 %v977
    %1937 = vmatprep.subr.mxu0 %v970
    %1938 = vmatpush1.msra.mxu0 %v969
    %1939 = vmatprep.subr.mxu0 %v962
    %1940 = vmatpush1.msra.mxu0 %v961
    %1941 = vmatprep.subr.mxu0 %v954
    %1942 = vmatpush1.msra.mxu0 %v953
    %1943 = vmatprep.subr.mxu0 %v946
    %1944 = vmatpush1.msra.mxu0 %v945
    %1945 = vmatprep.subr.mxu0 %v938
    %1946 = vmatpush1.msra.mxu0 %v937
    %1947 = vmatprep.subr.mxu0 %v1186
    %1948 = vmatpush2.msra.mxu0 %v1185
    %1949 = vmatprep.subr.mxu0 %v1178
    %1950 = vmatpush2.msra.mxu0 %v1177
    %1951 = vmatprep.subr.mxu0 %v1170
    %1952 = vmatpush2.msra.mxu0 %v1169
    %1953 = vmatprep.subr.mxu0 %v1162
    %1954 = vmatpush2.msra.mxu0 %v1161
    %1955 = vmatprep.subr.mxu0 %v1154
    %1956 = vmatpush2.msra.mxu0 %v1153
    %1957 = vmatprep.subr.mxu0 %v1146
    %1958 = vmatpush2.msra.mxu0 %v1145
    %1959 = vmatprep.subr.mxu0 %v1138
    %1960 = vmatpush2.msra.mxu0 %v1137
    %1961 = vmatprep.subr.mxu0 %v1130
    %1962 = vmatpush2.msra.mxu0 %v1129
    %1963 = vmatprep.subr.mxu0 %v1122
    %1964 = vmatpush2.msra.mxu0 %v1121
    %1965 = vmatprep.subr.mxu0 %v1114
    %1966 = vmatpush2.msra.mxu0 %v1113
    %1967 = vmatprep.subr.mxu0 %v1106
    %1968 = vmatpush2.msra.mxu0 %v1105
    %1969 = vmatprep.subr.mxu0 %v1098
    %1970 = vmatpush2.msra.mxu0 %v1097
    %1971 = vmatprep.subr.mxu0 %v1090
    %1972 = vmatpush2.msra.mxu0 %v1089
    %1973 = vmatprep.subr.mxu0 %v1082
    %1974 = vmatpush2.msra.mxu0 %v1081
    %1975 = vmatprep.subr.mxu0 %v1074
    %1976 = vmatpush2.msra.mxu0 %v1073
    %1977 = vmatprep.subr.mxu0 %v1066
    %1978 = vmatpush2.msra.mxu0 %v1065
    %1979 = vmatprep.mubr.f32.mxu0 %v420
    %1980 = vmatmul.mubr.f32.gmra.mxu0 %v419
    %v1981 = vpop.f32.mrf.mxu0
    %v1982 = vadd.f32 %v1911, %v1981
    %v1983 = vpop.f32.mrf.mxu0
    %v1984 = vadd.f32 %v1913, %v1983
    %1985 = vdwg.mxu0
    %1986 = vmatprep.subr.mxu0 %v1314
    %1987 = vmatpush1.msra.mxu0 %v1313
    %1988 = vmatprep.subr.mxu0 %v1306
    %1989 = vmatpush1.msra.mxu0 %v1305
    %1990 = vmatprep.subr.mxu0 %v1298
    %1991 = vmatpush1.msra.mxu0 %v1297
    %1992 = vmatprep.subr.mxu0 %v1290
    %1993 = vmatpush1.msra.mxu0 %v1289
    %1994 = vmatprep.subr.mxu0 %v1282
    %1995 = vmatpush1.msra.mxu0 %v1281
    %1996 = vmatprep.subr.mxu0 %v1274
    %1997 = vmatpush1.msra.mxu0 %v1273
    %1998 = vmatprep.subr.mxu0 %v1266
    %1999 = vmatpush1.msra.mxu0 %v1265
    %2000 = vmatprep.subr.mxu0 %v1258
    %2001 = vmatpush1.msra.mxu0 %v1257
    %2002 = vmatprep.subr.mxu0 %v1250
    %2003 = vmatpush1.msra.mxu0 %v1249
    %2004 = vmatprep.subr.mxu0 %v1242
    %2005 = vmatpush1.msra.mxu0 %v1241
    %2006 = vmatprep.subr.mxu0 %v1234
    %2007 = vmatpush1.msra.mxu0 %v1233
    %2008 = vmatprep.subr.mxu0 %v1226
    %2009 = vmatpush1.msra.mxu0 %v1225
    %2010 = vmatprep.subr.mxu0 %v1218
    %2011 = vmatpush1.msra.mxu0 %v1217
    %2012 = vmatprep.subr.mxu0 %v1210
    %2013 = vmatpush1.msra.mxu0 %v1209
    %2014 = vmatprep.subr.mxu0 %v1202
    %2015 = vmatpush1.msra.mxu0 %v1201
    %2016 = vmatprep.subr.mxu0 %v1194
    %2017 = vmatpush1.msra.mxu0 %v1193
    %2018 = vmatprep.subr.mxu0 %v1442
    %2019 = vmatpush2.msra.mxu0 %v1441
    %2020 = vmatprep.subr.mxu0 %v1434
    %2021 = vmatpush2.msra.mxu0 %v1433
    %2022 = vmatprep.subr.mxu0 %v1426
    %2023 = vmatpush2.msra.mxu0 %v1425
    %2024 = vmatprep.subr.mxu0 %v1418
    %2025 = vmatpush2.msra.mxu0 %v1417
    %2026 = vmatprep.subr.mxu0 %v1410
    %2027 = vmatpush2.msra.mxu0 %v1409
    %2028 = vmatprep.subr.mxu0 %v1402
    %2029 = vmatpush2.msra.mxu0 %v1401
    %2030 = vmatprep.subr.mxu0 %v1394
    %2031 = vmatpush2.msra.mxu0 %v1393
    %2032 = vmatprep.subr.mxu0 %v1386
    %2033 = vmatpush2.msra.mxu0 %v1385
    %2034 = vmatprep.subr.mxu0 %v1378
    %2035 = vmatpush2.msra.mxu0 %v1377
    %2036 = vmatprep.subr.mxu0 %v1370
    %2037 = vmatpush2.msra.mxu0 %v1369
    %2038 = vmatprep.subr.mxu0 %v1362
    %2039 = vmatpush2.msra.mxu0 %v1361
    %2040 = vmatprep.subr.mxu0 %v1354
    %2041 = vmatpush2.msra.mxu0 %v1353
    %2042 = vmatprep.subr.mxu0 %v1346
    %2043 = vmatpush2.msra.mxu0 %v1345
    %2044 = vmatprep.subr.mxu0 %v1338
    %2045 = vmatpush2.msra.mxu0 %v1337
    %2046 = vmatprep.subr.mxu0 %v1330
    %2047 = vmatpush2.msra.mxu0 %v1329
    %2048 = vmatprep.subr.mxu0 %v1322
    %2049 = vmatpush2.msra.mxu0 %v1321
    %2050 = vmatprep.mubr.f32.mxu0 %v422
    %2051 = vmatmul.mubr.f32.gmra.mxu0 %v421
    %v2052 = vpop.f32.mrf.mxu0
    %v2053 = vadd.f32 %v1982, %v2052
    %v2054 = vpop.f32.mrf.mxu0
    %v2055 = vadd.f32 %v1984, %v2054
    %2056 = vdwg.mxu0
    %2057 = vmatprep.subr.mxu0 %v548
    %2058 = vmatpush1.msra.mxu0 %v547
    %2059 = vmatprep.subr.mxu0 %v540
    %2060 = vmatpush1.msra.mxu0 %v539
    %2061 = vmatprep.subr.mxu0 %v532
    %2062 = vmatpush1.msra.mxu0 %v531
    %2063 = vmatprep.subr.mxu0 %v524
    %2064 = vmatpush1.msra.mxu0 %v523
    %2065 = vmatprep.subr.mxu0 %v516
    %2066 = vmatpush1.msra.mxu0 %v515
    %2067 = vmatprep.subr.mxu0 %v508
    %2068 = vmatpush1.msra.mxu0 %v507
    %2069 = vmatprep.subr.mxu0 %v500
    %2070 = vmatpush1.msra.mxu0 %v499
    %2071 = vmatprep.subr.mxu0 %v492
    %2072 = vmatpush1.msra.mxu0 %v491
    %2073 = vmatprep.subr.mxu0 %v484
    %2074 = vmatpush1.msra.mxu0 %v483
    %2075 = vmatprep.subr.mxu0 %v476
    %2076 = vmatpush1.msra.mxu0 %v475
    %2077 = vmatprep.subr.mxu0 %v468
    %2078 = vmatpush1.msra.mxu0 %v467
    %2079 = vmatprep.subr.mxu0 %v460
    %2080 = vmatpush1.msra.mxu0 %v459
    %2081 = vmatprep.subr.mxu0 %v452
    %2082 = vmatpush1.msra.mxu0 %v451
    %2083 = vmatprep.subr.mxu0 %v444
    %2084 = vmatpush1.msra.mxu0 %v443
    %2085 = vmatprep.subr.mxu0 %v436
    %2086 = vmatpush1.msra.mxu0 %v435
    %2087 = vmatprep.subr.mxu0 %v428
    %2088 = vmatpush1.msra.mxu0 %v427
    %2089 = vmatprep.subr.mxu0 %v676
    %2090 = vmatpush2.msra.mxu0 %v675
    %2091 = vmatprep.subr.mxu0 %v668
    %2092 = vmatpush2.msra.mxu0 %v667
    %2093 = vmatprep.subr.mxu0 %v660
    %2094 = vmatpush2.msra.mxu0 %v659
    %2095 = vmatprep.subr.mxu0 %v652
    %2096 = vmatpush2.msra.mxu0 %v651
    %2097 = vmatprep.subr.mxu0 %v644
    %2098 = vmatpush2.msra.mxu0 %v643
    %2099 = vmatprep.subr.mxu0 %v636
    %2100 = vmatpush2.msra.mxu0 %v635
    %2101 = vmatprep.subr.mxu0 %v628
    %2102 = vmatpush2.msra.mxu0 %v627
    %2103 = vmatprep.subr.mxu0 %v620
    %2104 = vmatpush2.msra.mxu0 %v619
    %2105 = vmatprep.subr.mxu0 %v612
    %2106 = vmatpush2.msra.mxu0 %v611
    %2107 = vmatprep.subr.mxu0 %v604
    %2108 = vmatpush2.msra.mxu0 %v603
    %2109 = vmatprep.subr.mxu0 %v596
    %2110 = vmatpush2.msra.mxu0 %v595
    %2111 = vmatprep.subr.mxu0 %v588
    %2112 = vmatpush2.msra.mxu0 %v587
    %2113 = vmatprep.subr.mxu0 %v580
    %2114 = vmatpush2.msra.mxu0 %v579
    %2115 = vmatprep.subr.mxu0 %v572
    %2116 = vmatpush2.msra.mxu0 %v571
    %2117 = vmatprep.subr.mxu0 %v564
    %2118 = vmatpush2.msra.mxu0 %v563
    %2119 = vmatprep.subr.mxu0 %v556
    %2120 = vmatpush2.msra.mxu0 %v555
    %2121 = vmatprep.mubr.f32.mxu0 %v416
    %2122 = vmatmul.mubr.f32.gmra.mxu0 %v415
    %v2123 = vpop.f32.mrf.mxu0
    %v2124 = vadd.f32 %v1468, %v2123
    %v2125 = vpop.f32.mrf.mxu0
    %v2126 = vadd.f32 %v1472, %v2125
    %2127 = vdwg.mxu0
    %2128 = vmatprep.subr.mxu0 %v804
    %2129 = vmatpush1.msra.mxu0 %v803
    %2130 = vmatprep.subr.mxu0 %v796
    %2131 = vmatpush1.msra.mxu0 %v795
    %2132 = vmatprep.subr.mxu0 %v788
    %2133 = vmatpush1.msra.mxu0 %v787
    %2134 = vmatprep.subr.mxu0 %v780
    %2135 = vmatpush1.msra.mxu0 %v779
    %2136 = vmatprep.subr.mxu0 %v772
    %2137 = vmatpush1.msra.mxu0 %v771
    %2138 = vmatprep.subr.mxu0 %v764
    %2139 = vmatpush1.msra.mxu0 %v763
    %2140 = vmatprep.subr.mxu0 %v756
    %2141 = vmatpush1.msra.mxu0 %v755
    %2142 = vmatprep.subr.mxu0 %v748
    %2143 = vmatpush1.msra.mxu0 %v747
    %2144 = vmatprep.subr.mxu0 %v740
    %2145 = vmatpush1.msra.mxu0 %v739
    %2146 = vmatprep.subr.mxu0 %v732
    %2147 = vmatpush1.msra.mxu0 %v731
    %2148 = vmatprep.subr.mxu0 %v724
    %2149 = vmatpush1.msra.mxu0 %v723
    %2150 = vmatprep.subr.mxu0 %v716
    %2151 = vmatpush1.msra.mxu0 %v715
    %2152 = vmatprep.subr.mxu0 %v708
    %2153 = vmatpush1.msra.mxu0 %v707
    %2154 = vmatprep.subr.mxu0 %v700
    %2155 = vmatpush1.msra.mxu0 %v699
    %2156 = vmatprep.subr.mxu0 %v692
    %2157 = vmatpush1.msra.mxu0 %v691
    %2158 = vmatprep.subr.mxu0 %v684
    %2159 = vmatpush1.msra.mxu0 %v683
    %2160 = vmatprep.subr.mxu0 %v932
    %2161 = vmatpush2.msra.mxu0 %v931
    %2162 = vmatprep.subr.mxu0 %v924
    %2163 = vmatpush2.msra.mxu0 %v923
    %2164 = vmatprep.subr.mxu0 %v916
    %2165 = vmatpush2.msra.mxu0 %v915
    %2166 = vmatprep.subr.mxu0 %v908
    %2167 = vmatpush2.msra.mxu0 %v907
    %2168 = vmatprep.subr.mxu0 %v900
    %2169 = vmatpush2.msra.mxu0 %v899
    %2170 = vmatprep.subr.mxu0 %v892
    %2171 = vmatpush2.msra.mxu0 %v891
    %2172 = vmatprep.subr.mxu0 %v884
    %2173 = vmatpush2.msra.mxu0 %v883
    %2174 = vmatprep.subr.mxu0 %v876
    %2175 = vmatpush2.msra.mxu0 %v875
    %2176 = vmatprep.subr.mxu0 %v868
    %2177 = vmatpush2.msra.mxu0 %v867
    %2178 = vmatprep.subr.mxu0 %v860
    %2179 = vmatpush2.msra.mxu0 %v859
    %2180 = vmatprep.subr.mxu0 %v852
    %2181 = vmatpush2.msra.mxu0 %v851
    %2182 = vmatprep.subr.mxu0 %v844
    %2183 = vmatpush2.msra.mxu0 %v843
    %2184 = vmatprep.subr.mxu0 %v836
    %2185 = vmatpush2.msra.mxu0 %v835
    %2186 = vmatprep.subr.mxu0 %v828
    %2187 = vmatpush2.msra.mxu0 %v827
    %2188 = vmatprep.subr.mxu0 %v820
    %2189 = vmatpush2.msra.mxu0 %v819
    %2190 = vmatprep.subr.mxu0 %v812
    %2191 = vmatpush2.msra.mxu0 %v811
    %2192 = vmatprep.mubr.f32.mxu0 %v418
    %2193 = vmatmul.mubr.f32.gmra.mxu0 %v417
    %v2194 = vpop.f32.mrf.mxu0
    %v2195 = vadd.f32 %v2124, %v2194
    %v2196 = vpop.f32.mrf.mxu0
    %v2197 = vadd.f32 %v2126, %v2196
    %2198 = vdwg.mxu0
    %2199 = vmatprep.subr.mxu0 %v1060
    %2200 = vmatpush1.msra.mxu0 %v1059
    %2201 = vmatprep.subr.mxu0 %v1052
    %2202 = vmatpush1.msra.mxu0 %v1051
    %2203 = vmatprep.subr.mxu0 %v1044
    %2204 = vmatpush1.msra.mxu0 %v1043
    %2205 = vmatprep.subr.mxu0 %v1036
    %2206 = vmatpush1.msra.mxu0 %v1035
    %2207 = vmatprep.subr.mxu0 %v1028
    %2208 = vmatpush1.msra.mxu0 %v1027
    %2209 = vmatprep.subr.mxu0 %v1020
    %2210 = vmatpush1.msra.mxu0 %v1019
    %2211 = vmatprep.subr.mxu0 %v1012
    %2212 = vmatpush1.msra.mxu0 %v1011
    %2213 = vmatprep.subr.mxu0 %v1004
    %2214 = vmatpush1.msra.mxu0 %v1003
    %2215 = vmatprep.subr.mxu0 %v996
    %2216 = vmatpush1.msra.mxu0 %v995
    %2217 = vmatprep.subr.mxu0 %v988
    %2218 = vmatpush1.msra.mxu0 %v987
    %2219 = vmatprep.subr.mxu0 %v980
    %2220 = vmatpush1.msra.mxu0 %v979
    %2221 = vmatprep.subr.mxu0 %v972
    %2222 = vmatpush1.msra.mxu0 %v971
    %2223 = vmatprep.subr.mxu0 %v964
    %2224 = vmatpush1.msra.mxu0 %v963
    %2225 = vmatprep.subr.mxu0 %v956
    %2226 = vmatpush1.msra.mxu0 %v955
    %2227 = vmatprep.subr.mxu0 %v948
    %2228 = vmatpush1.msra.mxu0 %v947
    %2229 = vmatprep.subr.mxu0 %v940
    %2230 = vmatpush1.msra.mxu0 %v939
    %2231 = vmatprep.subr.mxu0 %v1188
    %2232 = vmatpush2.msra.mxu0 %v1187
    %2233 = vmatprep.subr.mxu0 %v1180
    %2234 = vmatpush2.msra.mxu0 %v1179
    %2235 = vmatprep.subr.mxu0 %v1172
    %2236 = vmatpush2.msra.mxu0 %v1171
    %2237 = vmatprep.subr.mxu0 %v1164
    %2238 = vmatpush2.msra.mxu0 %v1163
    %2239 = vmatprep.subr.mxu0 %v1156
    %2240 = vmatpush2.msra.mxu0 %v1155
    %2241 = vmatprep.subr.mxu0 %v1148
    %2242 = vmatpush2.msra.mxu0 %v1147
    %2243 = vmatprep.subr.mxu0 %v1140
    %2244 = vmatpush2.msra.mxu0 %v1139
    %2245 = vmatprep.subr.mxu0 %v1132
    %2246 = vmatpush2.msra.mxu0 %v1131
    %2247 = vmatprep.subr.mxu0 %v1124
    %2248 = vmatpush2.msra.mxu0 %v1123
    %2249 = vmatprep.subr.mxu0 %v1116
    %2250 = vmatpush2.msra.mxu0 %v1115
    %2251 = vmatprep.subr.mxu0 %v1108
    %2252 = vmatpush2.msra.mxu0 %v1107
    %2253 = vmatprep.subr.mxu0 %v1100
    %2254 = vmatpush2.msra.mxu0 %v1099
    %2255 = vmatprep.subr.mxu0 %v1092
    %2256 = vmatpush2.msra.mxu0 %v1091
    %2257 = vmatprep.subr.mxu0 %v1084
    %2258 = vmatpush2.msra.mxu0 %v1083
    %2259 = vmatprep.subr.mxu0 %v1076
    %2260 = vmatpush2.msra.mxu0 %v1075
    %2261 = vmatprep.subr.mxu0 %v1068
    %2262 = vmatpush2.msra.mxu0 %v1067
    %2263 = vmatprep.mubr.f32.mxu0 %v420
    %2264 = vmatmul.mubr.f32.gmra.mxu0 %v419
    %v2265 = vpop.f32.mrf.mxu0
    %v2266 = vadd.f32 %v2195, %v2265
    %v2267 = vpop.f32.mrf.mxu0
    %v2268 = vadd.f32 %v2197, %v2267
    %2269 = vdwg.mxu0
    %2270 = vmatprep.subr.mxu0 %v1316
    %2271 = vmatpush1.msra.mxu0 %v1315
    %2272 = vmatprep.subr.mxu0 %v1308
    %2273 = vmatpush1.msra.mxu0 %v1307
    %2274 = vmatprep.subr.mxu0 %v1300
    %2275 = vmatpush1.msra.mxu0 %v1299
    %2276 = vmatprep.subr.mxu0 %v1292
    %2277 = vmatpush1.msra.mxu0 %v1291
    %2278 = vmatprep.subr.mxu0 %v1284
    %2279 = vmatpush1.msra.mxu0 %v1283
    %2280 = vmatprep.subr.mxu0 %v1276
    %2281 = vmatpush1.msra.mxu0 %v1275
    %2282 = vmatprep.subr.mxu0 %v1268
    %2283 = vmatpush1.msra.mxu0 %v1267
    %2284 = vmatprep.subr.mxu0 %v1260
    %2285 = vmatpush1.msra.mxu0 %v1259
    %2286 = vmatprep.subr.mxu0 %v1252
    %2287 = vmatpush1.msra.mxu0 %v1251
    %2288 = vmatprep.subr.mxu0 %v1244
    %2289 = vmatpush1.msra.mxu0 %v1243
    %2290 = vmatprep.subr.mxu0 %v1236
    %2291 = vmatpush1.msra.mxu0 %v1235
    %2292 = vmatprep.subr.mxu0 %v1228
    %2293 = vmatpush1.msra.mxu0 %v1227
    %2294 = vmatprep.subr.mxu0 %v1220
    %2295 = vmatpush1.msra.mxu0 %v1219
    %2296 = vmatprep.subr.mxu0 %v1212
    %2297 = vmatpush1.msra.mxu0 %v1211
    %2298 = vmatprep.subr.mxu0 %v1204
    %2299 = vmatpush1.msra.mxu0 %v1203
    %2300 = vmatprep.subr.mxu0 %v1196
    %2301 = vmatpush1.msra.mxu0 %v1195
    %2302 = vmatprep.subr.mxu0 %v1444
    %2303 = vmatpush2.msra.mxu0 %v1443
    %2304 = vmatprep.subr.mxu0 %v1436
    %2305 = vmatpush2.msra.mxu0 %v1435
    %2306 = vmatprep.subr.mxu0 %v1428
    %2307 = vmatpush2.msra.mxu0 %v1427
    %2308 = vmatprep.subr.mxu0 %v1420
    %2309 = vmatpush2.msra.mxu0 %v1419
    %2310 = vmatprep.subr.mxu0 %v1412
    %2311 = vmatpush2.msra.mxu0 %v1411
    %2312 = vmatprep.subr.mxu0 %v1404
    %2313 = vmatpush2.msra.mxu0 %v1403
    %2314 = vmatprep.subr.mxu0 %v1396
    %2315 = vmatpush2.msra.mxu0 %v1395
    %2316 = vmatprep.subr.mxu0 %v1388
    %2317 = vmatpush2.msra.mxu0 %v1387
    %2318 = vmatprep.subr.mxu0 %v1380
    %2319 = vmatpush2.msra.mxu0 %v1379
    %2320 = vmatprep.subr.mxu0 %v1372
    %2321 = vmatpush2.msra.mxu0 %v1371
    %2322 = vmatprep.subr.mxu0 %v1364
    %2323 = vmatpush2.msra.mxu0 %v1363
    %2324 = vmatprep.subr.mxu0 %v1356
    %2325 = vmatpush2.msra.mxu0 %v1355
    %2326 = vmatprep.subr.mxu0 %v1348
    %2327 = vmatpush2.msra.mxu0 %v1347
    %2328 = vmatprep.subr.mxu0 %v1340
    %2329 = vmatpush2.msra.mxu0 %v1339
    %2330 = vmatprep.subr.mxu0 %v1332
    %2331 = vmatpush2.msra.mxu0 %v1331
    %2332 = vmatprep.subr.mxu0 %v1324
    %2333 = vmatpush2.msra.mxu0 %v1323
    %2334 = vmatprep.mubr.f32.mxu0 %v422
    %2335 = vmatmul.mubr.f32.gmra.mxu0 %v421
    %v2336 = vpop.f32.mrf.mxu0
    %v2337 = vadd.f32 %v2266, %v2336
    %v2338 = vpop.f32.mrf.mxu0
    %v2339 = vadd.f32 %v2268, %v2338
    %2340 = vdwg.mxu0
    %2341 = vmatprep.subr.mxu0 %v550
    %2342 = vmatpush1.msra.mxu0 %v549
    %2343 = vmatprep.subr.mxu0 %v542
    %2344 = vmatpush1.msra.mxu0 %v541
    %2345 = vmatprep.subr.mxu0 %v534
    %2346 = vmatpush1.msra.mxu0 %v533
    %2347 = vmatprep.subr.mxu0 %v526
    %2348 = vmatpush1.msra.mxu0 %v525
    %2349 = vmatprep.subr.mxu0 %v518
    %2350 = vmatpush1.msra.mxu0 %v517
    %2351 = vmatprep.subr.mxu0 %v510
    %2352 = vmatpush1.msra.mxu0 %v509
    %2353 = vmatprep.subr.mxu0 %v502
    %2354 = vmatpush1.msra.mxu0 %v501
    %2355 = vmatprep.subr.mxu0 %v494
    %2356 = vmatpush1.msra.mxu0 %v493
    %2357 = vmatprep.subr.mxu0 %v486
    %2358 = vmatpush1.msra.mxu0 %v485
    %2359 = vmatprep.subr.mxu0 %v478
    %2360 = vmatpush1.msra.mxu0 %v477
    %2361 = vmatprep.subr.mxu0 %v470
    %2362 = vmatpush1.msra.mxu0 %v469
    %2363 = vmatprep.subr.mxu0 %v462
    %2364 = vmatpush1.msra.mxu0 %v461
    %2365 = vmatprep.subr.mxu0 %v454
    %2366 = vmatpush1.msra.mxu0 %v453
    %2367 = vmatprep.subr.mxu0 %v446
    %2368 = vmatpush1.msra.mxu0 %v445
    %2369 = vmatprep.subr.mxu0 %v438
    %2370 = vmatpush1.msra.mxu0 %v437
    %2371 = vmatprep.subr.mxu0 %v430
    %2372 = vmatpush1.msra.mxu0 %v429
    %2373 = vmatprep.subr.mxu0 %v678
    %2374 = vmatpush2.msra.mxu0 %v677
    %2375 = vmatprep.subr.mxu0 %v670
    %2376 = vmatpush2.msra.mxu0 %v669
    %2377 = vmatprep.subr.mxu0 %v662
    %2378 = vmatpush2.msra.mxu0 %v661
    %2379 = vmatprep.subr.mxu0 %v654
    %2380 = vmatpush2.msra.mxu0 %v653
    %2381 = vmatprep.subr.mxu0 %v646
    %2382 = vmatpush2.msra.mxu0 %v645
    %2383 = vmatprep.subr.mxu0 %v638
    %2384 = vmatpush2.msra.mxu0 %v637
    %2385 = vmatprep.subr.mxu0 %v630
    %2386 = vmatpush2.msra.mxu0 %v629
    %2387 = vmatprep.subr.mxu0 %v622
    %2388 = vmatpush2.msra.mxu0 %v621
    %2389 = vmatprep.subr.mxu0 %v614
    %2390 = vmatpush2.msra.mxu0 %v613
    %2391 = vmatprep.subr.mxu0 %v606
    %2392 = vmatpush2.msra.mxu0 %v605
    %2393 = vmatprep.subr.mxu0 %v598
    %2394 = vmatpush2.msra.mxu0 %v597
    %2395 = vmatprep.subr.mxu0 %v590
    %2396 = vmatpush2.msra.mxu0 %v589
    %2397 = vmatprep.subr.mxu0 %v582
    %2398 = vmatpush2.msra.mxu0 %v581
    %2399 = vmatprep.subr.mxu0 %v574
    %2400 = vmatpush2.msra.mxu0 %v573
    %2401 = vmatprep.subr.mxu0 %v566
    %2402 = vmatpush2.msra.mxu0 %v565
    %2403 = vmatprep.subr.mxu0 %v558
    %2404 = vmatpush2.msra.mxu0 %v557
    %2405 = vmatprep.mubr.f32.mxu0 %v416
    %2406 = vmatmul.mubr.f32.gmra.mxu0 %v415
    %v2407 = vpop.f32.mrf.mxu0
    %v2408 = vadd.f32 %v1476, %v2407
    %v2409 = vpop.f32.mrf.mxu0
    %v2410 = vadd.f32 %v1480, %v2409
    %2411 = vdwg.mxu0
    %2412 = vmatprep.subr.mxu0 %v806
    %2413 = vmatpush1.msra.mxu0 %v805
    %2414 = vmatprep.subr.mxu0 %v798
    %2415 = vmatpush1.msra.mxu0 %v797
    %2416 = vmatprep.subr.mxu0 %v790
    %2417 = vmatpush1.msra.mxu0 %v789
    %2418 = vmatprep.subr.mxu0 %v782
    %2419 = vmatpush1.msra.mxu0 %v781
    %2420 = vmatprep.subr.mxu0 %v774
    %2421 = vmatpush1.msra.mxu0 %v773
    %2422 = vmatprep.subr.mxu0 %v766
    %2423 = vmatpush1.msra.mxu0 %v765
    %2424 = vmatprep.subr.mxu0 %v758
    %2425 = vmatpush1.msra.mxu0 %v757
    %2426 = vmatprep.subr.mxu0 %v750
    %2427 = vmatpush1.msra.mxu0 %v749
    %2428 = vmatprep.subr.mxu0 %v742
    %2429 = vmatpush1.msra.mxu0 %v741
    %2430 = vmatprep.subr.mxu0 %v734
    %2431 = vmatpush1.msra.mxu0 %v733
    %2432 = vmatprep.subr.mxu0 %v726
    %2433 = vmatpush1.msra.mxu0 %v725
    %2434 = vmatprep.subr.mxu0 %v718
    %2435 = vmatpush1.msra.mxu0 %v717
    %2436 = vmatprep.subr.mxu0 %v710
    %2437 = vmatpush1.msra.mxu0 %v709
    %2438 = vmatprep.subr.mxu0 %v702
    %2439 = vmatpush1.msra.mxu0 %v701
    %2440 = vmatprep.subr.mxu0 %v694
    %2441 = vmatpush1.msra.mxu0 %v693
    %2442 = vmatprep.subr.mxu0 %v686
    %2443 = vmatpush1.msra.mxu0 %v685
    %2444 = vmatprep.subr.mxu0 %v934
    %2445 = vmatpush2.msra.mxu0 %v933
    %2446 = vmatprep.subr.mxu0 %v926
    %2447 = vmatpush2.msra.mxu0 %v925
    %2448 = vmatprep.subr.mxu0 %v918
    %2449 = vmatpush2.msra.mxu0 %v917
    %2450 = vmatprep.subr.mxu0 %v910
    %2451 = vmatpush2.msra.mxu0 %v909
    %2452 = vmatprep.subr.mxu0 %v902
    %2453 = vmatpush2.msra.mxu0 %v901
    %2454 = vmatprep.subr.mxu0 %v894
    %2455 = vmatpush2.msra.mxu0 %v893
    %2456 = vmatprep.subr.mxu0 %v886
    %2457 = vmatpush2.msra.mxu0 %v885
    %2458 = vmatprep.subr.mxu0 %v878
    %2459 = vmatpush2.msra.mxu0 %v877
    %2460 = vmatprep.subr.mxu0 %v870
    %2461 = vmatpush2.msra.mxu0 %v869
    %2462 = vmatprep.subr.mxu0 %v862
    %2463 = vmatpush2.msra.mxu0 %v861
    %2464 = vmatprep.subr.mxu0 %v854
    %2465 = vmatpush2.msra.mxu0 %v853
    %2466 = vmatprep.subr.mxu0 %v846
    %2467 = vmatpush2.msra.mxu0 %v845
    %2468 = vmatprep.subr.mxu0 %v838
    %2469 = vmatpush2.msra.mxu0 %v837
    %2470 = vmatprep.subr.mxu0 %v830
    %2471 = vmatpush2.msra.mxu0 %v829
    %2472 = vmatprep.subr.mxu0 %v822
    %2473 = vmatpush2.msra.mxu0 %v821
    %2474 = vmatprep.subr.mxu0 %v814
    %2475 = vmatpush2.msra.mxu0 %v813
    %2476 = vmatprep.mubr.f32.mxu0 %v418
    %2477 = vmatmul.mubr.f32.gmra.mxu0 %v417
    %v2478 = vpop.f32.mrf.mxu0
    %v2479 = vadd.f32 %v2408, %v2478
    %v2480 = vpop.f32.mrf.mxu0
    %v2481 = vadd.f32 %v2410, %v2480
    %2482 = vdwg.mxu0
    %2483 = vmatprep.subr.mxu0 %v1062
    %2484 = vmatpush1.msra.mxu0 %v1061
    %2485 = vmatprep.subr.mxu0 %v1054
    %2486 = vmatpush1.msra.mxu0 %v1053
    %2487 = vmatprep.subr.mxu0 %v1046
    %2488 = vmatpush1.msra.mxu0 %v1045
    %2489 = vmatprep.subr.mxu0 %v1038
    %2490 = vmatpush1.msra.mxu0 %v1037
    %2491 = vmatprep.subr.mxu0 %v1030
    %2492 = vmatpush1.msra.mxu0 %v1029
    %2493 = vmatprep.subr.mxu0 %v1022
    %2494 = vmatpush1.msra.mxu0 %v1021
    %2495 = vmatprep.subr.mxu0 %v1014
    %2496 = vmatpush1.msra.mxu0 %v1013
    %2497 = vmatprep.subr.mxu0 %v1006
    %2498 = vmatpush1.msra.mxu0 %v1005
    %2499 = vmatprep.subr.mxu0 %v998
    %2500 = vmatpush1.msra.mxu0 %v997
    %2501 = vmatprep.subr.mxu0 %v990
    %2502 = vmatpush1.msra.mxu0 %v989
    %2503 = vmatprep.subr.mxu0 %v982
    %2504 = vmatpush1.msra.mxu0 %v981
    %2505 = vmatprep.subr.mxu0 %v974
    %2506 = vmatpush1.msra.mxu0 %v973
    %2507 = vmatprep.subr.mxu0 %v966
    %2508 = vmatpush1.msra.mxu0 %v965
    %2509 = vmatprep.subr.mxu0 %v958
    %2510 = vmatpush1.msra.mxu0 %v957
    %2511 = vmatprep.subr.mxu0 %v950
    %2512 = vmatpush1.msra.mxu0 %v949
    %2513 = vmatprep.subr.mxu0 %v942
    %2514 = vmatpush1.msra.mxu0 %v941
    %2515 = vmatprep.subr.mxu0 %v1190
    %2516 = vmatpush2.msra.mxu0 %v1189
    %2517 = vmatprep.subr.mxu0 %v1182
    %2518 = vmatpush2.msra.mxu0 %v1181
    %2519 = vmatprep.subr.mxu0 %v1174
    %2520 = vmatpush2.msra.mxu0 %v1173
    %2521 = vmatprep.subr.mxu0 %v1166
    %2522 = vmatpush2.msra.mxu0 %v1165
    %2523 = vmatprep.subr.mxu0 %v1158
    %2524 = vmatpush2.msra.mxu0 %v1157
    %2525 = vmatprep.subr.mxu0 %v1150
    %2526 = vmatpush2.msra.mxu0 %v1149
    %2527 = vmatprep.subr.mxu0 %v1142
    %2528 = vmatpush2.msra.mxu0 %v1141
    %2529 = vmatprep.subr.mxu0 %v1134
    %2530 = vmatpush2.msra.mxu0 %v1133
    %2531 = vmatprep.subr.mxu0 %v1126
    %2532 = vmatpush2.msra.mxu0 %v1125
    %2533 = vmatprep.subr.mxu0 %v1118
    %2534 = vmatpush2.msra.mxu0 %v1117
    %2535 = vmatprep.subr.mxu0 %v1110
    %2536 = vmatpush2.msra.mxu0 %v1109
    %2537 = vmatprep.subr.mxu0 %v1102
    %2538 = vmatpush2.msra.mxu0 %v1101
    %2539 = vmatprep.subr.mxu0 %v1094
    %2540 = vmatpush2.msra.mxu0 %v1093
    %2541 = vmatprep.subr.mxu0 %v1086
    %2542 = vmatpush2.msra.mxu0 %v1085
    %2543 = vmatprep.subr.mxu0 %v1078
    %2544 = vmatpush2.msra.mxu0 %v1077
    %2545 = vmatprep.subr.mxu0 %v1070
    %2546 = vmatpush2.msra.mxu0 %v1069
    %2547 = vmatprep.mubr.f32.mxu0 %v420
    %2548 = vmatmul.mubr.f32.gmra.mxu0 %v419
    %v2549 = vpop.f32.mrf.mxu0
    %v2550 = vadd.f32 %v2479, %v2549
    %v2551 = vpop.f32.mrf.mxu0
    %v2552 = vadd.f32 %v2481, %v2551
    %2553 = vdwg.mxu0
    %2554 = vmatprep.subr.mxu0 %v1318
    %2555 = vmatpush1.msra.mxu0 %v1317
    %2556 = vmatprep.subr.mxu0 %v1310
    %2557 = vmatpush1.msra.mxu0 %v1309
    %2558 = vmatprep.subr.mxu0 %v1302
    %2559 = vmatpush1.msra.mxu0 %v1301
    %2560 = vmatprep.subr.mxu0 %v1294
    %2561 = vmatpush1.msra.mxu0 %v1293
    %2562 = vmatprep.subr.mxu0 %v1286
    %2563 = vmatpush1.msra.mxu0 %v1285
    %2564 = vmatprep.subr.mxu0 %v1278
    %2565 = vmatpush1.msra.mxu0 %v1277
    %2566 = vmatprep.subr.mxu0 %v1270
    %2567 = vmatpush1.msra.mxu0 %v1269
    %2568 = vmatprep.subr.mxu0 %v1262
    %2569 = vmatpush1.msra.mxu0 %v1261
    %2570 = vmatprep.subr.mxu0 %v1254
    %2571 = vmatpush1.msra.mxu0 %v1253
    %2572 = vmatprep.subr.mxu0 %v1246
    %2573 = vmatpush1.msra.mxu0 %v1245
    %2574 = vmatprep.subr.mxu0 %v1238
    %2575 = vmatpush1.msra.mxu0 %v1237
    %2576 = vmatprep.subr.mxu0 %v1230
    %2577 = vmatpush1.msra.mxu0 %v1229
    %2578 = vmatprep.subr.mxu0 %v1222
    %2579 = vmatpush1.msra.mxu0 %v1221
    %2580 = vmatprep.subr.mxu0 %v1214
    %2581 = vmatpush1.msra.mxu0 %v1213
    %2582 = vmatprep.subr.mxu0 %v1206
    %2583 = vmatpush1.msra.mxu0 %v1205
    %2584 = vmatprep.subr.mxu0 %v1198
    %2585 = vmatpush1.msra.mxu0 %v1197
    %2586 = vmatprep.subr.mxu0 %v1446
    %2587 = vmatpush2.msra.mxu0 %v1445
    %2588 = vmatprep.subr.mxu0 %v1438
    %2589 = vmatpush2.msra.mxu0 %v1437
    %2590 = vmatprep.subr.mxu0 %v1430
    %2591 = vmatpush2.msra.mxu0 %v1429
    %2592 = vmatprep.subr.mxu0 %v1422
    %2593 = vmatpush2.msra.mxu0 %v1421
    %2594 = vmatprep.subr.mxu0 %v1414
    %2595 = vmatpush2.msra.mxu0 %v1413
    %2596 = vmatprep.subr.mxu0 %v1406
    %2597 = vmatpush2.msra.mxu0 %v1405
    %2598 = vmatprep.subr.mxu0 %v1398
    %2599 = vmatpush2.msra.mxu0 %v1397
    %2600 = vmatprep.subr.mxu0 %v1390
    %2601 = vmatpush2.msra.mxu0 %v1389
    %2602 = vmatprep.subr.mxu0 %v1382
    %2603 = vmatpush2.msra.mxu0 %v1381
    %2604 = vmatprep.subr.mxu0 %v1374
    %2605 = vmatpush2.msra.mxu0 %v1373
    %2606 = vmatprep.subr.mxu0 %v1366
    %2607 = vmatpush2.msra.mxu0 %v1365
    %2608 = vmatprep.subr.mxu0 %v1358
    %2609 = vmatpush2.msra.mxu0 %v1357
    %2610 = vmatprep.subr.mxu0 %v1350
    %2611 = vmatpush2.msra.mxu0 %v1349
    %2612 = vmatprep.subr.mxu0 %v1342
    %2613 = vmatpush2.msra.mxu0 %v1341
    %2614 = vmatprep.subr.mxu0 %v1334
    %2615 = vmatpush2.msra.mxu0 %v1333
    %2616 = vmatprep.subr.mxu0 %v1326
    %2617 = vmatpush2.msra.mxu0 %v1325
    %2618 = vmatprep.mubr.f32.mxu0 %v422
    %2619 = vmatmul.mubr.f32.gmra.mxu0 %v421
    %v2620 = vpop.f32.mrf.mxu0
    %v2621 = vadd.f32 %v2550, %v2620
    %v2622 = vpop.f32.mrf.mxu0
    %v2623 = vadd.f32 %v2552, %v2622
    %2624 = vdwg.mxu0
    %v2625 = vmax.f32 %v1769, 0.0
    %v2626 = vmax.f32 %v1771, 0.0
    %v2627 = vmax.f32 %v2053, 0.0
    %v2628 = vmax.f32 %v2055, 0.0
    %v2629 = vmax.f32 %v2337, 0.0
    %v2630 = vmax.f32 %v2339, 0.0
    %v2631 = vmax.f32 %v2621, 0.0
    %v2632 = vmax.f32 %v2623, 0.0
    %s2633 = smul.u32 8, 128
    %s2634 = smul.u32 %s2633, 8
    %s2635 = sshll.u32 %s2634, 4
    %2636 = dma.done [#allocation4], %s2635
    %v2637 = vld [vmem:[#allocation2] sm:$0xff]
    %v2638 = vld [vmem:[#allocation2 + $0x8] sm:$0xff]
    %v2639 = vld [vmem:[#allocation2 + $0x10] sm:$0xff]
    %v2640 = vld [vmem:[#allocation2 + $0x18] sm:$0xff]
    %v2641 = vld [vmem:[#allocation2 + $0x20] sm:$0xff]
    %v2642 = vld [vmem:[#allocation2 + $0x28] sm:$0xff]
    %v2643 = vld [vmem:[#allocation2 + $0x30] sm:$0xff]
    %v2644 = vld [vmem:[#allocation2 + $0x38] sm:$0xff]
    %v2645 = vld [vmem:[#allocation2 + $0x40] sm:$0xff]
    %v2646 = vld [vmem:[#allocation2 + $0x48] sm:$0xff]
    %v2647 = vld [vmem:[#allocation2 + $0x50] sm:$0xff]
    %v2648 = vld [vmem:[#allocation2 + $0x58] sm:$0xff]
    %v2649 = vld [vmem:[#allocation2 + $0x60] sm:$0xff]
    %v2650 = vld [vmem:[#allocation2 + $0x68] sm:$0xff]
    %v2651 = vld [vmem:[#allocation2 + $0x70] sm:$0xff]
    %v2652 = vld [vmem:[#allocation2 + $0x78] sm:$0xff]
    %v2653 = vld [vmem:[#allocation2 + $0x80] sm:$0xff]
    %v2654 = vld [vmem:[#allocation2 + $0x88] sm:$0xff]
    %v2655 = vld [vmem:[#allocation2 + $0x90] sm:$0xff]
    %v2656 = vld [vmem:[#allocation2 + $0x98] sm:$0xff]
    %v2657 = vld [vmem:[#allocation2 + $0xa0] sm:$0xff]
    %v2658 = vld [vmem:[#allocation2 + $0xa8] sm:$0xff]
    %v2659 = vld [vmem:[#allocation2 + $0xb0] sm:$0xff]
    %v2660 = vld [vmem:[#allocation2 + $0xb8] sm:$0xff]
    %v2661 = vld [vmem:[#allocation2 + $0xc0] sm:$0xff]
    %v2662 = vld [vmem:[#allocation2 + $0xc8] sm:$0xff]
    %v2663 = vld [vmem:[#allocation2 + $0xd0] sm:$0xff]
    %v2664 = vld [vmem:[#allocation2 + $0xd8] sm:$0xff]
    %v2665 = vld [vmem:[#allocation2 + $0xe0] sm:$0xff]
    %v2666 = vld [vmem:[#allocation2 + $0xe8] sm:$0xff]
    %v2667 = vld [vmem:[#allocation2 + $0xf0] sm:$0xff]
    %v2668 = vld [vmem:[#allocation2 + $0xf8] sm:$0xff]
    %v2669 = vld [vmem:[#allocation2 + $0x100] sm:$0xff]
    %v2670 = vld [vmem:[#allocation2 + $0x108] sm:$0xff]
    %v2671 = vld [vmem:[#allocation2 + $0x110] sm:$0xff]
    %v2672 = vld [vmem:[#allocation2 + $0x118] sm:$0xff]
    %v2673 = vld [vmem:[#allocation2 + $0x120] sm:$0xff]
    %v2674 = vld [vmem:[#allocation2 + $0x128] sm:$0xff]
    %v2675 = vld [vmem:[#allocation2 + $0x130] sm:$0xff]
    %v2676 = vld [vmem:[#allocation2 + $0x138] sm:$0xff]
    %v2677 = vld [vmem:[#allocation2 + $0x140] sm:$0xff]
    %v2678 = vld [vmem:[#allocation2 + $0x148] sm:$0xff]
    %v2679 = vld [vmem:[#allocation2 + $0x150] sm:$0xff]
    %v2680 = vld [vmem:[#allocation2 + $0x158] sm:$0xff]
    %v2681 = vld [vmem:[#allocation2 + $0x160] sm:$0xff]
    %v2682 = vld [vmem:[#allocation2 + $0x168] sm:$0xff]
    %v2683 = vld [vmem:[#allocation2 + $0x170] sm:$0xff]
    %v2684 = vld [vmem:[#allocation2 + $0x178] sm:$0xff]
    %v2685 = vld [vmem:[#allocation2 + $0x180] sm:$0xff]
    %v2686 = vld [vmem:[#allocation2 + $0x188] sm:$0xff]
    %v2687 = vld [vmem:[#allocation2 + $0x190] sm:$0xff]
    %v2688 = vld [vmem:[#allocation2 + $0x198] sm:$0xff]
    %v2689 = vld [vmem:[#allocation2 + $0x1a0] sm:$0xff]
    %v2690 = vld [vmem:[#allocation2 + $0x1a8] sm:$0xff]
    %v2691 = vld [vmem:[#allocation2 + $0x1b0] sm:$0xff]
    %v2692 = vld [vmem:[#allocation2 + $0x1b8] sm:$0xff]
    %v2693 = vld [vmem:[#allocation2 + $0x1c0] sm:$0xff]
    %v2694 = vld [vmem:[#allocation2 + $0x1c8] sm:$0xff]
    %v2695 = vld [vmem:[#allocation2 + $0x1d0] sm:$0xff]
    %v2696 = vld [vmem:[#allocation2 + $0x1d8] sm:$0xff]
    %v2697 = vld [vmem:[#allocation2 + $0x1e0] sm:$0xff]
    %v2698 = vld [vmem:[#allocation2 + $0x1e8] sm:$0xff]
    %v2699 = vld [vmem:[#allocation2 + $0x1f0] sm:$0xff]
    %v2700 = vld [vmem:[#allocation2 + $0x1f8] sm:$0xff]
    %v2701 = vld [vmem:[#allocation2 + $0x200] sm:$0xff]
    %v2702 = vld [vmem:[#allocation2 + $0x208] sm:$0xff]
    %v2703 = vld [vmem:[#allocation2 + $0x210] sm:$0xff]
    %v2704 = vld [vmem:[#allocation2 + $0x218] sm:$0xff]
    %v2705 = vld [vmem:[#allocation2 + $0x220] sm:$0xff]
    %v2706 = vld [vmem:[#allocation2 + $0x228] sm:$0xff]
    %v2707 = vld [vmem:[#allocation2 + $0x230] sm:$0xff]
    %v2708 = vld [vmem:[#allocation2 + $0x238] sm:$0xff]
    %v2709 = vld [vmem:[#allocation2 + $0x240] sm:$0xff]
    %v2710 = vld [vmem:[#allocation2 + $0x248] sm:$0xff]
    %v2711 = vld [vmem:[#allocation2 + $0x250] sm:$0xff]
    %v2712 = vld [vmem:[#allocation2 + $0x258] sm:$0xff]
    %v2713 = vld [vmem:[#allocation2 + $0x260] sm:$0xff]
    %v2714 = vld [vmem:[#allocation2 + $0x268] sm:$0xff]
    %v2715 = vld [vmem:[#allocation2 + $0x270] sm:$0xff]
    %v2716 = vld [vmem:[#allocation2 + $0x278] sm:$0xff]
    %v2717 = vld [vmem:[#allocation2 + $0x280] sm:$0xff]
    %v2718 = vld [vmem:[#allocation2 + $0x288] sm:$0xff]
    %v2719 = vld [vmem:[#allocation2 + $0x290] sm:$0xff]
    %v2720 = vld [vmem:[#allocation2 + $0x298] sm:$0xff]
    %v2721 = vld [vmem:[#allocation2 + $0x2a0] sm:$0xff]
    %v2722 = vld [vmem:[#allocation2 + $0x2a8] sm:$0xff]
    %v2723 = vld [vmem:[#allocation2 + $0x2b0] sm:$0xff]
    %v2724 = vld [vmem:[#allocation2 + $0x2b8] sm:$0xff]
    %v2725 = vld [vmem:[#allocation2 + $0x2c0] sm:$0xff]
    %v2726 = vld [vmem:[#allocation2 + $0x2c8] sm:$0xff]
    %v2727 = vld [vmem:[#allocation2 + $0x2d0] sm:$0xff]
    %v2728 = vld [vmem:[#allocation2 + $0x2d8] sm:$0xff]
    %v2729 = vld [vmem:[#allocation2 + $0x2e0] sm:$0xff]
    %v2730 = vld [vmem:[#allocation2 + $0x2e8] sm:$0xff]
    %v2731 = vld [vmem:[#allocation2 + $0x2f0] sm:$0xff]
    %v2732 = vld [vmem:[#allocation2 + $0x2f8] sm:$0xff]
    %v2733 = vld [vmem:[#allocation2 + $0x300] sm:$0xff]
    %v2734 = vld [vmem:[#allocation2 + $0x308] sm:$0xff]
    %v2735 = vld [vmem:[#allocation2 + $0x310] sm:$0xff]
    %v2736 = vld [vmem:[#allocation2 + $0x318] sm:$0xff]
    %v2737 = vld [vmem:[#allocation2 + $0x320] sm:$0xff]
    %v2738 = vld [vmem:[#allocation2 + $0x328] sm:$0xff]
    %v2739 = vld [vmem:[#allocation2 + $0x330] sm:$0xff]
    %v2740 = vld [vmem:[#allocation2 + $0x338] sm:$0xff]
    %v2741 = vld [vmem:[#allocation2 + $0x340] sm:$0xff]
    %v2742 = vld [vmem:[#allocation2 + $0x348] sm:$0xff]
    %v2743 = vld [vmem:[#allocation2 + $0x350] sm:$0xff]
    %v2744 = vld [vmem:[#allocation2 + $0x358] sm:$0xff]
    %v2745 = vld [vmem:[#allocation2 + $0x360] sm:$0xff]
    %v2746 = vld [vmem:[#allocation2 + $0x368] sm:$0xff]
    %v2747 = vld [vmem:[#allocation2 + $0x370] sm:$0xff]
    %v2748 = vld [vmem:[#allocation2 + $0x378] sm:$0xff]
    %v2749 = vld [vmem:[#allocation2 + $0x380] sm:$0xff]
    %v2750 = vld [vmem:[#allocation2 + $0x388] sm:$0xff]
    %v2751 = vld [vmem:[#allocation2 + $0x390] sm:$0xff]
    %v2752 = vld [vmem:[#allocation2 + $0x398] sm:$0xff]
    %v2753 = vld [vmem:[#allocation2 + $0x3a0] sm:$0xff]
    %v2754 = vld [vmem:[#allocation2 + $0x3a8] sm:$0xff]
    %v2755 = vld [vmem:[#allocation2 + $0x3b0] sm:$0xff]
    %v2756 = vld [vmem:[#allocation2 + $0x3b8] sm:$0xff]
    %v2757 = vld [vmem:[#allocation2 + $0x3c0] sm:$0xff]
    %v2758 = vld [vmem:[#allocation2 + $0x3c8] sm:$0xff]
    %v2759 = vld [vmem:[#allocation2 + $0x3d0] sm:$0xff]
    %v2760 = vld [vmem:[#allocation2 + $0x3d8] sm:$0xff]
    %v2761 = vld [vmem:[#allocation2 + $0x3e0] sm:$0xff]
    %v2762 = vld [vmem:[#allocation2 + $0x3e8] sm:$0xff]
    %v2763 = vld [vmem:[#allocation2 + $0x3f0] sm:$0xff]
    %v2764 = vld [vmem:[#allocation2 + $0x3f8] sm:$0xff]
    %v2765 = vld [vmem:[#allocation2 + $0x400] sm:$0xff]
    %v2766 = vld [vmem:[#allocation2 + $0x408] sm:$0xff]
    %v2767 = vld [vmem:[#allocation2 + $0x410] sm:$0xff]
    %v2768 = vld [vmem:[#allocation2 + $0x418] sm:$0xff]
    %v2769 = vld [vmem:[#allocation2 + $0x420] sm:$0xff]
    %v2770 = vld [vmem:[#allocation2 + $0x428] sm:$0xff]
    %v2771 = vld [vmem:[#allocation2 + $0x430] sm:$0xff]
    %v2772 = vld [vmem:[#allocation2 + $0x438] sm:$0xff]
    %v2773 = vld [vmem:[#allocation2 + $0x440] sm:$0xff]
    %v2774 = vld [vmem:[#allocation2 + $0x448] sm:$0xff]
    %v2775 = vld [vmem:[#allocation2 + $0x450] sm:$0xff]
    %v2776 = vld [vmem:[#allocation2 + $0x458] sm:$0xff]
    %v2777 = vld [vmem:[#allocation2 + $0x460] sm:$0xff]
    %v2778 = vld [vmem:[#allocation2 + $0x468] sm:$0xff]
    %v2779 = vld [vmem:[#allocation2 + $0x470] sm:$0xff]
    %v2780 = vld [vmem:[#allocation2 + $0x478] sm:$0xff]
    %v2781 = vld [vmem:[#allocation2 + $0x480] sm:$0xff]
    %v2782 = vld [vmem:[#allocation2 + $0x488] sm:$0xff]
    %v2783 = vld [vmem:[#allocation2 + $0x490] sm:$0xff]
    %v2784 = vld [vmem:[#allocation2 + $0x498] sm:$0xff]
    %v2785 = vld [vmem:[#allocation2 + $0x4a0] sm:$0xff]
    %v2786 = vld [vmem:[#allocation2 + $0x4a8] sm:$0xff]
    %v2787 = vld [vmem:[#allocation2 + $0x4b0] sm:$0xff]
    %v2788 = vld [vmem:[#allocation2 + $0x4b8] sm:$0xff]
    %v2789 = vld [vmem:[#allocation2 + $0x4c0] sm:$0xff]
    %v2790 = vld [vmem:[#allocation2 + $0x4c8] sm:$0xff]
    %v2791 = vld [vmem:[#allocation2 + $0x4d0] sm:$0xff]
    %v2792 = vld [vmem:[#allocation2 + $0x4d8] sm:$0xff]
    %v2793 = vld [vmem:[#allocation2 + $0x4e0] sm:$0xff]
    %v2794 = vld [vmem:[#allocation2 + $0x4e8] sm:$0xff]
    %v2795 = vld [vmem:[#allocation2 + $0x4f0] sm:$0xff]
    %v2796 = vld [vmem:[#allocation2 + $0x4f8] sm:$0xff]
    %v2797 = vld [vmem:[#allocation2 + $0x500] sm:$0xff]
    %v2798 = vld [vmem:[#allocation2 + $0x508] sm:$0xff]
    %v2799 = vld [vmem:[#allocation2 + $0x510] sm:$0xff]
    %v2800 = vld [vmem:[#allocation2 + $0x518] sm:$0xff]
    %v2801 = vld [vmem:[#allocation2 + $0x520] sm:$0xff]
    %v2802 = vld [vmem:[#allocation2 + $0x528] sm:$0xff]
    %v2803 = vld [vmem:[#allocation2 + $0x530] sm:$0xff]
    %v2804 = vld [vmem:[#allocation2 + $0x538] sm:$0xff]
    %v2805 = vld [vmem:[#allocation2 + $0x540] sm:$0xff]
    %v2806 = vld [vmem:[#allocation2 + $0x548] sm:$0xff]
    %v2807 = vld [vmem:[#allocation2 + $0x550] sm:$0xff]
    %v2808 = vld [vmem:[#allocation2 + $0x558] sm:$0xff]
    %v2809 = vld [vmem:[#allocation2 + $0x560] sm:$0xff]
    %v2810 = vld [vmem:[#allocation2 + $0x568] sm:$0xff]
    %v2811 = vld [vmem:[#allocation2 + $0x570] sm:$0xff]
    %v2812 = vld [vmem:[#allocation2 + $0x578] sm:$0xff]
    %v2813 = vld [vmem:[#allocation2 + $0x580] sm:$0xff]
    %v2814 = vld [vmem:[#allocation2 + $0x588] sm:$0xff]
    %v2815 = vld [vmem:[#allocation2 + $0x590] sm:$0xff]
    %v2816 = vld [vmem:[#allocation2 + $0x598] sm:$0xff]
    %v2817 = vld [vmem:[#allocation2 + $0x5a0] sm:$0xff]
    %v2818 = vld [vmem:[#allocation2 + $0x5a8] sm:$0xff]
    %v2819 = vld [vmem:[#allocation2 + $0x5b0] sm:$0xff]
    %v2820 = vld [vmem:[#allocation2 + $0x5b8] sm:$0xff]
    %v2821 = vld [vmem:[#allocation2 + $0x5c0] sm:$0xff]
    %v2822 = vld [vmem:[#allocation2 + $0x5c8] sm:$0xff]
    %v2823 = vld [vmem:[#allocation2 + $0x5d0] sm:$0xff]
    %v2824 = vld [vmem:[#allocation2 + $0x5d8] sm:$0xff]
    %v2825 = vld [vmem:[#allocation2 + $0x5e0] sm:$0xff]
    %v2826 = vld [vmem:[#allocation2 + $0x5e8] sm:$0xff]
    %v2827 = vld [vmem:[#allocation2 + $0x5f0] sm:$0xff]
    %v2828 = vld [vmem:[#allocation2 + $0x5f8] sm:$0xff]
    %v2829 = vld [vmem:[#allocation2 + $0x600] sm:$0xff]
    %v2830 = vld [vmem:[#allocation2 + $0x608] sm:$0xff]
    %v2831 = vld [vmem:[#allocation2 + $0x610] sm:$0xff]
    %v2832 = vld [vmem:[#allocation2 + $0x618] sm:$0xff]
    %v2833 = vld [vmem:[#allocation2 + $0x620] sm:$0xff]
    %v2834 = vld [vmem:[#allocation2 + $0x628] sm:$0xff]
    %v2835 = vld [vmem:[#allocation2 + $0x630] sm:$0xff]
    %v2836 = vld [vmem:[#allocation2 + $0x638] sm:$0xff]
    %v2837 = vld [vmem:[#allocation2 + $0x640] sm:$0xff]
    %v2838 = vld [vmem:[#allocation2 + $0x648] sm:$0xff]
    %v2839 = vld [vmem:[#allocation2 + $0x650] sm:$0xff]
    %v2840 = vld [vmem:[#allocation2 + $0x658] sm:$0xff]
    %v2841 = vld [vmem:[#allocation2 + $0x660] sm:$0xff]
    %v2842 = vld [vmem:[#allocation2 + $0x668] sm:$0xff]
    %v2843 = vld [vmem:[#allocation2 + $0x670] sm:$0xff]
    %v2844 = vld [vmem:[#allocation2 + $0x678] sm:$0xff]
    %v2845 = vld [vmem:[#allocation2 + $0x680] sm:$0xff]
    %v2846 = vld [vmem:[#allocation2 + $0x688] sm:$0xff]
    %v2847 = vld [vmem:[#allocation2 + $0x690] sm:$0xff]
    %v2848 = vld [vmem:[#allocation2 + $0x698] sm:$0xff]
    %v2849 = vld [vmem:[#allocation2 + $0x6a0] sm:$0xff]
    %v2850 = vld [vmem:[#allocation2 + $0x6a8] sm:$0xff]
    %v2851 = vld [vmem:[#allocation2 + $0x6b0] sm:$0xff]
    %v2852 = vld [vmem:[#allocation2 + $0x6b8] sm:$0xff]
    %v2853 = vld [vmem:[#allocation2 + $0x6c0] sm:$0xff]
    %v2854 = vld [vmem:[#allocation2 + $0x6c8] sm:$0xff]
    %v2855 = vld [vmem:[#allocation2 + $0x6d0] sm:$0xff]
    %v2856 = vld [vmem:[#allocation2 + $0x6d8] sm:$0xff]
    %v2857 = vld [vmem:[#allocation2 + $0x6e0] sm:$0xff]
    %v2858 = vld [vmem:[#allocation2 + $0x6e8] sm:$0xff]
    %v2859 = vld [vmem:[#allocation2 + $0x6f0] sm:$0xff]
    %v2860 = vld [vmem:[#allocation2 + $0x6f8] sm:$0xff]
    %v2861 = vld [vmem:[#allocation2 + $0x700] sm:$0xff]
    %v2862 = vld [vmem:[#allocation2 + $0x708] sm:$0xff]
    %v2863 = vld [vmem:[#allocation2 + $0x710] sm:$0xff]
    %v2864 = vld [vmem:[#allocation2 + $0x718] sm:$0xff]
    %v2865 = vld [vmem:[#allocation2 + $0x720] sm:$0xff]
    %v2866 = vld [vmem:[#allocation2 + $0x728] sm:$0xff]
    %v2867 = vld [vmem:[#allocation2 + $0x730] sm:$0xff]
    %v2868 = vld [vmem:[#allocation2 + $0x738] sm:$0xff]
    %v2869 = vld [vmem:[#allocation2 + $0x740] sm:$0xff]
    %v2870 = vld [vmem:[#allocation2 + $0x748] sm:$0xff]
    %v2871 = vld [vmem:[#allocation2 + $0x750] sm:$0xff]
    %v2872 = vld [vmem:[#allocation2 + $0x758] sm:$0xff]
    %v2873 = vld [vmem:[#allocation2 + $0x760] sm:$0xff]
    %v2874 = vld [vmem:[#allocation2 + $0x768] sm:$0xff]
    %v2875 = vld [vmem:[#allocation2 + $0x770] sm:$0xff]
    %v2876 = vld [vmem:[#allocation2 + $0x778] sm:$0xff]
    %v2877 = vld [vmem:[#allocation2 + $0x780] sm:$0xff]
    %v2878 = vld [vmem:[#allocation2 + $0x788] sm:$0xff]
    %v2879 = vld [vmem:[#allocation2 + $0x790] sm:$0xff]
    %v2880 = vld [vmem:[#allocation2 + $0x798] sm:$0xff]
    %v2881 = vld [vmem:[#allocation2 + $0x7a0] sm:$0xff]
    %v2882 = vld [vmem:[#allocation2 + $0x7a8] sm:$0xff]
    %v2883 = vld [vmem:[#allocation2 + $0x7b0] sm:$0xff]
    %v2884 = vld [vmem:[#allocation2 + $0x7b8] sm:$0xff]
    %v2885 = vld [vmem:[#allocation2 + $0x7c0] sm:$0xff]
    %v2886 = vld [vmem:[#allocation2 + $0x7c8] sm:$0xff]
    %v2887 = vld [vmem:[#allocation2 + $0x7d0] sm:$0xff]
    %v2888 = vld [vmem:[#allocation2 + $0x7d8] sm:$0xff]
    %v2889 = vld [vmem:[#allocation2 + $0x7e0] sm:$0xff]
    %v2890 = vld [vmem:[#allocation2 + $0x7e8] sm:$0xff]
    %v2891 = vld [vmem:[#allocation2 + $0x7f0] sm:$0xff]
    %v2892 = vld [vmem:[#allocation2 + $0x7f8] sm:$0xff]
    %v2893 = vld [vmem:[#allocation2 + $0x800] sm:$0xff]
    %v2894 = vld [vmem:[#allocation2 + $0x808] sm:$0xff]
    %v2895 = vld [vmem:[#allocation2 + $0x810] sm:$0xff]
    %v2896 = vld [vmem:[#allocation2 + $0x818] sm:$0xff]
    %v2897 = vld [vmem:[#allocation2 + $0x820] sm:$0xff]
    %v2898 = vld [vmem:[#allocation2 + $0x828] sm:$0xff]
    %v2899 = vld [vmem:[#allocation2 + $0x830] sm:$0xff]
    %v2900 = vld [vmem:[#allocation2 + $0x838] sm:$0xff]
    %v2901 = vld [vmem:[#allocation2 + $0x840] sm:$0xff]
    %v2902 = vld [vmem:[#allocation2 + $0x848] sm:$0xff]
    %v2903 = vld [vmem:[#allocation2 + $0x850] sm:$0xff]
    %v2904 = vld [vmem:[#allocation2 + $0x858] sm:$0xff]
    %v2905 = vld [vmem:[#allocation2 + $0x860] sm:$0xff]
    %v2906 = vld [vmem:[#allocation2 + $0x868] sm:$0xff]
    %v2907 = vld [vmem:[#allocation2 + $0x870] sm:$0xff]
    %v2908 = vld [vmem:[#allocation2 + $0x878] sm:$0xff]
    %v2909 = vld [vmem:[#allocation2 + $0x880] sm:$0xff]
    %v2910 = vld [vmem:[#allocation2 + $0x888] sm:$0xff]
    %v2911 = vld [vmem:[#allocation2 + $0x890] sm:$0xff]
    %v2912 = vld [vmem:[#allocation2 + $0x898] sm:$0xff]
    %v2913 = vld [vmem:[#allocation2 + $0x8a0] sm:$0xff]
    %v2914 = vld [vmem:[#allocation2 + $0x8a8] sm:$0xff]
    %v2915 = vld [vmem:[#allocation2 + $0x8b0] sm:$0xff]
    %v2916 = vld [vmem:[#allocation2 + $0x8b8] sm:$0xff]
    %v2917 = vld [vmem:[#allocation2 + $0x8c0] sm:$0xff]
    %v2918 = vld [vmem:[#allocation2 + $0x8c8] sm:$0xff]
    %v2919 = vld [vmem:[#allocation2 + $0x8d0] sm:$0xff]
    %v2920 = vld [vmem:[#allocation2 + $0x8d8] sm:$0xff]
    %v2921 = vld [vmem:[#allocation2 + $0x8e0] sm:$0xff]
    %v2922 = vld [vmem:[#allocation2 + $0x8e8] sm:$0xff]
    %v2923 = vld [vmem:[#allocation2 + $0x8f0] sm:$0xff]
    %v2924 = vld [vmem:[#allocation2 + $0x8f8] sm:$0xff]
    %v2925 = vld [vmem:[#allocation2 + $0x900] sm:$0xff]
    %v2926 = vld [vmem:[#allocation2 + $0x908] sm:$0xff]
    %v2927 = vld [vmem:[#allocation2 + $0x910] sm:$0xff]
    %v2928 = vld [vmem:[#allocation2 + $0x918] sm:$0xff]
    %v2929 = vld [vmem:[#allocation2 + $0x920] sm:$0xff]
    %v2930 = vld [vmem:[#allocation2 + $0x928] sm:$0xff]
    %v2931 = vld [vmem:[#allocation2 + $0x930] sm:$0xff]
    %v2932 = vld [vmem:[#allocation2 + $0x938] sm:$0xff]
    %v2933 = vld [vmem:[#allocation2 + $0x940] sm:$0xff]
    %v2934 = vld [vmem:[#allocation2 + $0x948] sm:$0xff]
    %v2935 = vld [vmem:[#allocation2 + $0x950] sm:$0xff]
    %v2936 = vld [vmem:[#allocation2 + $0x958] sm:$0xff]
    %v2937 = vld [vmem:[#allocation2 + $0x960] sm:$0xff]
    %v2938 = vld [vmem:[#allocation2 + $0x968] sm:$0xff]
    %v2939 = vld [vmem:[#allocation2 + $0x970] sm:$0xff]
    %v2940 = vld [vmem:[#allocation2 + $0x978] sm:$0xff]
    %v2941 = vld [vmem:[#allocation2 + $0x980] sm:$0xff]
    %v2942 = vld [vmem:[#allocation2 + $0x988] sm:$0xff]
    %v2943 = vld [vmem:[#allocation2 + $0x990] sm:$0xff]
    %v2944 = vld [vmem:[#allocation2 + $0x998] sm:$0xff]
    %v2945 = vld [vmem:[#allocation2 + $0x9a0] sm:$0xff]
    %v2946 = vld [vmem:[#allocation2 + $0x9a8] sm:$0xff]
    %v2947 = vld [vmem:[#allocation2 + $0x9b0] sm:$0xff]
    %v2948 = vld [vmem:[#allocation2 + $0x9b8] sm:$0xff]
    %v2949 = vld [vmem:[#allocation2 + $0x9c0] sm:$0xff]
    %v2950 = vld [vmem:[#allocation2 + $0x9c8] sm:$0xff]
    %v2951 = vld [vmem:[#allocation2 + $0x9d0] sm:$0xff]
    %v2952 = vld [vmem:[#allocation2 + $0x9d8] sm:$0xff]
    %v2953 = vld [vmem:[#allocation2 + $0x9e0] sm:$0xff]
    %v2954 = vld [vmem:[#allocation2 + $0x9e8] sm:$0xff]
    %v2955 = vld [vmem:[#allocation2 + $0x9f0] sm:$0xff]
    %v2956 = vld [vmem:[#allocation2 + $0x9f8] sm:$0xff]
    %v2957 = vld [vmem:[#allocation2 + $0xa00] sm:$0xff]
    %v2958 = vld [vmem:[#allocation2 + $0xa08] sm:$0xff]
    %v2959 = vld [vmem:[#allocation2 + $0xa10] sm:$0xff]
    %v2960 = vld [vmem:[#allocation2 + $0xa18] sm:$0xff]
    %v2961 = vld [vmem:[#allocation2 + $0xa20] sm:$0xff]
    %v2962 = vld [vmem:[#allocation2 + $0xa28] sm:$0xff]
    %v2963 = vld [vmem:[#allocation2 + $0xa30] sm:$0xff]
    %v2964 = vld [vmem:[#allocation2 + $0xa38] sm:$0xff]
    %v2965 = vld [vmem:[#allocation2 + $0xa40] sm:$0xff]
    %v2966 = vld [vmem:[#allocation2 + $0xa48] sm:$0xff]
    %v2967 = vld [vmem:[#allocation2 + $0xa50] sm:$0xff]
    %v2968 = vld [vmem:[#allocation2 + $0xa58] sm:$0xff]
    %v2969 = vld [vmem:[#allocation2 + $0xa60] sm:$0xff]
    %v2970 = vld [vmem:[#allocation2 + $0xa68] sm:$0xff]
    %v2971 = vld [vmem:[#allocation2 + $0xa70] sm:$0xff]
    %v2972 = vld [vmem:[#allocation2 + $0xa78] sm:$0xff]
    %v2973 = vld [vmem:[#allocation2 + $0xa80] sm:$0xff]
    %v2974 = vld [vmem:[#allocation2 + $0xa88] sm:$0xff]
    %v2975 = vld [vmem:[#allocation2 + $0xa90] sm:$0xff]
    %v2976 = vld [vmem:[#allocation2 + $0xa98] sm:$0xff]
    %v2977 = vld [vmem:[#allocation2 + $0xaa0] sm:$0xff]
    %v2978 = vld [vmem:[#allocation2 + $0xaa8] sm:$0xff]
    %v2979 = vld [vmem:[#allocation2 + $0xab0] sm:$0xff]
    %v2980 = vld [vmem:[#allocation2 + $0xab8] sm:$0xff]
    %v2981 = vld [vmem:[#allocation2 + $0xac0] sm:$0xff]
    %v2982 = vld [vmem:[#allocation2 + $0xac8] sm:$0xff]
    %v2983 = vld [vmem:[#allocation2 + $0xad0] sm:$0xff]
    %v2984 = vld [vmem:[#allocation2 + $0xad8] sm:$0xff]
    %v2985 = vld [vmem:[#allocation2 + $0xae0] sm:$0xff]
    %v2986 = vld [vmem:[#allocation2 + $0xae8] sm:$0xff]
    %v2987 = vld [vmem:[#allocation2 + $0xaf0] sm:$0xff]
    %v2988 = vld [vmem:[#allocation2 + $0xaf8] sm:$0xff]
    %v2989 = vld [vmem:[#allocation2 + $0xb00] sm:$0xff]
    %v2990 = vld [vmem:[#allocation2 + $0xb08] sm:$0xff]
    %v2991 = vld [vmem:[#allocation2 + $0xb10] sm:$0xff]
    %v2992 = vld [vmem:[#allocation2 + $0xb18] sm:$0xff]
    %v2993 = vld [vmem:[#allocation2 + $0xb20] sm:$0xff]
    %v2994 = vld [vmem:[#allocation2 + $0xb28] sm:$0xff]
    %v2995 = vld [vmem:[#allocation2 + $0xb30] sm:$0xff]
    %v2996 = vld [vmem:[#allocation2 + $0xb38] sm:$0xff]
    %v2997 = vld [vmem:[#allocation2 + $0xb40] sm:$0xff]
    %v2998 = vld [vmem:[#allocation2 + $0xb48] sm:$0xff]
    %v2999 = vld [vmem:[#allocation2 + $0xb50] sm:$0xff]
    %v3000 = vld [vmem:[#allocation2 + $0xb58] sm:$0xff]
    %v3001 = vld [vmem:[#allocation2 + $0xb60] sm:$0xff]
    %v3002 = vld [vmem:[#allocation2 + $0xb68] sm:$0xff]
    %v3003 = vld [vmem:[#allocation2 + $0xb70] sm:$0xff]
    %v3004 = vld [vmem:[#allocation2 + $0xb78] sm:$0xff]
    %v3005 = vld [vmem:[#allocation2 + $0xb80] sm:$0xff]
    %v3006 = vld [vmem:[#allocation2 + $0xb88] sm:$0xff]
    %v3007 = vld [vmem:[#allocation2 + $0xb90] sm:$0xff]
    %v3008 = vld [vmem:[#allocation2 + $0xb98] sm:$0xff]
    %v3009 = vld [vmem:[#allocation2 + $0xba0] sm:$0xff]
    %v3010 = vld [vmem:[#allocation2 + $0xba8] sm:$0xff]
    %v3011 = vld [vmem:[#allocation2 + $0xbb0] sm:$0xff]
    %v3012 = vld [vmem:[#allocation2 + $0xbb8] sm:$0xff]
    %v3013 = vld [vmem:[#allocation2 + $0xbc0] sm:$0xff]
    %v3014 = vld [vmem:[#allocation2 + $0xbc8] sm:$0xff]
    %v3015 = vld [vmem:[#allocation2 + $0xbd0] sm:$0xff]
    %v3016 = vld [vmem:[#allocation2 + $0xbd8] sm:$0xff]
    %v3017 = vld [vmem:[#allocation2 + $0xbe0] sm:$0xff]
    %v3018 = vld [vmem:[#allocation2 + $0xbe8] sm:$0xff]
    %v3019 = vld [vmem:[#allocation2 + $0xbf0] sm:$0xff]
    %v3020 = vld [vmem:[#allocation2 + $0xbf8] sm:$0xff]
    %v3021 = vld [vmem:[#allocation2 + $0xc00] sm:$0xff]
    %v3022 = vld [vmem:[#allocation2 + $0xc08] sm:$0xff]
    %v3023 = vld [vmem:[#allocation2 + $0xc10] sm:$0xff]
    %v3024 = vld [vmem:[#allocation2 + $0xc18] sm:$0xff]
    %v3025 = vld [vmem:[#allocation2 + $0xc20] sm:$0xff]
    %v3026 = vld [vmem:[#allocation2 + $0xc28] sm:$0xff]
    %v3027 = vld [vmem:[#allocation2 + $0xc30] sm:$0xff]
    %v3028 = vld [vmem:[#allocation2 + $0xc38] sm:$0xff]
    %v3029 = vld [vmem:[#allocation2 + $0xc40] sm:$0xff]
    %v3030 = vld [vmem:[#allocation2 + $0xc48] sm:$0xff]
    %v3031 = vld [vmem:[#allocation2 + $0xc50] sm:$0xff]
    %v3032 = vld [vmem:[#allocation2 + $0xc58] sm:$0xff]
    %v3033 = vld [vmem:[#allocation2 + $0xc60] sm:$0xff]
    %v3034 = vld [vmem:[#allocation2 + $0xc68] sm:$0xff]
    %v3035 = vld [vmem:[#allocation2 + $0xc70] sm:$0xff]
    %v3036 = vld [vmem:[#allocation2 + $0xc78] sm:$0xff]
    %v3037 = vld [vmem:[#allocation2 + $0xc80] sm:$0xff]
    %v3038 = vld [vmem:[#allocation2 + $0xc88] sm:$0xff]
    %v3039 = vld [vmem:[#allocation2 + $0xc90] sm:$0xff]
    %v3040 = vld [vmem:[#allocation2 + $0xc98] sm:$0xff]
    %v3041 = vld [vmem:[#allocation2 + $0xca0] sm:$0xff]
    %v3042 = vld [vmem:[#allocation2 + $0xca8] sm:$0xff]
    %v3043 = vld [vmem:[#allocation2 + $0xcb0] sm:$0xff]
    %v3044 = vld [vmem:[#allocation2 + $0xcb8] sm:$0xff]
    %v3045 = vld [vmem:[#allocation2 + $0xcc0] sm:$0xff]
    %v3046 = vld [vmem:[#allocation2 + $0xcc8] sm:$0xff]
    %v3047 = vld [vmem:[#allocation2 + $0xcd0] sm:$0xff]
    %v3048 = vld [vmem:[#allocation2 + $0xcd8] sm:$0xff]
    %v3049 = vld [vmem:[#allocation2 + $0xce0] sm:$0xff]
    %v3050 = vld [vmem:[#allocation2 + $0xce8] sm:$0xff]
    %v3051 = vld [vmem:[#allocation2 + $0xcf0] sm:$0xff]
    %v3052 = vld [vmem:[#allocation2 + $0xcf8] sm:$0xff]
    %v3053 = vld [vmem:[#allocation2 + $0xd00] sm:$0xff]
    %v3054 = vld [vmem:[#allocation2 + $0xd08] sm:$0xff]
    %v3055 = vld [vmem:[#allocation2 + $0xd10] sm:$0xff]
    %v3056 = vld [vmem:[#allocation2 + $0xd18] sm:$0xff]
    %v3057 = vld [vmem:[#allocation2 + $0xd20] sm:$0xff]
    %v3058 = vld [vmem:[#allocation2 + $0xd28] sm:$0xff]
    %v3059 = vld [vmem:[#allocation2 + $0xd30] sm:$0xff]
    %v3060 = vld [vmem:[#allocation2 + $0xd38] sm:$0xff]
    %v3061 = vld [vmem:[#allocation2 + $0xd40] sm:$0xff]
    %v3062 = vld [vmem:[#allocation2 + $0xd48] sm:$0xff]
    %v3063 = vld [vmem:[#allocation2 + $0xd50] sm:$0xff]
    %v3064 = vld [vmem:[#allocation2 + $0xd58] sm:$0xff]
    %v3065 = vld [vmem:[#allocation2 + $0xd60] sm:$0xff]
    %v3066 = vld [vmem:[#allocation2 + $0xd68] sm:$0xff]
    %v3067 = vld [vmem:[#allocation2 + $0xd70] sm:$0xff]
    %v3068 = vld [vmem:[#allocation2 + $0xd78] sm:$0xff]
    %v3069 = vld [vmem:[#allocation2 + $0xd80] sm:$0xff]
    %v3070 = vld [vmem:[#allocation2 + $0xd88] sm:$0xff]
    %v3071 = vld [vmem:[#allocation2 + $0xd90] sm:$0xff]
    %v3072 = vld [vmem:[#allocation2 + $0xd98] sm:$0xff]
    %v3073 = vld [vmem:[#allocation2 + $0xda0] sm:$0xff]
    %v3074 = vld [vmem:[#allocation2 + $0xda8] sm:$0xff]
    %v3075 = vld [vmem:[#allocation2 + $0xdb0] sm:$0xff]
    %v3076 = vld [vmem:[#allocation2 + $0xdb8] sm:$0xff]
    %v3077 = vld [vmem:[#allocation2 + $0xdc0] sm:$0xff]
    %v3078 = vld [vmem:[#allocation2 + $0xdc8] sm:$0xff]
    %v3079 = vld [vmem:[#allocation2 + $0xdd0] sm:$0xff]
    %v3080 = vld [vmem:[#allocation2 + $0xdd8] sm:$0xff]
    %v3081 = vld [vmem:[#allocation2 + $0xde0] sm:$0xff]
    %v3082 = vld [vmem:[#allocation2 + $0xde8] sm:$0xff]
    %v3083 = vld [vmem:[#allocation2 + $0xdf0] sm:$0xff]
    %v3084 = vld [vmem:[#allocation2 + $0xdf8] sm:$0xff]
    %v3085 = vld [vmem:[#allocation2 + $0xe00] sm:$0xff]
    %v3086 = vld [vmem:[#allocation2 + $0xe08] sm:$0xff]
    %v3087 = vld [vmem:[#allocation2 + $0xe10] sm:$0xff]
    %v3088 = vld [vmem:[#allocation2 + $0xe18] sm:$0xff]
    %v3089 = vld [vmem:[#allocation2 + $0xe20] sm:$0xff]
    %v3090 = vld [vmem:[#allocation2 + $0xe28] sm:$0xff]
    %v3091 = vld [vmem:[#allocation2 + $0xe30] sm:$0xff]
    %v3092 = vld [vmem:[#allocation2 + $0xe38] sm:$0xff]
    %v3093 = vld [vmem:[#allocation2 + $0xe40] sm:$0xff]
    %v3094 = vld [vmem:[#allocation2 + $0xe48] sm:$0xff]
    %v3095 = vld [vmem:[#allocation2 + $0xe50] sm:$0xff]
    %v3096 = vld [vmem:[#allocation2 + $0xe58] sm:$0xff]
    %v3097 = vld [vmem:[#allocation2 + $0xe60] sm:$0xff]
    %v3098 = vld [vmem:[#allocation2 + $0xe68] sm:$0xff]
    %v3099 = vld [vmem:[#allocation2 + $0xe70] sm:$0xff]
    %v3100 = vld [vmem:[#allocation2 + $0xe78] sm:$0xff]
    %v3101 = vld [vmem:[#allocation2 + $0xe80] sm:$0xff]
    %v3102 = vld [vmem:[#allocation2 + $0xe88] sm:$0xff]
    %v3103 = vld [vmem:[#allocation2 + $0xe90] sm:$0xff]
    %v3104 = vld [vmem:[#allocation2 + $0xe98] sm:$0xff]
    %v3105 = vld [vmem:[#allocation2 + $0xea0] sm:$0xff]
    %v3106 = vld [vmem:[#allocation2 + $0xea8] sm:$0xff]
    %v3107 = vld [vmem:[#allocation2 + $0xeb0] sm:$0xff]
    %v3108 = vld [vmem:[#allocation2 + $0xeb8] sm:$0xff]
    %v3109 = vld [vmem:[#allocation2 + $0xec0] sm:$0xff]
    %v3110 = vld [vmem:[#allocation2 + $0xec8] sm:$0xff]
    %v3111 = vld [vmem:[#allocation2 + $0xed0] sm:$0xff]
    %v3112 = vld [vmem:[#allocation2 + $0xed8] sm:$0xff]
    %v3113 = vld [vmem:[#allocation2 + $0xee0] sm:$0xff]
    %v3114 = vld [vmem:[#allocation2 + $0xee8] sm:$0xff]
    %v3115 = vld [vmem:[#allocation2 + $0xef0] sm:$0xff]
    %v3116 = vld [vmem:[#allocation2 + $0xef8] sm:$0xff]
    %v3117 = vld [vmem:[#allocation2 + $0xf00] sm:$0xff]
    %v3118 = vld [vmem:[#allocation2 + $0xf08] sm:$0xff]
    %v3119 = vld [vmem:[#allocation2 + $0xf10] sm:$0xff]
    %v3120 = vld [vmem:[#allocation2 + $0xf18] sm:$0xff]
    %v3121 = vld [vmem:[#allocation2 + $0xf20] sm:$0xff]
    %v3122 = vld [vmem:[#allocation2 + $0xf28] sm:$0xff]
    %v3123 = vld [vmem:[#allocation2 + $0xf30] sm:$0xff]
    %v3124 = vld [vmem:[#allocation2 + $0xf38] sm:$0xff]
    %v3125 = vld [vmem:[#allocation2 + $0xf40] sm:$0xff]
    %v3126 = vld [vmem:[#allocation2 + $0xf48] sm:$0xff]
    %v3127 = vld [vmem:[#allocation2 + $0xf50] sm:$0xff]
    %v3128 = vld [vmem:[#allocation2 + $0xf58] sm:$0xff]
    %v3129 = vld [vmem:[#allocation2 + $0xf60] sm:$0xff]
    %v3130 = vld [vmem:[#allocation2 + $0xf68] sm:$0xff]
    %v3131 = vld [vmem:[#allocation2 + $0xf70] sm:$0xff]
    %v3132 = vld [vmem:[#allocation2 + $0xf78] sm:$0xff]
    %v3133 = vld [vmem:[#allocation2 + $0xf80] sm:$0xff]
    %v3134 = vld [vmem:[#allocation2 + $0xf88] sm:$0xff]
    %v3135 = vld [vmem:[#allocation2 + $0xf90] sm:$0xff]
    %v3136 = vld [vmem:[#allocation2 + $0xf98] sm:$0xff]
    %v3137 = vld [vmem:[#allocation2 + $0xfa0] sm:$0xff]
    %v3138 = vld [vmem:[#allocation2 + $0xfa8] sm:$0xff]
    %v3139 = vld [vmem:[#allocation2 + $0xfb0] sm:$0xff]
    %v3140 = vld [vmem:[#allocation2 + $0xfb8] sm:$0xff]
    %v3141 = vld [vmem:[#allocation2 + $0xfc0] sm:$0xff]
    %v3142 = vld [vmem:[#allocation2 + $0xfc8] sm:$0xff]
    %v3143 = vld [vmem:[#allocation2 + $0xfd0] sm:$0xff]
    %v3144 = vld [vmem:[#allocation2 + $0xfd8] sm:$0xff]
    %v3145 = vld [vmem:[#allocation2 + $0xfe0] sm:$0xff]
    %v3146 = vld [vmem:[#allocation2 + $0xfe8] sm:$0xff]
    %v3147 = vld [vmem:[#allocation2 + $0xff0] sm:$0xff]
    %v3148 = vld [vmem:[#allocation2 + $0xff8] sm:$0xff]
    %v3149 = vld [vmem:[#allocation2 + $0x1000] sm:$0xff]
    %v3150 = vld [vmem:[#allocation2 + $0x1008] sm:$0xff]
    %v3151 = vld [vmem:[#allocation2 + $0x1010] sm:$0xff]
    %v3152 = vld [vmem:[#allocation2 + $0x1018] sm:$0xff]
    %v3153 = vld [vmem:[#allocation2 + $0x1020] sm:$0xff]
    %v3154 = vld [vmem:[#allocation2 + $0x1028] sm:$0xff]
    %v3155 = vld [vmem:[#allocation2 + $0x1030] sm:$0xff]
    %v3156 = vld [vmem:[#allocation2 + $0x1038] sm:$0xff]
    %v3157 = vld [vmem:[#allocation2 + $0x1040] sm:$0xff]
    %v3158 = vld [vmem:[#allocation2 + $0x1048] sm:$0xff]
    %v3159 = vld [vmem:[#allocation2 + $0x1050] sm:$0xff]
    %v3160 = vld [vmem:[#allocation2 + $0x1058] sm:$0xff]
    %v3161 = vld [vmem:[#allocation2 + $0x1060] sm:$0xff]
    %v3162 = vld [vmem:[#allocation2 + $0x1068] sm:$0xff]
    %v3163 = vld [vmem:[#allocation2 + $0x1070] sm:$0xff]
    %v3164 = vld [vmem:[#allocation2 + $0x1078] sm:$0xff]
    %v3165 = vld [vmem:[#allocation2 + $0x1080] sm:$0xff]
    %v3166 = vld [vmem:[#allocation2 + $0x1088] sm:$0xff]
    %v3167 = vld [vmem:[#allocation2 + $0x1090] sm:$0xff]
    %v3168 = vld [vmem:[#allocation2 + $0x1098] sm:$0xff]
    %v3169 = vld [vmem:[#allocation2 + $0x10a0] sm:$0xff]
    %v3170 = vld [vmem:[#allocation2 + $0x10a8] sm:$0xff]
    %v3171 = vld [vmem:[#allocation2 + $0x10b0] sm:$0xff]
    %v3172 = vld [vmem:[#allocation2 + $0x10b8] sm:$0xff]
    %v3173 = vld [vmem:[#allocation2 + $0x10c0] sm:$0xff]
    %v3174 = vld [vmem:[#allocation2 + $0x10c8] sm:$0xff]
    %v3175 = vld [vmem:[#allocation2 + $0x10d0] sm:$0xff]
    %v3176 = vld [vmem:[#allocation2 + $0x10d8] sm:$0xff]
    %v3177 = vld [vmem:[#allocation2 + $0x10e0] sm:$0xff]
    %v3178 = vld [vmem:[#allocation2 + $0x10e8] sm:$0xff]
    %v3179 = vld [vmem:[#allocation2 + $0x10f0] sm:$0xff]
    %v3180 = vld [vmem:[#allocation2 + $0x10f8] sm:$0xff]
    %v3181 = vld [vmem:[#allocation2 + $0x1100] sm:$0xff]
    %v3182 = vld [vmem:[#allocation2 + $0x1108] sm:$0xff]
    %v3183 = vld [vmem:[#allocation2 + $0x1110] sm:$0xff]
    %v3184 = vld [vmem:[#allocation2 + $0x1118] sm:$0xff]
    %v3185 = vld [vmem:[#allocation2 + $0x1120] sm:$0xff]
    %v3186 = vld [vmem:[#allocation2 + $0x1128] sm:$0xff]
    %v3187 = vld [vmem:[#allocation2 + $0x1130] sm:$0xff]
    %v3188 = vld [vmem:[#allocation2 + $0x1138] sm:$0xff]
    %v3189 = vld [vmem:[#allocation2 + $0x1140] sm:$0xff]
    %v3190 = vld [vmem:[#allocation2 + $0x1148] sm:$0xff]
    %v3191 = vld [vmem:[#allocation2 + $0x1150] sm:$0xff]
    %v3192 = vld [vmem:[#allocation2 + $0x1158] sm:$0xff]
    %v3193 = vld [vmem:[#allocation2 + $0x1160] sm:$0xff]
    %v3194 = vld [vmem:[#allocation2 + $0x1168] sm:$0xff]
    %v3195 = vld [vmem:[#allocation2 + $0x1170] sm:$0xff]
    %v3196 = vld [vmem:[#allocation2 + $0x1178] sm:$0xff]
    %v3197 = vld [vmem:[#allocation2 + $0x1180] sm:$0xff]
    %v3198 = vld [vmem:[#allocation2 + $0x1188] sm:$0xff]
    %v3199 = vld [vmem:[#allocation2 + $0x1190] sm:$0xff]
    %v3200 = vld [vmem:[#allocation2 + $0x1198] sm:$0xff]
    %v3201 = vld [vmem:[#allocation2 + $0x11a0] sm:$0xff]
    %v3202 = vld [vmem:[#allocation2 + $0x11a8] sm:$0xff]
    %v3203 = vld [vmem:[#allocation2 + $0x11b0] sm:$0xff]
    %v3204 = vld [vmem:[#allocation2 + $0x11b8] sm:$0xff]
    %v3205 = vld [vmem:[#allocation2 + $0x11c0] sm:$0xff]
    %v3206 = vld [vmem:[#allocation2 + $0x11c8] sm:$0xff]
    %v3207 = vld [vmem:[#allocation2 + $0x11d0] sm:$0xff]
    %v3208 = vld [vmem:[#allocation2 + $0x11d8] sm:$0xff]
    %v3209 = vld [vmem:[#allocation2 + $0x11e0] sm:$0xff]
    %v3210 = vld [vmem:[#allocation2 + $0x11e8] sm:$0xff]
    %v3211 = vld [vmem:[#allocation2 + $0x11f0] sm:$0xff]
    %v3212 = vld [vmem:[#allocation2 + $0x11f8] sm:$0xff]
    %v3213 = vld [vmem:[#allocation2 + $0x1200] sm:$0xff]
    %v3214 = vld [vmem:[#allocation2 + $0x1208] sm:$0xff]
    %v3215 = vld [vmem:[#allocation2 + $0x1210] sm:$0xff]
    %v3216 = vld [vmem:[#allocation2 + $0x1218] sm:$0xff]
    %v3217 = vld [vmem:[#allocation2 + $0x1220] sm:$0xff]
    %v3218 = vld [vmem:[#allocation2 + $0x1228] sm:$0xff]
    %v3219 = vld [vmem:[#allocation2 + $0x1230] sm:$0xff]
    %v3220 = vld [vmem:[#allocation2 + $0x1238] sm:$0xff]
    %v3221 = vld [vmem:[#allocation2 + $0x1240] sm:$0xff]
    %v3222 = vld [vmem:[#allocation2 + $0x1248] sm:$0xff]
    %v3223 = vld [vmem:[#allocation2 + $0x1250] sm:$0xff]
    %v3224 = vld [vmem:[#allocation2 + $0x1258] sm:$0xff]
    %v3225 = vld [vmem:[#allocation2 + $0x1260] sm:$0xff]
    %v3226 = vld [vmem:[#allocation2 + $0x1268] sm:$0xff]
    %v3227 = vld [vmem:[#allocation2 + $0x1270] sm:$0xff]
    %v3228 = vld [vmem:[#allocation2 + $0x1278] sm:$0xff]
    %v3229 = vld [vmem:[#allocation2 + $0x1280] sm:$0xff]
    %v3230 = vld [vmem:[#allocation2 + $0x1288] sm:$0xff]
    %v3231 = vld [vmem:[#allocation2 + $0x1290] sm:$0xff]
    %v3232 = vld [vmem:[#allocation2 + $0x1298] sm:$0xff]
    %v3233 = vld [vmem:[#allocation2 + $0x12a0] sm:$0xff]
    %v3234 = vld [vmem:[#allocation2 + $0x12a8] sm:$0xff]
    %v3235 = vld [vmem:[#allocation2 + $0x12b0] sm:$0xff]
    %v3236 = vld [vmem:[#allocation2 + $0x12b8] sm:$0xff]
    %v3237 = vld [vmem:[#allocation2 + $0x12c0] sm:$0xff]
    %v3238 = vld [vmem:[#allocation2 + $0x12c8] sm:$0xff]
    %v3239 = vld [vmem:[#allocation2 + $0x12d0] sm:$0xff]
    %v3240 = vld [vmem:[#allocation2 + $0x12d8] sm:$0xff]
    %v3241 = vld [vmem:[#allocation2 + $0x12e0] sm:$0xff]
    %v3242 = vld [vmem:[#allocation2 + $0x12e8] sm:$0xff]
    %v3243 = vld [vmem:[#allocation2 + $0x12f0] sm:$0xff]
    %v3244 = vld [vmem:[#allocation2 + $0x12f8] sm:$0xff]
    %v3245 = vld [vmem:[#allocation2 + $0x1300] sm:$0xff]
    %v3246 = vld [vmem:[#allocation2 + $0x1308] sm:$0xff]
    %v3247 = vld [vmem:[#allocation2 + $0x1310] sm:$0xff]
    %v3248 = vld [vmem:[#allocation2 + $0x1318] sm:$0xff]
    %v3249 = vld [vmem:[#allocation2 + $0x1320] sm:$0xff]
    %v3250 = vld [vmem:[#allocation2 + $0x1328] sm:$0xff]
    %v3251 = vld [vmem:[#allocation2 + $0x1330] sm:$0xff]
    %v3252 = vld [vmem:[#allocation2 + $0x1338] sm:$0xff]
    %v3253 = vld [vmem:[#allocation2 + $0x1340] sm:$0xff]
    %v3254 = vld [vmem:[#allocation2 + $0x1348] sm:$0xff]
    %v3255 = vld [vmem:[#allocation2 + $0x1350] sm:$0xff]
    %v3256 = vld [vmem:[#allocation2 + $0x1358] sm:$0xff]
    %v3257 = vld [vmem:[#allocation2 + $0x1360] sm:$0xff]
    %v3258 = vld [vmem:[#allocation2 + $0x1368] sm:$0xff]
    %v3259 = vld [vmem:[#allocation2 + $0x1370] sm:$0xff]
    %v3260 = vld [vmem:[#allocation2 + $0x1378] sm:$0xff]
    %v3261 = vld [vmem:[#allocation2 + $0x1380] sm:$0xff]
    %v3262 = vld [vmem:[#allocation2 + $0x1388] sm:$0xff]
    %v3263 = vld [vmem:[#allocation2 + $0x1390] sm:$0xff]
    %v3264 = vld [vmem:[#allocation2 + $0x1398] sm:$0xff]
    %v3265 = vld [vmem:[#allocation2 + $0x13a0] sm:$0xff]
    %v3266 = vld [vmem:[#allocation2 + $0x13a8] sm:$0xff]
    %v3267 = vld [vmem:[#allocation2 + $0x13b0] sm:$0xff]
    %v3268 = vld [vmem:[#allocation2 + $0x13b8] sm:$0xff]
    %v3269 = vld [vmem:[#allocation2 + $0x13c0] sm:$0xff]
    %v3270 = vld [vmem:[#allocation2 + $0x13c8] sm:$0xff]
    %v3271 = vld [vmem:[#allocation2 + $0x13d0] sm:$0xff]
    %v3272 = vld [vmem:[#allocation2 + $0x13d8] sm:$0xff]
    %v3273 = vld [vmem:[#allocation2 + $0x13e0] sm:$0xff]
    %v3274 = vld [vmem:[#allocation2 + $0x13e8] sm:$0xff]
    %v3275 = vld [vmem:[#allocation2 + $0x13f0] sm:$0xff]
    %v3276 = vld [vmem:[#allocation2 + $0x13f8] sm:$0xff]
    %v3277 = vld [vmem:[#allocation2 + $0x1400] sm:$0xff]
    %v3278 = vld [vmem:[#allocation2 + $0x1408] sm:$0xff]
    %v3279 = vld [vmem:[#allocation2 + $0x1410] sm:$0xff]
    %v3280 = vld [vmem:[#allocation2 + $0x1418] sm:$0xff]
    %v3281 = vld [vmem:[#allocation2 + $0x1420] sm:$0xff]
    %v3282 = vld [vmem:[#allocation2 + $0x1428] sm:$0xff]
    %v3283 = vld [vmem:[#allocation2 + $0x1430] sm:$0xff]
    %v3284 = vld [vmem:[#allocation2 + $0x1438] sm:$0xff]
    %v3285 = vld [vmem:[#allocation2 + $0x1440] sm:$0xff]
    %v3286 = vld [vmem:[#allocation2 + $0x1448] sm:$0xff]
    %v3287 = vld [vmem:[#allocation2 + $0x1450] sm:$0xff]
    %v3288 = vld [vmem:[#allocation2 + $0x1458] sm:$0xff]
    %v3289 = vld [vmem:[#allocation2 + $0x1460] sm:$0xff]
    %v3290 = vld [vmem:[#allocation2 + $0x1468] sm:$0xff]
    %v3291 = vld [vmem:[#allocation2 + $0x1470] sm:$0xff]
    %v3292 = vld [vmem:[#allocation2 + $0x1478] sm:$0xff]
    %v3293 = vld [vmem:[#allocation2 + $0x1480] sm:$0xff]
    %v3294 = vld [vmem:[#allocation2 + $0x1488] sm:$0xff]
    %v3295 = vld [vmem:[#allocation2 + $0x1490] sm:$0xff]
    %v3296 = vld [vmem:[#allocation2 + $0x1498] sm:$0xff]
    %v3297 = vld [vmem:[#allocation2 + $0x14a0] sm:$0xff]
    %v3298 = vld [vmem:[#allocation2 + $0x14a8] sm:$0xff]
    %v3299 = vld [vmem:[#allocation2 + $0x14b0] sm:$0xff]
    %v3300 = vld [vmem:[#allocation2 + $0x14b8] sm:$0xff]
    %v3301 = vld [vmem:[#allocation2 + $0x14c0] sm:$0xff]
    %v3302 = vld [vmem:[#allocation2 + $0x14c8] sm:$0xff]
    %v3303 = vld [vmem:[#allocation2 + $0x14d0] sm:$0xff]
    %v3304 = vld [vmem:[#allocation2 + $0x14d8] sm:$0xff]
    %v3305 = vld [vmem:[#allocation2 + $0x14e0] sm:$0xff]
    %v3306 = vld [vmem:[#allocation2 + $0x14e8] sm:$0xff]
    %v3307 = vld [vmem:[#allocation2 + $0x14f0] sm:$0xff]
    %v3308 = vld [vmem:[#allocation2 + $0x14f8] sm:$0xff]
    %v3309 = vld [vmem:[#allocation2 + $0x1500] sm:$0xff]
    %v3310 = vld [vmem:[#allocation2 + $0x1508] sm:$0xff]
    %v3311 = vld [vmem:[#allocation2 + $0x1510] sm:$0xff]
    %v3312 = vld [vmem:[#allocation2 + $0x1518] sm:$0xff]
    %v3313 = vld [vmem:[#allocation2 + $0x1520] sm:$0xff]
    %v3314 = vld [vmem:[#allocation2 + $0x1528] sm:$0xff]
    %v3315 = vld [vmem:[#allocation2 + $0x1530] sm:$0xff]
    %v3316 = vld [vmem:[#allocation2 + $0x1538] sm:$0xff]
    %v3317 = vld [vmem:[#allocation2 + $0x1540] sm:$0xff]
    %v3318 = vld [vmem:[#allocation2 + $0x1548] sm:$0xff]
    %v3319 = vld [vmem:[#allocation2 + $0x1550] sm:$0xff]
    %v3320 = vld [vmem:[#allocation2 + $0x1558] sm:$0xff]
    %v3321 = vld [vmem:[#allocation2 + $0x1560] sm:$0xff]
    %v3322 = vld [vmem:[#allocation2 + $0x1568] sm:$0xff]
    %v3323 = vld [vmem:[#allocation2 + $0x1570] sm:$0xff]
    %v3324 = vld [vmem:[#allocation2 + $0x1578] sm:$0xff]
    %v3325 = vld [vmem:[#allocation2 + $0x1580] sm:$0xff]
    %v3326 = vld [vmem:[#allocation2 + $0x1588] sm:$0xff]
    %v3327 = vld [vmem:[#allocation2 + $0x1590] sm:$0xff]
    %v3328 = vld [vmem:[#allocation2 + $0x1598] sm:$0xff]
    %v3329 = vld [vmem:[#allocation2 + $0x15a0] sm:$0xff]
    %v3330 = vld [vmem:[#allocation2 + $0x15a8] sm:$0xff]
    %v3331 = vld [vmem:[#allocation2 + $0x15b0] sm:$0xff]
    %v3332 = vld [vmem:[#allocation2 + $0x15b8] sm:$0xff]
    %v3333 = vld [vmem:[#allocation2 + $0x15c0] sm:$0xff]
    %v3334 = vld [vmem:[#allocation2 + $0x15c8] sm:$0xff]
    %v3335 = vld [vmem:[#allocation2 + $0x15d0] sm:$0xff]
    %v3336 = vld [vmem:[#allocation2 + $0x15d8] sm:$0xff]
    %v3337 = vld [vmem:[#allocation2 + $0x15e0] sm:$0xff]
    %v3338 = vld [vmem:[#allocation2 + $0x15e8] sm:$0xff]
    %v3339 = vld [vmem:[#allocation2 + $0x15f0] sm:$0xff]
    %v3340 = vld [vmem:[#allocation2 + $0x15f8] sm:$0xff]
    %v3341 = vld [vmem:[#allocation2 + $0x1600] sm:$0xff]
    %v3342 = vld [vmem:[#allocation2 + $0x1608] sm:$0xff]
    %v3343 = vld [vmem:[#allocation2 + $0x1610] sm:$0xff]
    %v3344 = vld [vmem:[#allocation2 + $0x1618] sm:$0xff]
    %v3345 = vld [vmem:[#allocation2 + $0x1620] sm:$0xff]
    %v3346 = vld [vmem:[#allocation2 + $0x1628] sm:$0xff]
    %v3347 = vld [vmem:[#allocation2 + $0x1630] sm:$0xff]
    %v3348 = vld [vmem:[#allocation2 + $0x1638] sm:$0xff]
    %v3349 = vld [vmem:[#allocation2 + $0x1640] sm:$0xff]
    %v3350 = vld [vmem:[#allocation2 + $0x1648] sm:$0xff]
    %v3351 = vld [vmem:[#allocation2 + $0x1650] sm:$0xff]
    %v3352 = vld [vmem:[#allocation2 + $0x1658] sm:$0xff]
    %v3353 = vld [vmem:[#allocation2 + $0x1660] sm:$0xff]
    %v3354 = vld [vmem:[#allocation2 + $0x1668] sm:$0xff]
    %v3355 = vld [vmem:[#allocation2 + $0x1670] sm:$0xff]
    %v3356 = vld [vmem:[#allocation2 + $0x1678] sm:$0xff]
    %v3357 = vld [vmem:[#allocation2 + $0x1680] sm:$0xff]
    %v3358 = vld [vmem:[#allocation2 + $0x1688] sm:$0xff]
    %v3359 = vld [vmem:[#allocation2 + $0x1690] sm:$0xff]
    %v3360 = vld [vmem:[#allocation2 + $0x1698] sm:$0xff]
    %v3361 = vld [vmem:[#allocation2 + $0x16a0] sm:$0xff]
    %v3362 = vld [vmem:[#allocation2 + $0x16a8] sm:$0xff]
    %v3363 = vld [vmem:[#allocation2 + $0x16b0] sm:$0xff]
    %v3364 = vld [vmem:[#allocation2 + $0x16b8] sm:$0xff]
    %v3365 = vld [vmem:[#allocation2 + $0x16c0] sm:$0xff]
    %v3366 = vld [vmem:[#allocation2 + $0x16c8] sm:$0xff]
    %v3367 = vld [vmem:[#allocation2 + $0x16d0] sm:$0xff]
    %v3368 = vld [vmem:[#allocation2 + $0x16d8] sm:$0xff]
    %v3369 = vld [vmem:[#allocation2 + $0x16e0] sm:$0xff]
    %v3370 = vld [vmem:[#allocation2 + $0x16e8] sm:$0xff]
    %v3371 = vld [vmem:[#allocation2 + $0x16f0] sm:$0xff]
    %v3372 = vld [vmem:[#allocation2 + $0x16f8] sm:$0xff]
    %v3373 = vld [vmem:[#allocation2 + $0x1700] sm:$0xff]
    %v3374 = vld [vmem:[#allocation2 + $0x1708] sm:$0xff]
    %v3375 = vld [vmem:[#allocation2 + $0x1710] sm:$0xff]
    %v3376 = vld [vmem:[#allocation2 + $0x1718] sm:$0xff]
    %v3377 = vld [vmem:[#allocation2 + $0x1720] sm:$0xff]
    %v3378 = vld [vmem:[#allocation2 + $0x1728] sm:$0xff]
    %v3379 = vld [vmem:[#allocation2 + $0x1730] sm:$0xff]
    %v3380 = vld [vmem:[#allocation2 + $0x1738] sm:$0xff]
    %v3381 = vld [vmem:[#allocation2 + $0x1740] sm:$0xff]
    %v3382 = vld [vmem:[#allocation2 + $0x1748] sm:$0xff]
    %v3383 = vld [vmem:[#allocation2 + $0x1750] sm:$0xff]
    %v3384 = vld [vmem:[#allocation2 + $0x1758] sm:$0xff]
    %v3385 = vld [vmem:[#allocation2 + $0x1760] sm:$0xff]
    %v3386 = vld [vmem:[#allocation2 + $0x1768] sm:$0xff]
    %v3387 = vld [vmem:[#allocation2 + $0x1770] sm:$0xff]
    %v3388 = vld [vmem:[#allocation2 + $0x1778] sm:$0xff]
    %v3389 = vld [vmem:[#allocation2 + $0x1780] sm:$0xff]
    %v3390 = vld [vmem:[#allocation2 + $0x1788] sm:$0xff]
    %v3391 = vld [vmem:[#allocation2 + $0x1790] sm:$0xff]
    %v3392 = vld [vmem:[#allocation2 + $0x1798] sm:$0xff]
    %v3393 = vld [vmem:[#allocation2 + $0x17a0] sm:$0xff]
    %v3394 = vld [vmem:[#allocation2 + $0x17a8] sm:$0xff]
    %v3395 = vld [vmem:[#allocation2 + $0x17b0] sm:$0xff]
    %v3396 = vld [vmem:[#allocation2 + $0x17b8] sm:$0xff]
    %v3397 = vld [vmem:[#allocation2 + $0x17c0] sm:$0xff]
    %v3398 = vld [vmem:[#allocation2 + $0x17c8] sm:$0xff]
    %v3399 = vld [vmem:[#allocation2 + $0x17d0] sm:$0xff]
    %v3400 = vld [vmem:[#allocation2 + $0x17d8] sm:$0xff]
    %v3401 = vld [vmem:[#allocation2 + $0x17e0] sm:$0xff]
    %v3402 = vld [vmem:[#allocation2 + $0x17e8] sm:$0xff]
    %v3403 = vld [vmem:[#allocation2 + $0x17f0] sm:$0xff]
    %v3404 = vld [vmem:[#allocation2 + $0x17f8] sm:$0xff]
    %v3405 = vld [vmem:[#allocation2 + $0x1800] sm:$0xff]
    %v3406 = vld [vmem:[#allocation2 + $0x1808] sm:$0xff]
    %v3407 = vld [vmem:[#allocation2 + $0x1810] sm:$0xff]
    %v3408 = vld [vmem:[#allocation2 + $0x1818] sm:$0xff]
    %v3409 = vld [vmem:[#allocation2 + $0x1820] sm:$0xff]
    %v3410 = vld [vmem:[#allocation2 + $0x1828] sm:$0xff]
    %v3411 = vld [vmem:[#allocation2 + $0x1830] sm:$0xff]
    %v3412 = vld [vmem:[#allocation2 + $0x1838] sm:$0xff]
    %v3413 = vld [vmem:[#allocation2 + $0x1840] sm:$0xff]
    %v3414 = vld [vmem:[#allocation2 + $0x1848] sm:$0xff]
    %v3415 = vld [vmem:[#allocation2 + $0x1850] sm:$0xff]
    %v3416 = vld [vmem:[#allocation2 + $0x1858] sm:$0xff]
    %v3417 = vld [vmem:[#allocation2 + $0x1860] sm:$0xff]
    %v3418 = vld [vmem:[#allocation2 + $0x1868] sm:$0xff]
    %v3419 = vld [vmem:[#allocation2 + $0x1870] sm:$0xff]
    %v3420 = vld [vmem:[#allocation2 + $0x1878] sm:$0xff]
    %v3421 = vld [vmem:[#allocation2 + $0x1880] sm:$0xff]
    %v3422 = vld [vmem:[#allocation2 + $0x1888] sm:$0xff]
    %v3423 = vld [vmem:[#allocation2 + $0x1890] sm:$0xff]
    %v3424 = vld [vmem:[#allocation2 + $0x1898] sm:$0xff]
    %v3425 = vld [vmem:[#allocation2 + $0x18a0] sm:$0xff]
    %v3426 = vld [vmem:[#allocation2 + $0x18a8] sm:$0xff]
    %v3427 = vld [vmem:[#allocation2 + $0x18b0] sm:$0xff]
    %v3428 = vld [vmem:[#allocation2 + $0x18b8] sm:$0xff]
    %v3429 = vld [vmem:[#allocation2 + $0x18c0] sm:$0xff]
    %v3430 = vld [vmem:[#allocation2 + $0x18c8] sm:$0xff]
    %v3431 = vld [vmem:[#allocation2 + $0x18d0] sm:$0xff]
    %v3432 = vld [vmem:[#allocation2 + $0x18d8] sm:$0xff]
    %v3433 = vld [vmem:[#allocation2 + $0x18e0] sm:$0xff]
    %v3434 = vld [vmem:[#allocation2 + $0x18e8] sm:$0xff]
    %v3435 = vld [vmem:[#allocation2 + $0x18f0] sm:$0xff]
    %v3436 = vld [vmem:[#allocation2 + $0x18f8] sm:$0xff]
    %v3437 = vld [vmem:[#allocation2 + $0x1900] sm:$0xff]
    %v3438 = vld [vmem:[#allocation2 + $0x1908] sm:$0xff]
    %v3439 = vld [vmem:[#allocation2 + $0x1910] sm:$0xff]
    %v3440 = vld [vmem:[#allocation2 + $0x1918] sm:$0xff]
    %v3441 = vld [vmem:[#allocation2 + $0x1920] sm:$0xff]
    %v3442 = vld [vmem:[#allocation2 + $0x1928] sm:$0xff]
    %v3443 = vld [vmem:[#allocation2 + $0x1930] sm:$0xff]
    %v3444 = vld [vmem:[#allocation2 + $0x1938] sm:$0xff]
    %v3445 = vld [vmem:[#allocation2 + $0x1940] sm:$0xff]
    %v3446 = vld [vmem:[#allocation2 + $0x1948] sm:$0xff]
    %v3447 = vld [vmem:[#allocation2 + $0x1950] sm:$0xff]
    %v3448 = vld [vmem:[#allocation2 + $0x1958] sm:$0xff]
    %v3449 = vld [vmem:[#allocation2 + $0x1960] sm:$0xff]
    %v3450 = vld [vmem:[#allocation2 + $0x1968] sm:$0xff]
    %v3451 = vld [vmem:[#allocation2 + $0x1970] sm:$0xff]
    %v3452 = vld [vmem:[#allocation2 + $0x1978] sm:$0xff]
    %v3453 = vld [vmem:[#allocation2 + $0x1980] sm:$0xff]
    %v3454 = vld [vmem:[#allocation2 + $0x1988] sm:$0xff]
    %v3455 = vld [vmem:[#allocation2 + $0x1990] sm:$0xff]
    %v3456 = vld [vmem:[#allocation2 + $0x1998] sm:$0xff]
    %v3457 = vld [vmem:[#allocation2 + $0x19a0] sm:$0xff]
    %v3458 = vld [vmem:[#allocation2 + $0x19a8] sm:$0xff]
    %v3459 = vld [vmem:[#allocation2 + $0x19b0] sm:$0xff]
    %v3460 = vld [vmem:[#allocation2 + $0x19b8] sm:$0xff]
    %v3461 = vld [vmem:[#allocation2 + $0x19c0] sm:$0xff]
    %v3462 = vld [vmem:[#allocation2 + $0x19c8] sm:$0xff]
    %v3463 = vld [vmem:[#allocation2 + $0x19d0] sm:$0xff]
    %v3464 = vld [vmem:[#allocation2 + $0x19d8] sm:$0xff]
    %v3465 = vld [vmem:[#allocation2 + $0x19e0] sm:$0xff]
    %v3466 = vld [vmem:[#allocation2 + $0x19e8] sm:$0xff]
    %v3467 = vld [vmem:[#allocation2 + $0x19f0] sm:$0xff]
    %v3468 = vld [vmem:[#allocation2 + $0x19f8] sm:$0xff]
    %v3469 = vld [vmem:[#allocation2 + $0x1a00] sm:$0xff]
    %v3470 = vld [vmem:[#allocation2 + $0x1a08] sm:$0xff]
    %v3471 = vld [vmem:[#allocation2 + $0x1a10] sm:$0xff]
    %v3472 = vld [vmem:[#allocation2 + $0x1a18] sm:$0xff]
    %v3473 = vld [vmem:[#allocation2 + $0x1a20] sm:$0xff]
    %v3474 = vld [vmem:[#allocation2 + $0x1a28] sm:$0xff]
    %v3475 = vld [vmem:[#allocation2 + $0x1a30] sm:$0xff]
    %v3476 = vld [vmem:[#allocation2 + $0x1a38] sm:$0xff]
    %v3477 = vld [vmem:[#allocation2 + $0x1a40] sm:$0xff]
    %v3478 = vld [vmem:[#allocation2 + $0x1a48] sm:$0xff]
    %v3479 = vld [vmem:[#allocation2 + $0x1a50] sm:$0xff]
    %v3480 = vld [vmem:[#allocation2 + $0x1a58] sm:$0xff]
    %v3481 = vld [vmem:[#allocation2 + $0x1a60] sm:$0xff]
    %v3482 = vld [vmem:[#allocation2 + $0x1a68] sm:$0xff]
    %v3483 = vld [vmem:[#allocation2 + $0x1a70] sm:$0xff]
    %v3484 = vld [vmem:[#allocation2 + $0x1a78] sm:$0xff]
    %v3485 = vld [vmem:[#allocation2 + $0x1a80] sm:$0xff]
    %v3486 = vld [vmem:[#allocation2 + $0x1a88] sm:$0xff]
    %v3487 = vld [vmem:[#allocation2 + $0x1a90] sm:$0xff]
    %v3488 = vld [vmem:[#allocation2 + $0x1a98] sm:$0xff]
    %v3489 = vld [vmem:[#allocation2 + $0x1aa0] sm:$0xff]
    %v3490 = vld [vmem:[#allocation2 + $0x1aa8] sm:$0xff]
    %v3491 = vld [vmem:[#allocation2 + $0x1ab0] sm:$0xff]
    %v3492 = vld [vmem:[#allocation2 + $0x1ab8] sm:$0xff]
    %v3493 = vld [vmem:[#allocation2 + $0x1ac0] sm:$0xff]
    %v3494 = vld [vmem:[#allocation2 + $0x1ac8] sm:$0xff]
    %v3495 = vld [vmem:[#allocation2 + $0x1ad0] sm:$0xff]
    %v3496 = vld [vmem:[#allocation2 + $0x1ad8] sm:$0xff]
    %v3497 = vld [vmem:[#allocation2 + $0x1ae0] sm:$0xff]
    %v3498 = vld [vmem:[#allocation2 + $0x1ae8] sm:$0xff]
    %v3499 = vld [vmem:[#allocation2 + $0x1af0] sm:$0xff]
    %v3500 = vld [vmem:[#allocation2 + $0x1af8] sm:$0xff]
    %v3501 = vld [vmem:[#allocation2 + $0x1b00] sm:$0xff]
    %v3502 = vld [vmem:[#allocation2 + $0x1b08] sm:$0xff]
    %v3503 = vld [vmem:[#allocation2 + $0x1b10] sm:$0xff]
    %v3504 = vld [vmem:[#allocation2 + $0x1b18] sm:$0xff]
    %v3505 = vld [vmem:[#allocation2 + $0x1b20] sm:$0xff]
    %v3506 = vld [vmem:[#allocation2 + $0x1b28] sm:$0xff]
    %v3507 = vld [vmem:[#allocation2 + $0x1b30] sm:$0xff]
    %v3508 = vld [vmem:[#allocation2 + $0x1b38] sm:$0xff]
    %v3509 = vld [vmem:[#allocation2 + $0x1b40] sm:$0xff]
    %v3510 = vld [vmem:[#allocation2 + $0x1b48] sm:$0xff]
    %v3511 = vld [vmem:[#allocation2 + $0x1b50] sm:$0xff]
    %v3512 = vld [vmem:[#allocation2 + $0x1b58] sm:$0xff]
    %v3513 = vld [vmem:[#allocation2 + $0x1b60] sm:$0xff]
    %v3514 = vld [vmem:[#allocation2 + $0x1b68] sm:$0xff]
    %v3515 = vld [vmem:[#allocation2 + $0x1b70] sm:$0xff]
    %v3516 = vld [vmem:[#allocation2 + $0x1b78] sm:$0xff]
    %v3517 = vld [vmem:[#allocation2 + $0x1b80] sm:$0xff]
    %v3518 = vld [vmem:[#allocation2 + $0x1b88] sm:$0xff]
    %v3519 = vld [vmem:[#allocation2 + $0x1b90] sm:$0xff]
    %v3520 = vld [vmem:[#allocation2 + $0x1b98] sm:$0xff]
    %v3521 = vld [vmem:[#allocation2 + $0x1ba0] sm:$0xff]
    %v3522 = vld [vmem:[#allocation2 + $0x1ba8] sm:$0xff]
    %v3523 = vld [vmem:[#allocation2 + $0x1bb0] sm:$0xff]
    %v3524 = vld [vmem:[#allocation2 + $0x1bb8] sm:$0xff]
    %v3525 = vld [vmem:[#allocation2 + $0x1bc0] sm:$0xff]
    %v3526 = vld [vmem:[#allocation2 + $0x1bc8] sm:$0xff]
    %v3527 = vld [vmem:[#allocation2 + $0x1bd0] sm:$0xff]
    %v3528 = vld [vmem:[#allocation2 + $0x1bd8] sm:$0xff]
    %v3529 = vld [vmem:[#allocation2 + $0x1be0] sm:$0xff]
    %v3530 = vld [vmem:[#allocation2 + $0x1be8] sm:$0xff]
    %v3531 = vld [vmem:[#allocation2 + $0x1bf0] sm:$0xff]
    %v3532 = vld [vmem:[#allocation2 + $0x1bf8] sm:$0xff]
    %v3533 = vld [vmem:[#allocation2 + $0x1c00] sm:$0xff]
    %v3534 = vld [vmem:[#allocation2 + $0x1c08] sm:$0xff]
    %v3535 = vld [vmem:[#allocation2 + $0x1c10] sm:$0xff]
    %v3536 = vld [vmem:[#allocation2 + $0x1c18] sm:$0xff]
    %v3537 = vld [vmem:[#allocation2 + $0x1c20] sm:$0xff]
    %v3538 = vld [vmem:[#allocation2 + $0x1c28] sm:$0xff]
    %v3539 = vld [vmem:[#allocation2 + $0x1c30] sm:$0xff]
    %v3540 = vld [vmem:[#allocation2 + $0x1c38] sm:$0xff]
    %v3541 = vld [vmem:[#allocation2 + $0x1c40] sm:$0xff]
    %v3542 = vld [vmem:[#allocation2 + $0x1c48] sm:$0xff]
    %v3543 = vld [vmem:[#allocation2 + $0x1c50] sm:$0xff]
    %v3544 = vld [vmem:[#allocation2 + $0x1c58] sm:$0xff]
    %v3545 = vld [vmem:[#allocation2 + $0x1c60] sm:$0xff]
    %v3546 = vld [vmem:[#allocation2 + $0x1c68] sm:$0xff]
    %v3547 = vld [vmem:[#allocation2 + $0x1c70] sm:$0xff]
    %v3548 = vld [vmem:[#allocation2 + $0x1c78] sm:$0xff]
    %v3549 = vld [vmem:[#allocation2 + $0x1c80] sm:$0xff]
    %v3550 = vld [vmem:[#allocation2 + $0x1c88] sm:$0xff]
    %v3551 = vld [vmem:[#allocation2 + $0x1c90] sm:$0xff]
    %v3552 = vld [vmem:[#allocation2 + $0x1c98] sm:$0xff]
    %v3553 = vld [vmem:[#allocation2 + $0x1ca0] sm:$0xff]
    %v3554 = vld [vmem:[#allocation2 + $0x1ca8] sm:$0xff]
    %v3555 = vld [vmem:[#allocation2 + $0x1cb0] sm:$0xff]
    %v3556 = vld [vmem:[#allocation2 + $0x1cb8] sm:$0xff]
    %v3557 = vld [vmem:[#allocation2 + $0x1cc0] sm:$0xff]
    %v3558 = vld [vmem:[#allocation2 + $0x1cc8] sm:$0xff]
    %v3559 = vld [vmem:[#allocation2 + $0x1cd0] sm:$0xff]
    %v3560 = vld [vmem:[#allocation2 + $0x1cd8] sm:$0xff]
    %v3561 = vld [vmem:[#allocation2 + $0x1ce0] sm:$0xff]
    %v3562 = vld [vmem:[#allocation2 + $0x1ce8] sm:$0xff]
    %v3563 = vld [vmem:[#allocation2 + $0x1cf0] sm:$0xff]
    %v3564 = vld [vmem:[#allocation2 + $0x1cf8] sm:$0xff]
    %v3565 = vld [vmem:[#allocation2 + $0x1d00] sm:$0xff]
    %v3566 = vld [vmem:[#allocation2 + $0x1d08] sm:$0xff]
    %v3567 = vld [vmem:[#allocation2 + $0x1d10] sm:$0xff]
    %v3568 = vld [vmem:[#allocation2 + $0x1d18] sm:$0xff]
    %v3569 = vld [vmem:[#allocation2 + $0x1d20] sm:$0xff]
    %v3570 = vld [vmem:[#allocation2 + $0x1d28] sm:$0xff]
    %v3571 = vld [vmem:[#allocation2 + $0x1d30] sm:$0xff]
    %v3572 = vld [vmem:[#allocation2 + $0x1d38] sm:$0xff]
    %v3573 = vld [vmem:[#allocation2 + $0x1d40] sm:$0xff]
    %v3574 = vld [vmem:[#allocation2 + $0x1d48] sm:$0xff]
    %v3575 = vld [vmem:[#allocation2 + $0x1d50] sm:$0xff]
    %v3576 = vld [vmem:[#allocation2 + $0x1d58] sm:$0xff]
    %v3577 = vld [vmem:[#allocation2 + $0x1d60] sm:$0xff]
    %v3578 = vld [vmem:[#allocation2 + $0x1d68] sm:$0xff]
    %v3579 = vld [vmem:[#allocation2 + $0x1d70] sm:$0xff]
    %v3580 = vld [vmem:[#allocation2 + $0x1d78] sm:$0xff]
    %v3581 = vld [vmem:[#allocation2 + $0x1d80] sm:$0xff]
    %v3582 = vld [vmem:[#allocation2 + $0x1d88] sm:$0xff]
    %v3583 = vld [vmem:[#allocation2 + $0x1d90] sm:$0xff]
    %v3584 = vld [vmem:[#allocation2 + $0x1d98] sm:$0xff]
    %v3585 = vld [vmem:[#allocation2 + $0x1da0] sm:$0xff]
    %v3586 = vld [vmem:[#allocation2 + $0x1da8] sm:$0xff]
    %v3587 = vld [vmem:[#allocation2 + $0x1db0] sm:$0xff]
    %v3588 = vld [vmem:[#allocation2 + $0x1db8] sm:$0xff]
    %v3589 = vld [vmem:[#allocation2 + $0x1dc0] sm:$0xff]
    %v3590 = vld [vmem:[#allocation2 + $0x1dc8] sm:$0xff]
    %v3591 = vld [vmem:[#allocation2 + $0x1dd0] sm:$0xff]
    %v3592 = vld [vmem:[#allocation2 + $0x1dd8] sm:$0xff]
    %v3593 = vld [vmem:[#allocation2 + $0x1de0] sm:$0xff]
    %v3594 = vld [vmem:[#allocation2 + $0x1de8] sm:$0xff]
    %v3595 = vld [vmem:[#allocation2 + $0x1df0] sm:$0xff]
    %v3596 = vld [vmem:[#allocation2 + $0x1df8] sm:$0xff]
    %v3597 = vld [vmem:[#allocation2 + $0x1e00] sm:$0xff]
    %v3598 = vld [vmem:[#allocation2 + $0x1e08] sm:$0xff]
    %v3599 = vld [vmem:[#allocation2 + $0x1e10] sm:$0xff]
    %v3600 = vld [vmem:[#allocation2 + $0x1e18] sm:$0xff]
    %v3601 = vld [vmem:[#allocation2 + $0x1e20] sm:$0xff]
    %v3602 = vld [vmem:[#allocation2 + $0x1e28] sm:$0xff]
    %v3603 = vld [vmem:[#allocation2 + $0x1e30] sm:$0xff]
    %v3604 = vld [vmem:[#allocation2 + $0x1e38] sm:$0xff]
    %v3605 = vld [vmem:[#allocation2 + $0x1e40] sm:$0xff]
    %v3606 = vld [vmem:[#allocation2 + $0x1e48] sm:$0xff]
    %v3607 = vld [vmem:[#allocation2 + $0x1e50] sm:$0xff]
    %v3608 = vld [vmem:[#allocation2 + $0x1e58] sm:$0xff]
    %v3609 = vld [vmem:[#allocation2 + $0x1e60] sm:$0xff]
    %v3610 = vld [vmem:[#allocation2 + $0x1e68] sm:$0xff]
    %v3611 = vld [vmem:[#allocation2 + $0x1e70] sm:$0xff]
    %v3612 = vld [vmem:[#allocation2 + $0x1e78] sm:$0xff]
    %v3613 = vld [vmem:[#allocation2 + $0x1e80] sm:$0xff]
    %v3614 = vld [vmem:[#allocation2 + $0x1e88] sm:$0xff]
    %v3615 = vld [vmem:[#allocation2 + $0x1e90] sm:$0xff]
    %v3616 = vld [vmem:[#allocation2 + $0x1e98] sm:$0xff]
    %v3617 = vld [vmem:[#allocation2 + $0x1ea0] sm:$0xff]
    %v3618 = vld [vmem:[#allocation2 + $0x1ea8] sm:$0xff]
    %v3619 = vld [vmem:[#allocation2 + $0x1eb0] sm:$0xff]
    %v3620 = vld [vmem:[#allocation2 + $0x1eb8] sm:$0xff]
    %v3621 = vld [vmem:[#allocation2 + $0x1ec0] sm:$0xff]
    %v3622 = vld [vmem:[#allocation2 + $0x1ec8] sm:$0xff]
    %v3623 = vld [vmem:[#allocation2 + $0x1ed0] sm:$0xff]
    %v3624 = vld [vmem:[#allocation2 + $0x1ed8] sm:$0xff]
    %v3625 = vld [vmem:[#allocation2 + $0x1ee0] sm:$0xff]
    %v3626 = vld [vmem:[#allocation2 + $0x1ee8] sm:$0xff]
    %v3627 = vld [vmem:[#allocation2 + $0x1ef0] sm:$0xff]
    %v3628 = vld [vmem:[#allocation2 + $0x1ef8] sm:$0xff]
    %v3629 = vld [vmem:[#allocation2 + $0x1f00] sm:$0xff]
    %v3630 = vld [vmem:[#allocation2 + $0x1f08] sm:$0xff]
    %v3631 = vld [vmem:[#allocation2 + $0x1f10] sm:$0xff]
    %v3632 = vld [vmem:[#allocation2 + $0x1f18] sm:$0xff]
    %v3633 = vld [vmem:[#allocation2 + $0x1f20] sm:$0xff]
    %v3634 = vld [vmem:[#allocation2 + $0x1f28] sm:$0xff]
    %v3635 = vld [vmem:[#allocation2 + $0x1f30] sm:$0xff]
    %v3636 = vld [vmem:[#allocation2 + $0x1f38] sm:$0xff]
    %v3637 = vld [vmem:[#allocation2 + $0x1f40] sm:$0xff]
    %v3638 = vld [vmem:[#allocation2 + $0x1f48] sm:$0xff]
    %v3639 = vld [vmem:[#allocation2 + $0x1f50] sm:$0xff]
    %v3640 = vld [vmem:[#allocation2 + $0x1f58] sm:$0xff]
    %v3641 = vld [vmem:[#allocation2 + $0x1f60] sm:$0xff]
    %v3642 = vld [vmem:[#allocation2 + $0x1f68] sm:$0xff]
    %v3643 = vld [vmem:[#allocation2 + $0x1f70] sm:$0xff]
    %v3644 = vld [vmem:[#allocation2 + $0x1f78] sm:$0xff]
    %v3645 = vld [vmem:[#allocation2 + $0x1f80] sm:$0xff]
    %v3646 = vld [vmem:[#allocation2 + $0x1f88] sm:$0xff]
    %v3647 = vld [vmem:[#allocation2 + $0x1f90] sm:$0xff]
    %v3648 = vld [vmem:[#allocation2 + $0x1f98] sm:$0xff]
    %v3649 = vld [vmem:[#allocation2 + $0x1fa0] sm:$0xff]
    %v3650 = vld [vmem:[#allocation2 + $0x1fa8] sm:$0xff]
    %v3651 = vld [vmem:[#allocation2 + $0x1fb0] sm:$0xff]
    %v3652 = vld [vmem:[#allocation2 + $0x1fb8] sm:$0xff]
    %v3653 = vld [vmem:[#allocation2 + $0x1fc0] sm:$0xff]
    %v3654 = vld [vmem:[#allocation2 + $0x1fc8] sm:$0xff]
    %v3655 = vld [vmem:[#allocation2 + $0x1fd0] sm:$0xff]
    %v3656 = vld [vmem:[#allocation2 + $0x1fd8] sm:$0xff]
    %v3657 = vld [vmem:[#allocation2 + $0x1fe0] sm:$0xff]
    %v3658 = vld [vmem:[#allocation2 + $0x1fe8] sm:$0xff]
    %v3659 = vld [vmem:[#allocation2 + $0x1ff0] sm:$0xff]
    %v3660 = vld [vmem:[#allocation2 + $0x1ff8] sm:$0xff]
    %v3661 = vld [vmem:[#allocation10] sm:$0xff]
    %v3663 = vlaneseq
    %v3664 = vshrl.u32 %v3663, 7
    %v3665 = vsub.s32 0, %v3664
    %v3666 = vrot.slane %v3661, %v3665
    %v3667 = vlaneseq
    %v3668 = vshrl.u32 %v3667, 7
    %v3669 = vsub.s32 1, %v3668
    %v3670 = vrot.slane %v3661, %v3669
    %v3671 = vlaneseq
    %v3672 = vshrl.u32 %v3671, 7
    %v3673 = vsub.s32 2, %v3672
    %v3674 = vrot.slane %v3661, %v3673
    %v3675 = vlaneseq
    %v3676 = vshrl.u32 %v3675, 7
    %v3677 = vsub.s32 3, %v3676
    %v3678 = vrot.slane %v3661, %v3677
    %v3679 = vlaneseq
    %v3680 = vshrl.u32 %v3679, 7
    %v3681 = vsub.s32 4, %v3680
    %v3682 = vrot.slane %v3661, %v3681
    %v3683 = vlaneseq
    %v3684 = vshrl.u32 %v3683, 7
    %v3685 = vsub.s32 5, %v3684
    %v3686 = vrot.slane %v3661, %v3685
    %v3687 = vlaneseq
    %v3688 = vshrl.u32 %v3687, 7
    %v3689 = vsub.s32 6, %v3688
    %v3690 = vrot.slane %v3661, %v3689
    %v3691 = vlaneseq
    %v3692 = vshrl.u32 %v3691, 7
    %v3693 = vsub.s32 7, %v3692
    %v3694 = vrot.slane %v3661, %v3693
    %3703 = vmatprep.subr.mxu0 %v2758
    %3704 = vmatpush1.msra.mxu0 %v2757
    %3705 = vmatprep.subr.mxu0 %v2750
    %3706 = vmatpush1.msra.mxu0 %v2749
    %3707 = vmatprep.subr.mxu0 %v2742
    %3708 = vmatpush1.msra.mxu0 %v2741
    %3709 = vmatprep.subr.mxu0 %v2734
    %3710 = vmatpush1.msra.mxu0 %v2733
    %3711 = vmatprep.subr.mxu0 %v2726
    %3712 = vmatpush1.msra.mxu0 %v2725
    %3713 = vmatprep.subr.mxu0 %v2718
    %3714 = vmatpush1.msra.mxu0 %v2717
    %3715 = vmatprep.subr.mxu0 %v2710
    %3716 = vmatpush1.msra.mxu0 %v2709
    %3717 = vmatprep.subr.mxu0 %v2702
    %3718 = vmatpush1.msra.mxu0 %v2701
    %3719 = vmatprep.subr.mxu0 %v2694
    %3720 = vmatpush1.msra.mxu0 %v2693
    %3721 = vmatprep.subr.mxu0 %v2686
    %3722 = vmatpush1.msra.mxu0 %v2685
    %3723 = vmatprep.subr.mxu0 %v2678
    %3724 = vmatpush1.msra.mxu0 %v2677
    %3725 = vmatprep.subr.mxu0 %v2670
    %3726 = vmatpush1.msra.mxu0 %v2669
    %3727 = vmatprep.subr.mxu0 %v2662
    %3728 = vmatpush1.msra.mxu0 %v2661
    %3729 = vmatprep.subr.mxu0 %v2654
    %3730 = vmatpush1.msra.mxu0 %v2653
    %3731 = vmatprep.subr.mxu0 %v2646
    %3732 = vmatpush1.msra.mxu0 %v2645
    %3733 = vmatprep.subr.mxu0 %v2638
    %3734 = vmatpush1.msra.mxu0 %v2637
    %3735 = vmatprep.subr.mxu0 %v2886
    %3736 = vmatpush2.msra.mxu0 %v2885
    %3737 = vmatprep.subr.mxu0 %v2878
    %3738 = vmatpush2.msra.mxu0 %v2877
    %3739 = vmatprep.subr.mxu0 %v2870
    %3740 = vmatpush2.msra.mxu0 %v2869
    %3741 = vmatprep.subr.mxu0 %v2862
    %3742 = vmatpush2.msra.mxu0 %v2861
    %3743 = vmatprep.subr.mxu0 %v2854
    %3744 = vmatpush2.msra.mxu0 %v2853
    %3745 = vmatprep.subr.mxu0 %v2846
    %3746 = vmatpush2.msra.mxu0 %v2845
    %3747 = vmatprep.subr.mxu0 %v2838
    %3748 = vmatpush2.msra.mxu0 %v2837
    %3749 = vmatprep.subr.mxu0 %v2830
    %3750 = vmatpush2.msra.mxu0 %v2829
    %3751 = vmatprep.subr.mxu0 %v2822
    %3752 = vmatpush2.msra.mxu0 %v2821
    %3753 = vmatprep.subr.mxu0 %v2814
    %3754 = vmatpush2.msra.mxu0 %v2813
    %3755 = vmatprep.subr.mxu0 %v2806
    %3756 = vmatpush2.msra.mxu0 %v2805
    %3757 = vmatprep.subr.mxu0 %v2798
    %3758 = vmatpush2.msra.mxu0 %v2797
    %3759 = vmatprep.subr.mxu0 %v2790
    %3760 = vmatpush2.msra.mxu0 %v2789
    %3761 = vmatprep.subr.mxu0 %v2782
    %3762 = vmatpush2.msra.mxu0 %v2781
    %3763 = vmatprep.subr.mxu0 %v2774
    %3764 = vmatpush2.msra.mxu0 %v2773
    %3765 = vmatprep.subr.mxu0 %v2766
    %3766 = vmatpush2.msra.mxu0 %v2765
    %3767 = vmatprep.mubr.f32.mxu0 %v2626
    %3768 = vmatmul.mubr.f32.gmra.mxu0 %v2625
    %v3769 = vpop.f32.mrf.mxu0
    %v3770 = vadd.f32 %v3666, %v3769
    %v3771 = vpop.f32.mrf.mxu0
    %v3772 = vadd.f32 %v3670, %v3771
    %3773 = vdwg.mxu0
    %3774 = vmatprep.subr.mxu0 %v3014
    %3775 = vmatpush1.msra.mxu0 %v3013
    %3776 = vmatprep.subr.mxu0 %v3006
    %3777 = vmatpush1.msra.mxu0 %v3005
    %3778 = vmatprep.subr.mxu0 %v2998
    %3779 = vmatpush1.msra.mxu0 %v2997
    %3780 = vmatprep.subr.mxu0 %v2990
    %3781 = vmatpush1.msra.mxu0 %v2989
    %3782 = vmatprep.subr.mxu0 %v2982
    %3783 = vmatpush1.msra.mxu0 %v2981
    %3784 = vmatprep.subr.mxu0 %v2974
    %3785 = vmatpush1.msra.mxu0 %v2973
    %3786 = vmatprep.subr.mxu0 %v2966
    %3787 = vmatpush1.msra.mxu0 %v2965
    %3788 = vmatprep.subr.mxu0 %v2958
    %3789 = vmatpush1.msra.mxu0 %v2957
    %3790 = vmatprep.subr.mxu0 %v2950
    %3791 = vmatpush1.msra.mxu0 %v2949
    %3792 = vmatprep.subr.mxu0 %v2942
    %3793 = vmatpush1.msra.mxu0 %v2941
    %3794 = vmatprep.subr.mxu0 %v2934
    %3795 = vmatpush1.msra.mxu0 %v2933
    %3796 = vmatprep.subr.mxu0 %v2926
    %3797 = vmatpush1.msra.mxu0 %v2925
    %3798 = vmatprep.subr.mxu0 %v2918
    %3799 = vmatpush1.msra.mxu0 %v2917
    %3800 = vmatprep.subr.mxu0 %v2910
    %3801 = vmatpush1.msra.mxu0 %v2909
    %3802 = vmatprep.subr.mxu0 %v2902
    %3803 = vmatpush1.msra.mxu0 %v2901
    %3804 = vmatprep.subr.mxu0 %v2894
    %3805 = vmatpush1.msra.mxu0 %v2893
    %3806 = vmatprep.subr.mxu0 %v3142
    %3807 = vmatpush2.msra.mxu0 %v3141
    %3808 = vmatprep.subr.mxu0 %v3134
    %3809 = vmatpush2.msra.mxu0 %v3133
    %3810 = vmatprep.subr.mxu0 %v3126
    %3811 = vmatpush2.msra.mxu0 %v3125
    %3812 = vmatprep.subr.mxu0 %v3118
    %3813 = vmatpush2.msra.mxu0 %v3117
    %3814 = vmatprep.subr.mxu0 %v3110
    %3815 = vmatpush2.msra.mxu0 %v3109
    %3816 = vmatprep.subr.mxu0 %v3102
    %3817 = vmatpush2.msra.mxu0 %v3101
    %3818 = vmatprep.subr.mxu0 %v3094
    %3819 = vmatpush2.msra.mxu0 %v3093
    %3820 = vmatprep.subr.mxu0 %v3086
    %3821 = vmatpush2.msra.mxu0 %v3085
    %3822 = vmatprep.subr.mxu0 %v3078
    %3823 = vmatpush2.msra.mxu0 %v3077
    %3824 = vmatprep.subr.mxu0 %v3070
    %3825 = vmatpush2.msra.mxu0 %v3069
    %3826 = vmatprep.subr.mxu0 %v3062
    %3827 = vmatpush2.msra.mxu0 %v3061
    %3828 = vmatprep.subr.mxu0 %v3054
    %3829 = vmatpush2.msra.mxu0 %v3053
    %3830 = vmatprep.subr.mxu0 %v3046
    %3831 = vmatpush2.msra.mxu0 %v3045
    %3832 = vmatprep.subr.mxu0 %v3038
    %3833 = vmatpush2.msra.mxu0 %v3037
    %3834 = vmatprep.subr.mxu0 %v3030
    %3835 = vmatpush2.msra.mxu0 %v3029
    %3836 = vmatprep.subr.mxu0 %v3022
    %3837 = vmatpush2.msra.mxu0 %v3021
    %3838 = vmatprep.mubr.f32.mxu0 %v2628
    %3839 = vmatmul.mubr.f32.gmra.mxu0 %v2627
    %v3840 = vpop.f32.mrf.mxu0
    %v3841 = vadd.f32 %v3770, %v3840
    %v3842 = vpop.f32.mrf.mxu0
    %v3843 = vadd.f32 %v3772, %v3842
    %3844 = vdwg.mxu0
    %3845 = vmatprep.subr.mxu0 %v3270
    %3846 = vmatpush1.msra.mxu0 %v3269
    %3847 = vmatprep.subr.mxu0 %v3262
    %3848 = vmatpush1.msra.mxu0 %v3261
    %3849 = vmatprep.subr.mxu0 %v3254
    %3850 = vmatpush1.msra.mxu0 %v3253
    %3851 = vmatprep.subr.mxu0 %v3246
    %3852 = vmatpush1.msra.mxu0 %v3245
    %3853 = vmatprep.subr.mxu0 %v3238
    %3854 = vmatpush1.msra.mxu0 %v3237
    %3855 = vmatprep.subr.mxu0 %v3230
    %3856 = vmatpush1.msra.mxu0 %v3229
    %3857 = vmatprep.subr.mxu0 %v3222
    %3858 = vmatpush1.msra.mxu0 %v3221
    %3859 = vmatprep.subr.mxu0 %v3214
    %3860 = vmatpush1.msra.mxu0 %v3213
    %3861 = vmatprep.subr.mxu0 %v3206
    %3862 = vmatpush1.msra.mxu0 %v3205
    %3863 = vmatprep.subr.mxu0 %v3198
    %3864 = vmatpush1.msra.mxu0 %v3197
    %3865 = vmatprep.subr.mxu0 %v3190
    %3866 = vmatpush1.msra.mxu0 %v3189
    %3867 = vmatprep.subr.mxu0 %v3182
    %3868 = vmatpush1.msra.mxu0 %v3181
    %3869 = vmatprep.subr.mxu0 %v3174
    %3870 = vmatpush1.msra.mxu0 %v3173
    %3871 = vmatprep.subr.mxu0 %v3166
    %3872 = vmatpush1.msra.mxu0 %v3165
    %3873 = vmatprep.subr.mxu0 %v3158
    %3874 = vmatpush1.msra.mxu0 %v3157
    %3875 = vmatprep.subr.mxu0 %v3150
    %3876 = vmatpush1.msra.mxu0 %v3149
    %3877 = vmatprep.subr.mxu0 %v3398
    %3878 = vmatpush2.msra.mxu0 %v3397
    %3879 = vmatprep.subr.mxu0 %v3390
    %3880 = vmatpush2.msra.mxu0 %v3389
    %3881 = vmatprep.subr.mxu0 %v3382
    %3882 = vmatpush2.msra.mxu0 %v3381
    %3883 = vmatprep.subr.mxu0 %v3374
    %3884 = vmatpush2.msra.mxu0 %v3373
    %3885 = vmatprep.subr.mxu0 %v3366
    %3886 = vmatpush2.msra.mxu0 %v3365
    %3887 = vmatprep.subr.mxu0 %v3358
    %3888 = vmatpush2.msra.mxu0 %v3357
    %3889 = vmatprep.subr.mxu0 %v3350
    %3890 = vmatpush2.msra.mxu0 %v3349
    %3891 = vmatprep.subr.mxu0 %v3342
    %3892 = vmatpush2.msra.mxu0 %v3341
    %3893 = vmatprep.subr.mxu0 %v3334
    %3894 = vmatpush2.msra.mxu0 %v3333
    %3895 = vmatprep.subr.mxu0 %v3326
    %3896 = vmatpush2.msra.mxu0 %v3325
    %3897 = vmatprep.subr.mxu0 %v3318
    %3898 = vmatpush2.msra.mxu0 %v3317
    %3899 = vmatprep.subr.mxu0 %v3310
    %3900 = vmatpush2.msra.mxu0 %v3309
    %3901 = vmatprep.subr.mxu0 %v3302
    %3902 = vmatpush2.msra.mxu0 %v3301
    %3903 = vmatprep.subr.mxu0 %v3294
    %3904 = vmatpush2.msra.mxu0 %v3293
    %3905 = vmatprep.subr.mxu0 %v3286
    %3906 = vmatpush2.msra.mxu0 %v3285
    %3907 = vmatprep.subr.mxu0 %v3278
    %3908 = vmatpush2.msra.mxu0 %v3277
    %3909 = vmatprep.mubr.f32.mxu0 %v2630
    %3910 = vmatmul.mubr.f32.gmra.mxu0 %v2629
    %v3911 = vpop.f32.mrf.mxu0
    %v3912 = vadd.f32 %v3841, %v3911
    %v3913 = vpop.f32.mrf.mxu0
    %v3914 = vadd.f32 %v3843, %v3913
    %3915 = vdwg.mxu0
    %3916 = vmatprep.subr.mxu0 %v3526
    %3917 = vmatpush1.msra.mxu0 %v3525
    %3918 = vmatprep.subr.mxu0 %v3518
    %3919 = vmatpush1.msra.mxu0 %v3517
    %3920 = vmatprep.subr.mxu0 %v3510
    %3921 = vmatpush1.msra.mxu0 %v3509
    %3922 = vmatprep.subr.mxu0 %v3502
    %3923 = vmatpush1.msra.mxu0 %v3501
    %3924 = vmatprep.subr.mxu0 %v3494
    %3925 = vmatpush1.msra.mxu0 %v3493
    %3926 = vmatprep.subr.mxu0 %v3486
    %3927 = vmatpush1.msra.mxu0 %v3485
    %3928 = vmatprep.subr.mxu0 %v3478
    %3929 = vmatpush1.msra.mxu0 %v3477
    %3930 = vmatprep.subr.mxu0 %v3470
    %3931 = vmatpush1.msra.mxu0 %v3469
    %3932 = vmatprep.subr.mxu0 %v3462
    %3933 = vmatpush1.msra.mxu0 %v3461
    %3934 = vmatprep.subr.mxu0 %v3454
    %3935 = vmatpush1.msra.mxu0 %v3453
    %3936 = vmatprep.subr.mxu0 %v3446
    %3937 = vmatpush1.msra.mxu0 %v3445
    %3938 = vmatprep.subr.mxu0 %v3438
    %3939 = vmatpush1.msra.mxu0 %v3437
    %3940 = vmatprep.subr.mxu0 %v3430
    %3941 = vmatpush1.msra.mxu0 %v3429
    %3942 = vmatprep.subr.mxu0 %v3422
    %3943 = vmatpush1.msra.mxu0 %v3421
    %3944 = vmatprep.subr.mxu0 %v3414
    %3945 = vmatpush1.msra.mxu0 %v3413
    %3946 = vmatprep.subr.mxu0 %v3406
    %3947 = vmatpush1.msra.mxu0 %v3405
    %3948 = vmatprep.subr.mxu0 %v3654
    %3949 = vmatpush2.msra.mxu0 %v3653
    %3950 = vmatprep.subr.mxu0 %v3646
    %3951 = vmatpush2.msra.mxu0 %v3645
    %3952 = vmatprep.subr.mxu0 %v3638
    %3953 = vmatpush2.msra.mxu0 %v3637
    %3954 = vmatprep.subr.mxu0 %v3630
    %3955 = vmatpush2.msra.mxu0 %v3629
    %3956 = vmatprep.subr.mxu0 %v3622
    %3957 = vmatpush2.msra.mxu0 %v3621
    %3958 = vmatprep.subr.mxu0 %v3614
    %3959 = vmatpush2.msra.mxu0 %v3613
    %3960 = vmatprep.subr.mxu0 %v3606
    %3961 = vmatpush2.msra.mxu0 %v3605
    %3962 = vmatprep.subr.mxu0 %v3598
    %3963 = vmatpush2.msra.mxu0 %v3597
    %3964 = vmatprep.subr.mxu0 %v3590
    %3965 = vmatpush2.msra.mxu0 %v3589
    %3966 = vmatprep.subr.mxu0 %v3582
    %3967 = vmatpush2.msra.mxu0 %v3581
    %3968 = vmatprep.subr.mxu0 %v3574
    %3969 = vmatpush2.msra.mxu0 %v3573
    %3970 = vmatprep.subr.mxu0 %v3566
    %3971 = vmatpush2.msra.mxu0 %v3565
    %3972 = vmatprep.subr.mxu0 %v3558
    %3973 = vmatpush2.msra.mxu0 %v3557
    %3974 = vmatprep.subr.mxu0 %v3550
    %3975 = vmatpush2.msra.mxu0 %v3549
    %3976 = vmatprep.subr.mxu0 %v3542
    %3977 = vmatpush2.msra.mxu0 %v3541
    %3978 = vmatprep.subr.mxu0 %v3534
    %3979 = vmatpush2.msra.mxu0 %v3533
    %3980 = vmatprep.mubr.f32.mxu0 %v2632
    %3981 = vmatmul.mubr.f32.gmra.mxu0 %v2631
    %v3982 = vpop.f32.mrf.mxu0
    %v3983 = vadd.f32 %v3912, %v3982
    %v3984 = vpop.f32.mrf.mxu0
    %v3985 = vadd.f32 %v3914, %v3984
    %3986 = vdwg.mxu0
    %3987 = vmatprep.subr.mxu0 %v2760
    %3988 = vmatpush1.msra.mxu0 %v2759
    %3989 = vmatprep.subr.mxu0 %v2752
    %3990 = vmatpush1.msra.mxu0 %v2751
    %3991 = vmatprep.subr.mxu0 %v2744
    %3992 = vmatpush1.msra.mxu0 %v2743
    %3993 = vmatprep.subr.mxu0 %v2736
    %3994 = vmatpush1.msra.mxu0 %v2735
    %3995 = vmatprep.subr.mxu0 %v2728
    %3996 = vmatpush1.msra.mxu0 %v2727
    %3997 = vmatprep.subr.mxu0 %v2720
    %3998 = vmatpush1.msra.mxu0 %v2719
    %3999 = vmatprep.subr.mxu0 %v2712
    %4000 = vmatpush1.msra.mxu0 %v2711
    %4001 = vmatprep.subr.mxu0 %v2704
    %4002 = vmatpush1.msra.mxu0 %v2703
    %4003 = vmatprep.subr.mxu0 %v2696
    %4004 = vmatpush1.msra.mxu0 %v2695
    %4005 = vmatprep.subr.mxu0 %v2688
    %4006 = vmatpush1.msra.mxu0 %v2687
    %4007 = vmatprep.subr.mxu0 %v2680
    %4008 = vmatpush1.msra.mxu0 %v2679
    %4009 = vmatprep.subr.mxu0 %v2672
    %4010 = vmatpush1.msra.mxu0 %v2671
    %4011 = vmatprep.subr.mxu0 %v2664
    %4012 = vmatpush1.msra.mxu0 %v2663
    %4013 = vmatprep.subr.mxu0 %v2656
    %4014 = vmatpush1.msra.mxu0 %v2655
    %4015 = vmatprep.subr.mxu0 %v2648
    %4016 = vmatpush1.msra.mxu0 %v2647
    %4017 = vmatprep.subr.mxu0 %v2640
    %4018 = vmatpush1.msra.mxu0 %v2639
    %4019 = vmatprep.subr.mxu0 %v2888
    %4020 = vmatpush2.msra.mxu0 %v2887
    %4021 = vmatprep.subr.mxu0 %v2880
    %4022 = vmatpush2.msra.mxu0 %v2879
    %4023 = vmatprep.subr.mxu0 %v2872
    %4024 = vmatpush2.msra.mxu0 %v2871
    %4025 = vmatprep.subr.mxu0 %v2864
    %4026 = vmatpush2.msra.mxu0 %v2863
    %4027 = vmatprep.subr.mxu0 %v2856
    %4028 = vmatpush2.msra.mxu0 %v2855
    %4029 = vmatprep.subr.mxu0 %v2848
    %4030 = vmatpush2.msra.mxu0 %v2847
    %4031 = vmatprep.subr.mxu0 %v2840
    %4032 = vmatpush2.msra.mxu0 %v2839
    %4033 = vmatprep.subr.mxu0 %v2832
    %4034 = vmatpush2.msra.mxu0 %v2831
    %4035 = vmatprep.subr.mxu0 %v2824
    %4036 = vmatpush2.msra.mxu0 %v2823
    %4037 = vmatprep.subr.mxu0 %v2816
    %4038 = vmatpush2.msra.mxu0 %v2815
    %4039 = vmatprep.subr.mxu0 %v2808
    %4040 = vmatpush2.msra.mxu0 %v2807
    %4041 = vmatprep.subr.mxu0 %v2800
    %4042 = vmatpush2.msra.mxu0 %v2799
    %4043 = vmatprep.subr.mxu0 %v2792
    %4044 = vmatpush2.msra.mxu0 %v2791
    %4045 = vmatprep.subr.mxu0 %v2784
    %4046 = vmatpush2.msra.mxu0 %v2783
    %4047 = vmatprep.subr.mxu0 %v2776
    %4048 = vmatpush2.msra.mxu0 %v2775
    %4049 = vmatprep.subr.mxu0 %v2768
    %4050 = vmatpush2.msra.mxu0 %v2767
    %4051 = vmatprep.mubr.f32.mxu0 %v2626
    %4052 = vmatmul.mubr.f32.gmra.mxu0 %v2625
    %v4053 = vpop.f32.mrf.mxu0
    %v4054 = vadd.f32 %v3674, %v4053
    %v4055 = vpop.f32.mrf.mxu0
    %v4056 = vadd.f32 %v3678, %v4055
    %4057 = vdwg.mxu0
    %4058 = vmatprep.subr.mxu0 %v3016
    %4059 = vmatpush1.msra.mxu0 %v3015
    %4060 = vmatprep.subr.mxu0 %v3008
    %4061 = vmatpush1.msra.mxu0 %v3007
    %4062 = vmatprep.subr.mxu0 %v3000
    %4063 = vmatpush1.msra.mxu0 %v2999
    %4064 = vmatprep.subr.mxu0 %v2992
    %4065 = vmatpush1.msra.mxu0 %v2991
    %4066 = vmatprep.subr.mxu0 %v2984
    %4067 = vmatpush1.msra.mxu0 %v2983
    %4068 = vmatprep.subr.mxu0 %v2976
    %4069 = vmatpush1.msra.mxu0 %v2975
    %4070 = vmatprep.subr.mxu0 %v2968
    %4071 = vmatpush1.msra.mxu0 %v2967
    %4072 = vmatprep.subr.mxu0 %v2960
    %4073 = vmatpush1.msra.mxu0 %v2959
    %4074 = vmatprep.subr.mxu0 %v2952
    %4075 = vmatpush1.msra.mxu0 %v2951
    %4076 = vmatprep.subr.mxu0 %v2944
    %4077 = vmatpush1.msra.mxu0 %v2943
    %4078 = vmatprep.subr.mxu0 %v2936
    %4079 = vmatpush1.msra.mxu0 %v2935
    %4080 = vmatprep.subr.mxu0 %v2928
    %4081 = vmatpush1.msra.mxu0 %v2927
    %4082 = vmatprep.subr.mxu0 %v2920
    %4083 = vmatpush1.msra.mxu0 %v2919
    %4084 = vmatprep.subr.mxu0 %v2912
    %4085 = vmatpush1.msra.mxu0 %v2911
    %4086 = vmatprep.subr.mxu0 %v2904
    %4087 = vmatpush1.msra.mxu0 %v2903
    %4088 = vmatprep.subr.mxu0 %v2896
    %4089 = vmatpush1.msra.mxu0 %v2895
    %4090 = vmatprep.subr.mxu0 %v3144
    %4091 = vmatpush2.msra.mxu0 %v3143
    %4092 = vmatprep.subr.mxu0 %v3136
    %4093 = vmatpush2.msra.mxu0 %v3135
    %4094 = vmatprep.subr.mxu0 %v3128
    %4095 = vmatpush2.msra.mxu0 %v3127
    %4096 = vmatprep.subr.mxu0 %v3120
    %4097 = vmatpush2.msra.mxu0 %v3119
    %4098 = vmatprep.subr.mxu0 %v3112
    %4099 = vmatpush2.msra.mxu0 %v3111
    %4100 = vmatprep.subr.mxu0 %v3104
    %4101 = vmatpush2.msra.mxu0 %v3103
    %4102 = vmatprep.subr.mxu0 %v3096
    %4103 = vmatpush2.msra.mxu0 %v3095
    %4104 = vmatprep.subr.mxu0 %v3088
    %4105 = vmatpush2.msra.mxu0 %v3087
    %4106 = vmatprep.subr.mxu0 %v3080
    %4107 = vmatpush2.msra.mxu0 %v3079
    %4108 = vmatprep.subr.mxu0 %v3072
    %4109 = vmatpush2.msra.mxu0 %v3071
    %4110 = vmatprep.subr.mxu0 %v3064
    %4111 = vmatpush2.msra.mxu0 %v3063
    %4112 = vmatprep.subr.mxu0 %v3056
    %4113 = vmatpush2.msra.mxu0 %v3055
    %4114 = vmatprep.subr.mxu0 %v3048
    %4115 = vmatpush2.msra.mxu0 %v3047
    %4116 = vmatprep.subr.mxu0 %v3040
    %4117 = vmatpush2.msra.mxu0 %v3039
    %4118 = vmatprep.subr.mxu0 %v3032
    %4119 = vmatpush2.msra.mxu0 %v3031
    %4120 = vmatprep.subr.mxu0 %v3024
    %4121 = vmatpush2.msra.mxu0 %v3023
    %4122 = vmatprep.mubr.f32.mxu0 %v2628
    %4123 = vmatmul.mubr.f32.gmra.mxu0 %v2627
    %v4124 = vpop.f32.mrf.mxu0
    %v4125 = vadd.f32 %v4054, %v4124
    %v4126 = vpop.f32.mrf.mxu0
    %v4127 = vadd.f32 %v4056, %v4126
    %4128 = vdwg.mxu0
    %4129 = vmatprep.subr.mxu0 %v3272
    %4130 = vmatpush1.msra.mxu0 %v3271
    %4131 = vmatprep.subr.mxu0 %v3264
    %4132 = vmatpush1.msra.mxu0 %v3263
    %4133 = vmatprep.subr.mxu0 %v3256
    %4134 = vmatpush1.msra.mxu0 %v3255
    %4135 = vmatprep.subr.mxu0 %v3248
    %4136 = vmatpush1.msra.mxu0 %v3247
    %4137 = vmatprep.subr.mxu0 %v3240
    %4138 = vmatpush1.msra.mxu0 %v3239
    %4139 = vmatprep.subr.mxu0 %v3232
    %4140 = vmatpush1.msra.mxu0 %v3231
    %4141 = vmatprep.subr.mxu0 %v3224
    %4142 = vmatpush1.msra.mxu0 %v3223
    %4143 = vmatprep.subr.mxu0 %v3216
    %4144 = vmatpush1.msra.mxu0 %v3215
    %4145 = vmatprep.subr.mxu0 %v3208
    %4146 = vmatpush1.msra.mxu0 %v3207
    %4147 = vmatprep.subr.mxu0 %v3200
    %4148 = vmatpush1.msra.mxu0 %v3199
    %4149 = vmatprep.subr.mxu0 %v3192
    %4150 = vmatpush1.msra.mxu0 %v3191
    %4151 = vmatprep.subr.mxu0 %v3184
    %4152 = vmatpush1.msra.mxu0 %v3183
    %4153 = vmatprep.subr.mxu0 %v3176
    %4154 = vmatpush1.msra.mxu0 %v3175
    %4155 = vmatprep.subr.mxu0 %v3168
    %4156 = vmatpush1.msra.mxu0 %v3167
    %4157 = vmatprep.subr.mxu0 %v3160
    %4158 = vmatpush1.msra.mxu0 %v3159
    %4159 = vmatprep.subr.mxu0 %v3152
    %4160 = vmatpush1.msra.mxu0 %v3151
    %4161 = vmatprep.subr.mxu0 %v3400
    %4162 = vmatpush2.msra.mxu0 %v3399
    %4163 = vmatprep.subr.mxu0 %v3392
    %4164 = vmatpush2.msra.mxu0 %v3391
    %4165 = vmatprep.subr.mxu0 %v3384
    %4166 = vmatpush2.msra.mxu0 %v3383
    %4167 = vmatprep.subr.mxu0 %v3376
    %4168 = vmatpush2.msra.mxu0 %v3375
    %4169 = vmatprep.subr.mxu0 %v3368
    %4170 = vmatpush2.msra.mxu0 %v3367
    %4171 = vmatprep.subr.mxu0 %v3360
    %4172 = vmatpush2.msra.mxu0 %v3359
    %4173 = vmatprep.subr.mxu0 %v3352
    %4174 = vmatpush2.msra.mxu0 %v3351
    %4175 = vmatprep.subr.mxu0 %v3344
    %4176 = vmatpush2.msra.mxu0 %v3343
    %4177 = vmatprep.subr.mxu0 %v3336
    %4178 = vmatpush2.msra.mxu0 %v3335
    %4179 = vmatprep.subr.mxu0 %v3328
    %4180 = vmatpush2.msra.mxu0 %v3327
    %4181 = vmatprep.subr.mxu0 %v3320
    %4182 = vmatpush2.msra.mxu0 %v3319
    %4183 = vmatprep.subr.mxu0 %v3312
    %4184 = vmatpush2.msra.mxu0 %v3311
    %4185 = vmatprep.subr.mxu0 %v3304
    %4186 = vmatpush2.msra.mxu0 %v3303
    %4187 = vmatprep.subr.mxu0 %v3296
    %4188 = vmatpush2.msra.mxu0 %v3295
    %4189 = vmatprep.subr.mxu0 %v3288
    %4190 = vmatpush2.msra.mxu0 %v3287
    %4191 = vmatprep.subr.mxu0 %v3280
    %4192 = vmatpush2.msra.mxu0 %v3279
    %4193 = vmatprep.mubr.f32.mxu0 %v2630
    %4194 = vmatmul.mubr.f32.gmra.mxu0 %v2629
    %v4195 = vpop.f32.mrf.mxu0
    %v4196 = vadd.f32 %v4125, %v4195
    %v4197 = vpop.f32.mrf.mxu0
    %v4198 = vadd.f32 %v4127, %v4197
    %4199 = vdwg.mxu0
    %4200 = vmatprep.subr.mxu0 %v3528
    %4201 = vmatpush1.msra.mxu0 %v3527
    %4202 = vmatprep.subr.mxu0 %v3520
    %4203 = vmatpush1.msra.mxu0 %v3519
    %4204 = vmatprep.subr.mxu0 %v3512
    %4205 = vmatpush1.msra.mxu0 %v3511
    %4206 = vmatprep.subr.mxu0 %v3504
    %4207 = vmatpush1.msra.mxu0 %v3503
    %4208 = vmatprep.subr.mxu0 %v3496
    %4209 = vmatpush1.msra.mxu0 %v3495
    %4210 = vmatprep.subr.mxu0 %v3488
    %4211 = vmatpush1.msra.mxu0 %v3487
    %4212 = vmatprep.subr.mxu0 %v3480
    %4213 = vmatpush1.msra.mxu0 %v3479
    %4214 = vmatprep.subr.mxu0 %v3472
    %4215 = vmatpush1.msra.mxu0 %v3471
    %4216 = vmatprep.subr.mxu0 %v3464
    %4217 = vmatpush1.msra.mxu0 %v3463
    %4218 = vmatprep.subr.mxu0 %v3456
    %4219 = vmatpush1.msra.mxu0 %v3455
    %4220 = vmatprep.subr.mxu0 %v3448
    %4221 = vmatpush1.msra.mxu0 %v3447
    %4222 = vmatprep.subr.mxu0 %v3440
    %4223 = vmatpush1.msra.mxu0 %v3439
    %4224 = vmatprep.subr.mxu0 %v3432
    %4225 = vmatpush1.msra.mxu0 %v3431
    %4226 = vmatprep.subr.mxu0 %v3424
    %4227 = vmatpush1.msra.mxu0 %v3423
    %4228 = vmatprep.subr.mxu0 %v3416
    %4229 = vmatpush1.msra.mxu0 %v3415
    %4230 = vmatprep.subr.mxu0 %v3408
    %4231 = vmatpush1.msra.mxu0 %v3407
    %4232 = vmatprep.subr.mxu0 %v3656
    %4233 = vmatpush2.msra.mxu0 %v3655
    %4234 = vmatprep.subr.mxu0 %v3648
    %4235 = vmatpush2.msra.mxu0 %v3647
    %4236 = vmatprep.subr.mxu0 %v3640
    %4237 = vmatpush2.msra.mxu0 %v3639
    %4238 = vmatprep.subr.mxu0 %v3632
    %4239 = vmatpush2.msra.mxu0 %v3631
    %4240 = vmatprep.subr.mxu0 %v3624
    %4241 = vmatpush2.msra.mxu0 %v3623
    %4242 = vmatprep.subr.mxu0 %v3616
    %4243 = vmatpush2.msra.mxu0 %v3615
    %4244 = vmatprep.subr.mxu0 %v3608
    %4245 = vmatpush2.msra.mxu0 %v3607
    %4246 = vmatprep.subr.mxu0 %v3600
    %4247 = vmatpush2.msra.mxu0 %v3599
    %4248 = vmatprep.subr.mxu0 %v3592
    %4249 = vmatpush2.msra.mxu0 %v3591
    %4250 = vmatprep.subr.mxu0 %v3584
    %4251 = vmatpush2.msra.mxu0 %v3583
    %4252 = vmatprep.subr.mxu0 %v3576
    %4253 = vmatpush2.msra.mxu0 %v3575
    %4254 = vmatprep.subr.mxu0 %v3568
    %4255 = vmatpush2.msra.mxu0 %v3567
    %4256 = vmatprep.subr.mxu0 %v3560
    %4257 = vmatpush2.msra.mxu0 %v3559
    %4258 = vmatprep.subr.mxu0 %v3552
    %4259 = vmatpush2.msra.mxu0 %v3551
    %4260 = vmatprep.subr.mxu0 %v3544
    %4261 = vmatpush2.msra.mxu0 %v3543
    %4262 = vmatprep.subr.mxu0 %v3536
    %4263 = vmatpush2.msra.mxu0 %v3535
    %4264 = vmatprep.mubr.f32.mxu0 %v2632
    %4265 = vmatmul.mubr.f32.gmra.mxu0 %v2631
    %v4266 = vpop.f32.mrf.mxu0
    %v4267 = vadd.f32 %v4196, %v4266
    %v4268 = vpop.f32.mrf.mxu0
    %v4269 = vadd.f32 %v4198, %v4268
    %4270 = vdwg.mxu0
    %4271 = vmatprep.subr.mxu0 %v2762
    %4272 = vmatpush1.msra.mxu0 %v2761
    %4273 = vmatprep.subr.mxu0 %v2754
    %4274 = vmatpush1.msra.mxu0 %v2753
    %4275 = vmatprep.subr.mxu0 %v2746
    %4276 = vmatpush1.msra.mxu0 %v2745
    %4277 = vmatprep.subr.mxu0 %v2738
    %4278 = vmatpush1.msra.mxu0 %v2737
    %4279 = vmatprep.subr.mxu0 %v2730
    %4280 = vmatpush1.msra.mxu0 %v2729
    %4281 = vmatprep.subr.mxu0 %v2722
    %4282 = vmatpush1.msra.mxu0 %v2721
    %4283 = vmatprep.subr.mxu0 %v2714
    %4284 = vmatpush1.msra.mxu0 %v2713
    %4285 = vmatprep.subr.mxu0 %v2706
    %4286 = vmatpush1.msra.mxu0 %v2705
    %4287 = vmatprep.subr.mxu0 %v2698
    %4288 = vmatpush1.msra.mxu0 %v2697
    %4289 = vmatprep.subr.mxu0 %v2690
    %4290 = vmatpush1.msra.mxu0 %v2689
    %4291 = vmatprep.subr.mxu0 %v2682
    %4292 = vmatpush1.msra.mxu0 %v2681
    %4293 = vmatprep.subr.mxu0 %v2674
    %4294 = vmatpush1.msra.mxu0 %v2673
    %4295 = vmatprep.subr.mxu0 %v2666
    %4296 = vmatpush1.msra.mxu0 %v2665
    %4297 = vmatprep.subr.mxu0 %v2658
    %4298 = vmatpush1.msra.mxu0 %v2657
    %4299 = vmatprep.subr.mxu0 %v2650
    %4300 = vmatpush1.msra.mxu0 %v2649
    %4301 = vmatprep.subr.mxu0 %v2642
    %4302 = vmatpush1.msra.mxu0 %v2641
    %4303 = vmatprep.subr.mxu0 %v2890
    %4304 = vmatpush2.msra.mxu0 %v2889
    %4305 = vmatprep.subr.mxu0 %v2882
    %4306 = vmatpush2.msra.mxu0 %v2881
    %4307 = vmatprep.subr.mxu0 %v2874
    %4308 = vmatpush2.msra.mxu0 %v2873
    %4309 = vmatprep.subr.mxu0 %v2866
    %4310 = vmatpush2.msra.mxu0 %v2865
    %4311 = vmatprep.subr.mxu0 %v2858
    %4312 = vmatpush2.msra.mxu0 %v2857
    %4313 = vmatprep.subr.mxu0 %v2850
    %4314 = vmatpush2.msra.mxu0 %v2849
    %4315 = vmatprep.subr.mxu0 %v2842
    %4316 = vmatpush2.msra.mxu0 %v2841
    %4317 = vmatprep.subr.mxu0 %v2834
    %4318 = vmatpush2.msra.mxu0 %v2833
    %4319 = vmatprep.subr.mxu0 %v2826
    %4320 = vmatpush2.msra.mxu0 %v2825
    %4321 = vmatprep.subr.mxu0 %v2818
    %4322 = vmatpush2.msra.mxu0 %v2817
    %4323 = vmatprep.subr.mxu0 %v2810
    %4324 = vmatpush2.msra.mxu0 %v2809
    %4325 = vmatprep.subr.mxu0 %v2802
    %4326 = vmatpush2.msra.mxu0 %v2801
    %4327 = vmatprep.subr.mxu0 %v2794
    %4328 = vmatpush2.msra.mxu0 %v2793
    %4329 = vmatprep.subr.mxu0 %v2786
    %4330 = vmatpush2.msra.mxu0 %v2785
    %4331 = vmatprep.subr.mxu0 %v2778
    %4332 = vmatpush2.msra.mxu0 %v2777
    %4333 = vmatprep.subr.mxu0 %v2770
    %4334 = vmatpush2.msra.mxu0 %v2769
    %4335 = vmatprep.mubr.f32.mxu0 %v2626
    %4336 = vmatmul.mubr.f32.gmra.mxu0 %v2625
    %v4337 = vpop.f32.mrf.mxu0
    %v4338 = vadd.f32 %v3682, %v4337
    %v4339 = vpop.f32.mrf.mxu0
    %v4340 = vadd.f32 %v3686, %v4339
    %4341 = vdwg.mxu0
    %4342 = vmatprep.subr.mxu0 %v3018
    %4343 = vmatpush1.msra.mxu0 %v3017
    %4344 = vmatprep.subr.mxu0 %v3010
    %4345 = vmatpush1.msra.mxu0 %v3009
    %4346 = vmatprep.subr.mxu0 %v3002
    %4347 = vmatpush1.msra.mxu0 %v3001
    %4348 = vmatprep.subr.mxu0 %v2994
    %4349 = vmatpush1.msra.mxu0 %v2993
    %4350 = vmatprep.subr.mxu0 %v2986
    %4351 = vmatpush1.msra.mxu0 %v2985
    %4352 = vmatprep.subr.mxu0 %v2978
    %4353 = vmatpush1.msra.mxu0 %v2977
    %4354 = vmatprep.subr.mxu0 %v2970
    %4355 = vmatpush1.msra.mxu0 %v2969
    %4356 = vmatprep.subr.mxu0 %v2962
    %4357 = vmatpush1.msra.mxu0 %v2961
    %4358 = vmatprep.subr.mxu0 %v2954
    %4359 = vmatpush1.msra.mxu0 %v2953
    %4360 = vmatprep.subr.mxu0 %v2946
    %4361 = vmatpush1.msra.mxu0 %v2945
    %4362 = vmatprep.subr.mxu0 %v2938
    %4363 = vmatpush1.msra.mxu0 %v2937
    %4364 = vmatprep.subr.mxu0 %v2930
    %4365 = vmatpush1.msra.mxu0 %v2929
    %4366 = vmatprep.subr.mxu0 %v2922
    %4367 = vmatpush1.msra.mxu0 %v2921
    %4368 = vmatprep.subr.mxu0 %v2914
    %4369 = vmatpush1.msra.mxu0 %v2913
    %4370 = vmatprep.subr.mxu0 %v2906
    %4371 = vmatpush1.msra.mxu0 %v2905
    %4372 = vmatprep.subr.mxu0 %v2898
    %4373 = vmatpush1.msra.mxu0 %v2897
    %4374 = vmatprep.subr.mxu0 %v3146
    %4375 = vmatpush2.msra.mxu0 %v3145
    %4376 = vmatprep.subr.mxu0 %v3138
    %4377 = vmatpush2.msra.mxu0 %v3137
    %4378 = vmatprep.subr.mxu0 %v3130
    %4379 = vmatpush2.msra.mxu0 %v3129
    %4380 = vmatprep.subr.mxu0 %v3122
    %4381 = vmatpush2.msra.mxu0 %v3121
    %4382 = vmatprep.subr.mxu0 %v3114
    %4383 = vmatpush2.msra.mxu0 %v3113
    %4384 = vmatprep.subr.mxu0 %v3106
    %4385 = vmatpush2.msra.mxu0 %v3105
    %4386 = vmatprep.subr.mxu0 %v3098
    %4387 = vmatpush2.msra.mxu0 %v3097
    %4388 = vmatprep.subr.mxu0 %v3090
    %4389 = vmatpush2.msra.mxu0 %v3089
    %4390 = vmatprep.subr.mxu0 %v3082
    %4391 = vmatpush2.msra.mxu0 %v3081
    %4392 = vmatprep.subr.mxu0 %v3074
    %4393 = vmatpush2.msra.mxu0 %v3073
    %4394 = vmatprep.subr.mxu0 %v3066
    %4395 = vmatpush2.msra.mxu0 %v3065
    %4396 = vmatprep.subr.mxu0 %v3058
    %4397 = vmatpush2.msra.mxu0 %v3057
    %4398 = vmatprep.subr.mxu0 %v3050
    %4399 = vmatpush2.msra.mxu0 %v3049
    %4400 = vmatprep.subr.mxu0 %v3042
    %4401 = vmatpush2.msra.mxu0 %v3041
    %4402 = vmatprep.subr.mxu0 %v3034
    %4403 = vmatpush2.msra.mxu0 %v3033
    %4404 = vmatprep.subr.mxu0 %v3026
    %4405 = vmatpush2.msra.mxu0 %v3025
    %4406 = vmatprep.mubr.f32.mxu0 %v2628
    %4407 = vmatmul.mubr.f32.gmra.mxu0 %v2627
    %v4408 = vpop.f32.mrf.mxu0
    %v4409 = vadd.f32 %v4338, %v4408
    %v4410 = vpop.f32.mrf.mxu0
    %v4411 = vadd.f32 %v4340, %v4410
    %4412 = vdwg.mxu0
    %4413 = vmatprep.subr.mxu0 %v3274
    %4414 = vmatpush1.msra.mxu0 %v3273
    %4415 = vmatprep.subr.mxu0 %v3266
    %4416 = vmatpush1.msra.mxu0 %v3265
    %4417 = vmatprep.subr.mxu0 %v3258
    %4418 = vmatpush1.msra.mxu0 %v3257
    %4419 = vmatprep.subr.mxu0 %v3250
    %4420 = vmatpush1.msra.mxu0 %v3249
    %4421 = vmatprep.subr.mxu0 %v3242
    %4422 = vmatpush1.msra.mxu0 %v3241
    %4423 = vmatprep.subr.mxu0 %v3234
    %4424 = vmatpush1.msra.mxu0 %v3233
    %4425 = vmatprep.subr.mxu0 %v3226
    %4426 = vmatpush1.msra.mxu0 %v3225
    %4427 = vmatprep.subr.mxu0 %v3218
    %4428 = vmatpush1.msra.mxu0 %v3217
    %4429 = vmatprep.subr.mxu0 %v3210
    %4430 = vmatpush1.msra.mxu0 %v3209
    %4431 = vmatprep.subr.mxu0 %v3202
    %4432 = vmatpush1.msra.mxu0 %v3201
    %4433 = vmatprep.subr.mxu0 %v3194
    %4434 = vmatpush1.msra.mxu0 %v3193
    %4435 = vmatprep.subr.mxu0 %v3186
    %4436 = vmatpush1.msra.mxu0 %v3185
    %4437 = vmatprep.subr.mxu0 %v3178
    %4438 = vmatpush1.msra.mxu0 %v3177
    %4439 = vmatprep.subr.mxu0 %v3170
    %4440 = vmatpush1.msra.mxu0 %v3169
    %4441 = vmatprep.subr.mxu0 %v3162
    %4442 = vmatpush1.msra.mxu0 %v3161
    %4443 = vmatprep.subr.mxu0 %v3154
    %4444 = vmatpush1.msra.mxu0 %v3153
    %4445 = vmatprep.subr.mxu0 %v3402
    %4446 = vmatpush2.msra.mxu0 %v3401
    %4447 = vmatprep.subr.mxu0 %v3394
    %4448 = vmatpush2.msra.mxu0 %v3393
    %4449 = vmatprep.subr.mxu0 %v3386
    %4450 = vmatpush2.msra.mxu0 %v3385
    %4451 = vmatprep.subr.mxu0 %v3378
    %4452 = vmatpush2.msra.mxu0 %v3377
    %4453 = vmatprep.subr.mxu0 %v3370
    %4454 = vmatpush2.msra.mxu0 %v3369
    %4455 = vmatprep.subr.mxu0 %v3362
    %4456 = vmatpush2.msra.mxu0 %v3361
    %4457 = vmatprep.subr.mxu0 %v3354
    %4458 = vmatpush2.msra.mxu0 %v3353
    %4459 = vmatprep.subr.mxu0 %v3346
    %4460 = vmatpush2.msra.mxu0 %v3345
    %4461 = vmatprep.subr.mxu0 %v3338
    %4462 = vmatpush2.msra.mxu0 %v3337
    %4463 = vmatprep.subr.mxu0 %v3330
    %4464 = vmatpush2.msra.mxu0 %v3329
    %4465 = vmatprep.subr.mxu0 %v3322
    %4466 = vmatpush2.msra.mxu0 %v3321
    %4467 = vmatprep.subr.mxu0 %v3314
    %4468 = vmatpush2.msra.mxu0 %v3313
    %4469 = vmatprep.subr.mxu0 %v3306
    %4470 = vmatpush2.msra.mxu0 %v3305
    %4471 = vmatprep.subr.mxu0 %v3298
    %4472 = vmatpush2.msra.mxu0 %v3297
    %4473 = vmatprep.subr.mxu0 %v3290
    %4474 = vmatpush2.msra.mxu0 %v3289
    %4475 = vmatprep.subr.mxu0 %v3282
    %4476 = vmatpush2.msra.mxu0 %v3281
    %4477 = vmatprep.mubr.f32.mxu0 %v2630
    %4478 = vmatmul.mubr.f32.gmra.mxu0 %v2629
    %v4479 = vpop.f32.mrf.mxu0
    %v4480 = vadd.f32 %v4409, %v4479
    %v4481 = vpop.f32.mrf.mxu0
    %v4482 = vadd.f32 %v4411, %v4481
    %4483 = vdwg.mxu0
    %4484 = vmatprep.subr.mxu0 %v3530
    %4485 = vmatpush1.msra.mxu0 %v3529
    %4486 = vmatprep.subr.mxu0 %v3522
    %4487 = vmatpush1.msra.mxu0 %v3521
    %4488 = vmatprep.subr.mxu0 %v3514
    %4489 = vmatpush1.msra.mxu0 %v3513
    %4490 = vmatprep.subr.mxu0 %v3506
    %4491 = vmatpush1.msra.mxu0 %v3505
    %4492 = vmatprep.subr.mxu0 %v3498
    %4493 = vmatpush1.msra.mxu0 %v3497
    %4494 = vmatprep.subr.mxu0 %v3490
    %4495 = vmatpush1.msra.mxu0 %v3489
    %4496 = vmatprep.subr.mxu0 %v3482
    %4497 = vmatpush1.msra.mxu0 %v3481
    %4498 = vmatprep.subr.mxu0 %v3474
    %4499 = vmatpush1.msra.mxu0 %v3473
    %4500 = vmatprep.subr.mxu0 %v3466
    %4501 = vmatpush1.msra.mxu0 %v3465
    %4502 = vmatprep.subr.mxu0 %v3458
    %4503 = vmatpush1.msra.mxu0 %v3457
    %4504 = vmatprep.subr.mxu0 %v3450
    %4505 = vmatpush1.msra.mxu0 %v3449
    %4506 = vmatprep.subr.mxu0 %v3442
    %4507 = vmatpush1.msra.mxu0 %v3441
    %4508 = vmatprep.subr.mxu0 %v3434
    %4509 = vmatpush1.msra.mxu0 %v3433
    %4510 = vmatprep.subr.mxu0 %v3426
    %4511 = vmatpush1.msra.mxu0 %v3425
    %4512 = vmatprep.subr.mxu0 %v3418
    %4513 = vmatpush1.msra.mxu0 %v3417
    %4514 = vmatprep.subr.mxu0 %v3410
    %4515 = vmatpush1.msra.mxu0 %v3409
    %4516 = vmatprep.subr.mxu0 %v3658
    %4517 = vmatpush2.msra.mxu0 %v3657
    %4518 = vmatprep.subr.mxu0 %v3650
    %4519 = vmatpush2.msra.mxu0 %v3649
    %4520 = vmatprep.subr.mxu0 %v3642
    %4521 = vmatpush2.msra.mxu0 %v3641
    %4522 = vmatprep.subr.mxu0 %v3634
    %4523 = vmatpush2.msra.mxu0 %v3633
    %4524 = vmatprep.subr.mxu0 %v3626
    %4525 = vmatpush2.msra.mxu0 %v3625
    %4526 = vmatprep.subr.mxu0 %v3618
    %4527 = vmatpush2.msra.mxu0 %v3617
    %4528 = vmatprep.subr.mxu0 %v3610
    %4529 = vmatpush2.msra.mxu0 %v3609
    %4530 = vmatprep.subr.mxu0 %v3602
    %4531 = vmatpush2.msra.mxu0 %v3601
    %4532 = vmatprep.subr.mxu0 %v3594
    %4533 = vmatpush2.msra.mxu0 %v3593
    %4534 = vmatprep.subr.mxu0 %v3586
    %4535 = vmatpush2.msra.mxu0 %v3585
    %4536 = vmatprep.subr.mxu0 %v3578
    %4537 = vmatpush2.msra.mxu0 %v3577
    %4538 = vmatprep.subr.mxu0 %v3570
    %4539 = vmatpush2.msra.mxu0 %v3569
    %4540 = vmatprep.subr.mxu0 %v3562
    %4541 = vmatpush2.msra.mxu0 %v3561
    %4542 = vmatprep.subr.mxu0 %v3554
    %4543 = vmatpush2.msra.mxu0 %v3553
    %4544 = vmatprep.subr.mxu0 %v3546
    %4545 = vmatpush2.msra.mxu0 %v3545
    %4546 = vmatprep.subr.mxu0 %v3538
    %4547 = vmatpush2.msra.mxu0 %v3537
    %4548 = vmatprep.mubr.f32.mxu0 %v2632
    %4549 = vmatmul.mubr.f32.gmra.mxu0 %v2631
    %v4550 = vpop.f32.mrf.mxu0
    %v4551 = vadd.f32 %v4480, %v4550
    %v4552 = vpop.f32.mrf.mxu0
    %v4553 = vadd.f32 %v4482, %v4552
    %4554 = vdwg.mxu0
    %4555 = vmatprep.subr.mxu0 %v2764
    %4556 = vmatpush1.msra.mxu0 %v2763
    %4557 = vmatprep.subr.mxu0 %v2756
    %4558 = vmatpush1.msra.mxu0 %v2755
    %4559 = vmatprep.subr.mxu0 %v2748
    %4560 = vmatpush1.msra.mxu0 %v2747
    %4561 = vmatprep.subr.mxu0 %v2740
    %4562 = vmatpush1.msra.mxu0 %v2739
    %4563 = vmatprep.subr.mxu0 %v2732
    %4564 = vmatpush1.msra.mxu0 %v2731
    %4565 = vmatprep.subr.mxu0 %v2724
    %4566 = vmatpush1.msra.mxu0 %v2723
    %4567 = vmatprep.subr.mxu0 %v2716
    %4568 = vmatpush1.msra.mxu0 %v2715
    %4569 = vmatprep.subr.mxu0 %v2708
    %4570 = vmatpush1.msra.mxu0 %v2707
    %4571 = vmatprep.subr.mxu0 %v2700
    %4572 = vmatpush1.msra.mxu0 %v2699
    %4573 = vmatprep.subr.mxu0 %v2692
    %4574 = vmatpush1.msra.mxu0 %v2691
    %4575 = vmatprep.subr.mxu0 %v2684
    %4576 = vmatpush1.msra.mxu0 %v2683
    %4577 = vmatprep.subr.mxu0 %v2676
    %4578 = vmatpush1.msra.mxu0 %v2675
    %4579 = vmatprep.subr.mxu0 %v2668
    %4580 = vmatpush1.msra.mxu0 %v2667
    %4581 = vmatprep.subr.mxu0 %v2660
    %4582 = vmatpush1.msra.mxu0 %v2659
    %4583 = vmatprep.subr.mxu0 %v2652
    %4584 = vmatpush1.msra.mxu0 %v2651
    %4585 = vmatprep.subr.mxu0 %v2644
    %4586 = vmatpush1.msra.mxu0 %v2643
    %4587 = vmatprep.subr.mxu0 %v2892
    %4588 = vmatpush2.msra.mxu0 %v2891
    %4589 = vmatprep.subr.mxu0 %v2884
    %4590 = vmatpush2.msra.mxu0 %v2883
    %4591 = vmatprep.subr.mxu0 %v2876
    %4592 = vmatpush2.msra.mxu0 %v2875
    %4593 = vmatprep.subr.mxu0 %v2868
    %4594 = vmatpush2.msra.mxu0 %v2867
    %4595 = vmatprep.subr.mxu0 %v2860
    %4596 = vmatpush2.msra.mxu0 %v2859
    %4597 = vmatprep.subr.mxu0 %v2852
    %4598 = vmatpush2.msra.mxu0 %v2851
    %4599 = vmatprep.subr.mxu0 %v2844
    %4600 = vmatpush2.msra.mxu0 %v2843
    %4601 = vmatprep.subr.mxu0 %v2836
    %4602 = vmatpush2.msra.mxu0 %v2835
    %4603 = vmatprep.subr.mxu0 %v2828
    %4604 = vmatpush2.msra.mxu0 %v2827
    %4605 = vmatprep.subr.mxu0 %v2820
    %4606 = vmatpush2.msra.mxu0 %v2819
    %4607 = vmatprep.subr.mxu0 %v2812
    %4608 = vmatpush2.msra.mxu0 %v2811
    %4609 = vmatprep.subr.mxu0 %v2804
    %4610 = vmatpush2.msra.mxu0 %v2803
    %4611 = vmatprep.subr.mxu0 %v2796
    %4612 = vmatpush2.msra.mxu0 %v2795
    %4613 = vmatprep.subr.mxu0 %v2788
    %4614 = vmatpush2.msra.mxu0 %v2787
    %4615 = vmatprep.subr.mxu0 %v2780
    %4616 = vmatpush2.msra.mxu0 %v2779
    %4617 = vmatprep.subr.mxu0 %v2772
    %4618 = vmatpush2.msra.mxu0 %v2771
    %4619 = vmatprep.mubr.f32.mxu0 %v2626
    %4620 = vmatmul.mubr.f32.gmra.mxu0 %v2625
    %v4621 = vpop.f32.mrf.mxu0
    %v4622 = vadd.f32 %v3690, %v4621
    %v4623 = vpop.f32.mrf.mxu0
    %v4624 = vadd.f32 %v3694, %v4623
    %4625 = vdwg.mxu0
    %4626 = vmatprep.subr.mxu0 %v3020
    %4627 = vmatpush1.msra.mxu0 %v3019
    %4628 = vmatprep.subr.mxu0 %v3012
    %4629 = vmatpush1.msra.mxu0 %v3011
    %4630 = vmatprep.subr.mxu0 %v3004
    %4631 = vmatpush1.msra.mxu0 %v3003
    %4632 = vmatprep.subr.mxu0 %v2996
    %4633 = vmatpush1.msra.mxu0 %v2995
    %4634 = vmatprep.subr.mxu0 %v2988
    %4635 = vmatpush1.msra.mxu0 %v2987
    %4636 = vmatprep.subr.mxu0 %v2980
    %4637 = vmatpush1.msra.mxu0 %v2979
    %4638 = vmatprep.subr.mxu0 %v2972
    %4639 = vmatpush1.msra.mxu0 %v2971
    %4640 = vmatprep.subr.mxu0 %v2964
    %4641 = vmatpush1.msra.mxu0 %v2963
    %4642 = vmatprep.subr.mxu0 %v2956
    %4643 = vmatpush1.msra.mxu0 %v2955
    %4644 = vmatprep.subr.mxu0 %v2948
    %4645 = vmatpush1.msra.mxu0 %v2947
    %4646 = vmatprep.subr.mxu0 %v2940
    %4647 = vmatpush1.msra.mxu0 %v2939
    %4648 = vmatprep.subr.mxu0 %v2932
    %4649 = vmatpush1.msra.mxu0 %v2931
    %4650 = vmatprep.subr.mxu0 %v2924
    %4651 = vmatpush1.msra.mxu0 %v2923
    %4652 = vmatprep.subr.mxu0 %v2916
    %4653 = vmatpush1.msra.mxu0 %v2915
    %4654 = vmatprep.subr.mxu0 %v2908
    %4655 = vmatpush1.msra.mxu0 %v2907
    %4656 = vmatprep.subr.mxu0 %v2900
    %4657 = vmatpush1.msra.mxu0 %v2899
    %4658 = vmatprep.subr.mxu0 %v3148
    %4659 = vmatpush2.msra.mxu0 %v3147
    %4660 = vmatprep.subr.mxu0 %v3140
    %4661 = vmatpush2.msra.mxu0 %v3139
    %4662 = vmatprep.subr.mxu0 %v3132
    %4663 = vmatpush2.msra.mxu0 %v3131
    %4664 = vmatprep.subr.mxu0 %v3124
    %4665 = vmatpush2.msra.mxu0 %v3123
    %4666 = vmatprep.subr.mxu0 %v3116
    %4667 = vmatpush2.msra.mxu0 %v3115
    %4668 = vmatprep.subr.mxu0 %v3108
    %4669 = vmatpush2.msra.mxu0 %v3107
    %4670 = vmatprep.subr.mxu0 %v3100
    %4671 = vmatpush2.msra.mxu0 %v3099
    %4672 = vmatprep.subr.mxu0 %v3092
    %4673 = vmatpush2.msra.mxu0 %v3091
    %4674 = vmatprep.subr.mxu0 %v3084
    %4675 = vmatpush2.msra.mxu0 %v3083
    %4676 = vmatprep.subr.mxu0 %v3076
    %4677 = vmatpush2.msra.mxu0 %v3075
    %4678 = vmatprep.subr.mxu0 %v3068
    %4679 = vmatpush2.msra.mxu0 %v3067
    %4680 = vmatprep.subr.mxu0 %v3060
    %4681 = vmatpush2.msra.mxu0 %v3059
    %4682 = vmatprep.subr.mxu0 %v3052
    %4683 = vmatpush2.msra.mxu0 %v3051
    %4684 = vmatprep.subr.mxu0 %v3044
    %4685 = vmatpush2.msra.mxu0 %v3043
    %4686 = vmatprep.subr.mxu0 %v3036
    %4687 = vmatpush2.msra.mxu0 %v3035
    %4688 = vmatprep.subr.mxu0 %v3028
    %4689 = vmatpush2.msra.mxu0 %v3027
    %4690 = vmatprep.mubr.f32.mxu0 %v2628
    %4691 = vmatmul.mubr.f32.gmra.mxu0 %v2627
    %v4692 = vpop.f32.mrf.mxu0
    %v4693 = vadd.f32 %v4622, %v4692
    %v4694 = vpop.f32.mrf.mxu0
    %v4695 = vadd.f32 %v4624, %v4694
    %4696 = vdwg.mxu0
    %4697 = vmatprep.subr.mxu0 %v3276
    %4698 = vmatpush1.msra.mxu0 %v3275
    %4699 = vmatprep.subr.mxu0 %v3268
    %4700 = vmatpush1.msra.mxu0 %v3267
    %4701 = vmatprep.subr.mxu0 %v3260
    %4702 = vmatpush1.msra.mxu0 %v3259
    %4703 = vmatprep.subr.mxu0 %v3252
    %4704 = vmatpush1.msra.mxu0 %v3251
    %4705 = vmatprep.subr.mxu0 %v3244
    %4706 = vmatpush1.msra.mxu0 %v3243
    %4707 = vmatprep.subr.mxu0 %v3236
    %4708 = vmatpush1.msra.mxu0 %v3235
    %4709 = vmatprep.subr.mxu0 %v3228
    %4710 = vmatpush1.msra.mxu0 %v3227
    %4711 = vmatprep.subr.mxu0 %v3220
    %4712 = vmatpush1.msra.mxu0 %v3219
    %4713 = vmatprep.subr.mxu0 %v3212
    %4714 = vmatpush1.msra.mxu0 %v3211
    %4715 = vmatprep.subr.mxu0 %v3204
    %4716 = vmatpush1.msra.mxu0 %v3203
    %4717 = vmatprep.subr.mxu0 %v3196
    %4718 = vmatpush1.msra.mxu0 %v3195
    %4719 = vmatprep.subr.mxu0 %v3188
    %4720 = vmatpush1.msra.mxu0 %v3187
    %4721 = vmatprep.subr.mxu0 %v3180
    %4722 = vmatpush1.msra.mxu0 %v3179
    %4723 = vmatprep.subr.mxu0 %v3172
    %4724 = vmatpush1.msra.mxu0 %v3171
    %4725 = vmatprep.subr.mxu0 %v3164
    %4726 = vmatpush1.msra.mxu0 %v3163
    %4727 = vmatprep.subr.mxu0 %v3156
    %4728 = vmatpush1.msra.mxu0 %v3155
    %4729 = vmatprep.subr.mxu0 %v3404
    %4730 = vmatpush2.msra.mxu0 %v3403
    %4731 = vmatprep.subr.mxu0 %v3396
    %4732 = vmatpush2.msra.mxu0 %v3395
    %4733 = vmatprep.subr.mxu0 %v3388
    %4734 = vmatpush2.msra.mxu0 %v3387
    %4735 = vmatprep.subr.mxu0 %v3380
    %4736 = vmatpush2.msra.mxu0 %v3379
    %4737 = vmatprep.subr.mxu0 %v3372
    %4738 = vmatpush2.msra.mxu0 %v3371
    %4739 = vmatprep.subr.mxu0 %v3364
    %4740 = vmatpush2.msra.mxu0 %v3363
    %4741 = vmatprep.subr.mxu0 %v3356
    %4742 = vmatpush2.msra.mxu0 %v3355
    %4743 = vmatprep.subr.mxu0 %v3348
    %4744 = vmatpush2.msra.mxu0 %v3347
    %4745 = vmatprep.subr.mxu0 %v3340
    %4746 = vmatpush2.msra.mxu0 %v3339
    %4747 = vmatprep.subr.mxu0 %v3332
    %4748 = vmatpush2.msra.mxu0 %v3331
    %4749 = vmatprep.subr.mxu0 %v3324
    %4750 = vmatpush2.msra.mxu0 %v3323
    %4751 = vmatprep.subr.mxu0 %v3316
    %4752 = vmatpush2.msra.mxu0 %v3315
    %4753 = vmatprep.subr.mxu0 %v3308
    %4754 = vmatpush2.msra.mxu0 %v3307
    %4755 = vmatprep.subr.mxu0 %v3300
    %4756 = vmatpush2.msra.mxu0 %v3299
    %4757 = vmatprep.subr.mxu0 %v3292
    %4758 = vmatpush2.msra.mxu0 %v3291
    %4759 = vmatprep.subr.mxu0 %v3284
    %4760 = vmatpush2.msra.mxu0 %v3283
    %4761 = vmatprep.mubr.f32.mxu0 %v2630
    %4762 = vmatmul.mubr.f32.gmra.mxu0 %v2629
    %v4763 = vpop.f32.mrf.mxu0
    %v4764 = vadd.f32 %v4693, %v4763
    %v4765 = vpop.f32.mrf.mxu0
    %v4766 = vadd.f32 %v4695, %v4765
    %4767 = vdwg.mxu0
    %4768 = vmatprep.subr.mxu0 %v3532
    %4769 = vmatpush1.msra.mxu0 %v3531
    %4770 = vmatprep.subr.mxu0 %v3524
    %4771 = vmatpush1.msra.mxu0 %v3523
    %4772 = vmatprep.subr.mxu0 %v3516
    %4773 = vmatpush1.msra.mxu0 %v3515
    %4774 = vmatprep.subr.mxu0 %v3508
    %4775 = vmatpush1.msra.mxu0 %v3507
    %4776 = vmatprep.subr.mxu0 %v3500
    %4777 = vmatpush1.msra.mxu0 %v3499
    %4778 = vmatprep.subr.mxu0 %v3492
    %4779 = vmatpush1.msra.mxu0 %v3491
    %4780 = vmatprep.subr.mxu0 %v3484
    %4781 = vmatpush1.msra.mxu0 %v3483
    %4782 = vmatprep.subr.mxu0 %v3476
    %4783 = vmatpush1.msra.mxu0 %v3475
    %4784 = vmatprep.subr.mxu0 %v3468
    %4785 = vmatpush1.msra.mxu0 %v3467
    %4786 = vmatprep.subr.mxu0 %v3460
    %4787 = vmatpush1.msra.mxu0 %v3459
    %4788 = vmatprep.subr.mxu0 %v3452
    %4789 = vmatpush1.msra.mxu0 %v3451
    %4790 = vmatprep.subr.mxu0 %v3444
    %4791 = vmatpush1.msra.mxu0 %v3443
    %4792 = vmatprep.subr.mxu0 %v3436
    %4793 = vmatpush1.msra.mxu0 %v3435
    %4794 = vmatprep.subr.mxu0 %v3428
    %4795 = vmatpush1.msra.mxu0 %v3427
    %4796 = vmatprep.subr.mxu0 %v3420
    %4797 = vmatpush1.msra.mxu0 %v3419
    %4798 = vmatprep.subr.mxu0 %v3412
    %4799 = vmatpush1.msra.mxu0 %v3411
    %4800 = vmatprep.subr.mxu0 %v3660
    %4801 = vmatpush2.msra.mxu0 %v3659
    %4802 = vmatprep.subr.mxu0 %v3652
    %4803 = vmatpush2.msra.mxu0 %v3651
    %4804 = vmatprep.subr.mxu0 %v3644
    %4805 = vmatpush2.msra.mxu0 %v3643
    %4806 = vmatprep.subr.mxu0 %v3636
    %4807 = vmatpush2.msra.mxu0 %v3635
    %4808 = vmatprep.subr.mxu0 %v3628
    %4809 = vmatpush2.msra.mxu0 %v3627
    %4810 = vmatprep.subr.mxu0 %v3620
    %4811 = vmatpush2.msra.mxu0 %v3619
    %4812 = vmatprep.subr.mxu0 %v3612
    %4813 = vmatpush2.msra.mxu0 %v3611
    %4814 = vmatprep.subr.mxu0 %v3604
    %4815 = vmatpush2.msra.mxu0 %v3603
    %4816 = vmatprep.subr.mxu0 %v3596
    %4817 = vmatpush2.msra.mxu0 %v3595
    %4818 = vmatprep.subr.mxu0 %v3588
    %4819 = vmatpush2.msra.mxu0 %v3587
    %4820 = vmatprep.subr.mxu0 %v3580
    %4821 = vmatpush2.msra.mxu0 %v3579
    %4822 = vmatprep.subr.mxu0 %v3572
    %4823 = vmatpush2.msra.mxu0 %v3571
    %4824 = vmatprep.subr.mxu0 %v3564
    %4825 = vmatpush2.msra.mxu0 %v3563
    %4826 = vmatprep.subr.mxu0 %v3556
    %4827 = vmatpush2.msra.mxu0 %v3555
    %4828 = vmatprep.subr.mxu0 %v3548
    %4829 = vmatpush2.msra.mxu0 %v3547
    %4830 = vmatprep.subr.mxu0 %v3540
    %4831 = vmatpush2.msra.mxu0 %v3539
    %4832 = vmatprep.mubr.f32.mxu0 %v2632
    %4833 = vmatmul.mubr.f32.gmra.mxu0 %v2631
    %v4834 = vpop.f32.mrf.mxu0
    %v4835 = vadd.f32 %v4764, %v4834
    %v4836 = vpop.f32.mrf.mxu0
    %v4837 = vadd.f32 %v4766, %v4836
    %4838 = vdwg.mxu0
    %v4839 = vmax.f32 %v3983, 0.0
    %v4840 = vmax.f32 %v3985, 0.0
    %v4841 = vmax.f32 %v4267, 0.0
    %v4842 = vmax.f32 %v4269, 0.0
    %v4843 = vmax.f32 %v4551, 0.0
    %v4844 = vmax.f32 %v4553, 0.0
    %v4845 = vmax.f32 %v4835, 0.0
    %v4846 = vmax.f32 %v4837, 0.0
    %s4847 = smul.u32 1024, 1
    %s4848 = sshll.u32 %s4847, 4
    %4849 = dma.done %s98, %s4848
    %v4850 = vld [vmem:[#allocation3] sm:$0xff]
    %v4851 = vld [vmem:[#allocation3 + $0x8] sm:$0xff]
    %v4852 = vld [vmem:[#allocation3 + $0x10] sm:$0xff]
    %v4853 = vld [vmem:[#allocation3 + $0x18] sm:$0xff]
    %v4854 = vld [vmem:[#allocation3 + $0x20] sm:$0xff]
    %v4855 = vld [vmem:[#allocation3 + $0x28] sm:$0xff]
    %v4856 = vld [vmem:[#allocation3 + $0x30] sm:$0xff]
    %v4857 = vld [vmem:[#allocation3 + $0x38] sm:$0xff]
    %v4858 = vld [vmem:[#allocation3 + $0x40] sm:$0xff]
    %v4859 = vld [vmem:[#allocation3 + $0x48] sm:$0xff]
    %v4860 = vld [vmem:[#allocation3 + $0x50] sm:$0xff]
    %v4861 = vld [vmem:[#allocation3 + $0x58] sm:$0xff]
    %v4862 = vld [vmem:[#allocation3 + $0x60] sm:$0xff]
    %v4863 = vld [vmem:[#allocation3 + $0x68] sm:$0xff]
    %v4864 = vld [vmem:[#allocation3 + $0x70] sm:$0xff]
    %v4865 = vld [vmem:[#allocation3 + $0x78] sm:$0xff]
    %v4866 = vld [vmem:[#allocation3 + $0x80] sm:$0xff]
    %v4867 = vld [vmem:[#allocation3 + $0x88] sm:$0xff]
    %v4868 = vld [vmem:[#allocation3 + $0x90] sm:$0xff]
    %v4869 = vld [vmem:[#allocation3 + $0x98] sm:$0xff]
    %v4870 = vld [vmem:[#allocation3 + $0xa0] sm:$0xff]
    %v4871 = vld [vmem:[#allocation3 + $0xa8] sm:$0xff]
    %v4872 = vld [vmem:[#allocation3 + $0xb0] sm:$0xff]
    %v4873 = vld [vmem:[#allocation3 + $0xb8] sm:$0xff]
    %v4874 = vld [vmem:[#allocation3 + $0xc0] sm:$0xff]
    %v4875 = vld [vmem:[#allocation3 + $0xc8] sm:$0xff]
    %v4876 = vld [vmem:[#allocation3 + $0xd0] sm:$0xff]
    %v4877 = vld [vmem:[#allocation3 + $0xd8] sm:$0xff]
    %v4878 = vld [vmem:[#allocation3 + $0xe0] sm:$0xff]
    %v4879 = vld [vmem:[#allocation3 + $0xe8] sm:$0xff]
    %v4880 = vld [vmem:[#allocation3 + $0xf0] sm:$0xff]
    %v4881 = vld [vmem:[#allocation3 + $0xf8] sm:$0xff]
    %v4882 = vld [vmem:[#allocation3 + $0x100] sm:$0xff]
    %v4883 = vld [vmem:[#allocation3 + $0x108] sm:$0xff]
    %v4884 = vld [vmem:[#allocation3 + $0x110] sm:$0xff]
    %v4885 = vld [vmem:[#allocation3 + $0x118] sm:$0xff]
    %v4886 = vld [vmem:[#allocation3 + $0x120] sm:$0xff]
    %v4887 = vld [vmem:[#allocation3 + $0x128] sm:$0xff]
    %v4888 = vld [vmem:[#allocation3 + $0x130] sm:$0xff]
    %v4889 = vld [vmem:[#allocation3 + $0x138] sm:$0xff]
    %v4890 = vld [vmem:[#allocation3 + $0x140] sm:$0xff]
    %v4891 = vld [vmem:[#allocation3 + $0x148] sm:$0xff]
    %v4892 = vld [vmem:[#allocation3 + $0x150] sm:$0xff]
    %v4893 = vld [vmem:[#allocation3 + $0x158] sm:$0xff]
    %v4894 = vld [vmem:[#allocation3 + $0x160] sm:$0xff]
    %v4895 = vld [vmem:[#allocation3 + $0x168] sm:$0xff]
    %v4896 = vld [vmem:[#allocation3 + $0x170] sm:$0xff]
    %v4897 = vld [vmem:[#allocation3 + $0x178] sm:$0xff]
    %v4898 = vld [vmem:[#allocation3 + $0x180] sm:$0xff]
    %v4899 = vld [vmem:[#allocation3 + $0x188] sm:$0xff]
    %v4900 = vld [vmem:[#allocation3 + $0x190] sm:$0xff]
    %v4901 = vld [vmem:[#allocation3 + $0x198] sm:$0xff]
    %v4902 = vld [vmem:[#allocation3 + $0x1a0] sm:$0xff]
    %v4903 = vld [vmem:[#allocation3 + $0x1a8] sm:$0xff]
    %v4904 = vld [vmem:[#allocation3 + $0x1b0] sm:$0xff]
    %v4905 = vld [vmem:[#allocation3 + $0x1b8] sm:$0xff]
    %v4906 = vld [vmem:[#allocation3 + $0x1c0] sm:$0xff]
    %v4907 = vld [vmem:[#allocation3 + $0x1c8] sm:$0xff]
    %v4908 = vld [vmem:[#allocation3 + $0x1d0] sm:$0xff]
    %v4909 = vld [vmem:[#allocation3 + $0x1d8] sm:$0xff]
    %v4910 = vld [vmem:[#allocation3 + $0x1e0] sm:$0xff]
    %v4911 = vld [vmem:[#allocation3 + $0x1e8] sm:$0xff]
    %v4912 = vld [vmem:[#allocation3 + $0x1f0] sm:$0xff]
    %v4913 = vld [vmem:[#allocation3 + $0x1f8] sm:$0xff]
    %v4914 = vld [vmem:[#allocation3 + $0x200] sm:$0xff]
    %v4915 = vld [vmem:[#allocation3 + $0x208] sm:$0xff]
    %v4916 = vld [vmem:[#allocation3 + $0x210] sm:$0xff]
    %v4917 = vld [vmem:[#allocation3 + $0x218] sm:$0xff]
    %v4918 = vld [vmem:[#allocation3 + $0x220] sm:$0xff]
    %v4919 = vld [vmem:[#allocation3 + $0x228] sm:$0xff]
    %v4920 = vld [vmem:[#allocation3 + $0x230] sm:$0xff]
    %v4921 = vld [vmem:[#allocation3 + $0x238] sm:$0xff]
    %v4922 = vld [vmem:[#allocation3 + $0x240] sm:$0xff]
    %v4923 = vld [vmem:[#allocation3 + $0x248] sm:$0xff]
    %v4924 = vld [vmem:[#allocation3 + $0x250] sm:$0xff]
    %v4925 = vld [vmem:[#allocation3 + $0x258] sm:$0xff]
    %v4926 = vld [vmem:[#allocation3 + $0x260] sm:$0xff]
    %v4927 = vld [vmem:[#allocation3 + $0x268] sm:$0xff]
    %v4928 = vld [vmem:[#allocation3 + $0x270] sm:$0xff]
    %v4929 = vld [vmem:[#allocation3 + $0x278] sm:$0xff]
    %v4930 = vld [vmem:[#allocation3 + $0x280] sm:$0xff]
    %v4931 = vld [vmem:[#allocation3 + $0x288] sm:$0xff]
    %v4932 = vld [vmem:[#allocation3 + $0x290] sm:$0xff]
    %v4933 = vld [vmem:[#allocation3 + $0x298] sm:$0xff]
    %v4934 = vld [vmem:[#allocation3 + $0x2a0] sm:$0xff]
    %v4935 = vld [vmem:[#allocation3 + $0x2a8] sm:$0xff]
    %v4936 = vld [vmem:[#allocation3 + $0x2b0] sm:$0xff]
    %v4937 = vld [vmem:[#allocation3 + $0x2b8] sm:$0xff]
    %v4938 = vld [vmem:[#allocation3 + $0x2c0] sm:$0xff]
    %v4939 = vld [vmem:[#allocation3 + $0x2c8] sm:$0xff]
    %v4940 = vld [vmem:[#allocation3 + $0x2d0] sm:$0xff]
    %v4941 = vld [vmem:[#allocation3 + $0x2d8] sm:$0xff]
    %v4942 = vld [vmem:[#allocation3 + $0x2e0] sm:$0xff]
    %v4943 = vld [vmem:[#allocation3 + $0x2e8] sm:$0xff]
    %v4944 = vld [vmem:[#allocation3 + $0x2f0] sm:$0xff]
    %v4945 = vld [vmem:[#allocation3 + $0x2f8] sm:$0xff]
    %v4946 = vld [vmem:[#allocation3 + $0x300] sm:$0xff]
    %v4947 = vld [vmem:[#allocation3 + $0x308] sm:$0xff]
    %v4948 = vld [vmem:[#allocation3 + $0x310] sm:$0xff]
    %v4949 = vld [vmem:[#allocation3 + $0x318] sm:$0xff]
    %v4950 = vld [vmem:[#allocation3 + $0x320] sm:$0xff]
    %v4951 = vld [vmem:[#allocation3 + $0x328] sm:$0xff]
    %v4952 = vld [vmem:[#allocation3 + $0x330] sm:$0xff]
    %v4953 = vld [vmem:[#allocation3 + $0x338] sm:$0xff]
    %v4954 = vld [vmem:[#allocation3 + $0x340] sm:$0xff]
    %v4955 = vld [vmem:[#allocation3 + $0x348] sm:$0xff]
    %v4956 = vld [vmem:[#allocation3 + $0x350] sm:$0xff]
    %v4957 = vld [vmem:[#allocation3 + $0x358] sm:$0xff]
    %v4958 = vld [vmem:[#allocation3 + $0x360] sm:$0xff]
    %v4959 = vld [vmem:[#allocation3 + $0x368] sm:$0xff]
    %v4960 = vld [vmem:[#allocation3 + $0x370] sm:$0xff]
    %v4961 = vld [vmem:[#allocation3 + $0x378] sm:$0xff]
    %v4962 = vld [vmem:[#allocation3 + $0x380] sm:$0xff]
    %v4963 = vld [vmem:[#allocation3 + $0x388] sm:$0xff]
    %v4964 = vld [vmem:[#allocation3 + $0x390] sm:$0xff]
    %v4965 = vld [vmem:[#allocation3 + $0x398] sm:$0xff]
    %v4966 = vld [vmem:[#allocation3 + $0x3a0] sm:$0xff]
    %v4967 = vld [vmem:[#allocation3 + $0x3a8] sm:$0xff]
    %v4968 = vld [vmem:[#allocation3 + $0x3b0] sm:$0xff]
    %v4969 = vld [vmem:[#allocation3 + $0x3b8] sm:$0xff]
    %v4970 = vld [vmem:[#allocation3 + $0x3c0] sm:$0xff]
    %v4971 = vld [vmem:[#allocation3 + $0x3c8] sm:$0xff]
    %v4972 = vld [vmem:[#allocation3 + $0x3d0] sm:$0xff]
    %v4973 = vld [vmem:[#allocation3 + $0x3d8] sm:$0xff]
    %v4974 = vld [vmem:[#allocation3 + $0x3e0] sm:$0xff]
    %v4975 = vld [vmem:[#allocation3 + $0x3e8] sm:$0xff]
    %v4976 = vld [vmem:[#allocation3 + $0x3f0] sm:$0xff]
    %v4977 = vld [vmem:[#allocation3 + $0x3f8] sm:$0xff]
    %v4978 = vld [vmem:[#allocation12] sm:$0x1]
    %v4980 = vlaneseq
    %v4981 = vshrl.u32 %v4980, 7
    %v4982 = vsub.s32 0, %v4981
    %v4983 = vrot.slane %v4978, %v4982
    %4985 = vmatprep.subr.mxu0 0.0
    %4986 = vmatpush1.msra.mxu0 %v4865
    %4987 = vmatprep.subr.mxu0 0.0
    %4988 = vmatpush1.msra.mxu0 %v4864
    %4989 = vmatprep.subr.mxu0 0.0
    %4990 = vmatpush1.msra.mxu0 %v4863
    %4991 = vmatprep.subr.mxu0 0.0
    %4992 = vmatpush1.msra.mxu0 %v4862
    %4993 = vmatprep.subr.mxu0 0.0
    %4994 = vmatpush1.msra.mxu0 %v4861
    %4995 = vmatprep.subr.mxu0 0.0
    %4996 = vmatpush1.msra.mxu0 %v4860
    %4997 = vmatprep.subr.mxu0 0.0
    %4998 = vmatpush1.msra.mxu0 %v4859
    %4999 = vmatprep.subr.mxu0 0.0
    %5000 = vmatpush1.msra.mxu0 %v4858
    %5001 = vmatprep.subr.mxu0 0.0
    %5002 = vmatpush1.msra.mxu0 %v4857
    %5003 = vmatprep.subr.mxu0 0.0
    %5004 = vmatpush1.msra.mxu0 %v4856
    %5005 = vmatprep.subr.mxu0 0.0
    %5006 = vmatpush1.msra.mxu0 %v4855
    %5007 = vmatprep.subr.mxu0 0.0
    %5008 = vmatpush1.msra.mxu0 %v4854
    %5009 = vmatprep.subr.mxu0 0.0
    %5010 = vmatpush1.msra.mxu0 %v4853
    %5011 = vmatprep.subr.mxu0 0.0
    %5012 = vmatpush1.msra.mxu0 %v4852
    %5013 = vmatprep.subr.mxu0 0.0
    %5014 = vmatpush1.msra.mxu0 %v4851
    %5015 = vmatprep.subr.mxu0 0.0
    %5016 = vmatpush1.msra.mxu0 %v4850
    %5017 = vmatprep.subr.mxu0 0.0
    %5018 = vmatpush2.msra.mxu0 %v4881
    %5019 = vmatprep.subr.mxu0 0.0
    %5020 = vmatpush2.msra.mxu0 %v4880
    %5021 = vmatprep.subr.mxu0 0.0
    %5022 = vmatpush2.msra.mxu0 %v4879
    %5023 = vmatprep.subr.mxu0 0.0
    %5024 = vmatpush2.msra.mxu0 %v4878
    %5025 = vmatprep.subr.mxu0 0.0
    %5026 = vmatpush2.msra.mxu0 %v4877
    %5027 = vmatprep.subr.mxu0 0.0
    %5028 = vmatpush2.msra.mxu0 %v4876
    %5029 = vmatprep.subr.mxu0 0.0
    %5030 = vmatpush2.msra.mxu0 %v4875
    %5031 = vmatprep.subr.mxu0 0.0
    %5032 = vmatpush2.msra.mxu0 %v4874
    %5033 = vmatprep.subr.mxu0 0.0
    %5034 = vmatpush2.msra.mxu0 %v4873
    %5035 = vmatprep.subr.mxu0 0.0
    %5036 = vmatpush2.msra.mxu0 %v4872
    %5037 = vmatprep.subr.mxu0 0.0
    %5038 = vmatpush2.msra.mxu0 %v4871
    %5039 = vmatprep.subr.mxu0 0.0
    %5040 = vmatpush2.msra.mxu0 %v4870
    %5041 = vmatprep.subr.mxu0 0.0
    %5042 = vmatpush2.msra.mxu0 %v4869
    %5043 = vmatprep.subr.mxu0 0.0
    %5044 = vmatpush2.msra.mxu0 %v4868
    %5045 = vmatprep.subr.mxu0 0.0
    %5046 = vmatpush2.msra.mxu0 %v4867
    %5047 = vmatprep.subr.mxu0 0.0
    %5048 = vmatpush2.msra.mxu0 %v4866
    %5049 = vmatprep.mubr.f32.mxu0 %v4840
    %5050 = vmatmul.mubr.f32.gmra.mxu0 %v4839
    %v5051 = vpop.f32.mrf.mxu0
    %v5052 = vadd.f32 %v4983, %v5051
    %v5053 = vpop.f32.mrf.mxu0
    %5054 = vdwg.mxu0
    %5055 = vmatprep.subr.mxu0 0.0
    %5056 = vmatpush1.msra.mxu0 %v4897
    %5057 = vmatprep.subr.mxu0 0.0
    %5058 = vmatpush1.msra.mxu0 %v4896
    %5059 = vmatprep.subr.mxu0 0.0
    %5060 = vmatpush1.msra.mxu0 %v4895
    %5061 = vmatprep.subr.mxu0 0.0
    %5062 = vmatpush1.msra.mxu0 %v4894
    %5063 = vmatprep.subr.mxu0 0.0
    %5064 = vmatpush1.msra.mxu0 %v4893
    %5065 = vmatprep.subr.mxu0 0.0
    %5066 = vmatpush1.msra.mxu0 %v4892
    %5067 = vmatprep.subr.mxu0 0.0
    %5068 = vmatpush1.msra.mxu0 %v4891
    %5069 = vmatprep.subr.mxu0 0.0
    %5070 = vmatpush1.msra.mxu0 %v4890
    %5071 = vmatprep.subr.mxu0 0.0
    %5072 = vmatpush1.msra.mxu0 %v4889
    %5073 = vmatprep.subr.mxu0 0.0
    %5074 = vmatpush1.msra.mxu0 %v4888
    %5075 = vmatprep.subr.mxu0 0.0
    %5076 = vmatpush1.msra.mxu0 %v4887
    %5077 = vmatprep.subr.mxu0 0.0
    %5078 = vmatpush1.msra.mxu0 %v4886
    %5079 = vmatprep.subr.mxu0 0.0
    %5080 = vmatpush1.msra.mxu0 %v4885
    %5081 = vmatprep.subr.mxu0 0.0
    %5082 = vmatpush1.msra.mxu0 %v4884
    %5083 = vmatprep.subr.mxu0 0.0
    %5084 = vmatpush1.msra.mxu0 %v4883
    %5085 = vmatprep.subr.mxu0 0.0
    %5086 = vmatpush1.msra.mxu0 %v4882
    %5087 = vmatprep.subr.mxu0 0.0
    %5088 = vmatpush2.msra.mxu0 %v4913
    %5089 = vmatprep.subr.mxu0 0.0
    %5090 = vmatpush2.msra.mxu0 %v4912
    %5091 = vmatprep.subr.mxu0 0.0
    %5092 = vmatpush2.msra.mxu0 %v4911
    %5093 = vmatprep.subr.mxu0 0.0
    %5094 = vmatpush2.msra.mxu0 %v4910
    %5095 = vmatprep.subr.mxu0 0.0
    %5096 = vmatpush2.msra.mxu0 %v4909
    %5097 = vmatprep.subr.mxu0 0.0
    %5098 = vmatpush2.msra.mxu0 %v4908
    %5099 = vmatprep.subr.mxu0 0.0
    %5100 = vmatpush2.msra.mxu0 %v4907
    %5101 = vmatprep.subr.mxu0 0.0
    %5102 = vmatpush2.msra.mxu0 %v4906
    %5103 = vmatprep.subr.mxu0 0.0
    %5104 = vmatpush2.msra.mxu0 %v4905
    %5105 = vmatprep.subr.mxu0 0.0
    %5106 = vmatpush2.msra.mxu0 %v4904
    %5107 = vmatprep.subr.mxu0 0.0
    %5108 = vmatpush2.msra.mxu0 %v4903
    %5109 = vmatprep.subr.mxu0 0.0
    %5110 = vmatpush2.msra.mxu0 %v4902
    %5111 = vmatprep.subr.mxu0 0.0
    %5112 = vmatpush2.msra.mxu0 %v4901
    %5113 = vmatprep.subr.mxu0 0.0
    %5114 = vmatpush2.msra.mxu0 %v4900
    %5115 = vmatprep.subr.mxu0 0.0
    %5116 = vmatpush2.msra.mxu0 %v4899
    %5117 = vmatprep.subr.mxu0 0.0
    %5118 = vmatpush2.msra.mxu0 %v4898
    %5119 = vmatprep.mubr.f32.mxu0 %v4842
    %5120 = vmatmul.mubr.f32.gmra.mxu0 %v4841
    %v5121 = vpop.f32.mrf.mxu0
    %v5122 = vadd.f32 %v5052, %v5121
    %v5123 = vpop.f32.mrf.mxu0
    %5124 = vdwg.mxu0
    %5125 = vmatprep.subr.mxu0 0.0
    %5126 = vmatpush1.msra.mxu0 %v4929
    %5127 = vmatprep.subr.mxu0 0.0
    %5128 = vmatpush1.msra.mxu0 %v4928
    %5129 = vmatprep.subr.mxu0 0.0
    %5130 = vmatpush1.msra.mxu0 %v4927
    %5131 = vmatprep.subr.mxu0 0.0
    %5132 = vmatpush1.msra.mxu0 %v4926
    %5133 = vmatprep.subr.mxu0 0.0
    %5134 = vmatpush1.msra.mxu0 %v4925
    %5135 = vmatprep.subr.mxu0 0.0
    %5136 = vmatpush1.msra.mxu0 %v4924
    %5137 = vmatprep.subr.mxu0 0.0
    %5138 = vmatpush1.msra.mxu0 %v4923
    %5139 = vmatprep.subr.mxu0 0.0
    %5140 = vmatpush1.msra.mxu0 %v4922
    %5141 = vmatprep.subr.mxu0 0.0
    %5142 = vmatpush1.msra.mxu0 %v4921
    %5143 = vmatprep.subr.mxu0 0.0
    %5144 = vmatpush1.msra.mxu0 %v4920
    %5145 = vmatprep.subr.mxu0 0.0
    %5146 = vmatpush1.msra.mxu0 %v4919
    %5147 = vmatprep.subr.mxu0 0.0
    %5148 = vmatpush1.msra.mxu0 %v4918
    %5149 = vmatprep.subr.mxu0 0.0
    %5150 = vmatpush1.msra.mxu0 %v4917
    %5151 = vmatprep.subr.mxu0 0.0
    %5152 = vmatpush1.msra.mxu0 %v4916
    %5153 = vmatprep.subr.mxu0 0.0
    %5154 = vmatpush1.msra.mxu0 %v4915
    %5155 = vmatprep.subr.mxu0 0.0
    %5156 = vmatpush1.msra.mxu0 %v4914
    %5157 = vmatprep.subr.mxu0 0.0
    %5158 = vmatpush2.msra.mxu0 %v4945
    %5159 = vmatprep.subr.mxu0 0.0
    %5160 = vmatpush2.msra.mxu0 %v4944
    %5161 = vmatprep.subr.mxu0 0.0
    %5162 = vmatpush2.msra.mxu0 %v4943
    %5163 = vmatprep.subr.mxu0 0.0
    %5164 = vmatpush2.msra.mxu0 %v4942
    %5165 = vmatprep.subr.mxu0 0.0
    %5166 = vmatpush2.msra.mxu0 %v4941
    %5167 = vmatprep.subr.mxu0 0.0
    %5168 = vmatpush2.msra.mxu0 %v4940
    %5169 = vmatprep.subr.mxu0 0.0
    %5170 = vmatpush2.msra.mxu0 %v4939
    %5171 = vmatprep.subr.mxu0 0.0
    %5172 = vmatpush2.msra.mxu0 %v4938
    %5173 = vmatprep.subr.mxu0 0.0
    %5174 = vmatpush2.msra.mxu0 %v4937
    %5175 = vmatprep.subr.mxu0 0.0
    %5176 = vmatpush2.msra.mxu0 %v4936
    %5177 = vmatprep.subr.mxu0 0.0
    %5178 = vmatpush2.msra.mxu0 %v4935
    %5179 = vmatprep.subr.mxu0 0.0
    %5180 = vmatpush2.msra.mxu0 %v4934
    %5181 = vmatprep.subr.mxu0 0.0
    %5182 = vmatpush2.msra.mxu0 %v4933
    %5183 = vmatprep.subr.mxu0 0.0
    %5184 = vmatpush2.msra.mxu0 %v4932
    %5185 = vmatprep.subr.mxu0 0.0
    %5186 = vmatpush2.msra.mxu0 %v4931
    %5187 = vmatprep.subr.mxu0 0.0
    %5188 = vmatpush2.msra.mxu0 %v4930
    %5189 = vmatprep.mubr.f32.mxu0 %v4844
    %5190 = vmatmul.mubr.f32.gmra.mxu0 %v4843
    %v5191 = vpop.f32.mrf.mxu0
    %v5192 = vadd.f32 %v5122, %v5191
    %v5193 = vpop.f32.mrf.mxu0
    %5194 = vdwg.mxu0
    %5195 = vmatprep.subr.mxu0 0.0
    %5196 = vmatpush1.msra.mxu0 %v4961
    %5197 = vmatprep.subr.mxu0 0.0
    %5198 = vmatpush1.msra.mxu0 %v4960
    %5199 = vmatprep.subr.mxu0 0.0
    %5200 = vmatpush1.msra.mxu0 %v4959
    %5201 = vmatprep.subr.mxu0 0.0
    %5202 = vmatpush1.msra.mxu0 %v4958
    %5203 = vmatprep.subr.mxu0 0.0
    %5204 = vmatpush1.msra.mxu0 %v4957
    %5205 = vmatprep.subr.mxu0 0.0
    %5206 = vmatpush1.msra.mxu0 %v4956
    %5207 = vmatprep.subr.mxu0 0.0
    %5208 = vmatpush1.msra.mxu0 %v4955
    %5209 = vmatprep.subr.mxu0 0.0
    %5210 = vmatpush1.msra.mxu0 %v4954
    %5211 = vmatprep.subr.mxu0 0.0
    %5212 = vmatpush1.msra.mxu0 %v4953
    %5213 = vmatprep.subr.mxu0 0.0
    %5214 = vmatpush1.msra.mxu0 %v4952
    %5215 = vmatprep.subr.mxu0 0.0
    %5216 = vmatpush1.msra.mxu0 %v4951
    %5217 = vmatprep.subr.mxu0 0.0
    %5218 = vmatpush1.msra.mxu0 %v4950
    %5219 = vmatprep.subr.mxu0 0.0
    %5220 = vmatpush1.msra.mxu0 %v4949
    %5221 = vmatprep.subr.mxu0 0.0
    %5222 = vmatpush1.msra.mxu0 %v4948
    %5223 = vmatprep.subr.mxu0 0.0
    %5224 = vmatpush1.msra.mxu0 %v4947
    %5225 = vmatprep.subr.mxu0 0.0
    %5226 = vmatpush1.msra.mxu0 %v4946
    %5227 = vmatprep.subr.mxu0 0.0
    %5228 = vmatpush2.msra.mxu0 %v4977
    %5229 = vmatprep.subr.mxu0 0.0
    %5230 = vmatpush2.msra.mxu0 %v4976
    %5231 = vmatprep.subr.mxu0 0.0
    %5232 = vmatpush2.msra.mxu0 %v4975
    %5233 = vmatprep.subr.mxu0 0.0
    %5234 = vmatpush2.msra.mxu0 %v4974
    %5235 = vmatprep.subr.mxu0 0.0
    %5236 = vmatpush2.msra.mxu0 %v4973
    %5237 = vmatprep.subr.mxu0 0.0
    %5238 = vmatpush2.msra.mxu0 %v4972
    %5239 = vmatprep.subr.mxu0 0.0
    %5240 = vmatpush2.msra.mxu0 %v4971
    %5241 = vmatprep.subr.mxu0 0.0
    %5242 = vmatpush2.msra.mxu0 %v4970
    %5243 = vmatprep.subr.mxu0 0.0
    %5244 = vmatpush2.msra.mxu0 %v4969
    %5245 = vmatprep.subr.mxu0 0.0
    %5246 = vmatpush2.msra.mxu0 %v4968
    %5247 = vmatprep.subr.mxu0 0.0
    %5248 = vmatpush2.msra.mxu0 %v4967
    %5249 = vmatprep.subr.mxu0 0.0
    %5250 = vmatpush2.msra.mxu0 %v4966
    %5251 = vmatprep.subr.mxu0 0.0
    %5252 = vmatpush2.msra.mxu0 %v4965
    %5253 = vmatprep.subr.mxu0 0.0
    %5254 = vmatpush2.msra.mxu0 %v4964
    %5255 = vmatprep.subr.mxu0 0.0
    %5256 = vmatpush2.msra.mxu0 %v4963
    %5257 = vmatprep.subr.mxu0 0.0
    %5258 = vmatpush2.msra.mxu0 %v4962
    %5259 = vmatprep.mubr.f32.mxu0 %v4846
    %5260 = vmatmul.mubr.f32.gmra.mxu0 %v4845
    %v5261 = vpop.f32.mrf.mxu0
    %v5262 = vadd.f32 %v5192, %v5261
    %v5263 = vpop.f32.mrf.mxu0
    %5264 = vdwg.mxu0
    %v5265 = vxor.u32 %v5262, 2147483648
    %v5266 = vmul.f32 %v5265, 1.442695
    %v5267 = vpow.pop %v5266
    %v5268 = vadd.f32 %v5267, 1.0
    %v5269 = vrcp.pop %v5268
    %v5270 = vmul.f32 1.0, %v5269
    %5271 = vst [vmem:[%s8] sm:$0xff] %v5270
    // Predicated region
    $region54: #{neural_network_forward.1} parent=1 // pred_check
      _
    $region55: #{neural_network_forward.1} parent=1 // pred_check_branch
      %5273 = sbr.rel (0) target = $region57
    $region56: #{neural_network_forward.1} parent=1 // pred_region
      _
    $region57: #{neural_network_forward.1} parent=1 // pred_fallthru
      _
    // Predicated region
    $region58: #{neural_network_forward.1} parent=1 // pred_check
      _
    $region59: #{neural_network_forward.1} parent=1 // pred_check_branch
      %5275 = sbr.rel (0) target = $region61
    $region60: #{neural_network_forward.1} parent=1 // pred_region
      _
    $region61: #{neural_network_forward.1} parent=1 // pred_fallthru
      _
    %5276 = vsyncpa [#allocation6], 1
    %5277 = vsyncpa [#allocation8], 1
    %5278 = vsyncpa [#allocation11], 1
  %5279 = vsyncmov [#allocation4]
  %s5280 = vpop.sfrf %5279
  %p5281 = scmp.eq.s32.totalorder %s5280, 0
  %p5282 = pneg %p5281
  %5284 = shalt.err (%p5282)
  %s5285 = scalar_lea.sflag [#allocation4], 1
  %5286 = vsyncmov %s5285
  %s5287 = vpop.sfrf %5286
  %p5288 = scmp.eq.s32.totalorder %s5287, 0
  %p5289 = pneg %p5288
  %5291 = shalt.err (%p5289)

</llo_original>
